<compile_context>
chip_gen: v7x
topology: tpu7x:2x2x1
jax: 0.10.0
libtpu: 0.0.40
codegen_flags: <defaults>
</compile_context>

<pallas_src>
import jax
import jax.numpy as jnp
from jax.experimental import pallas as pl
from jax.experimental.pallas import tpu as pltpu


def basic_block_kernel(xpad_ref, w1_ref, b1_ref, w2_ref, b2_ref, out_ref,
                       y1pad_ref):
    # xpad_ref : (1, H+4, W+2, Cin) bf16  input, padded 2 rows / 1 col each side
    # w1_ref   : (9, Cin,  Cout)   bf16   conv1 taps (BN1 scale folded), k = ky*3+kx
    # b1_ref   : (1, Cout)         f32    folded BN1 bias
    # w2_ref   : (9, Cout, Cout)   bf16   conv2 taps (BN2 scale folded)
    # b2_ref   : (1, Cout)         f32    folded BN2 bias
    # out_ref  : (1, TH, W, Cout)  bf16   one row-tile of the output
    # y1pad_ref: (TH+2, W+2, Cout) bf16   column-padded conv1 activation (+row halo)
    TH, W, Cout = out_ref.shape[1], out_ref.shape[2], out_ref.shape[3]
    Cin = xpad_ref.shape[3]

    i = pl.program_id(1)
    n_tiles = pl.num_programs(1)
    r0 = pl.multiple_of(i * TH, TH)          # first output row of this tile

    # ---- conv1 (+ folded BN1 scale): 9 tap-wise MXU matmuls, f32 accumulation.
    # Covers TH+2 activation rows (1-row halo each side for conv2).
    m1 = (TH + 2) * W
    acc1 = None
    for dy in range(3):
        for dx in range(3):
            k = dy * 3 + dx
            patch = xpad_ref[0, pl.ds(r0 + dy, TH + 2), dx:dx + W, :]
            part = jnp.dot(patch.reshape(m1, Cin), w1_ref[k],
                           preferred_element_type=jnp.float32)
            acc1 = part if acc1 is None else acc1 + part

    # bn1 bias + relu (f32 on the accumulator), store bf16 into the
    # column-padded activation scratch.  Only the two border columns need
    # explicit zeros each step (interior is fully rewritten).
    o1 = jnp.maximum(acc1 + b1_ref[0], 0.0).reshape(TH + 2, W, Cout)
    y1pad_ref[:, 0:1, :] = jnp.zeros((TH + 2, 1, Cout), y1pad_ref.dtype)
    y1pad_ref[:, W + 1:W + 2, :] = jnp.zeros((TH + 2, 1, Cout), y1pad_ref.dtype)
    y1pad_ref[:, 1:W + 1, :] = o1.astype(y1pad_ref.dtype)

    # Halo rows that fall outside the image are conv2's zero row padding:
    # only the first / last row tile does any masking work.
    @pl.when(i == 0)
    def _():
        y1pad_ref[0:1, :, :] = jnp.zeros((1, W + 2, Cout), y1pad_ref.dtype)

    @pl.when(i == n_tiles - 1)
    def _():
        y1pad_ref[TH + 1:TH + 2, :, :] = jnp.zeros((1, W + 2, Cout),
                                                   y1pad_ref.dtype)

    # ---- conv2 (+ folded BN2 scale): 9 tap-wise matmuls, f32 accumulation.
    m2 = TH * W
    acc2 = None
    for dy in range(3):
        for dx in range(3):
            k = dy * 3 + dx
            patch = y1pad_ref[dy:dy + TH, dx:dx + W, :]
            part = jnp.dot(patch.reshape(m2, Cout), w2_ref[k],
                           preferred_element_type=jnp.float32)
            acc2 = part if acc2 is None else acc2 + part

    # ---- bn2 bias + identity residual + relu (f32), emit bf16.
    # TODO(synk): residual is taken from the bf16-rounded input (xpad); pass a
    #             separate f32 identity if full f32 residual precision matters.
    ident = xpad_ref[0, pl.ds(r0 + 2, TH), 1:W + 1, :].reshape(m2, Cin)
    out = jnp.maximum(acc2 + b2_ref[0] + ident.astype(jnp.float32), 0.0)
    out_ref[0] = out.reshape(TH, W, Cout).astype(out_ref.dtype)


def _fold_weights(w_oihw, scale):
    """OIHW f32 weights with the BN scale folded per output channel, reshaped
    to tap-major (9, Cin, Cout) bf16 matching the kernel's tap loop."""
    w = w_oihw * scale[:, None, None, None]
    w = jnp.transpose(w, (2, 3, 1, 0))          # (kh, kw, Cin, Cout)
    kh, kw, ci, co = w.shape
    return w.reshape(kh * kw, ci, co).astype(jnp.bfloat16)


def _vmem_padded_bytes(shape, itemsize):
    """Rough VMEM footprint: last dim padded to 128 lanes, 2nd-last to 8 sublanes."""
    s = list(shape)
    s[-1] = -(-s[-1] // 128) * 128
    if len(s) >= 2:
        s[-2] = -(-s[-2] // 8) * 8
    n = 1
    for d in s:
        n *= max(int(d), 1)
    return n * itemsize


def _pick_row_tile(H, W, Cin, Cout, budget_bytes):
    """Largest row-tile height TH dividing H whose VMEM footprint fits budget."""
    def est(th):
        b = 2 * _vmem_padded_bytes((H + 4, W + 2, Cin), 2)       # input block (x2 buffers)
        b += 2 * _vmem_padded_bytes((th, W, Cout), 2)            # output block
        b += _vmem_padded_bytes((th + 2, W + 2, Cout), 2)        # y1pad scratch
        b += 2 * (_vmem_padded_bytes((9, Cin, Cout), 2)
                  + _vmem_padded_bytes((9, Cout, Cout), 2))      # weights
        b += 2 * _vmem_padded_bytes(((th + 2) * W, Cout), 4)     # f32 accumulators
        return b

    cands = [H] + [t for t in range(8 * (H // 8), 0, -8) if H % t == 0]
    for th in cands:
        if est(th) <= budget_bytes:
            return th, est(th)
    th = cands[-1]
    return th, est(th)


_VMEM_BUDGET = 36 * 1024 * 1024     # conservative: fits v7x's 64 MiB physical VMEM


@jax.jit
def basic_block_pallas_nhwc(x_nhwc, w1_folded, b1, w2_folded, b2):
    """Fused BasicBlock, NHWC in / NHWC bf16 out — chain this across blocks."""
    N, H, W, Cin = x_nhwc.shape
    Cout = w1_folded.shape[2]
    assert Cin == Cout, "downsample=None requires in_channels == out_channels"

    TH, est = _pick_row_tile(H, W, Cin, Cout, _VMEM_BUDGET)
    n_tiles = H // TH
    vmem_limit = int(min(max(2 * est, 32 * 1024 * 1024), 48 * 1024 * 1024))

    # One padding pass per block: 2 rows / 1 col (conv padding + conv2 row halo).
    xpad = jnp.pad(x_nhwc.astype(jnp.bfloat16),
                   ((0, 0), (2, 2), (1, 1), (0, 0)))

    b1 = b1.reshape(1, Cout).astype(jnp.float32)
    b2 = b2.reshape(1, Cout).astype(jnp.float32)

    return pl.pallas_call(
        basic_block_kernel,
        out_shape=jax.ShapeDtypeStruct((N, H, W, Cout), jnp.bfloat16),
        grid=(N, n_tiles),
        in_specs=[
            pl.BlockSpec((1, H + 4, W + 2, Cin), lambda n, i: (n, 0, 0, 0)),
            pl.BlockSpec((9, Cin, Cout), lambda n, i: (0, 0, 0)),
            pl.BlockSpec((1, Cout), lambda n, i: (0, 0)),
            pl.BlockSpec((9, Cout, Cout), lambda n, i: (0, 0, 0)),
            pl.BlockSpec((1, Cout), lambda n, i: (0, 0)),
        ],
        out_specs=pl.BlockSpec((1, TH, W, Cout), lambda n, i: (n, i, 0, 0)),
        scratch_shapes=[pltpu.VMEM((TH + 2, W + 2, Cout), jnp.bfloat16)],
        compiler_params=pltpu.CompilerParams(
            dimension_semantics=("parallel", "parallel"),
            vmem_limit_bytes=vmem_limit),
    )(xpad, w1_folded, b1, w2_folded, b2)


@jax.jit
def basic_block_pallas(x_nchw, w1_oihw, scale1, bias1, w2_oihw, scale2, bias2):
    """PyTorch-layout adapter: NCHW f32 in -> NCHW f32 out.

    In a real network keep activations NHWC/bf16 across blocks and call
    basic_block_pallas_nhwc directly; this transpose/cast belongs only at
    network entry/exit.
    """
    x_nhwc = jnp.transpose(x_nchw, (0, 2, 3, 1))
    w1f = _fold_weights(w1_oihw, scale1)
    w2f = _fold_weights(w2_oihw, scale2)
    out = basic_block_pallas_nhwc(x_nhwc, w1f, bias1, w2f, bias2)
    return jnp.transpose(out.astype(jnp.float32), (0, 3, 1, 2))


def _reference_basic_block(x, w1s, b1, w2s, b2):
    """Pure-JAX f32 reference (lax conv); BN scales already folded into weights."""
    dn = jax.lax.conv_dimension_numbers(x.shape, w1s.shape,
                                        ('NCHW', 'OIHW', 'NCHW'))
    out = jax.lax.conv_general_dilated(x, w1s, (1, 1), ((1, 1), (1, 1)),
                                       dimension_numbers=dn)
    out = jnp.maximum(out + b1[None, :, None, None], 0.0)
    out = jax.lax.conv_general_dilated(out, w2s, (1, 1), ((1, 1), (1, 1)),
                                       dimension_numbers=dn)
    out = jnp.maximum(out + b2[None, :, None, None] + x, 0.0)
    return out


if __name__ == "__main__":
    key = jax.random.PRNGKey(0)
    N, C, H, W = 2, 4, 16, 16
    keys = jax.random.split(key, 11)

    x = jax.random.normal(keys[0], (N, C, H, W), jnp.float32)

    # conv weights (OIHW, no bias)
    w1 = jax.random.normal(keys[1], (C, C, 3, 3), jnp.float32) * 0.1
    w2 = jax.random.normal(keys[2], (C, C, 3, 3), jnp.float32) * 0.1

    # BatchNorm parameters + running stats (eval mode), folded to scale/bias
    eps = 1e-5
    g1 = jax.random.uniform(keys[3], (C,), jnp.float32, 0.5, 1.5)
    be1 = jax.random.normal(keys[4], (C,), jnp.float32) * 0.1
    m1 = jax.random.normal(keys[5], (C,), jnp.float32) * 0.1
    v1 = jax.random.uniform(keys[6], (C,), jnp.float32, 0.5, 1.5)
    g2 = jax.random.uniform(keys[7], (C,), jnp.float32, 0.5, 1.5)
    be2 = jax.random.normal(keys[8], (C,), jnp.float32) * 0.1
    m2 = jax.random.normal(keys[9], (C,), jnp.float32) * 0.1
    v2 = jax.random.uniform(keys[10], (C,), jnp.float32, 0.5, 1.5)

    scale1 = g1 / jnp.sqrt(v1 + eps)
    bias1 = be1 - m1 * scale1
    scale2 = g2 / jnp.sqrt(v2 + eps)
    bias2 = be2 - m2 * scale2

    out = basic_block_pallas(x, w1, scale1, bias1, w2, scale2, bias2)
    out = jax.block_until_ready(out)
    assert out.shape == (N, C, H, W)

    # Reference on bf16-rounded inputs / scale-folded bf16-rounded weights
    # (matches what the kernel feeds the MXU); f32 everywhere else.
    xb = x.astype(jnp.bfloat16).astype(jnp.float32)
    w1s = (w1 * scale1[:, None, None, None]).astype(jnp.bfloat16).astype(jnp.float32)
    w2s = (w2 * scale2[:, None, None, None]).astype(jnp.bfloat16).astype(jnp.float32)
    ref = _reference_basic_block(xb, w1s, bias1, w2s, bias2)

    max_err = float(jnp.max(jnp.abs(out - ref)))
    assert jnp.allclose(out, ref, atol=3e-2, rtol=3e-2), (
        f"mismatch vs reference (max abs err {max_err})")

    print("KERNEL_OK")
</pallas_src>

<mosaic_0001>
module attributes {stable_mosaic.version = 11 : i64} {
  func.func @basic_block_kernel(%arg0: i32, %arg1: i32, %arg2: memref<1x20x18x4xbf16, #tpu.memory_space<vmem>>, %arg3: memref<9x4x4xbf16, #tpu.memory_space<vmem>>, %arg4: memref<1x4xf32, #tpu.memory_space<vmem>>, %arg5: memref<9x4x4xbf16, #tpu.memory_space<vmem>>, %arg6: memref<1x4xf32, #tpu.memory_space<vmem>>, %arg7: memref<1x16x16x4xbf16, #tpu.memory_space<vmem>>, %arg8: memref<18x18x4xbf16, #tpu.memory_space<vmem>>) attributes {dimension_semantics = [#tpu.dimension_semantics<parallel>, #tpu.dimension_semantics<parallel>], iteration_bounds = array<i64: 2, 1>, scalar_prefetch = 0 : i64, scratch_operands = 1 : i64, tpu.core_type = #tpu.core_type<tc>, window_params = [{transform_indices = @transform_0, window_bounds = array<i64: 1, 20, 18, 4>}, {pipeline_mode = #tpu.pipeline_mode<synchronous>, transform_indices = @transform_1, window_bounds = array<i64: 9, 4, 4>}, {pipeline_mode = #tpu.pipeline_mode<synchronous>, transform_indices = @transform_2, window_bounds = array<i64: 1, 4>}, {pipeline_mode = #tpu.pipeline_mode<synchronous>, transform_indices = @transform_3, window_bounds = array<i64: 9, 4, 4>}, {pipeline_mode = #tpu.pipeline_mode<synchronous>, transform_indices = @transform_4, window_bounds = array<i64: 1, 4>}, {transform_indices = @transform_5, window_bounds = array<i64: 1, 16, 16, 4>}]} {
    %c16_i32 = arith.constant 16 : i32
    %0 = arith.muli %arg1, %c16_i32 : i32
    %1 = tpu.assume_multiple %0, 16 : i32
    %c0_i32 = arith.constant 0 : i32
    %2 = arith.addi %1, %c0_i32 : i32
    %c0 = arith.constant 0 : index
    %3 = arith.index_cast %2 : i32 to index
    %c0_0 = arith.constant 0 : index
    %c0_1 = arith.constant 0 : index
    %4 = vector.load %arg2[%c0, %3, %c0_0, %c0_1] : memref<1x20x18x4xbf16, #tpu.memory_space<vmem>>, vector<1x18x16x4xbf16>
    %5 = vector.shape_cast %4 : vector<1x18x16x4xbf16> to vector<18x16x4xbf16>
    %6 = vector.shape_cast %5 : vector<18x16x4xbf16> to vector<288x4xbf16>
    %c0_2 = arith.constant 0 : index
    %c0_3 = arith.constant 0 : index
    %c0_4 = arith.constant 0 : index
    %7 = vector.load %arg3[%c0_2, %c0_3, %c0_4] : memref<9x4x4xbf16, #tpu.memory_space<vmem>>, vector<1x4x4xbf16>
    %8 = vector.shape_cast %7 : vector<1x4x4xbf16> to vector<4x4xbf16>
    %cst = arith.constant dense<0.000000e+00> : vector<288x4xf32>
    %9 = tpu.matmul %6, %8, %cst {dimension_numbers = #tpu.dot_dimension_numbers<[1], [0], [0], [1], [0, 0, 1, 1], [], []>} : vector<288x4xbf16>, vector<4x4xbf16>, vector<288x4xf32> -> vector<288x4xf32>
    %c0_i32_5 = arith.constant 0 : i32
    %10 = arith.addi %1, %c0_i32_5 : i32
    %c0_6 = arith.constant 0 : index
    %11 = arith.index_cast %10 : i32 to index
    %c1 = arith.constant 1 : index
    %c0_7 = arith.constant 0 : index
    %12 = vector.load %arg2[%c0_6, %11, %c1, %c0_7] : memref<1x20x18x4xbf16, #tpu.memory_space<vmem>>, vector<1x18x16x4xbf16>
    %13 = vector.shape_cast %12 : vector<1x18x16x4xbf16> to vector<18x16x4xbf16>
    %14 = vector.shape_cast %13 : vector<18x16x4xbf16> to vector<288x4xbf16>
    %c1_8 = arith.constant 1 : index
    %c0_9 = arith.constant 0 : index
    %c0_10 = arith.constant 0 : index
    %15 = vector.load %arg3[%c1_8, %c0_9, %c0_10] : memref<9x4x4xbf16, #tpu.memory_space<vmem>>, vector<1x4x4xbf16>
    %16 = vector.shape_cast %15 : vector<1x4x4xbf16> to vector<4x4xbf16>
    %cst_11 = arith.constant dense<0.000000e+00> : vector<288x4xf32>
    %17 = tpu.matmul %14, %16, %cst_11 {dimension_numbers = #tpu.dot_dimension_numbers<[1], [0], [0], [1], [0, 0, 1, 1], [], []>} : vector<288x4xbf16>, vector<4x4xbf16>, vector<288x4xf32> -> vector<288x4xf32>
    %18 = arith.addf %9, %17 : vector<288x4xf32>
    %c0_i32_12 = arith.constant 0 : i32
    %19 = arith.addi %1, %c0_i32_12 : i32
    %c0_13 = arith.constant 0 : index
    %20 = arith.index_cast %19 : i32 to index
    %c2 = arith.constant 2 : index
    %c0_14 = arith.constant 0 : index
    %21 = vector.load %arg2[%c0_13, %20, %c2, %c0_14] : memref<1x20x18x4xbf16, #tpu.memory_space<vmem>>, vector<1x18x16x4xbf16>
    %22 = vector.shape_cast %21 : vector<1x18x16x4xbf16> to vector<18x16x4xbf16>
    %23 = vector.shape_cast %22 : vector<18x16x4xbf16> to vector<288x4xbf16>
    %c2_15 = arith.constant 2 : index
    %c0_16 = arith.constant 0 : index
    %c0_17 = arith.constant 0 : index
    %24 = vector.load %arg3[%c2_15, %c0_16, %c0_17] : memref<9x4x4xbf16, #tpu.memory_space<vmem>>, vector<1x4x4xbf16>
    %25 = vector.shape_cast %24 : vector<1x4x4xbf16> to vector<4x4xbf16>
    %cst_18 = arith.constant dense<0.000000e+00> : vector<288x4xf32>
    %26 = tpu.matmul %23, %25, %cst_18 {dimension_numbers = #tpu.dot_dimension_numbers<[1], [0], [0], [1], [0, 0, 1, 1], [], []>} : vector<288x4xbf16>, vector<4x4xbf16>, vector<288x4xf32> -> vector<288x4xf32>
    %27 = arith.addf %18, %26 : vector<288x4xf32>
    %c1_i32 = arith.constant 1 : i32
    %28 = arith.addi %1, %c1_i32 : i32
    %c0_19 = arith.constant 0 : index
    %29 = arith.index_cast %28 : i32 to index
    %c0_20 = arith.constant 0 : index
    %c0_21 = arith.constant 0 : index
    %30 = vector.load %arg2[%c0_19, %29, %c0_20, %c0_21] : memref<1x20x18x4xbf16, #tpu.memory_space<vmem>>, vector<1x18x16x4xbf16>
    %31 = vector.shape_cast %30 : vector<1x18x16x4xbf16> to vector<18x16x4xbf16>
    %32 = vector.shape_cast %31 : vector<18x16x4xbf16> to vector<288x4xbf16>
    %c3 = arith.constant 3 : index
    %c0_22 = arith.constant 0 : index
    %c0_23 = arith.constant 0 : index
    %33 = vector.load %arg3[%c3, %c0_22, %c0_23] : memref<9x4x4xbf16, #tpu.memory_space<vmem>>, vector<1x4x4xbf16>
    %34 = vector.shape_cast %33 : vector<1x4x4xbf16> to vector<4x4xbf16>
    %cst_24 = arith.constant dense<0.000000e+00> : vector<288x4xf32>
    %35 = tpu.matmul %32, %34, %cst_24 {dimension_numbers = #tpu.dot_dimension_numbers<[1], [0], [0], [1], [0, 0, 1, 1], [], []>} : vector<288x4xbf16>, vector<4x4xbf16>, vector<288x4xf32> -> vector<288x4xf32>
    %36 = arith.addf %27, %35 : vector<288x4xf32>
    %c1_i32_25 = arith.constant 1 : i32
    %37 = arith.addi %1, %c1_i32_25 : i32
    %c0_26 = arith.constant 0 : index
    %38 = arith.index_cast %37 : i32 to index
    %c1_27 = arith.constant 1 : index
    %c0_28 = arith.constant 0 : index
    %39 = vector.load %arg2[%c0_26, %38, %c1_27, %c0_28] : memref<1x20x18x4xbf16, #tpu.memory_space<vmem>>, vector<1x18x16x4xbf16>
    %40 = vector.shape_cast %39 : vector<1x18x16x4xbf16> to vector<18x16x4xbf16>
    %41 = vector.shape_cast %40 : vector<18x16x4xbf16> to vector<288x4xbf16>
    %c4 = arith.constant 4 : index
    %c0_29 = arith.constant 0 : index
    %c0_30 = arith.constant 0 : index
    %42 = vector.load %arg3[%c4, %c0_29, %c0_30] : memref<9x4x4xbf16, #tpu.memory_space<vmem>>, vector<1x4x4xbf16>
    %43 = vector.shape_cast %42 : vector<1x4x4xbf16> to vector<4x4xbf16>
    %cst_31 = arith.constant dense<0.000000e+00> : vector<288x4xf32>
    %44 = tpu.matmul %41, %43, %cst_31 {dimension_numbers = #tpu.dot_dimension_numbers<[1], [0], [0], [1], [0, 0, 1, 1], [], []>} : vector<288x4xbf16>, vector<4x4xbf16>, vector<288x4xf32> -> vector<288x4xf32>
    %45 = arith.addf %36, %44 : vector<288x4xf32>
    %c1_i32_32 = arith.constant 1 : i32
    %46 = arith.addi %1, %c1_i32_32 : i32
    %c0_33 = arith.constant 0 : index
    %47 = arith.index_cast %46 : i32 to index
    %c2_34 = arith.constant 2 : index
    %c0_35 = arith.constant 0 : index
    %48 = vector.load %arg2[%c0_33, %47, %c2_34, %c0_35] : memref<1x20x18x4xbf16, #tpu.memory_space<vmem>>, vector<1x18x16x4xbf16>
    %49 = vector.shape_cast %48 : vector<1x18x16x4xbf16> to vector<18x16x4xbf16>
    %50 = vector.shape_cast %49 : vector<18x16x4xbf16> to vector<288x4xbf16>
    %c5 = arith.constant 5 : index
    %c0_36 = arith.constant 0 : index
    %c0_37 = arith.constant 0 : index
    %51 = vector.load %arg3[%c5, %c0_36, %c0_37] : memref<9x4x4xbf16, #tpu.memory_space<vmem>>, vector<1x4x4xbf16>
    %52 = vector.shape_cast %51 : vector<1x4x4xbf16> to vector<4x4xbf16>
    %cst_38 = arith.constant dense<0.000000e+00> : vector<288x4xf32>
    %53 = tpu.matmul %50, %52, %cst_38 {dimension_numbers = #tpu.dot_dimension_numbers<[1], [0], [0], [1], [0, 0, 1, 1], [], []>} : vector<288x4xbf16>, vector<4x4xbf16>, vector<288x4xf32> -> vector<288x4xf32>
    %54 = arith.addf %45, %53 : vector<288x4xf32>
    %c2_i32 = arith.constant 2 : i32
    %55 = arith.addi %1, %c2_i32 : i32
    %c0_39 = arith.constant 0 : index
    %56 = arith.index_cast %55 : i32 to index
    %c0_40 = arith.constant 0 : index
    %c0_41 = arith.constant 0 : index
    %57 = vector.load %arg2[%c0_39, %56, %c0_40, %c0_41] : memref<1x20x18x4xbf16, #tpu.memory_space<vmem>>, vector<1x18x16x4xbf16>
    %58 = vector.shape_cast %57 : vector<1x18x16x4xbf16> to vector<18x16x4xbf16>
    %59 = vector.shape_cast %58 : vector<18x16x4xbf16> to vector<288x4xbf16>
    %c6 = arith.constant 6 : index
    %c0_42 = arith.constant 0 : index
    %c0_43 = arith.constant 0 : index
    %60 = vector.load %arg3[%c6, %c0_42, %c0_43] : memref<9x4x4xbf16, #tpu.memory_space<vmem>>, vector<1x4x4xbf16>
    %61 = vector.shape_cast %60 : vector<1x4x4xbf16> to vector<4x4xbf16>
    %cst_44 = arith.constant dense<0.000000e+00> : vector<288x4xf32>
    %62 = tpu.matmul %59, %61, %cst_44 {dimension_numbers = #tpu.dot_dimension_numbers<[1], [0], [0], [1], [0, 0, 1, 1], [], []>} : vector<288x4xbf16>, vector<4x4xbf16>, vector<288x4xf32> -> vector<288x4xf32>
    %63 = arith.addf %54, %62 : vector<288x4xf32>
    %c2_i32_45 = arith.constant 2 : i32
    %64 = arith.addi %1, %c2_i32_45 : i32
    %c0_46 = arith.constant 0 : index
    %65 = arith.index_cast %64 : i32 to index
    %c1_47 = arith.constant 1 : index
    %c0_48 = arith.constant 0 : index
    %66 = vector.load %arg2[%c0_46, %65, %c1_47, %c0_48] : memref<1x20x18x4xbf16, #tpu.memory_space<vmem>>, vector<1x18x16x4xbf16>
    %67 = vector.shape_cast %66 : vector<1x18x16x4xbf16> to vector<18x16x4xbf16>
    %68 = vector.shape_cast %67 : vector<18x16x4xbf16> to vector<288x4xbf16>
    %c7 = arith.constant 7 : index
    %c0_49 = arith.constant 0 : index
    %c0_50 = arith.constant 0 : index
    %69 = vector.load %arg3[%c7, %c0_49, %c0_50] : memref<9x4x4xbf16, #tpu.memory_space<vmem>>, vector<1x4x4xbf16>
    %70 = vector.shape_cast %69 : vector<1x4x4xbf16> to vector<4x4xbf16>
    %cst_51 = arith.constant dense<0.000000e+00> : vector<288x4xf32>
    %71 = tpu.matmul %68, %70, %cst_51 {dimension_numbers = #tpu.dot_dimension_numbers<[1], [0], [0], [1], [0, 0, 1, 1], [], []>} : vector<288x4xbf16>, vector<4x4xbf16>, vector<288x4xf32> -> vector<288x4xf32>
    %72 = arith.addf %63, %71 : vector<288x4xf32>
    %c2_i32_52 = arith.constant 2 : i32
    %73 = arith.addi %1, %c2_i32_52 : i32
    %c0_53 = arith.constant 0 : index
    %74 = arith.index_cast %73 : i32 to index
    %c2_54 = arith.constant 2 : index
    %c0_55 = arith.constant 0 : index
    %75 = vector.load %arg2[%c0_53, %74, %c2_54, %c0_55] : memref<1x20x18x4xbf16, #tpu.memory_space<vmem>>, vector<1x18x16x4xbf16>
    %76 = vector.shape_cast %75 : vector<1x18x16x4xbf16> to vector<18x16x4xbf16>
    %77 = vector.shape_cast %76 : vector<18x16x4xbf16> to vector<288x4xbf16>
    %c8 = arith.constant 8 : index
    %c0_56 = arith.constant 0 : index
    %c0_57 = arith.constant 0 : index
    %78 = vector.load %arg3[%c8, %c0_56, %c0_57] : memref<9x4x4xbf16, #tpu.memory_space<vmem>>, vector<1x4x4xbf16>
    %79 = vector.shape_cast %78 : vector<1x4x4xbf16> to vector<4x4xbf16>
    %cst_58 = arith.constant dense<0.000000e+00> : vector<288x4xf32>
    %80 = tpu.matmul %77, %79, %cst_58 {dimension_numbers = #tpu.dot_dimension_numbers<[1], [0], [0], [1], [0, 0, 1, 1], [], []>} : vector<288x4xbf16>, vector<4x4xbf16>, vector<288x4xf32> -> vector<288x4xf32>
    %81 = arith.addf %72, %80 : vector<288x4xf32>
    %c0_59 = arith.constant 0 : index
    %c0_60 = arith.constant 0 : index
    %82 = vector.load %arg4[%c0_59, %c0_60] : memref<1x4xf32, #tpu.memory_space<vmem>>, vector<1x4xf32>
    %83 = vector.shape_cast %82 : vector<1x4xf32> to vector<4xf32>
    %84 = vector.shape_cast %83 : vector<4xf32> to vector<1x4xf32>
    %85 = vector.broadcast %84 : vector<1x4xf32> to vector<288x4xf32>
    %86 = arith.addf %81, %85 : vector<288x4xf32>
    %cst_61 = arith.constant 0.000000e+00 : f32
    %87 = vector.broadcast %cst_61 : f32 to vector<288x4xf32>
    %88 = arith.maximumf %86, %87 : vector<288x4xf32>
    %89 = vector.shape_cast %88 : vector<288x4xf32> to vector<18x16x4xf32>
    %cst_62 = arith.constant 0.000000e+00 : bf16
    %90 = vector.broadcast %cst_62 : bf16 to vector<18x1x4xbf16>
    %c0_63 = arith.constant 0 : index
    %c0_64 = arith.constant 0 : index
    %c0_65 = arith.constant 0 : index
    %91 = vector.load %arg8[%c0_63, %c0_64, %c0_65] : memref<18x18x4xbf16, #tpu.memory_space<vmem>>, vector<18x1x4xbf16>
    tpu.vector_store %arg8[%c0_63, %c0_64, %c0_65], %90 {strides = array<i32>} : memref<18x18x4xbf16, #tpu.memory_space<vmem>>, vector<18x1x4xbf16>,
    %cst_66 = arith.constant 0.000000e+00 : bf16
    %92 = vector.broadcast %cst_66 : bf16 to vector<18x1x4xbf16>
    %c0_67 = arith.constant 0 : index
    %c17 = arith.constant 17 : index
    %c0_68 = arith.constant 0 : index
    %93 = vector.load %arg8[%c0_67, %c17, %c0_68] : memref<18x18x4xbf16, #tpu.memory_space<vmem>>, vector<18x1x4xbf16>
    tpu.vector_store %arg8[%c0_67, %c17, %c0_68], %92 {strides = array<i32>} : memref<18x18x4xbf16, #tpu.memory_space<vmem>>, vector<18x1x4xbf16>,
    %94 = arith.truncf %89 : vector<18x16x4xf32> to vector<18x16x4xbf16>
    %c0_69 = arith.constant 0 : index
    %c1_70 = arith.constant 1 : index
    %c0_71 = arith.constant 0 : index
    %95 = vector.load %arg8[%c0_69, %c1_70, %c0_71] : memref<18x18x4xbf16, #tpu.memory_space<vmem>>, vector<18x16x4xbf16>
    tpu.vector_store %arg8[%c0_69, %c1_70, %c0_71], %94 {strides = array<i32>} : memref<18x18x4xbf16, #tpu.memory_space<vmem>>, vector<18x16x4xbf16>,
    %c0_i32_72 = arith.constant 0 : i32
    %96 = arith.cmpi eq, %arg1, %c0_i32_72 : i32
    %97 = arith.extui %96 : i1 to i32
    %c0_i32_73 = arith.constant 0 : i32
    %98 = arith.cmpi ne, %97, %c0_i32_73 : i32
    scf.if %98 {
      %cst_150 = arith.constant 0.000000e+00 : bf16
      %174 = vector.broadcast %cst_150 : bf16 to vector<1x18x4xbf16>
      %c0_151 = arith.constant 0 : index
      %c0_152 = arith.constant 0 : index
      %c0_153 = arith.constant 0 : index
      %175 = vector.load %arg8[%c0_151, %c0_152, %c0_153] : memref<18x18x4xbf16, #tpu.memory_space<vmem>>, vector<1x18x4xbf16>
      tpu.vector_store %arg8[%c0_151, %c0_152, %c0_153], %174 {strides = array<i32>} : memref<18x18x4xbf16, #tpu.memory_space<vmem>>, vector<1x18x4xbf16>,
    } else {
    }
    %c0_i32_74 = arith.constant 0 : i32
    %99 = arith.cmpi eq, %arg1, %c0_i32_74 : i32
    %100 = arith.extui %99 : i1 to i32
    %c0_i32_75 = arith.constant 0 : i32
    %101 = arith.cmpi ne, %100, %c0_i32_75 : i32
    scf.if %101 {
      %cst_150 = arith.constant 0.000000e+00 : bf16
      %174 = vector.broadcast %cst_150 : bf16 to vector<1x18x4xbf16>
      %c17_151 = arith.constant 17 : index
      %c0_152 = arith.constant 0 : index
      %c0_153 = arith.constant 0 : index
      %175 = vector.load %arg8[%c17_151, %c0_152, %c0_153] : memref<18x18x4xbf16, #tpu.memory_space<vmem>>, vector<1x18x4xbf16>
      tpu.vector_store %arg8[%c17_151, %c0_152, %c0_153], %174 {strides = array<i32>} : memref<18x18x4xbf16, #tpu.memory_space<vmem>>, vector<1x18x4xbf16>,
    } else {
    }
    %c0_76 = arith.constant 0 : index
    %c0_77 = arith.constant 0 : index
    %c0_78 = arith.constant 0 : index
    %102 = vector.load %arg8[%c0_76, %c0_77, %c0_78] : memref<18x18x4xbf16, #tpu.memory_space<vmem>>, vector<16x16x4xbf16>
    %103 = vector.shape_cast %102 : vector<16x16x4xbf16> to vector<256x4xbf16>
    %c0_79 = arith.constant 0 : index
    %c0_80 = arith.constant 0 : index
    %c0_81 = arith.constant 0 : index
    %104 = vector.load %arg5[%c0_79, %c0_80, %c0_81] : memref<9x4x4xbf16, #tpu.memory_space<vmem>>, vector<1x4x4xbf16>
    %105 = vector.shape_cast %104 : vector<1x4x4xbf16> to vector<4x4xbf16>
    %cst_82 = arith.constant dense<0.000000e+00> : vector<256x4xf32>
    %106 = tpu.matmul %103, %105, %cst_82 {dimension_numbers = #tpu.dot_dimension_numbers<[1], [0], [0], [1], [0, 0, 1, 1], [], []>} : vector<256x4xbf16>, vector<4x4xbf16>, vector<256x4xf32> -> vector<256x4xf32>
    %c0_83 = arith.constant 0 : index
    %c1_84 = arith.constant 1 : index
    %c0_85 = arith.constant 0 : index
    %107 = vector.load %arg8[%c0_83, %c1_84, %c0_85] : memref<18x18x4xbf16, #tpu.memory_space<vmem>>, vector<16x16x4xbf16>
    %108 = vector.shape_cast %107 : vector<16x16x4xbf16> to vector<256x4xbf16>
    %c1_86 = arith.constant 1 : index
    %c0_87 = arith.constant 0 : index
    %c0_88 = arith.constant 0 : index
    %109 = vector.load %arg5[%c1_86, %c0_87, %c0_88] : memref<9x4x4xbf16, #tpu.memory_space<vmem>>, vector<1x4x4xbf16>
    %110 = vector.shape_cast %109 : vector<1x4x4xbf16> to vector<4x4xbf16>
    %cst_89 = arith.constant dense<0.000000e+00> : vector<256x4xf32>
    %111 = tpu.matmul %108, %110, %cst_89 {dimension_numbers = #tpu.dot_dimension_numbers<[1], [0], [0], [1], [0, 0, 1, 1], [], []>} : vector<256x4xbf16>, vector<4x4xbf16>, vector<256x4xf32> -> vector<256x4xf32>
    %112 = arith.addf %106, %111 : vector<256x4xf32>
    %c0_90 = arith.constant 0 : index
    %c2_91 = arith.constant 2 : index
    %c0_92 = arith.constant 0 : index
    %113 = vector.load %arg8[%c0_90, %c2_91, %c0_92] : memref<18x18x4xbf16, #tpu.memory_space<vmem>>, vector<16x16x4xbf16>
    %114 = vector.shape_cast %113 : vector<16x16x4xbf16> to vector<256x4xbf16>
    %c2_93 = arith.constant 2 : index
    %c0_94 = arith.constant 0 : index
    %c0_95 = arith.constant 0 : index
    %115 = vector.load %arg5[%c2_93, %c0_94, %c0_95] : memref<9x4x4xbf16, #tpu.memory_space<vmem>>, vector<1x4x4xbf16>
    %116 = vector.shape_cast %115 : vector<1x4x4xbf16> to vector<4x4xbf16>
    %cst_96 = arith.constant dense<0.000000e+00> : vector<256x4xf32>
    %117 = tpu.matmul %114, %116, %cst_96 {dimension_numbers = #tpu.dot_dimension_numbers<[1], [0], [0], [1], [0, 0, 1, 1], [], []>} : vector<256x4xbf16>, vector<4x4xbf16>, vector<256x4xf32> -> vector<256x4xf32>
    %118 = arith.addf %112, %117 : vector<256x4xf32>
    %c1_97 = arith.constant 1 : index
    %c0_98 = arith.constant 0 : index
    %c0_99 = arith.constant 0 : index
    %119 = vector.load %arg8[%c1_97, %c0_98, %c0_99] : memref<18x18x4xbf16, #tpu.memory_space<vmem>>, vector<16x16x4xbf16>
    %120 = vector.shape_cast %119 : vector<16x16x4xbf16> to vector<256x4xbf16>
    %c3_100 = arith.constant 3 : index
    %c0_101 = arith.constant 0 : index
    %c0_102 = arith.constant 0 : index
    %121 = vector.load %arg5[%c3_100, %c0_101, %c0_102] : memref<9x4x4xbf16, #tpu.memory_space<vmem>>, vector<1x4x4xbf16>
    %122 = vector.shape_cast %121 : vector<1x4x4xbf16> to vector<4x4xbf16>
    %cst_103 = arith.constant dense<0.000000e+00> : vector<256x4xf32>
    %123 = tpu.matmul %120, %122, %cst_103 {dimension_numbers = #tpu.dot_dimension_numbers<[1], [0], [0], [1], [0, 0, 1, 1], [], []>} : vector<256x4xbf16>, vector<4x4xbf16>, vector<256x4xf32> -> vector<256x4xf32>
    %124 = arith.addf %118, %123 : vector<256x4xf32>
    %c1_104 = arith.constant 1 : index
    %c1_105 = arith.constant 1 : index
    %c0_106 = arith.constant 0 : index
    %125 = vector.load %arg8[%c1_104, %c1_105, %c0_106] : memref<18x18x4xbf16, #tpu.memory_space<vmem>>, vector<16x16x4xbf16>
    %126 = vector.shape_cast %125 : vector<16x16x4xbf16> to vector<256x4xbf16>
    %c4_107 = arith.constant 4 : index
    %c0_108 = arith.constant 0 : index
    %c0_109 = arith.constant 0 : index
    %127 = vector.load %arg5[%c4_107, %c0_108, %c0_109] : memref<9x4x4xbf16, #tpu.memory_space<vmem>>, vector<1x4x4xbf16>
    %128 = vector.shape_cast %127 : vector<1x4x4xbf16> to vector<4x4xbf16>
    %cst_110 = arith.constant dense<0.000000e+00> : vector<256x4xf32>
    %129 = tpu.matmul %126, %128, %cst_110 {dimension_numbers = #tpu.dot_dimension_numbers<[1], [0], [0], [1], [0, 0, 1, 1], [], []>} : vector<256x4xbf16>, vector<4x4xbf16>, vector<256x4xf32> -> vector<256x4xf32>
    %130 = arith.addf %124, %129 : vector<256x4xf32>
    %c1_111 = arith.constant 1 : index
    %c2_112 = arith.constant 2 : index
    %c0_113 = arith.constant 0 : index
    %131 = vector.load %arg8[%c1_111, %c2_112, %c0_113] : memref<18x18x4xbf16, #tpu.memory_space<vmem>>, vector<16x16x4xbf16>
    %132 = vector.shape_cast %131 : vector<16x16x4xbf16> to vector<256x4xbf16>
    %c5_114 = arith.constant 5 : index
    %c0_115 = arith.constant 0 : index
    %c0_116 = arith.constant 0 : index
    %133 = vector.load %arg5[%c5_114, %c0_115, %c0_116] : memref<9x4x4xbf16, #tpu.memory_space<vmem>>, vector<1x4x4xbf16>
    %134 = vector.shape_cast %133 : vector<1x4x4xbf16> to vector<4x4xbf16>
    %cst_117 = arith.constant dense<0.000000e+00> : vector<256x4xf32>
    %135 = tpu.matmul %132, %134, %cst_117 {dimension_numbers = #tpu.dot_dimension_numbers<[1], [0], [0], [1], [0, 0, 1, 1], [], []>} : vector<256x4xbf16>, vector<4x4xbf16>, vector<256x4xf32> -> vector<256x4xf32>
    %136 = arith.addf %130, %135 : vector<256x4xf32>
    %c2_118 = arith.constant 2 : index
    %c0_119 = arith.constant 0 : index
    %c0_120 = arith.constant 0 : index
    %137 = vector.load %arg8[%c2_118, %c0_119, %c0_120] : memref<18x18x4xbf16, #tpu.memory_space<vmem>>, vector<16x16x4xbf16>
    %138 = vector.shape_cast %137 : vector<16x16x4xbf16> to vector<256x4xbf16>
    %c6_121 = arith.constant 6 : index
    %c0_122 = arith.constant 0 : index
    %c0_123 = arith.constant 0 : index
    %139 = vector.load %arg5[%c6_121, %c0_122, %c0_123] : memref<9x4x4xbf16, #tpu.memory_space<vmem>>, vector<1x4x4xbf16>
    %140 = vector.shape_cast %139 : vector<1x4x4xbf16> to vector<4x4xbf16>
    %cst_124 = arith.constant dense<0.000000e+00> : vector<256x4xf32>
    %141 = tpu.matmul %138, %140, %cst_124 {dimension_numbers = #tpu.dot_dimension_numbers<[1], [0], [0], [1], [0, 0, 1, 1], [], []>} : vector<256x4xbf16>, vector<4x4xbf16>, vector<256x4xf32> -> vector<256x4xf32>
    %142 = arith.addf %136, %141 : vector<256x4xf32>
    %c2_125 = arith.constant 2 : index
    %c1_126 = arith.constant 1 : index
    %c0_127 = arith.constant 0 : index
    %143 = vector.load %arg8[%c2_125, %c1_126, %c0_127] : memref<18x18x4xbf16, #tpu.memory_space<vmem>>, vector<16x16x4xbf16>
    %144 = vector.shape_cast %143 : vector<16x16x4xbf16> to vector<256x4xbf16>
    %c7_128 = arith.constant 7 : index
    %c0_129 = arith.constant 0 : index
    %c0_130 = arith.constant 0 : index
    %145 = vector.load %arg5[%c7_128, %c0_129, %c0_130] : memref<9x4x4xbf16, #tpu.memory_space<vmem>>, vector<1x4x4xbf16>
    %146 = vector.shape_cast %145 : vector<1x4x4xbf16> to vector<4x4xbf16>
    %cst_131 = arith.constant dense<0.000000e+00> : vector<256x4xf32>
    %147 = tpu.matmul %144, %146, %cst_131 {dimension_numbers = #tpu.dot_dimension_numbers<[1], [0], [0], [1], [0, 0, 1, 1], [], []>} : vector<256x4xbf16>, vector<4x4xbf16>, vector<256x4xf32> -> vector<256x4xf32>
    %148 = arith.addf %142, %147 : vector<256x4xf32>
    %c2_132 = arith.constant 2 : index
    %c2_133 = arith.constant 2 : index
    %c0_134 = arith.constant 0 : index
    %149 = vector.load %arg8[%c2_132, %c2_133, %c0_134] : memref<18x18x4xbf16, #tpu.memory_space<vmem>>, vector<16x16x4xbf16>
    %150 = vector.shape_cast %149 : vector<16x16x4xbf16> to vector<256x4xbf16>
    %c8_135 = arith.constant 8 : index
    %c0_136 = arith.constant 0 : index
    %c0_137 = arith.constant 0 : index
    %151 = vector.load %arg5[%c8_135, %c0_136, %c0_137] : memref<9x4x4xbf16, #tpu.memory_space<vmem>>, vector<1x4x4xbf16>
    %152 = vector.shape_cast %151 : vector<1x4x4xbf16> to vector<4x4xbf16>
    %cst_138 = arith.constant dense<0.000000e+00> : vector<256x4xf32>
    %153 = tpu.matmul %150, %152, %cst_138 {dimension_numbers = #tpu.dot_dimension_numbers<[1], [0], [0], [1], [0, 0, 1, 1], [], []>} : vector<256x4xbf16>, vector<4x4xbf16>, vector<256x4xf32> -> vector<256x4xf32>
    %154 = arith.addf %148, %153 : vector<256x4xf32>
    %c2_i32_139 = arith.constant 2 : i32
    %155 = arith.addi %1, %c2_i32_139 : i32
    %c0_140 = arith.constant 0 : index
    %156 = arith.index_cast %155 : i32 to index
    %c1_141 = arith.constant 1 : index
    %c0_142 = arith.constant 0 : index
    %157 = vector.load %arg2[%c0_140, %156, %c1_141, %c0_142] : memref<1x20x18x4xbf16, #tpu.memory_space<vmem>>, vector<1x16x16x4xbf16>
    %158 = vector.shape_cast %157 : vector<1x16x16x4xbf16> to vector<16x16x4xbf16>
    %159 = vector.shape_cast %158 : vector<16x16x4xbf16> to vector<256x4xbf16>
    %c0_143 = arith.constant 0 : index
    %c0_144 = arith.constant 0 : index
    %160 = vector.load %arg6[%c0_143, %c0_144] : memref<1x4xf32, #tpu.memory_space<vmem>>, vector<1x4xf32>
    %161 = vector.shape_cast %160 : vector<1x4xf32> to vector<4xf32>
    %162 = vector.shape_cast %161 : vector<4xf32> to vector<1x4xf32>
    %163 = vector.broadcast %162 : vector<1x4xf32> to vector<256x4xf32>
    %164 = arith.addf %154, %163 : vector<256x4xf32>
    %165 = arith.extf %159 : vector<256x4xbf16> to vector<256x4xf32>
    %166 = arith.addf %164, %165 : vector<256x4xf32>
    %cst_145 = arith.constant 0.000000e+00 : f32
    %167 = vector.broadcast %cst_145 : f32 to vector<256x4xf32>
    %168 = arith.maximumf %166, %167 : vector<256x4xf32>
    %169 = vector.shape_cast %168 : vector<256x4xf32> to vector<16x16x4xf32>
    %170 = arith.truncf %169 : vector<16x16x4xf32> to vector<16x16x4xbf16>
    %c0_146 = arith.constant 0 : index
    %c0_147 = arith.constant 0 : index
    %c0_148 = arith.constant 0 : index
    %c0_149 = arith.constant 0 : index
    %171 = vector.load %arg7[%c0_146, %c0_147, %c0_148, %c0_149] : memref<1x16x16x4xbf16, #tpu.memory_space<vmem>>, vector<1x16x16x4xbf16>
    %172 = vector.shape_cast %171 : vector<1x16x16x4xbf16> to vector<16x16x4xbf16>
    %173 = vector.shape_cast %170 : vector<16x16x4xbf16> to vector<1x16x16x4xbf16>
    tpu.vector_store %arg7[%c0_146, %c0_147, %c0_148, %c0_149], %173 {strides = array<i32>} : memref<1x16x16x4xbf16, #tpu.memory_space<vmem>>, vector<1x16x16x4xbf16>,
    return
  }
  func.func @transform_0(%arg0: i32, %arg1: i32) -> (i32, i32, i32, i32) {
    %c0_i32 = arith.constant 0 : i32
    %c0_i32_0 = arith.constant 0 : i32
    %c0_i32_1 = arith.constant 0 : i32
    %c0_i32_2 = arith.constant 0 : i32
    return %arg0, %c0_i32, %c0_i32_0, %c0_i32_1 : i32, i32, i32, i32
  }
  func.func @transform_1(%arg0: i32, %arg1: i32) -> (i32, i32, i32) {
    %c0_i32 = arith.constant 0 : i32
    %c0_i32_0 = arith.constant 0 : i32
    %c0_i32_1 = arith.constant 0 : i32
    %c0_i32_2 = arith.constant 0 : i32
    return %c0_i32, %c0_i32_0, %c0_i32_1 : i32, i32, i32
  }
  func.func @transform_2(%arg0: i32, %arg1: i32) -> (i32, i32) {
    %c0_i32 = arith.constant 0 : i32
    %c0_i32_0 = arith.constant 0 : i32
    %c0_i32_1 = arith.constant 0 : i32
    return %c0_i32, %c0_i32_0 : i32, i32
  }
  func.func @transform_3(%arg0: i32, %arg1: i32) -> (i32, i32, i32) {
    %c0_i32 = arith.constant 0 : i32
    %c0_i32_0 = arith.constant 0 : i32
    %c0_i32_1 = arith.constant 0 : i32
    %c0_i32_2 = arith.constant 0 : i32
    return %c0_i32, %c0_i32_0, %c0_i32_1 : i32, i32, i32
  }
  func.func @transform_4(%arg0: i32, %arg1: i32) -> (i32, i32) {
    %c0_i32 = arith.constant 0 : i32
    %c0_i32_0 = arith.constant 0 : i32
    %c0_i32_1 = arith.constant 0 : i32
    return %c0_i32, %c0_i32_0 : i32, i32
  }
  func.func @transform_5(%arg0: i32, %arg1: i32) -> (i32, i32, i32, i32) {
    %c0_i32 = arith.constant 0 : i32
    %c0_i32_0 = arith.constant 0 : i32
    %c0_i32_1 = arith.constant 0 : i32
    return %arg0, %arg1, %c0_i32, %c0_i32_0 : i32, i32, i32, i32
  }
}

</mosaic_0001>

<llo_original>
// kernel: basic_block_pallas_nhwc.1
$region0: #{basic_block_pallas_nhwc.1}
  #allocation0 [shape = 'u32[]', space=smem, size = 0x4, offset = 0x4, fixed_abs, tag = 'smem constant byte address 0x4 - core index']
  #allocation1 [shape = 'u32[144,128]{1,0:T(1,128)}', space=vmem, size = 0x12000, scoped, tag = 'internal scratch']
  #allocation2 [shape = 'bf16[18,18,4]{2,1,0:T(8,128)(2,1)}', space=vmem, size = 0x1b000, scoped, tag = 'scratch operand']
  %s0 = inlined_call_operand.vmem [shape: bf16[2,20,18,4], index: 0, kind: input, shape index: {}]
  %s1 = inlined_call_operand.vmem [shape: bf16[9,4,4], index: 1, kind: input, shape index: {}]
  %s2 = inlined_call_operand.vmem [shape: f32[1,4], index: 2, kind: input, shape index: {}]
  %s3 = inlined_call_operand.vmem [shape: bf16[9,4,4], index: 3, kind: input, shape index: {}]
  %s4 = inlined_call_operand.vmem [shape: f32[1,4], index: 4, kind: input, shape index: {}]
  %s5 = inlined_call_operand.vmem [shape: bf16[2,16,16,4], index: 5, kind: output, shape index: {}]
  %s6 = sld [smem:[#allocation0]]
  $region57: #{basic_block_pallas_nhwc.1} parent=0
    _
  %s8 = ssub.s32 1, %s6
  %s9 = scalar_select 0, %s8, %s6
  loop: start=0, step=1, limit=4
  $region2: #{basic_block_pallas_nhwc.1} parent=0 // loop_pre_header
    _
  $region3: #{basic_block_pallas_nhwc.1} parent=0 // loop_header
    %s11 = sphi 0, %s15
    %p12 = scmp.ge.s32.totalorder %s11, 4
    %s18 = sphi 0, %s30
    %s19 = sphi 0, %s26
    %s20 = sphi 0, %s18
    %s21 = sphi 0, %s19
    %s22 = sphi 0, %s20
    %s23 = sphi 0, %s21
    %s33 = sphi 0, %s35
    %s36 = sphi 0, %s33
    %s37 = sphi 0, %s36
    %s53 = sphi 0, %s37
    %s57 = sphi 0, %s57
    %s59 = sphi 0, %s57
    %s60 = sphi 0, %s59
    %s74 = sphi 0, %s60
    %s78 = sphi 0, %s78
    %s80 = sphi 0, %s78
    %s81 = sphi 0, %s80
    %s95 = sphi 0, %s81
    %s99 = sphi 0, %s99
    %s101 = sphi 0, %s99
    %s102 = sphi 0, %s101
    %s116 = sphi 0, %s102
    %s120 = sphi 0, %s120
    %s122 = sphi 0, %s120
    %s123 = sphi 0, %s122
    %s137 = sphi 0, %s123
    %s145 = sphi 0, %s147
    %s148 = sphi 0, %s145
    %s149 = sphi 0, %s148
    %s165 = sphi 0, %s149
  $region4: #{basic_block_pallas_nhwc.1} parent=0 // loop_header_branch
    %14 = sbr.rel (%p12) target = $region8
  $region5: #{basic_block_pallas_nhwc.1} parent=0 // loop_body
    %s16 = ssub.s32 %s11, 1
    %s17 = ssub.s32 %s11, 2
    %s24 = sadd.s32 1, %s19
    %p25 = scmp.ge.s32.totalorder %s24, 1
    %s26 = scalar_select %p25, 0, %s24
    %s27 = sadd.s32 1, %s18
    %s28 = scalar_select %p25, %s27, %s18
    %p29 = scmp.ge.s32.totalorder %s28, 2
    %s30 = scalar_select %p29, 0, %s28
    %s31 = ssub.s32 %s18, %s30
    %p32 = scmp.eq.s32.totalorder %s31, 0
    %s34 = sadd.s32 %s33, 1
    %s35 = scalar_select %p32, %s33, %s34
    %p38 = pneg %p32
    %p39 = scmp.eq.s32.totalorder %s11, 1
    %p40 = por %p38, %p39
    %p41 = scmp.ne.s32.totalorder %s33, %s36
    %p42 = scmp.eq.s32.totalorder %s11, 0
    %p43 = por %p41, %p42
    %p44 = scmp.ne.s32.totalorder %s33, %s36
    %p45 = scmp.eq.s32.totalorder %s16, 1
    %p46 = por %p44, %p45
    %p47 = scmp.ne.s32.totalorder %s36, %s37
    %p48 = scmp.eq.s32.totalorder %s16, 0
    %p49 = por %p47, %p48
    %p50 = scmp.ne.s32.totalorder %s36, %s37
    %p51 = scmp.eq.s32.totalorder %s17, 1
    %p52 = por %p50, %p51
    %p54 = scmp.ne.s32.totalorder %s37, %s53
    %p55 = scmp.eq.s32.totalorder %s17, 0
    %p56 = por %p54, %p55
    %s58 = sadd.s32 %s57, 1
    %p61 = scmp.eq.s32.totalorder %s11, 1
    %p62 = scmp.ne.s32.totalorder %s57, %s59
    %p63 = scmp.eq.s32.totalorder %s11, 0
    %p64 = por %p62, %p63
    %p65 = scmp.ne.s32.totalorder %s57, %s59
    %p66 = scmp.eq.s32.totalorder %s16, 1
    %p67 = por %p65, %p66
    %p68 = scmp.ne.s32.totalorder %s59, %s60
    %p69 = scmp.eq.s32.totalorder %s16, 0
    %p70 = por %p68, %p69
    %p71 = scmp.ne.s32.totalorder %s59, %s60
    %p72 = scmp.eq.s32.totalorder %s17, 1
    %p73 = por %p71, %p72
    %p75 = scmp.ne.s32.totalorder %s60, %s74
    %p76 = scmp.eq.s32.totalorder %s17, 0
    %p77 = por %p75, %p76
    %s79 = sadd.s32 %s78, 1
    %p82 = scmp.eq.s32.totalorder %s11, 1
    %p83 = scmp.ne.s32.totalorder %s78, %s80
    %p84 = scmp.eq.s32.totalorder %s11, 0
    %p85 = por %p83, %p84
    %p86 = scmp.ne.s32.totalorder %s78, %s80
    %p87 = scmp.eq.s32.totalorder %s16, 1
    %p88 = por %p86, %p87
    %p89 = scmp.ne.s32.totalorder %s80, %s81
    %p90 = scmp.eq.s32.totalorder %s16, 0
    %p91 = por %p89, %p90
    %p92 = scmp.ne.s32.totalorder %s80, %s81
    %p93 = scmp.eq.s32.totalorder %s17, 1
    %p94 = por %p92, %p93
    %p96 = scmp.ne.s32.totalorder %s81, %s95
    %p97 = scmp.eq.s32.totalorder %s17, 0
    %p98 = por %p96, %p97
    %s100 = sadd.s32 %s99, 1
    %p103 = scmp.eq.s32.totalorder %s11, 1
    %p104 = scmp.ne.s32.totalorder %s99, %s101
    %p105 = scmp.eq.s32.totalorder %s11, 0
    %p106 = por %p104, %p105
    %p107 = scmp.ne.s32.totalorder %s99, %s101
    %p108 = scmp.eq.s32.totalorder %s16, 1
    %p109 = por %p107, %p108
    %p110 = scmp.ne.s32.totalorder %s101, %s102
    %p111 = scmp.eq.s32.totalorder %s16, 0
    %p112 = por %p110, %p111
    %p113 = scmp.ne.s32.totalorder %s101, %s102
    %p114 = scmp.eq.s32.totalorder %s17, 1
    %p115 = por %p113, %p114
    %p117 = scmp.ne.s32.totalorder %s102, %s116
    %p118 = scmp.eq.s32.totalorder %s17, 0
    %p119 = por %p117, %p118
    %s121 = sadd.s32 %s120, 1
    %p124 = scmp.eq.s32.totalorder %s11, 1
    %p125 = scmp.ne.s32.totalorder %s120, %s122
    %p126 = scmp.eq.s32.totalorder %s11, 0
    %p127 = por %p125, %p126
    %p128 = scmp.ne.s32.totalorder %s120, %s122
    %p129 = scmp.eq.s32.totalorder %s16, 1
    %p130 = por %p128, %p129
    %p131 = scmp.ne.s32.totalorder %s122, %s123
    %p132 = scmp.eq.s32.totalorder %s16, 0
    %p133 = por %p131, %p132
    %p134 = scmp.ne.s32.totalorder %s122, %s123
    %p135 = scmp.eq.s32.totalorder %s17, 1
    %p136 = por %p134, %p135
    %p138 = scmp.ne.s32.totalorder %s123, %s137
    %p139 = scmp.eq.s32.totalorder %s17, 0
    %p140 = por %p138, %p139
    %s141 = ssub.s32 %s18, %s30
    %s142 = ssub.s32 %s19, %s26
    %s143 = sor.u32 %s141, %s142
    %p144 = scmp.eq.s32.totalorder %s143, 0
    %s146 = sadd.s32 %s145, 1
    %s147 = scalar_select %p144, %s145, %s146
    %p150 = pneg %p144
    %p151 = scmp.eq.s32.totalorder %s11, 1
    %p152 = por %p150, %p151
    %p153 = scmp.ne.s32.totalorder %s145, %s148
    %p154 = scmp.eq.s32.totalorder %s11, 0
    %p155 = por %p153, %p154
    %p156 = scmp.ne.s32.totalorder %s145, %s148
    %p157 = scmp.eq.s32.totalorder %s16, 1
    %p158 = por %p156, %p157
    %p159 = scmp.ne.s32.totalorder %s148, %s149
    %p160 = scmp.eq.s32.totalorder %s16, 0
    %p161 = por %p159, %p160
    %p162 = scmp.ne.s32.totalorder %s148, %s149
    %p163 = scmp.eq.s32.totalorder %s17, 1
    %p164 = por %p162, %p163
    %p166 = scmp.ne.s32.totalorder %s149, %s165
    %p167 = scmp.eq.s32.totalorder %s17, 0
    %p168 = por %p166, %p167
    %p169 = scmp.le.s32.totalorder 1, %s11
    %p170 = scmp.lt.s32.totalorder %s11, 3
    %p171 = pnand %p169, %p170
    %p172 = pneg %p171
    // Predicated region
    $region9: #{basic_block_pallas_nhwc.1} parent=5 // pred_check
      _
    $region10: #{basic_block_pallas_nhwc.1} parent=5 // pred_check_branch
      %174 = sbr.rel (%p171) target = $region12
    $region11: #{basic_block_pallas_nhwc.1} parent=5 // pred_region
      %s175 = ssub.s32 %s11, 1
      // Predicated region
      $region13: #{basic_block_pallas_nhwc.1} parent=11 // pred_check
        %p176 = pneg %p70
      $region14: #{basic_block_pallas_nhwc.1} parent=11 // pred_check_branch
        %178 = sbr.rel (%p176) target = $region16
      $region15: #{basic_block_pallas_nhwc.1} parent=11 // pred_region
        _
      $region16: #{basic_block_pallas_nhwc.1} parent=11 // pred_fallthru
        _
      // Predicated region
      $region17: #{basic_block_pallas_nhwc.1} parent=11 // pred_check
        %p179 = pneg %p91
      $region18: #{basic_block_pallas_nhwc.1} parent=11 // pred_check_branch
        %181 = sbr.rel (%p179) target = $region20
      $region19: #{basic_block_pallas_nhwc.1} parent=11 // pred_region
        _
      $region20: #{basic_block_pallas_nhwc.1} parent=11 // pred_fallthru
        _
      // Predicated region
      $region21: #{basic_block_pallas_nhwc.1} parent=11 // pred_check
        %p182 = pneg %p112
      $region22: #{basic_block_pallas_nhwc.1} parent=11 // pred_check_branch
        %184 = sbr.rel (%p182) target = $region24
      $region23: #{basic_block_pallas_nhwc.1} parent=11 // pred_region
        _
      $region24: #{basic_block_pallas_nhwc.1} parent=11 // pred_fallthru
        _
      // Predicated region
      $region25: #{basic_block_pallas_nhwc.1} parent=11 // pred_check
        %p185 = pneg %p133
      $region26: #{basic_block_pallas_nhwc.1} parent=11 // pred_check_branch
        %187 = sbr.rel (%p185) target = $region28
      $region27: #{basic_block_pallas_nhwc.1} parent=11 // pred_region
        _
      $region28: #{basic_block_pallas_nhwc.1} parent=11 // pred_fallthru
        _
    $region12: #{basic_block_pallas_nhwc.1} parent=5 // pred_fallthru
      _
    %p188 = scmp.lt.s32.totalorder %s11, 2
    // Predicated region
    $region29: #{basic_block_pallas_nhwc.1} parent=5 // pred_check
      %p189 = pneg %p188
    $region30: #{basic_block_pallas_nhwc.1} parent=5 // pred_check_branch
      %191 = sbr.rel (%p189) target = $region32
    $region31: #{basic_block_pallas_nhwc.1} parent=5 // pred_region
      // Predicated region
      $region33: #{basic_block_pallas_nhwc.1} parent=31 // pred_check
        %p192 = pneg %p43
      $region34: #{basic_block_pallas_nhwc.1} parent=31 // pred_check_branch
        %194 = sbr.rel (%p192) target = $region36
      $region35: #{basic_block_pallas_nhwc.1} parent=31 // pred_region
        %p195 = scmp.lt.s32.totalorder %s18, 1
        %s196 = scalar_select %p195, %s18, 1
        %s197 = smul.addr %s196, 60
        %s198 = smul.addr %s197, 4
        %s199 = scalar_lea.vmem %s0, %s198
      $region36: #{basic_block_pallas_nhwc.1} parent=31 // pred_fallthru
        _
    $region32: #{basic_block_pallas_nhwc.1} parent=5 // pred_fallthru
      _
    %p200 = scmp.le.s32.totalorder 1, %s11
    %p201 = scmp.lt.s32.totalorder %s11, 3
    %p202 = pnand %p200, %p201
    %p203 = pneg %p202
    // Predicated region
    $region37: #{basic_block_pallas_nhwc.1} parent=5 // pred_check
      _
    $region38: #{basic_block_pallas_nhwc.1} parent=5 // pred_check_branch
      %205 = sbr.rel (%p202) target = $region40
    $region39: #{basic_block_pallas_nhwc.1} parent=5 // pred_region
      %s206 = ssub.s32 %s11, 1
      %p207 = scmp.lt.s32.totalorder %s20, 1
      %s208 = scalar_select %p207, %s20, 1
      %s209 = smul.addr %s208, 60
      %s210 = smul.addr %s209, 4
      %s211 = scalar_lea.vmem %s0, %s210
      %p212 = pneg %p49
      %p213 = pneg %p46
      %p214 = pneg %p70
      %p215 = pneg %p67
      %p216 = pneg %p91
      %p217 = pneg %p88
      %p218 = pneg %p112
      %p219 = pneg %p109
      %p220 = pneg %p133
      %p221 = pneg %p130
      %p222 = pneg %p161
      %p223 = pneg %p158
      %s224 = smul.u32 16, %s21
      %p225 = scmp.lt.s32.totalorder %s20, 1
      %s226 = scalar_select %p225, %s20, 1
      %p227 = scmp.lt.s32.totalorder %s224, 15
      %s228 = scalar_select %p227, %s224, 15
      %s229 = smul.addr %s228, 2
      %s230 = smul.addr %s226, 32
      %s231 = sadd.s32 %s229, %s230
      %s232 = smul.addr %s231, 4
      %s233 = scalar_lea.vmem %s5, %s232
      %p234 = scmp.lt.s32.totalorder %s20, 1
      %s235 = scalar_select %p234, %s20, 1
      %s236 = smul.addr %s235, 60
      %s237 = smul.addr %s236, 4
      %s238 = scalar_lea.vmem %s0, %s237
      %s239 = smul.u32 16, %s21
      %p240 = scmp.lt.s32.totalorder %s20, 1
      %s241 = scalar_select %p240, %s20, 1
      %p242 = scmp.lt.s32.totalorder %s239, 15
      %s243 = scalar_select %p242, %s239, 15
      %s244 = smul.addr %s243, 2
      %s245 = smul.addr %s241, 32
      %s246 = sadd.s32 %s244, %s245
      %s247 = smul.addr %s246, 4
      %s248 = scalar_lea.vmem %s5, %s247
      %s249 = smul.u32 16, %s21
      %s251 = smul.u32 %s21, 16
      %s252 = smul.u32 %s251, 3
      %s253 = smul.addr %s252, 4
      %s254 = scalar_lea.vmem %s238, %s253
      %v255 = vld [vmem:[%s254] sm:$0xf]
      %v256 = vld [vmem:[%s254 + $0x4] sm:$0xf]
      %v257 = vld [vmem:[%s254 + $0xc] sm:$0xf]
      %v258 = vld [vmem:[%s254 + $0x10] sm:$0xf]
      %v259 = vld [vmem:[%s254 + $0x18] sm:$0xf]
      %v260 = vld [vmem:[%s254 + $0x1c] sm:$0xf]
      %v261 = vld [vmem:[%s254 + $0x24] sm:$0xf]
      %v262 = vld [vmem:[%s254 + $0x28] sm:$0xf]
      %v263 = vld [vmem:[%s254 + $0x30] sm:$0xf]
      %v264 = vld [vmem:[%s254 + $0x34] sm:$0xf]
      %v265 = vld [vmem:[%s254 + $0x3c] sm:$0xf]
      %v266 = vld [vmem:[%s254 + $0x40] sm:$0xf]
      %v267 = vld [vmem:[%s254 + $0x48] sm:$0xf]
      %v268 = vld [vmem:[%s254 + $0x4c] sm:$0xf]
      %v269 = vld [vmem:[%s254 + $0x54] sm:$0xf]
      %v270 = vld [vmem:[%s254 + $0x58] sm:$0xf]
      %v271 = vld [vmem:[%s254 + $0x60] sm:$0xf]
      %v272 = vld [vmem:[%s254 + $0x64] sm:$0xf]
      %v273 = vld [vmem:[%s254 + $0x6c] sm:$0xf]
      %v274 = vld [vmem:[%s254 + $0x70] sm:$0xf]
      %v275 = vld [vmem:[%s254 + $0x78] sm:$0xf]
      %v276 = vld [vmem:[%s254 + $0x7c] sm:$0xf]
      %v277 = vld [vmem:[%s254 + $0x84] sm:$0xf]
      %v278 = vld [vmem:[%s254 + $0x88] sm:$0xf]
      %v279 = vld [vmem:[%s254 + $0x90] sm:$0xf]
      %v280 = vld [vmem:[%s254 + $0x94] sm:$0xf]
      %v281 = vld [vmem:[%s254 + $0x9c] sm:$0xf]
      %v282 = vld [vmem:[%s254 + $0xa0] sm:$0xf]
      %v283 = vld [vmem:[%s254 + $0xa8] sm:$0xf]
      %v284 = vld [vmem:[%s254 + $0xac] sm:$0xf]
      %v285 = vld [vmem:[%s254 + $0xb4] sm:$0xf]
      %v286 = vld [vmem:[%s254 + $0xb8] sm:$0xf]
      %v287 = vld [vmem:[%s254 + $0xc0] sm:$0xf]
      %v288 = vld [vmem:[%s254 + $0xc4] sm:$0xf]
      %v289 = vld [vmem:[%s254 + $0xcc] sm:$0xf]
      %v290 = vld [vmem:[%s254 + $0xd0] sm:$0xf]
      %v291 = vld [vmem:[%s1] sm:$0x3]
      %v292 = vld [vmem:[%s254 + $0x8] sm:$0x1]
      %v293 = vld [vmem:[%s254 + $0x14] sm:$0x1]
      %v294 = vld [vmem:[%s254 + $0x20] sm:$0x1]
      %v295 = vld [vmem:[%s254 + $0x2c] sm:$0x1]
      %v296 = vld [vmem:[%s254 + $0x38] sm:$0x1]
      %v297 = vld [vmem:[%s254 + $0x44] sm:$0x1]
      %v298 = vld [vmem:[%s254 + $0x50] sm:$0x1]
      %v299 = vld [vmem:[%s254 + $0x5c] sm:$0x1]
      %v300 = vld [vmem:[%s254 + $0x68] sm:$0x1]
      %v301 = vld [vmem:[%s254 + $0x74] sm:$0x1]
      %v302 = vld [vmem:[%s254 + $0x80] sm:$0x1]
      %v303 = vld [vmem:[%s254 + $0x8c] sm:$0x1]
      %v304 = vld [vmem:[%s254 + $0x98] sm:$0x1]
      %v305 = vld [vmem:[%s254 + $0xa4] sm:$0x1]
      %v306 = vld [vmem:[%s254 + $0xb0] sm:$0x1]
      %v307 = vld [vmem:[%s254 + $0xbc] sm:$0x1]
      %v308 = vld [vmem:[%s254 + $0xc8] sm:$0x1]
      %v309 = vld [vmem:[%s254 + $0xd4] sm:$0x1]
      %vm310 = vsmask.f32 3328
      %vm311 = vsmask.f32 7440
      %vm312 = vmor %vm310, %vm311
      %v314 = vshrl.u32 %v255, 16
      %v316 = vrot.slane %v314, 4
      %v317 = vshll.u32 %v255, 16
      %v319 = vrot.slane %v317, 5
      %v320 = vor.u32 %v316, %v319
      %v321 = vrot.slane %v320, 4
      %v323 = vshll.u32 %v256, 16
      %v325 = vrot.slane %v323, 5
      %v326 = vsel %vm312, %v321, %v325
      %v327 = vshrl.u32 %v256, 16
      %v329 = vrot.slane %v327, 4
      %v330 = vor.u32 %v329, %v325
      %v331 = vrot.slane %v330, 4
      %v333 = vshll.u32 %v292, 16
      %v335 = vrot.slane %v333, 5
      %v336 = vsel %vm312, %v331, %v335
      %v338 = vshrl.u32 %v257, 16
      %v340 = vrot.slane %v338, 4
      %v341 = vshll.u32 %v257, 16
      %v343 = vrot.slane %v341, 5
      %v344 = vor.u32 %v340, %v343
      %v345 = vrot.slane %v344, 4
      %v347 = vshll.u32 %v258, 16
      %v349 = vrot.slane %v347, 5
      %v350 = vsel %vm312, %v345, %v349
      %v351 = vshrl.u32 %v258, 16
      %v353 = vrot.slane %v351, 4
      %v354 = vor.u32 %v353, %v349
      %v355 = vrot.slane %v354, 4
      %v357 = vshll.u32 %v293, 16
      %v359 = vrot.slane %v357, 5
      %v360 = vsel %vm312, %v355, %v359
      %v362 = vshrl.u32 %v259, 16
      %v364 = vrot.slane %v362, 4
      %v365 = vshll.u32 %v259, 16
      %v367 = vrot.slane %v365, 5
      %v368 = vor.u32 %v364, %v367
      %v369 = vrot.slane %v368, 4
      %v371 = vshll.u32 %v260, 16
      %v373 = vrot.slane %v371, 5
      %v374 = vsel %vm312, %v369, %v373
      %v375 = vshrl.u32 %v260, 16
      %v377 = vrot.slane %v375, 4
      %v378 = vor.u32 %v377, %v373
      %v379 = vrot.slane %v378, 4
      %v381 = vshll.u32 %v294, 16
      %v383 = vrot.slane %v381, 5
      %v384 = vsel %vm312, %v379, %v383
      %v386 = vshrl.u32 %v261, 16
      %v388 = vrot.slane %v386, 4
      %v389 = vshll.u32 %v261, 16
      %v391 = vrot.slane %v389, 5
      %v392 = vor.u32 %v388, %v391
      %v393 = vrot.slane %v392, 4
      %v395 = vshll.u32 %v262, 16
      %v397 = vrot.slane %v395, 5
      %v398 = vsel %vm312, %v393, %v397
      %v399 = vshrl.u32 %v262, 16
      %v401 = vrot.slane %v399, 4
      %v402 = vor.u32 %v401, %v397
      %v403 = vrot.slane %v402, 4
      %v405 = vshll.u32 %v295, 16
      %v407 = vrot.slane %v405, 5
      %v408 = vsel %vm312, %v403, %v407
      %v410 = vshrl.u32 %v263, 16
      %v412 = vrot.slane %v410, 4
      %v413 = vshll.u32 %v263, 16
      %v415 = vrot.slane %v413, 5
      %v416 = vor.u32 %v412, %v415
      %v417 = vrot.slane %v416, 4
      %v419 = vshll.u32 %v264, 16
      %v421 = vrot.slane %v419, 5
      %v422 = vsel %vm312, %v417, %v421
      %v423 = vshrl.u32 %v264, 16
      %v425 = vrot.slane %v423, 4
      %v426 = vor.u32 %v425, %v421
      %v427 = vrot.slane %v426, 4
      %v429 = vshll.u32 %v296, 16
      %v431 = vrot.slane %v429, 5
      %v432 = vsel %vm312, %v427, %v431
      %v434 = vshrl.u32 %v265, 16
      %v436 = vrot.slane %v434, 4
      %v437 = vshll.u32 %v265, 16
      %v439 = vrot.slane %v437, 5
      %v440 = vor.u32 %v436, %v439
      %v441 = vrot.slane %v440, 4
      %v443 = vshll.u32 %v266, 16
      %v445 = vrot.slane %v443, 5
      %v446 = vsel %vm312, %v441, %v445
      %v447 = vshrl.u32 %v266, 16
      %v449 = vrot.slane %v447, 4
      %v450 = vor.u32 %v449, %v445
      %v451 = vrot.slane %v450, 4
      %v453 = vshll.u32 %v297, 16
      %v455 = vrot.slane %v453, 5
      %v456 = vsel %vm312, %v451, %v455
      %v458 = vshrl.u32 %v267, 16
      %v460 = vrot.slane %v458, 4
      %v461 = vshll.u32 %v267, 16
      %v463 = vrot.slane %v461, 5
      %v464 = vor.u32 %v460, %v463
      %v465 = vrot.slane %v464, 4
      %v467 = vshll.u32 %v268, 16
      %v469 = vrot.slane %v467, 5
      %v470 = vsel %vm312, %v465, %v469
      %v471 = vshrl.u32 %v268, 16
      %v473 = vrot.slane %v471, 4
      %v474 = vor.u32 %v473, %v469
      %v475 = vrot.slane %v474, 4
      %v477 = vshll.u32 %v298, 16
      %v479 = vrot.slane %v477, 5
      %v480 = vsel %vm312, %v475, %v479
      %v482 = vshrl.u32 %v269, 16
      %v484 = vrot.slane %v482, 4
      %v485 = vshll.u32 %v269, 16
      %v487 = vrot.slane %v485, 5
      %v488 = vor.u32 %v484, %v487
      %v489 = vrot.slane %v488, 4
      %v491 = vshll.u32 %v270, 16
      %v493 = vrot.slane %v491, 5
      %v494 = vsel %vm312, %v489, %v493
      %v495 = vshrl.u32 %v270, 16
      %v497 = vrot.slane %v495, 4
      %v498 = vor.u32 %v497, %v493
      %v499 = vrot.slane %v498, 4
      %v501 = vshll.u32 %v299, 16
      %v503 = vrot.slane %v501, 5
      %v504 = vsel %vm312, %v499, %v503
      %v506 = vshrl.u32 %v271, 16
      %v508 = vrot.slane %v506, 4
      %v509 = vshll.u32 %v271, 16
      %v511 = vrot.slane %v509, 5
      %v512 = vor.u32 %v508, %v511
      %v513 = vrot.slane %v512, 4
      %v515 = vshll.u32 %v272, 16
      %v517 = vrot.slane %v515, 5
      %v518 = vsel %vm312, %v513, %v517
      %v519 = vshrl.u32 %v272, 16
      %v521 = vrot.slane %v519, 4
      %v522 = vor.u32 %v521, %v517
      %v523 = vrot.slane %v522, 4
      %v525 = vshll.u32 %v300, 16
      %v527 = vrot.slane %v525, 5
      %v528 = vsel %vm312, %v523, %v527
      %v530 = vshrl.u32 %v273, 16
      %v532 = vrot.slane %v530, 4
      %v533 = vshll.u32 %v273, 16
      %v535 = vrot.slane %v533, 5
      %v536 = vor.u32 %v532, %v535
      %v537 = vrot.slane %v536, 4
      %v539 = vshll.u32 %v274, 16
      %v541 = vrot.slane %v539, 5
      %v542 = vsel %vm312, %v537, %v541
      %v543 = vshrl.u32 %v274, 16
      %v545 = vrot.slane %v543, 4
      %v546 = vor.u32 %v545, %v541
      %v547 = vrot.slane %v546, 4
      %v549 = vshll.u32 %v301, 16
      %v551 = vrot.slane %v549, 5
      %v552 = vsel %vm312, %v547, %v551
      %v554 = vshrl.u32 %v275, 16
      %v556 = vrot.slane %v554, 4
      %v557 = vshll.u32 %v275, 16
      %v559 = vrot.slane %v557, 5
      %v560 = vor.u32 %v556, %v559
      %v561 = vrot.slane %v560, 4
      %v563 = vshll.u32 %v276, 16
      %v565 = vrot.slane %v563, 5
      %v566 = vsel %vm312, %v561, %v565
      %v567 = vshrl.u32 %v276, 16
      %v569 = vrot.slane %v567, 4
      %v570 = vor.u32 %v569, %v565
      %v571 = vrot.slane %v570, 4
      %v573 = vshll.u32 %v302, 16
      %v575 = vrot.slane %v573, 5
      %v576 = vsel %vm312, %v571, %v575
      %v578 = vshrl.u32 %v277, 16
      %v580 = vrot.slane %v578, 4
      %v581 = vshll.u32 %v277, 16
      %v583 = vrot.slane %v581, 5
      %v584 = vor.u32 %v580, %v583
      %v585 = vrot.slane %v584, 4
      %v587 = vshll.u32 %v278, 16
      %v589 = vrot.slane %v587, 5
      %v590 = vsel %vm312, %v585, %v589
      %v591 = vshrl.u32 %v278, 16
      %v593 = vrot.slane %v591, 4
      %v594 = vor.u32 %v593, %v589
      %v595 = vrot.slane %v594, 4
      %v597 = vshll.u32 %v303, 16
      %v599 = vrot.slane %v597, 5
      %v600 = vsel %vm312, %v595, %v599
      %v602 = vshrl.u32 %v279, 16
      %v604 = vrot.slane %v602, 4
      %v605 = vshll.u32 %v279, 16
      %v607 = vrot.slane %v605, 5
      %v608 = vor.u32 %v604, %v607
      %v609 = vrot.slane %v608, 4
      %v611 = vshll.u32 %v280, 16
      %v613 = vrot.slane %v611, 5
      %v614 = vsel %vm312, %v609, %v613
      %v615 = vshrl.u32 %v280, 16
      %v617 = vrot.slane %v615, 4
      %v618 = vor.u32 %v617, %v613
      %v619 = vrot.slane %v618, 4
      %v621 = vshll.u32 %v304, 16
      %v623 = vrot.slane %v621, 5
      %v624 = vsel %vm312, %v619, %v623
      %v626 = vshrl.u32 %v281, 16
      %v628 = vrot.slane %v626, 4
      %v629 = vshll.u32 %v281, 16
      %v631 = vrot.slane %v629, 5
      %v632 = vor.u32 %v628, %v631
      %v633 = vrot.slane %v632, 4
      %v635 = vshll.u32 %v282, 16
      %v637 = vrot.slane %v635, 5
      %v638 = vsel %vm312, %v633, %v637
      %v639 = vshrl.u32 %v282, 16
      %v641 = vrot.slane %v639, 4
      %v642 = vor.u32 %v641, %v637
      %v643 = vrot.slane %v642, 4
      %v645 = vshll.u32 %v305, 16
      %v647 = vrot.slane %v645, 5
      %v648 = vsel %vm312, %v643, %v647
      %v650 = vshrl.u32 %v283, 16
      %v652 = vrot.slane %v650, 4
      %v653 = vshll.u32 %v283, 16
      %v655 = vrot.slane %v653, 5
      %v656 = vor.u32 %v652, %v655
      %v657 = vrot.slane %v656, 4
      %v659 = vshll.u32 %v284, 16
      %v661 = vrot.slane %v659, 5
      %v662 = vsel %vm312, %v657, %v661
      %v663 = vshrl.u32 %v284, 16
      %v665 = vrot.slane %v663, 4
      %v666 = vor.u32 %v665, %v661
      %v667 = vrot.slane %v666, 4
      %v669 = vshll.u32 %v306, 16
      %v671 = vrot.slane %v669, 5
      %v672 = vsel %vm312, %v667, %v671
      %v674 = vshrl.u32 %v285, 16
      %v676 = vrot.slane %v674, 4
      %v677 = vshll.u32 %v285, 16
      %v679 = vrot.slane %v677, 5
      %v680 = vor.u32 %v676, %v679
      %v681 = vrot.slane %v680, 4
      %v683 = vshll.u32 %v286, 16
      %v685 = vrot.slane %v683, 5
      %v686 = vsel %vm312, %v681, %v685
      %v687 = vshrl.u32 %v286, 16
      %v689 = vrot.slane %v687, 4
      %v690 = vor.u32 %v689, %v685
      %v691 = vrot.slane %v690, 4
      %v693 = vshll.u32 %v307, 16
      %v695 = vrot.slane %v693, 5
      %v696 = vsel %vm312, %v691, %v695
      %v698 = vshrl.u32 %v287, 16
      %v700 = vrot.slane %v698, 4
      %v701 = vshll.u32 %v287, 16
      %v703 = vrot.slane %v701, 5
      %v704 = vor.u32 %v700, %v703
      %v705 = vrot.slane %v704, 4
      %v707 = vshll.u32 %v288, 16
      %v709 = vrot.slane %v707, 5
      %v710 = vsel %vm312, %v705, %v709
      %v711 = vshrl.u32 %v288, 16
      %v713 = vrot.slane %v711, 4
      %v714 = vor.u32 %v713, %v709
      %v715 = vrot.slane %v714, 4
      %v717 = vshll.u32 %v308, 16
      %v719 = vrot.slane %v717, 5
      %v720 = vsel %vm312, %v715, %v719
      %v722 = vshrl.u32 %v289, 16
      %v724 = vrot.slane %v722, 4
      %v725 = vshll.u32 %v289, 16
      %v727 = vrot.slane %v725, 5
      %v728 = vor.u32 %v724, %v727
      %v729 = vrot.slane %v728, 4
      %v731 = vshll.u32 %v290, 16
      %v733 = vrot.slane %v731, 5
      %v734 = vsel %vm312, %v729, %v733
      %v735 = vshrl.u32 %v290, 16
      %v737 = vrot.slane %v735, 4
      %v738 = vor.u32 %v737, %v733
      %v739 = vrot.slane %v738, 4
      %v741 = vshll.u32 %v309, 16
      %v743 = vrot.slane %v741, 5
      %v744 = vsel %vm312, %v739, %v743
      %s745 = scalar_lea.vmem %s1, 2
      %v746 = vld [vmem:[%s745] sm:$0x3]
      %v747 = vunpack.c.l.b16 %v326
      %v748 = vunpack.c.l.b16 %v336
      %v749 = vunpack.c.l.b16 %v350
      %v750 = vunpack.c.l.b16 %v360
      %v751 = vunpack.c.l.b16 %v374
      %v752 = vunpack.c.l.b16 %v384
      %v753 = vunpack.c.l.b16 %v398
      %v754 = vunpack.c.l.b16 %v408
      %v755 = vunpack.c.l.b16 %v422
      %v756 = vunpack.c.l.b16 %v432
      %v757 = vunpack.c.l.b16 %v446
      %v758 = vunpack.c.l.b16 %v456
      %v759 = vunpack.c.l.b16 %v470
      %v760 = vunpack.c.l.b16 %v480
      %v761 = vunpack.c.l.b16 %v494
      %v762 = vunpack.c.l.b16 %v504
      %v763 = vunpack.c.l.b16 %v518
      %v764 = vunpack.c.l.b16 %v528
      %v765 = vunpack.c.l.b16 %v542
      %v766 = vunpack.c.l.b16 %v552
      %v767 = vunpack.c.l.b16 %v566
      %v768 = vunpack.c.l.b16 %v576
      %v769 = vunpack.c.l.b16 %v590
      %v770 = vunpack.c.l.b16 %v600
      %v771 = vunpack.c.l.b16 %v614
      %v772 = vunpack.c.l.b16 %v624
      %v773 = vunpack.c.l.b16 %v638
      %v774 = vunpack.c.l.b16 %v648
      %v775 = vunpack.c.l.b16 %v662
      %v776 = vunpack.c.l.b16 %v672
      %v777 = vunpack.c.l.b16 %v686
      %v778 = vunpack.c.l.b16 %v696
      %v779 = vunpack.c.l.b16 %v710
      %v780 = vunpack.c.l.b16 %v720
      %v781 = vunpack.c.l.b16 %v734
      %v782 = vunpack.c.l.b16 %v744
      %v783 = vpack.c.b16 %v748, %v747
      %v784 = vpack.c.b16 %v750, %v749
      %v785 = vpack.c.b16 %v752, %v751
      %v786 = vpack.c.b16 %v754, %v753
      %v787 = vpack.c.b16 %v756, %v755
      %v788 = vpack.c.b16 %v758, %v757
      %v789 = vpack.c.b16 %v760, %v759
      %v790 = vpack.c.b16 %v762, %v761
      %v791 = vpack.c.b16 %v764, %v763
      %v792 = vpack.c.b16 %v766, %v765
      %v793 = vpack.c.b16 %v768, %v767
      %v794 = vpack.c.b16 %v770, %v769
      %v795 = vpack.c.b16 %v772, %v771
      %v796 = vpack.c.b16 %v774, %v773
      %v797 = vpack.c.b16 %v776, %v775
      %v798 = vpack.c.b16 %v778, %v777
      %v799 = vpack.c.b16 %v780, %v779
      %v800 = vpack.c.b16 %v782, %v781
      %vm801 = vcmask 31744
      %v803 = vsel %vm801, %v783, 0
      %v806 = vsel %vm801, %v784, 0
      %v809 = vsel %vm801, %v785, 0
      %v812 = vsel %vm801, %v786, 0
      %v815 = vsel %vm801, %v787, 0
      %v818 = vsel %vm801, %v788, 0
      %v821 = vsel %vm801, %v789, 0
      %v824 = vsel %vm801, %v790, 0
      %v827 = vsel %vm801, %v791, 0
      %v830 = vsel %vm801, %v792, 0
      %v833 = vsel %vm801, %v793, 0
      %v836 = vsel %vm801, %v794, 0
      %v839 = vsel %vm801, %v795, 0
      %v842 = vsel %vm801, %v796, 0
      %v845 = vsel %vm801, %v797, 0
      %v848 = vsel %vm801, %v798, 0
      %v851 = vsel %vm801, %v799, 0
      %v854 = vsel %vm801, %v800, 0
      %vm856 = vcmask 1041408
      %v858 = vsel %vm856, %v746, 0
      %860 = vmatprep.subr.bf16.mxu0 0
      %861 = vmatpush1.bf16.msra.mxu0 %v858
      %862 = vmatprep.subr.bf16.mxu0 0
      %863 = vmatpush1.bf16.msra.mxu0 0
      %864 = vmatprep.subr.bf16.mxu0 0
      %865 = vmatpush1.bf16.msra.mxu0 0
      %866 = vmatprep.subr.bf16.mxu0 0
      %867 = vmatpush1.bf16.msra.mxu0 0
      %868 = vmatprep.subr.bf16.mxu0 0
      %869 = vmatpush1.bf16.msra.mxu0 0
      %870 = vmatprep.subr.bf16.mxu0 0
      %871 = vmatpush1.bf16.msra.mxu0 0
      %872 = vmatprep.subr.bf16.mxu0 0
      %873 = vmatpush1.bf16.msra.mxu0 0
      %874 = vmatprep.subr.bf16.mxu0 0
      %875 = vmatpush1.bf16.msra.mxu0 0
      %876 = vmatprep.subr.bf16.mxu0 0
      %877 = vmatpush1.bf16.msra.mxu0 0
      %878 = vmatprep.subr.bf16.mxu0 0
      %879 = vmatpush1.bf16.msra.mxu0 0
      %880 = vmatprep.subr.bf16.mxu0 0
      %881 = vmatpush1.bf16.msra.mxu0 0
      %882 = vmatprep.subr.bf16.mxu0 0
      %883 = vmatpush1.bf16.msra.mxu0 0
      %884 = vmatprep.subr.bf16.mxu0 0
      %885 = vmatpush1.bf16.msra.mxu0 0
      %886 = vmatprep.subr.bf16.mxu0 0
      %887 = vmatpush1.bf16.msra.mxu0 0
      %888 = vmatprep.subr.bf16.mxu0 0
      %889 = vmatpush1.bf16.msra.mxu0 0
      %890 = vmatprep.subr.bf16.mxu0 0
      %891 = vmatpush1.bf16.msra.mxu0 0
      %892 = vmatprep.mubr.bf16.mxu0 0
      %893 = vmatmul.mubr.bf16.gmra.mrb[0].mxu0 %v803
      %v894 = vpop.f32.mrb[0].mxu0
      %v895 = vadd.f32 0.0, %v894
      %v896 = vpop.f32.mrb[0].mxu0
      %v897 = vpop.f32.mrb[0].mxu0
      %v898 = vadd.f32 0.0, %v897
      %v899 = vpop.f32.mrb[0].mxu0
      %900 = vmatprep.mubr.bf16.mxu0 0
      %901 = vmatmul.mubr.bf16.gmra.mrb[0].mxu0 %v806
      %v902 = vpop.f32.mrb[0].mxu0
      %v903 = vadd.f32 0.0, %v902
      %v904 = vpop.f32.mrb[0].mxu0
      %v905 = vpop.f32.mrb[0].mxu0
      %v906 = vadd.f32 0.0, %v905
      %v907 = vpop.f32.mrb[0].mxu0
      %908 = vmatprep.mubr.bf16.mxu0 0
      %909 = vmatmul.mubr.bf16.gmra.mrb[0].mxu0 %v809
      %v910 = vpop.f32.mrb[0].mxu0
      %v911 = vadd.f32 0.0, %v910
      %v912 = vpop.f32.mrb[0].mxu0
      %v913 = vpop.f32.mrb[0].mxu0
      %v914 = vadd.f32 0.0, %v913
      %v915 = vpop.f32.mrb[0].mxu0
      %916 = vmatprep.mubr.bf16.mxu0 0
      %917 = vmatmul.mubr.bf16.gmra.mrb[0].mxu0 %v812
      %v918 = vpop.f32.mrb[0].mxu0
      %v919 = vadd.f32 0.0, %v918
      %v920 = vpop.f32.mrb[0].mxu0
      %v921 = vpop.f32.mrb[0].mxu0
      %v922 = vadd.f32 0.0, %v921
      %v923 = vpop.f32.mrb[0].mxu0
      %924 = vmatprep.mubr.bf16.mxu0 0
      %925 = vmatmul.mubr.bf16.gmra.mrb[0].mxu0 %v815
      %v926 = vpop.f32.mrb[0].mxu0
      %v927 = vadd.f32 0.0, %v926
      %v928 = vpop.f32.mrb[0].mxu0
      %v929 = vpop.f32.mrb[0].mxu0
      %v930 = vadd.f32 0.0, %v929
      %v931 = vpop.f32.mrb[0].mxu0
      %932 = vmatprep.mubr.bf16.mxu0 0
      %933 = vmatmul.mubr.bf16.gmra.mrb[0].mxu0 %v818
      %v934 = vpop.f32.mrb[0].mxu0
      %v935 = vadd.f32 0.0, %v934
      %v936 = vpop.f32.mrb[0].mxu0
      %v937 = vpop.f32.mrb[0].mxu0
      %v938 = vadd.f32 0.0, %v937
      %v939 = vpop.f32.mrb[0].mxu0
      %940 = vmatprep.mubr.bf16.mxu0 0
      %941 = vmatmul.mubr.bf16.gmra.mrb[0].mxu0 %v821
      %v942 = vpop.f32.mrb[0].mxu0
      %v943 = vadd.f32 0.0, %v942
      %v944 = vpop.f32.mrb[0].mxu0
      %v945 = vpop.f32.mrb[0].mxu0
      %v946 = vadd.f32 0.0, %v945
      %v947 = vpop.f32.mrb[0].mxu0
      %948 = vmatprep.mubr.bf16.mxu0 0
      %949 = vmatmul.mubr.bf16.gmra.mrb[0].mxu0 %v824
      %v950 = vpop.f32.mrb[0].mxu0
      %v951 = vadd.f32 0.0, %v950
      %v952 = vpop.f32.mrb[0].mxu0
      %v953 = vpop.f32.mrb[0].mxu0
      %v954 = vadd.f32 0.0, %v953
      %v955 = vpop.f32.mrb[0].mxu0
      %956 = vmatprep.mubr.bf16.mxu0 0
      %957 = vmatmul.mubr.bf16.gmra.mrb[0].mxu0 %v827
      %v958 = vpop.f32.mrb[0].mxu0
      %v959 = vadd.f32 0.0, %v958
      %v960 = vpop.f32.mrb[0].mxu0
      %v961 = vpop.f32.mrb[0].mxu0
      %v962 = vadd.f32 0.0, %v961
      %v963 = vpop.f32.mrb[0].mxu0
      %964 = vmatprep.mubr.bf16.mxu0 0
      %965 = vmatmul.mubr.bf16.gmra.mrb[0].mxu0 %v830
      %v966 = vpop.f32.mrb[0].mxu0
      %v967 = vadd.f32 0.0, %v966
      %v968 = vpop.f32.mrb[0].mxu0
      %v969 = vpop.f32.mrb[0].mxu0
      %v970 = vadd.f32 0.0, %v969
      %v971 = vpop.f32.mrb[0].mxu0
      %972 = vmatprep.mubr.bf16.mxu0 0
      %973 = vmatmul.mubr.bf16.gmra.mrb[0].mxu0 %v833
      %v974 = vpop.f32.mrb[0].mxu0
      %v975 = vadd.f32 0.0, %v974
      %v976 = vpop.f32.mrb[0].mxu0
      %v977 = vpop.f32.mrb[0].mxu0
      %v978 = vadd.f32 0.0, %v977
      %v979 = vpop.f32.mrb[0].mxu0
      %980 = vmatprep.mubr.bf16.mxu0 0
      %981 = vmatmul.mubr.bf16.gmra.mrb[0].mxu0 %v836
      %v982 = vpop.f32.mrb[0].mxu0
      %v983 = vadd.f32 0.0, %v982
      %v984 = vpop.f32.mrb[0].mxu0
      %v985 = vpop.f32.mrb[0].mxu0
      %v986 = vadd.f32 0.0, %v985
      %v987 = vpop.f32.mrb[0].mxu0
      %988 = vmatprep.mubr.bf16.mxu0 0
      %989 = vmatmul.mubr.bf16.gmra.mrb[0].mxu0 %v839
      %v990 = vpop.f32.mrb[0].mxu0
      %v991 = vadd.f32 0.0, %v990
      %v992 = vpop.f32.mrb[0].mxu0
      %v993 = vpop.f32.mrb[0].mxu0
      %v994 = vadd.f32 0.0, %v993
      %v995 = vpop.f32.mrb[0].mxu0
      %996 = vmatprep.mubr.bf16.mxu0 0
      %997 = vmatmul.mubr.bf16.gmra.mrb[0].mxu0 %v842
      %v998 = vpop.f32.mrb[0].mxu0
      %v999 = vadd.f32 0.0, %v998
      %v1000 = vpop.f32.mrb[0].mxu0
      %v1001 = vpop.f32.mrb[0].mxu0
      %v1002 = vadd.f32 0.0, %v1001
      %v1003 = vpop.f32.mrb[0].mxu0
      %1004 = vmatprep.mubr.bf16.mxu0 0
      %1005 = vmatmul.mubr.bf16.gmra.mrb[0].mxu0 %v845
      %v1006 = vpop.f32.mrb[0].mxu0
      %v1007 = vadd.f32 0.0, %v1006
      %v1008 = vpop.f32.mrb[0].mxu0
      %v1009 = vpop.f32.mrb[0].mxu0
      %v1010 = vadd.f32 0.0, %v1009
      %v1011 = vpop.f32.mrb[0].mxu0
      %1012 = vmatprep.mubr.bf16.mxu0 0
      %1013 = vmatmul.mubr.bf16.gmra.mrb[0].mxu0 %v848
      %v1014 = vpop.f32.mrb[0].mxu0
      %v1015 = vadd.f32 0.0, %v1014
      %v1016 = vpop.f32.mrb[0].mxu0
      %v1017 = vpop.f32.mrb[0].mxu0
      %v1018 = vadd.f32 0.0, %v1017
      %v1019 = vpop.f32.mrb[0].mxu0
      %1020 = vmatprep.mubr.bf16.mxu0 0
      %1021 = vmatmul.mubr.bf16.gmra.mrb[0].mxu0 %v851
      %v1022 = vpop.f32.mrb[0].mxu0
      %v1023 = vadd.f32 0.0, %v1022
      %v1024 = vpop.f32.mrb[0].mxu0
      %v1025 = vpop.f32.mrb[0].mxu0
      %v1026 = vadd.f32 0.0, %v1025
      %v1027 = vpop.f32.mrb[0].mxu0
      %1028 = vmatprep.mubr.bf16.mxu0 0
      %1029 = vmatmul.mubr.bf16.gmra.mrb[0].mxu0 %v854
      %v1030 = vpop.f32.mrb[0].mxu0
      %v1031 = vadd.f32 0.0, %v1030
      %v1032 = vpop.f32.mrb[0].mxu0
      %v1033 = vpop.f32.mrb[0].mxu0
      %v1034 = vadd.f32 0.0, %v1033
      %v1035 = vpop.f32.mrb[0].mxu0
      %1036 = vdwg.mxu0
      %v1073 = vunpack.c.l.b16 %v255
      %v1074 = vunpack.c.l.b16 %v256
      %v1075 = vunpack.c.l.b16 %v257
      %v1076 = vunpack.c.l.b16 %v258
      %v1077 = vunpack.c.l.b16 %v259
      %v1078 = vunpack.c.l.b16 %v260
      %v1079 = vunpack.c.l.b16 %v261
      %v1080 = vunpack.c.l.b16 %v262
      %v1081 = vunpack.c.l.b16 %v263
      %v1082 = vunpack.c.l.b16 %v264
      %v1083 = vunpack.c.l.b16 %v265
      %v1084 = vunpack.c.l.b16 %v266
      %v1085 = vunpack.c.l.b16 %v267
      %v1086 = vunpack.c.l.b16 %v268
      %v1087 = vunpack.c.l.b16 %v269
      %v1088 = vunpack.c.l.b16 %v270
      %v1089 = vunpack.c.l.b16 %v271
      %v1090 = vunpack.c.l.b16 %v272
      %v1091 = vunpack.c.l.b16 %v273
      %v1092 = vunpack.c.l.b16 %v274
      %v1093 = vunpack.c.l.b16 %v275
      %v1094 = vunpack.c.l.b16 %v276
      %v1095 = vunpack.c.l.b16 %v277
      %v1096 = vunpack.c.l.b16 %v278
      %v1097 = vunpack.c.l.b16 %v279
      %v1098 = vunpack.c.l.b16 %v280
      %v1099 = vunpack.c.l.b16 %v281
      %v1100 = vunpack.c.l.b16 %v282
      %v1101 = vunpack.c.l.b16 %v283
      %v1102 = vunpack.c.l.b16 %v284
      %v1103 = vunpack.c.l.b16 %v285
      %v1104 = vunpack.c.l.b16 %v286
      %v1105 = vunpack.c.l.b16 %v287
      %v1106 = vunpack.c.l.b16 %v288
      %v1107 = vunpack.c.l.b16 %v289
      %v1108 = vunpack.c.l.b16 %v290
      %v1109 = vpack.c.b16 %v1074, %v1073
      %v1110 = vpack.c.b16 %v1076, %v1075
      %v1111 = vpack.c.b16 %v1078, %v1077
      %v1112 = vpack.c.b16 %v1080, %v1079
      %v1113 = vpack.c.b16 %v1082, %v1081
      %v1114 = vpack.c.b16 %v1084, %v1083
      %v1115 = vpack.c.b16 %v1086, %v1085
      %v1116 = vpack.c.b16 %v1088, %v1087
      %v1117 = vpack.c.b16 %v1090, %v1089
      %v1118 = vpack.c.b16 %v1092, %v1091
      %v1119 = vpack.c.b16 %v1094, %v1093
      %v1120 = vpack.c.b16 %v1096, %v1095
      %v1121 = vpack.c.b16 %v1098, %v1097
      %v1122 = vpack.c.b16 %v1100, %v1099
      %v1123 = vpack.c.b16 %v1102, %v1101
      %v1124 = vpack.c.b16 %v1104, %v1103
      %v1125 = vpack.c.b16 %v1106, %v1105
      %v1126 = vpack.c.b16 %v1108, %v1107
      %v1128 = vsel %vm801, %v1109, 0
      %v1131 = vsel %vm801, %v1110, 0
      %v1134 = vsel %vm801, %v1111, 0
      %v1137 = vsel %vm801, %v1112, 0
      %v1140 = vsel %vm801, %v1113, 0
      %v1143 = vsel %vm801, %v1114, 0
      %v1146 = vsel %vm801, %v1115, 0
      %v1149 = vsel %vm801, %v1116, 0
      %v1152 = vsel %vm801, %v1117, 0
      %v1155 = vsel %vm801, %v1118, 0
      %v1158 = vsel %vm801, %v1119, 0
      %v1161 = vsel %vm801, %v1120, 0
      %v1164 = vsel %vm801, %v1121, 0
      %v1167 = vsel %vm801, %v1122, 0
      %v1170 = vsel %vm801, %v1123, 0
      %v1173 = vsel %vm801, %v1124, 0
      %v1176 = vsel %vm801, %v1125, 0
      %v1179 = vsel %vm801, %v1126, 0
      %v1182 = vsel %vm856, %v291, 0
      %1184 = vmatprep.subr.bf16.mxu0 0
      %1185 = vmatpush1.bf16.msra.mxu0 %v1182
      %1186 = vmatprep.subr.bf16.mxu0 0
      %1187 = vmatpush1.bf16.msra.mxu0 0
      %1188 = vmatprep.subr.bf16.mxu0 0
      %1189 = vmatpush1.bf16.msra.mxu0 0
      %1190 = vmatprep.subr.bf16.mxu0 0
      %1191 = vmatpush1.bf16.msra.mxu0 0
      %1192 = vmatprep.subr.bf16.mxu0 0
      %1193 = vmatpush1.bf16.msra.mxu0 0
      %1194 = vmatprep.subr.bf16.mxu0 0
      %1195 = vmatpush1.bf16.msra.mxu0 0
      %1196 = vmatprep.subr.bf16.mxu0 0
      %1197 = vmatpush1.bf16.msra.mxu0 0
      %1198 = vmatprep.subr.bf16.mxu0 0
      %1199 = vmatpush1.bf16.msra.mxu0 0
      %1200 = vmatprep.subr.bf16.mxu0 0
      %1201 = vmatpush1.bf16.msra.mxu0 0
      %1202 = vmatprep.subr.bf16.mxu0 0
      %1203 = vmatpush1.bf16.msra.mxu0 0
      %1204 = vmatprep.subr.bf16.mxu0 0
      %1205 = vmatpush1.bf16.msra.mxu0 0
      %1206 = vmatprep.subr.bf16.mxu0 0
      %1207 = vmatpush1.bf16.msra.mxu0 0
      %1208 = vmatprep.subr.bf16.mxu0 0
      %1209 = vmatpush1.bf16.msra.mxu0 0
      %1210 = vmatprep.subr.bf16.mxu0 0
      %1211 = vmatpush1.bf16.msra.mxu0 0
      %1212 = vmatprep.subr.bf16.mxu0 0
      %1213 = vmatpush1.bf16.msra.mxu0 0
      %1214 = vmatprep.subr.bf16.mxu0 0
      %1215 = vmatpush1.bf16.msra.mxu0 0
      %1216 = vmatprep.mubr.bf16.mxu0 0
      %1217 = vmatmul.mubr.bf16.gmra.mrb[0].mxu0 %v1128
      %v1218 = vpop.f32.mrb[0].mxu0
      %v1219 = vadd.f32 %v895, %v1218
      %v1220 = vpop.f32.mrb[0].mxu0
      %v1221 = vpop.f32.mrb[0].mxu0
      %v1222 = vadd.f32 %v898, %v1221
      %v1223 = vpop.f32.mrb[0].mxu0
      %1224 = vmatprep.mubr.bf16.mxu0 0
      %1225 = vmatmul.mubr.bf16.gmra.mrb[0].mxu0 %v1131
      %v1226 = vpop.f32.mrb[0].mxu0
      %v1227 = vadd.f32 %v903, %v1226
      %v1228 = vpop.f32.mrb[0].mxu0
      %v1229 = vpop.f32.mrb[0].mxu0
      %v1230 = vadd.f32 %v906, %v1229
      %v1231 = vpop.f32.mrb[0].mxu0
      %1232 = vmatprep.mubr.bf16.mxu0 0
      %1233 = vmatmul.mubr.bf16.gmra.mrb[0].mxu0 %v1134
      %v1234 = vpop.f32.mrb[0].mxu0
      %v1235 = vadd.f32 %v911, %v1234
      %v1236 = vpop.f32.mrb[0].mxu0
      %v1237 = vpop.f32.mrb[0].mxu0
      %v1238 = vadd.f32 %v914, %v1237
      %v1239 = vpop.f32.mrb[0].mxu0
      %1240 = vmatprep.mubr.bf16.mxu0 0
      %1241 = vmatmul.mubr.bf16.gmra.mrb[0].mxu0 %v1137
      %v1242 = vpop.f32.mrb[0].mxu0
      %v1243 = vadd.f32 %v919, %v1242
      %v1244 = vpop.f32.mrb[0].mxu0
      %v1245 = vpop.f32.mrb[0].mxu0
      %v1246 = vadd.f32 %v922, %v1245
      %v1247 = vpop.f32.mrb[0].mxu0
      %1248 = vmatprep.mubr.bf16.mxu0 0
      %1249 = vmatmul.mubr.bf16.gmra.mrb[0].mxu0 %v1140
      %v1250 = vpop.f32.mrb[0].mxu0
      %v1251 = vadd.f32 %v927, %v1250
      %v1252 = vpop.f32.mrb[0].mxu0
      %v1253 = vpop.f32.mrb[0].mxu0
      %v1254 = vadd.f32 %v930, %v1253
      %v1255 = vpop.f32.mrb[0].mxu0
      %1256 = vmatprep.mubr.bf16.mxu0 0
      %1257 = vmatmul.mubr.bf16.gmra.mrb[0].mxu0 %v1143
      %v1258 = vpop.f32.mrb[0].mxu0
      %v1259 = vadd.f32 %v935, %v1258
      %v1260 = vpop.f32.mrb[0].mxu0
      %v1261 = vpop.f32.mrb[0].mxu0
      %v1262 = vadd.f32 %v938, %v1261
      %v1263 = vpop.f32.mrb[0].mxu0
      %1264 = vmatprep.mubr.bf16.mxu0 0
      %1265 = vmatmul.mubr.bf16.gmra.mrb[0].mxu0 %v1146
      %v1266 = vpop.f32.mrb[0].mxu0
      %v1267 = vadd.f32 %v943, %v1266
      %v1268 = vpop.f32.mrb[0].mxu0
      %v1269 = vpop.f32.mrb[0].mxu0
      %v1270 = vadd.f32 %v946, %v1269
      %v1271 = vpop.f32.mrb[0].mxu0
      %1272 = vmatprep.mubr.bf16.mxu0 0
      %1273 = vmatmul.mubr.bf16.gmra.mrb[0].mxu0 %v1149
      %v1274 = vpop.f32.mrb[0].mxu0
      %v1275 = vadd.f32 %v951, %v1274
      %v1276 = vpop.f32.mrb[0].mxu0
      %v1277 = vpop.f32.mrb[0].mxu0
      %v1278 = vadd.f32 %v954, %v1277
      %v1279 = vpop.f32.mrb[0].mxu0
      %1280 = vmatprep.mubr.bf16.mxu0 0
      %1281 = vmatmul.mubr.bf16.gmra.mrb[0].mxu0 %v1152
      %v1282 = vpop.f32.mrb[0].mxu0
      %v1283 = vadd.f32 %v959, %v1282
      %v1284 = vpop.f32.mrb[0].mxu0
      %v1285 = vpop.f32.mrb[0].mxu0
      %v1286 = vadd.f32 %v962, %v1285
      %v1287 = vpop.f32.mrb[0].mxu0
      %1288 = vmatprep.mubr.bf16.mxu0 0
      %1289 = vmatmul.mubr.bf16.gmra.mrb[0].mxu0 %v1155
      %v1290 = vpop.f32.mrb[0].mxu0
      %v1291 = vadd.f32 %v967, %v1290
      %v1292 = vpop.f32.mrb[0].mxu0
      %v1293 = vpop.f32.mrb[0].mxu0
      %v1294 = vadd.f32 %v970, %v1293
      %v1295 = vpop.f32.mrb[0].mxu0
      %1296 = vmatprep.mubr.bf16.mxu0 0
      %1297 = vmatmul.mubr.bf16.gmra.mrb[0].mxu0 %v1158
      %v1298 = vpop.f32.mrb[0].mxu0
      %v1299 = vadd.f32 %v975, %v1298
      %v1300 = vpop.f32.mrb[0].mxu0
      %v1301 = vpop.f32.mrb[0].mxu0
      %v1302 = vadd.f32 %v978, %v1301
      %v1303 = vpop.f32.mrb[0].mxu0
      %1304 = vmatprep.mubr.bf16.mxu0 0
      %1305 = vmatmul.mubr.bf16.gmra.mrb[0].mxu0 %v1161
      %v1306 = vpop.f32.mrb[0].mxu0
      %v1307 = vadd.f32 %v983, %v1306
      %v1308 = vpop.f32.mrb[0].mxu0
      %v1309 = vpop.f32.mrb[0].mxu0
      %v1310 = vadd.f32 %v986, %v1309
      %v1311 = vpop.f32.mrb[0].mxu0
      %1312 = vmatprep.mubr.bf16.mxu0 0
      %1313 = vmatmul.mubr.bf16.gmra.mrb[0].mxu0 %v1164
      %v1314 = vpop.f32.mrb[0].mxu0
      %v1315 = vadd.f32 %v991, %v1314
      %v1316 = vpop.f32.mrb[0].mxu0
      %v1317 = vpop.f32.mrb[0].mxu0
      %v1318 = vadd.f32 %v994, %v1317
      %v1319 = vpop.f32.mrb[0].mxu0
      %1320 = vmatprep.mubr.bf16.mxu0 0
      %1321 = vmatmul.mubr.bf16.gmra.mrb[0].mxu0 %v1167
      %v1322 = vpop.f32.mrb[0].mxu0
      %v1323 = vadd.f32 %v999, %v1322
      %v1324 = vpop.f32.mrb[0].mxu0
      %v1325 = vpop.f32.mrb[0].mxu0
      %v1326 = vadd.f32 %v1002, %v1325
      %v1327 = vpop.f32.mrb[0].mxu0
      %1328 = vmatprep.mubr.bf16.mxu0 0
      %1329 = vmatmul.mubr.bf16.gmra.mrb[0].mxu0 %v1170
      %v1330 = vpop.f32.mrb[0].mxu0
      %v1331 = vadd.f32 %v1007, %v1330
      %v1332 = vpop.f32.mrb[0].mxu0
      %v1333 = vpop.f32.mrb[0].mxu0
      %v1334 = vadd.f32 %v1010, %v1333
      %v1335 = vpop.f32.mrb[0].mxu0
      %1336 = vmatprep.mubr.bf16.mxu0 0
      %1337 = vmatmul.mubr.bf16.gmra.mrb[0].mxu0 %v1173
      %v1338 = vpop.f32.mrb[0].mxu0
      %v1339 = vadd.f32 %v1015, %v1338
      %v1340 = vpop.f32.mrb[0].mxu0
      %v1341 = vpop.f32.mrb[0].mxu0
      %v1342 = vadd.f32 %v1018, %v1341
      %v1343 = vpop.f32.mrb[0].mxu0
      %1344 = vmatprep.mubr.bf16.mxu0 0
      %1345 = vmatmul.mubr.bf16.gmra.mrb[0].mxu0 %v1176
      %v1346 = vpop.f32.mrb[0].mxu0
      %v1347 = vadd.f32 %v1023, %v1346
      %v1348 = vpop.f32.mrb[0].mxu0
      %v1349 = vpop.f32.mrb[0].mxu0
      %v1350 = vadd.f32 %v1026, %v1349
      %v1351 = vpop.f32.mrb[0].mxu0
      %1352 = vmatprep.mubr.bf16.mxu0 0
      %1353 = vmatmul.mubr.bf16.gmra.mrb[0].mxu0 %v1179
      %v1354 = vpop.f32.mrb[0].mxu0
      %v1355 = vadd.f32 %v1031, %v1354
      %v1356 = vpop.f32.mrb[0].mxu0
      %v1357 = vpop.f32.mrb[0].mxu0
      %v1358 = vadd.f32 %v1034, %v1357
      %v1359 = vpop.f32.mrb[0].mxu0
      %1360 = vdwg.mxu0
      %v1361 = vld [vmem:[%s254] sm:$0xe]
      %v1362 = vld [vmem:[%s254 + $0xc] sm:$0xe]
      %v1363 = vld [vmem:[%s254 + $0x18] sm:$0xe]
      %v1364 = vld [vmem:[%s254 + $0x24] sm:$0xe]
      %v1365 = vld [vmem:[%s254 + $0x30] sm:$0xe]
      %v1366 = vld [vmem:[%s254 + $0x3c] sm:$0xe]
      %v1367 = vld [vmem:[%s254 + $0x48] sm:$0xe]
      %v1368 = vld [vmem:[%s254 + $0x54] sm:$0xe]
      %v1369 = vld [vmem:[%s254 + $0x60] sm:$0xe]
      %v1370 = vld [vmem:[%s254 + $0x6c] sm:$0xe]
      %v1371 = vld [vmem:[%s254 + $0x78] sm:$0xe]
      %v1372 = vld [vmem:[%s254 + $0x84] sm:$0xe]
      %v1373 = vld [vmem:[%s254 + $0x90] sm:$0xe]
      %v1374 = vld [vmem:[%s254 + $0x9c] sm:$0xe]
      %v1375 = vld [vmem:[%s254 + $0xa8] sm:$0xe]
      %v1376 = vld [vmem:[%s254 + $0xb4] sm:$0xe]
      %v1377 = vld [vmem:[%s254 + $0xc0] sm:$0xe]
      %v1378 = vld [vmem:[%s254 + $0xcc] sm:$0xe]
      %vm1415 = vcmask 1042432
      %vm1416 = vcmask 1046532
      %vm1417 = vmor %vm1415, %vm1416
      %v1418 = vrot.slane %v1361, 5
      %v1419 = vrot.slane %v1418, 4
      %v1420 = vrot.slane %v256, 5
      %v1421 = vsel %vm1417, %v1419, %v1420
      %v1422 = vrot.slane %v1420, 4
      %v1423 = vrot.slane %v292, 5
      %v1424 = vsel %vm1417, %v1422, %v1423
      %v1425 = vrot.slane %v1362, 5
      %v1426 = vrot.slane %v1425, 4
      %v1427 = vrot.slane %v258, 5
      %v1428 = vsel %vm1417, %v1426, %v1427
      %v1429 = vrot.slane %v1427, 4
      %v1430 = vrot.slane %v293, 5
      %v1431 = vsel %vm1417, %v1429, %v1430
      %v1432 = vrot.slane %v1363, 5
      %v1433 = vrot.slane %v1432, 4
      %v1434 = vrot.slane %v260, 5
      %v1435 = vsel %vm1417, %v1433, %v1434
      %v1436 = vrot.slane %v1434, 4
      %v1437 = vrot.slane %v294, 5
      %v1438 = vsel %vm1417, %v1436, %v1437
      %v1439 = vrot.slane %v1364, 5
      %v1440 = vrot.slane %v1439, 4
      %v1441 = vrot.slane %v262, 5
      %v1442 = vsel %vm1417, %v1440, %v1441
      %v1443 = vrot.slane %v1441, 4
      %v1444 = vrot.slane %v295, 5
      %v1445 = vsel %vm1417, %v1443, %v1444
      %v1446 = vrot.slane %v1365, 5
      %v1447 = vrot.slane %v1446, 4
      %v1448 = vrot.slane %v264, 5
      %v1449 = vsel %vm1417, %v1447, %v1448
      %v1450 = vrot.slane %v1448, 4
      %v1451 = vrot.slane %v296, 5
      %v1452 = vsel %vm1417, %v1450, %v1451
      %v1453 = vrot.slane %v1366, 5
      %v1454 = vrot.slane %v1453, 4
      %v1455 = vrot.slane %v266, 5
      %v1456 = vsel %vm1417, %v1454, %v1455
      %v1457 = vrot.slane %v1455, 4
      %v1458 = vrot.slane %v297, 5
      %v1459 = vsel %vm1417, %v1457, %v1458
      %v1460 = vrot.slane %v1367, 5
      %v1461 = vrot.slane %v1460, 4
      %v1462 = vrot.slane %v268, 5
      %v1463 = vsel %vm1417, %v1461, %v1462
      %v1464 = vrot.slane %v1462, 4
      %v1465 = vrot.slane %v298, 5
      %v1466 = vsel %vm1417, %v1464, %v1465
      %v1467 = vrot.slane %v1368, 5
      %v1468 = vrot.slane %v1467, 4
      %v1469 = vrot.slane %v270, 5
      %v1470 = vsel %vm1417, %v1468, %v1469
      %v1471 = vrot.slane %v1469, 4
      %v1472 = vrot.slane %v299, 5
      %v1473 = vsel %vm1417, %v1471, %v1472
      %v1474 = vrot.slane %v1369, 5
      %v1475 = vrot.slane %v1474, 4
      %v1476 = vrot.slane %v272, 5
      %v1477 = vsel %vm1417, %v1475, %v1476
      %v1478 = vrot.slane %v1476, 4
      %v1479 = vrot.slane %v300, 5
      %v1480 = vsel %vm1417, %v1478, %v1479
      %v1481 = vrot.slane %v1370, 5
      %v1482 = vrot.slane %v1481, 4
      %v1483 = vrot.slane %v274, 5
      %v1484 = vsel %vm1417, %v1482, %v1483
      %v1485 = vrot.slane %v1483, 4
      %v1486 = vrot.slane %v301, 5
      %v1487 = vsel %vm1417, %v1485, %v1486
      %v1488 = vrot.slane %v1371, 5
      %v1489 = vrot.slane %v1488, 4
      %v1490 = vrot.slane %v276, 5
      %v1491 = vsel %vm1417, %v1489, %v1490
      %v1492 = vrot.slane %v1490, 4
      %v1493 = vrot.slane %v302, 5
      %v1494 = vsel %vm1417, %v1492, %v1493
      %v1495 = vrot.slane %v1372, 5
      %v1496 = vrot.slane %v1495, 4
      %v1497 = vrot.slane %v278, 5
      %v1498 = vsel %vm1417, %v1496, %v1497
      %v1499 = vrot.slane %v1497, 4
      %v1500 = vrot.slane %v303, 5
      %v1501 = vsel %vm1417, %v1499, %v1500
      %v1502 = vrot.slane %v1373, 5
      %v1503 = vrot.slane %v1502, 4
      %v1504 = vrot.slane %v280, 5
      %v1505 = vsel %vm1417, %v1503, %v1504
      %v1506 = vrot.slane %v1504, 4
      %v1507 = vrot.slane %v304, 5
      %v1508 = vsel %vm1417, %v1506, %v1507
      %v1509 = vrot.slane %v1374, 5
      %v1510 = vrot.slane %v1509, 4
      %v1511 = vrot.slane %v282, 5
      %v1512 = vsel %vm1417, %v1510, %v1511
      %v1513 = vrot.slane %v1511, 4
      %v1514 = vrot.slane %v305, 5
      %v1515 = vsel %vm1417, %v1513, %v1514
      %v1516 = vrot.slane %v1375, 5
      %v1517 = vrot.slane %v1516, 4
      %v1518 = vrot.slane %v284, 5
      %v1519 = vsel %vm1417, %v1517, %v1518
      %v1520 = vrot.slane %v1518, 4
      %v1521 = vrot.slane %v306, 5
      %v1522 = vsel %vm1417, %v1520, %v1521
      %v1523 = vrot.slane %v1376, 5
      %v1524 = vrot.slane %v1523, 4
      %v1525 = vrot.slane %v286, 5
      %v1526 = vsel %vm1417, %v1524, %v1525
      %v1527 = vrot.slane %v1525, 4
      %v1528 = vrot.slane %v307, 5
      %v1529 = vsel %vm1417, %v1527, %v1528
      %v1530 = vrot.slane %v1377, 5
      %v1531 = vrot.slane %v1530, 4
      %v1532 = vrot.slane %v288, 5
      %v1533 = vsel %vm1417, %v1531, %v1532
      %v1534 = vrot.slane %v1532, 4
      %v1535 = vrot.slane %v308, 5
      %v1536 = vsel %vm1417, %v1534, %v1535
      %v1537 = vrot.slane %v1378, 5
      %v1538 = vrot.slane %v1537, 4
      %v1539 = vrot.slane %v290, 5
      %v1540 = vsel %vm1417, %v1538, %v1539
      %v1541 = vrot.slane %v1539, 4
      %v1542 = vrot.slane %v309, 5
      %v1543 = vsel %vm1417, %v1541, %v1542
      %s1544 = scalar_lea.vmem %s1, 4
      %v1545 = vld [vmem:[%s1544] sm:$0x3]
      %v1546 = vunpack.c.l.b16 %v1421
      %v1547 = vunpack.c.l.b16 %v1424
      %v1548 = vunpack.c.l.b16 %v1428
      %v1549 = vunpack.c.l.b16 %v1431
      %v1550 = vunpack.c.l.b16 %v1435
      %v1551 = vunpack.c.l.b16 %v1438
      %v1552 = vunpack.c.l.b16 %v1442
      %v1553 = vunpack.c.l.b16 %v1445
      %v1554 = vunpack.c.l.b16 %v1449
      %v1555 = vunpack.c.l.b16 %v1452
      %v1556 = vunpack.c.l.b16 %v1456
      %v1557 = vunpack.c.l.b16 %v1459
      %v1558 = vunpack.c.l.b16 %v1463
      %v1559 = vunpack.c.l.b16 %v1466
      %v1560 = vunpack.c.l.b16 %v1470
      %v1561 = vunpack.c.l.b16 %v1473
      %v1562 = vunpack.c.l.b16 %v1477
      %v1563 = vunpack.c.l.b16 %v1480
      %v1564 = vunpack.c.l.b16 %v1484
      %v1565 = vunpack.c.l.b16 %v1487
      %v1566 = vunpack.c.l.b16 %v1491
      %v1567 = vunpack.c.l.b16 %v1494
      %v1568 = vunpack.c.l.b16 %v1498
      %v1569 = vunpack.c.l.b16 %v1501
      %v1570 = vunpack.c.l.b16 %v1505
      %v1571 = vunpack.c.l.b16 %v1508
      %v1572 = vunpack.c.l.b16 %v1512
      %v1573 = vunpack.c.l.b16 %v1515
      %v1574 = vunpack.c.l.b16 %v1519
      %v1575 = vunpack.c.l.b16 %v1522
      %v1576 = vunpack.c.l.b16 %v1526
      %v1577 = vunpack.c.l.b16 %v1529
      %v1578 = vunpack.c.l.b16 %v1533
      %v1579 = vunpack.c.l.b16 %v1536
      %v1580 = vunpack.c.l.b16 %v1540
      %v1581 = vunpack.c.l.b16 %v1543
      %v1582 = vpack.c.b16 %v1547, %v1546
      %v1583 = vpack.c.b16 %v1549, %v1548
      %v1584 = vpack.c.b16 %v1551, %v1550
      %v1585 = vpack.c.b16 %v1553, %v1552
      %v1586 = vpack.c.b16 %v1555, %v1554
      %v1587 = vpack.c.b16 %v1557, %v1556
      %v1588 = vpack.c.b16 %v1559, %v1558
      %v1589 = vpack.c.b16 %v1561, %v1560
      %v1590 = vpack.c.b16 %v1563, %v1562
      %v1591 = vpack.c.b16 %v1565, %v1564
      %v1592 = vpack.c.b16 %v1567, %v1566
      %v1593 = vpack.c.b16 %v1569, %v1568
      %v1594 = vpack.c.b16 %v1571, %v1570
      %v1595 = vpack.c.b16 %v1573, %v1572
      %v1596 = vpack.c.b16 %v1575, %v1574
      %v1597 = vpack.c.b16 %v1577, %v1576
      %v1598 = vpack.c.b16 %v1579, %v1578
      %v1599 = vpack.c.b16 %v1581, %v1580
      %v1601 = vsel %vm801, %v1582, 0
      %v1604 = vsel %vm801, %v1583, 0
      %v1607 = vsel %vm801, %v1584, 0
      %v1610 = vsel %vm801, %v1585, 0
      %v1613 = vsel %vm801, %v1586, 0
      %v1616 = vsel %vm801, %v1587, 0
      %v1619 = vsel %vm801, %v1588, 0
      %v1622 = vsel %vm801, %v1589, 0
      %v1625 = vsel %vm801, %v1590, 0
      %v1628 = vsel %vm801, %v1591, 0
      %v1631 = vsel %vm801, %v1592, 0
      %v1634 = vsel %vm801, %v1593, 0
      %v1637 = vsel %vm801, %v1594, 0
      %v1640 = vsel %vm801, %v1595, 0
      %v1643 = vsel %vm801, %v1596, 0
      %v1646 = vsel %vm801, %v1597, 0
      %v1649 = vsel %vm801, %v1598, 0
      %v1652 = vsel %vm801, %v1599, 0
      %v1655 = vsel %vm856, %v1545, 0
      %1657 = vmatprep.subr.bf16.mxu0 0
      %1658 = vmatpush1.bf16.msra.mxu0 %v1655
      %1659 = vmatprep.subr.bf16.mxu0 0
      %1660 = vmatpush1.bf16.msra.mxu0 0
      %1661 = vmatprep.subr.bf16.mxu0 0
      %1662 = vmatpush1.bf16.msra.mxu0 0
      %1663 = vmatprep.subr.bf16.mxu0 0
      %1664 = vmatpush1.bf16.msra.mxu0 0
      %1665 = vmatprep.subr.bf16.mxu0 0
      %1666 = vmatpush1.bf16.msra.mxu0 0
      %1667 = vmatprep.subr.bf16.mxu0 0
      %1668 = vmatpush1.bf16.msra.mxu0 0
      %1669 = vmatprep.subr.bf16.mxu0 0
      %1670 = vmatpush1.bf16.msra.mxu0 0
      %1671 = vmatprep.subr.bf16.mxu0 0
      %1672 = vmatpush1.bf16.msra.mxu0 0
      %1673 = vmatprep.subr.bf16.mxu0 0
      %1674 = vmatpush1.bf16.msra.mxu0 0
      %1675 = vmatprep.subr.bf16.mxu0 0
      %1676 = vmatpush1.bf16.msra.mxu0 0
      %1677 = vmatprep.subr.bf16.mxu0 0
      %1678 = vmatpush1.bf16.msra.mxu0 0
      %1679 = vmatprep.subr.bf16.mxu0 0
      %1680 = vmatpush1.bf16.msra.mxu0 0
      %1681 = vmatprep.subr.bf16.mxu0 0
      %1682 = vmatpush1.bf16.msra.mxu0 0
      %1683 = vmatprep.subr.bf16.mxu0 0
      %1684 = vmatpush1.bf16.msra.mxu0 0
      %1685 = vmatprep.subr.bf16.mxu0 0
      %1686 = vmatpush1.bf16.msra.mxu0 0
      %1687 = vmatprep.subr.bf16.mxu0 0
      %1688 = vmatpush1.bf16.msra.mxu0 0
      %1689 = vmatprep.mubr.bf16.mxu0 0
      %1690 = vmatmul.mubr.bf16.gmra.mrb[0].mxu0 %v1601
      %v1691 = vpop.f32.mrb[0].mxu0
      %v1692 = vadd.f32 0.0, %v1691
      %v1693 = vpop.f32.mrb[0].mxu0
      %v1694 = vpop.f32.mrb[0].mxu0
      %v1695 = vadd.f32 0.0, %v1694
      %v1696 = vpop.f32.mrb[0].mxu0
      %1697 = vmatprep.mubr.bf16.mxu0 0
      %1698 = vmatmul.mubr.bf16.gmra.mrb[0].mxu0 %v1604
      %v1699 = vpop.f32.mrb[0].mxu0
      %v1700 = vadd.f32 0.0, %v1699
      %v1701 = vpop.f32.mrb[0].mxu0
      %v1702 = vpop.f32.mrb[0].mxu0
      %v1703 = vadd.f32 0.0, %v1702
      %v1704 = vpop.f32.mrb[0].mxu0
      %1705 = vmatprep.mubr.bf16.mxu0 0
      %1706 = vmatmul.mubr.bf16.gmra.mrb[0].mxu0 %v1607
      %v1707 = vpop.f32.mrb[0].mxu0
      %v1708 = vadd.f32 0.0, %v1707
      %v1709 = vpop.f32.mrb[0].mxu0
      %v1710 = vpop.f32.mrb[0].mxu0
      %v1711 = vadd.f32 0.0, %v1710
      %v1712 = vpop.f32.mrb[0].mxu0
      %1713 = vmatprep.mubr.bf16.mxu0 0
      %1714 = vmatmul.mubr.bf16.gmra.mrb[0].mxu0 %v1610
      %v1715 = vpop.f32.mrb[0].mxu0
      %v1716 = vadd.f32 0.0, %v1715
      %v1717 = vpop.f32.mrb[0].mxu0
      %v1718 = vpop.f32.mrb[0].mxu0
      %v1719 = vadd.f32 0.0, %v1718
      %v1720 = vpop.f32.mrb[0].mxu0
      %1721 = vmatprep.mubr.bf16.mxu0 0
      %1722 = vmatmul.mubr.bf16.gmra.mrb[0].mxu0 %v1613
      %v1723 = vpop.f32.mrb[0].mxu0
      %v1724 = vadd.f32 0.0, %v1723
      %v1725 = vpop.f32.mrb[0].mxu0
      %v1726 = vpop.f32.mrb[0].mxu0
      %v1727 = vadd.f32 0.0, %v1726
      %v1728 = vpop.f32.mrb[0].mxu0
      %1729 = vmatprep.mubr.bf16.mxu0 0
      %1730 = vmatmul.mubr.bf16.gmra.mrb[0].mxu0 %v1616
      %v1731 = vpop.f32.mrb[0].mxu0
      %v1732 = vadd.f32 0.0, %v1731
      %v1733 = vpop.f32.mrb[0].mxu0
      %v1734 = vpop.f32.mrb[0].mxu0
      %v1735 = vadd.f32 0.0, %v1734
      %v1736 = vpop.f32.mrb[0].mxu0
      %1737 = vmatprep.mubr.bf16.mxu0 0
      %1738 = vmatmul.mubr.bf16.gmra.mrb[0].mxu0 %v1619
      %v1739 = vpop.f32.mrb[0].mxu0
      %v1740 = vadd.f32 0.0, %v1739
      %v1741 = vpop.f32.mrb[0].mxu0
      %v1742 = vpop.f32.mrb[0].mxu0
      %v1743 = vadd.f32 0.0, %v1742
      %v1744 = vpop.f32.mrb[0].mxu0
      %1745 = vmatprep.mubr.bf16.mxu0 0
      %1746 = vmatmul.mubr.bf16.gmra.mrb[0].mxu0 %v1622
      %v1747 = vpop.f32.mrb[0].mxu0
      %v1748 = vadd.f32 0.0, %v1747
      %v1749 = vpop.f32.mrb[0].mxu0
      %v1750 = vpop.f32.mrb[0].mxu0
      %v1751 = vadd.f32 0.0, %v1750
      %v1752 = vpop.f32.mrb[0].mxu0
      %1753 = vmatprep.mubr.bf16.mxu0 0
      %1754 = vmatmul.mubr.bf16.gmra.mrb[0].mxu0 %v1625
      %v1755 = vpop.f32.mrb[0].mxu0
      %v1756 = vadd.f32 0.0, %v1755
      %v1757 = vpop.f32.mrb[0].mxu0
      %v1758 = vpop.f32.mrb[0].mxu0
      %v1759 = vadd.f32 0.0, %v1758
      %v1760 = vpop.f32.mrb[0].mxu0
      %1761 = vmatprep.mubr.bf16.mxu0 0
      %1762 = vmatmul.mubr.bf16.gmra.mrb[0].mxu0 %v1628
      %v1763 = vpop.f32.mrb[0].mxu0
      %v1764 = vadd.f32 0.0, %v1763
      %v1765 = vpop.f32.mrb[0].mxu0
      %v1766 = vpop.f32.mrb[0].mxu0
      %v1767 = vadd.f32 0.0, %v1766
      %v1768 = vpop.f32.mrb[0].mxu0
      %1769 = vmatprep.mubr.bf16.mxu0 0
      %1770 = vmatmul.mubr.bf16.gmra.mrb[0].mxu0 %v1631
      %v1771 = vpop.f32.mrb[0].mxu0
      %v1772 = vadd.f32 0.0, %v1771
      %v1773 = vpop.f32.mrb[0].mxu0
      %v1774 = vpop.f32.mrb[0].mxu0
      %v1775 = vadd.f32 0.0, %v1774
      %v1776 = vpop.f32.mrb[0].mxu0
      %1777 = vmatprep.mubr.bf16.mxu0 0
      %1778 = vmatmul.mubr.bf16.gmra.mrb[0].mxu0 %v1634
      %v1779 = vpop.f32.mrb[0].mxu0
      %v1780 = vadd.f32 0.0, %v1779
      %v1781 = vpop.f32.mrb[0].mxu0
      %v1782 = vpop.f32.mrb[0].mxu0
      %v1783 = vadd.f32 0.0, %v1782
      %v1784 = vpop.f32.mrb[0].mxu0
      %1785 = vmatprep.mubr.bf16.mxu0 0
      %1786 = vmatmul.mubr.bf16.gmra.mrb[0].mxu0 %v1637
      %v1787 = vpop.f32.mrb[0].mxu0
      %v1788 = vadd.f32 0.0, %v1787
      %v1789 = vpop.f32.mrb[0].mxu0
      %v1790 = vpop.f32.mrb[0].mxu0
      %v1791 = vadd.f32 0.0, %v1790
      %v1792 = vpop.f32.mrb[0].mxu0
      %1793 = vmatprep.mubr.bf16.mxu0 0
      %1794 = vmatmul.mubr.bf16.gmra.mrb[0].mxu0 %v1640
      %v1795 = vpop.f32.mrb[0].mxu0
      %v1796 = vadd.f32 0.0, %v1795
      %v1797 = vpop.f32.mrb[0].mxu0
      %v1798 = vpop.f32.mrb[0].mxu0
      %v1799 = vadd.f32 0.0, %v1798
      %v1800 = vpop.f32.mrb[0].mxu0
      %1801 = vmatprep.mubr.bf16.mxu0 0
      %1802 = vmatmul.mubr.bf16.gmra.mrb[0].mxu0 %v1643
      %v1803 = vpop.f32.mrb[0].mxu0
      %v1804 = vadd.f32 0.0, %v1803
      %v1805 = vpop.f32.mrb[0].mxu0
      %v1806 = vpop.f32.mrb[0].mxu0
      %v1807 = vadd.f32 0.0, %v1806
      %v1808 = vpop.f32.mrb[0].mxu0
      %1809 = vmatprep.mubr.bf16.mxu0 0
      %1810 = vmatmul.mubr.bf16.gmra.mrb[0].mxu0 %v1646
      %v1811 = vpop.f32.mrb[0].mxu0
      %v1812 = vadd.f32 0.0, %v1811
      %v1813 = vpop.f32.mrb[0].mxu0
      %v1814 = vpop.f32.mrb[0].mxu0
      %v1815 = vadd.f32 0.0, %v1814
      %v1816 = vpop.f32.mrb[0].mxu0
      %1817 = vmatprep.mubr.bf16.mxu0 0
      %1818 = vmatmul.mubr.bf16.gmra.mrb[0].mxu0 %v1649
      %v1819 = vpop.f32.mrb[0].mxu0
      %v1820 = vadd.f32 0.0, %v1819
      %v1821 = vpop.f32.mrb[0].mxu0
      %v1822 = vpop.f32.mrb[0].mxu0
      %v1823 = vadd.f32 0.0, %v1822
      %v1824 = vpop.f32.mrb[0].mxu0
      %1825 = vmatprep.mubr.bf16.mxu0 0
      %1826 = vmatmul.mubr.bf16.gmra.mrb[0].mxu0 %v1652
      %v1827 = vpop.f32.mrb[0].mxu0
      %v1828 = vadd.f32 0.0, %v1827
      %v1829 = vpop.f32.mrb[0].mxu0
      %v1830 = vpop.f32.mrb[0].mxu0
      %v1831 = vadd.f32 0.0, %v1830
      %v1832 = vpop.f32.mrb[0].mxu0
      %1833 = vdwg.mxu0
      %v1834 = vadd.f32 %v1219, %v1692
      %v1835 = vadd.f32 %v1222, %v1695
      %v1836 = vadd.f32 %v1227, %v1700
      %v1837 = vadd.f32 %v1230, %v1703
      %v1838 = vadd.f32 %v1235, %v1708
      %v1839 = vadd.f32 %v1238, %v1711
      %v1840 = vadd.f32 %v1243, %v1716
      %v1841 = vadd.f32 %v1246, %v1719
      %v1842 = vadd.f32 %v1251, %v1724
      %v1843 = vadd.f32 %v1254, %v1727
      %v1844 = vadd.f32 %v1259, %v1732
      %v1845 = vadd.f32 %v1262, %v1735
      %v1846 = vadd.f32 %v1267, %v1740
      %v1847 = vadd.f32 %v1270, %v1743
      %v1848 = vadd.f32 %v1275, %v1748
      %v1849 = vadd.f32 %v1278, %v1751
      %v1850 = vadd.f32 %v1283, %v1756
      %v1851 = vadd.f32 %v1286, %v1759
      %v1852 = vadd.f32 %v1291, %v1764
      %v1853 = vadd.f32 %v1294, %v1767
      %v1854 = vadd.f32 %v1299, %v1772
      %v1855 = vadd.f32 %v1302, %v1775
      %v1856 = vadd.f32 %v1307, %v1780
      %v1857 = vadd.f32 %v1310, %v1783
      %v1858 = vadd.f32 %v1315, %v1788
      %v1859 = vadd.f32 %v1318, %v1791
      %v1860 = vadd.f32 %v1323, %v1796
      %v1861 = vadd.f32 %v1326, %v1799
      %v1862 = vadd.f32 %v1331, %v1804
      %v1863 = vadd.f32 %v1334, %v1807
      %v1864 = vadd.f32 %v1339, %v1812
      %v1865 = vadd.f32 %v1342, %v1815
      %v1866 = vadd.f32 %v1347, %v1820
      %v1867 = vadd.f32 %v1350, %v1823
      %v1868 = vadd.f32 %v1355, %v1828
      %v1869 = vadd.f32 %v1358, %v1831
      %s1870 = sadd.s32 %s251, 1
      %s1871 = smul.u32 %s1870, 3
      %s1872 = smul.addr %s1871, 4
      %s1873 = scalar_lea.vmem %s238, %s1872
      %v1874 = vld [vmem:[%s1873] sm:$0xf]
      %v1875 = vld [vmem:[%s1873 + $0x4] sm:$0xf]
      %v1876 = vld [vmem:[%s1873 + $0xc] sm:$0xf]
      %v1877 = vld [vmem:[%s1873 + $0x10] sm:$0xf]
      %v1878 = vld [vmem:[%s1873 + $0x18] sm:$0xf]
      %v1879 = vld [vmem:[%s1873 + $0x1c] sm:$0xf]
      %v1880 = vld [vmem:[%s1873 + $0x24] sm:$0xf]
      %v1881 = vld [vmem:[%s1873 + $0x28] sm:$0xf]
      %v1882 = vld [vmem:[%s1873 + $0x30] sm:$0xf]
      %v1883 = vld [vmem:[%s1873 + $0x34] sm:$0xf]
      %v1884 = vld [vmem:[%s1873 + $0x3c] sm:$0xf]
      %v1885 = vld [vmem:[%s1873 + $0x40] sm:$0xf]
      %v1886 = vld [vmem:[%s1873 + $0x48] sm:$0xf]
      %v1887 = vld [vmem:[%s1873 + $0x4c] sm:$0xf]
      %v1888 = vld [vmem:[%s1873 + $0x54] sm:$0xf]
      %v1889 = vld [vmem:[%s1873 + $0x58] sm:$0xf]
      %v1890 = vld [vmem:[%s1873 + $0x60] sm:$0xf]
      %v1891 = vld [vmem:[%s1873 + $0x64] sm:$0xf]
      %v1892 = vld [vmem:[%s1873 + $0x6c] sm:$0xf]
      %v1893 = vld [vmem:[%s1873 + $0x70] sm:$0xf]
      %v1894 = vld [vmem:[%s1873 + $0x78] sm:$0xf]
      %v1895 = vld [vmem:[%s1873 + $0x7c] sm:$0xf]
      %v1896 = vld [vmem:[%s1873 + $0x84] sm:$0xf]
      %v1897 = vld [vmem:[%s1873 + $0x88] sm:$0xf]
      %v1898 = vld [vmem:[%s1873 + $0x90] sm:$0xf]
      %v1899 = vld [vmem:[%s1873 + $0x94] sm:$0xf]
      %v1900 = vld [vmem:[%s1873 + $0x9c] sm:$0xf]
      %v1901 = vld [vmem:[%s1873 + $0xa0] sm:$0xf]
      %v1902 = vld [vmem:[%s1873 + $0xa8] sm:$0xf]
      %v1903 = vld [vmem:[%s1873 + $0xac] sm:$0xf]
      %v1904 = vld [vmem:[%s1873 + $0xb4] sm:$0xf]
      %v1905 = vld [vmem:[%s1873 + $0xb8] sm:$0xf]
      %v1906 = vld [vmem:[%s1873 + $0xc0] sm:$0xf]
      %v1907 = vld [vmem:[%s1873 + $0xc4] sm:$0xf]
      %v1908 = vld [vmem:[%s1873 + $0xcc] sm:$0xf]
      %v1909 = vld [vmem:[%s1873 + $0xd0] sm:$0xf]
      %s1910 = scalar_lea.vmem %s1, 6
      %v1911 = vld [vmem:[%s1910] sm:$0x3]
      %v1948 = vunpack.c.l.b16 %v1874
      %v1949 = vunpack.c.l.b16 %v1875
      %v1950 = vunpack.c.l.b16 %v1876
      %v1951 = vunpack.c.l.b16 %v1877
      %v1952 = vunpack.c.l.b16 %v1878
      %v1953 = vunpack.c.l.b16 %v1879
      %v1954 = vunpack.c.l.b16 %v1880
      %v1955 = vunpack.c.l.b16 %v1881
      %v1956 = vunpack.c.l.b16 %v1882
      %v1957 = vunpack.c.l.b16 %v1883
      %v1958 = vunpack.c.l.b16 %v1884
      %v1959 = vunpack.c.l.b16 %v1885
      %v1960 = vunpack.c.l.b16 %v1886
      %v1961 = vunpack.c.l.b16 %v1887
      %v1962 = vunpack.c.l.b16 %v1888
      %v1963 = vunpack.c.l.b16 %v1889
      %v1964 = vunpack.c.l.b16 %v1890
      %v1965 = vunpack.c.l.b16 %v1891
      %v1966 = vunpack.c.l.b16 %v1892
      %v1967 = vunpack.c.l.b16 %v1893
      %v1968 = vunpack.c.l.b16 %v1894
      %v1969 = vunpack.c.l.b16 %v1895
      %v1970 = vunpack.c.l.b16 %v1896
      %v1971 = vunpack.c.l.b16 %v1897
      %v1972 = vunpack.c.l.b16 %v1898
      %v1973 = vunpack.c.l.b16 %v1899
      %v1974 = vunpack.c.l.b16 %v1900
      %v1975 = vunpack.c.l.b16 %v1901
      %v1976 = vunpack.c.l.b16 %v1902
      %v1977 = vunpack.c.l.b16 %v1903
      %v1978 = vunpack.c.l.b16 %v1904
      %v1979 = vunpack.c.l.b16 %v1905
      %v1980 = vunpack.c.l.b16 %v1906
      %v1981 = vunpack.c.l.b16 %v1907
      %v1982 = vunpack.c.l.b16 %v1908
      %v1983 = vunpack.c.l.b16 %v1909
      %v1984 = vpack.c.b16 %v1949, %v1948
      %v1985 = vpack.c.b16 %v1951, %v1950
      %v1986 = vpack.c.b16 %v1953, %v1952
      %v1987 = vpack.c.b16 %v1955, %v1954
      %v1988 = vpack.c.b16 %v1957, %v1956
      %v1989 = vpack.c.b16 %v1959, %v1958
      %v1990 = vpack.c.b16 %v1961, %v1960
      %v1991 = vpack.c.b16 %v1963, %v1962
      %v1992 = vpack.c.b16 %v1965, %v1964
      %v1993 = vpack.c.b16 %v1967, %v1966
      %v1994 = vpack.c.b16 %v1969, %v1968
      %v1995 = vpack.c.b16 %v1971, %v1970
      %v1996 = vpack.c.b16 %v1973, %v1972
      %v1997 = vpack.c.b16 %v1975, %v1974
      %v1998 = vpack.c.b16 %v1977, %v1976
      %v1999 = vpack.c.b16 %v1979, %v1978
      %v2000 = vpack.c.b16 %v1981, %v1980
      %v2001 = vpack.c.b16 %v1983, %v1982
      %v2003 = vsel %vm801, %v1984, 0
      %v2006 = vsel %vm801, %v1985, 0
      %v2009 = vsel %vm801, %v1986, 0
      %v2012 = vsel %vm801, %v1987, 0
      %v2015 = vsel %vm801, %v1988, 0
      %v2018 = vsel %vm801, %v1989, 0
      %v2021 = vsel %vm801, %v1990, 0
      %v2024 = vsel %vm801, %v1991, 0
      %v2027 = vsel %vm801, %v1992, 0
      %v2030 = vsel %vm801, %v1993, 0
      %v2033 = vsel %vm801, %v1994, 0
      %v2036 = vsel %vm801, %v1995, 0
      %v2039 = vsel %vm801, %v1996, 0
      %v2042 = vsel %vm801, %v1997, 0
      %v2045 = vsel %vm801, %v1998, 0
      %v2048 = vsel %vm801, %v1999, 0
      %v2051 = vsel %vm801, %v2000, 0
      %v2054 = vsel %vm801, %v2001, 0
      %v2057 = vsel %vm856, %v1911, 0
      %2059 = vmatprep.subr.bf16.mxu0 0
      %2060 = vmatpush1.bf16.msra.mxu0 %v2057
      %2061 = vmatprep.subr.bf16.mxu0 0
      %2062 = vmatpush1.bf16.msra.mxu0 0
      %2063 = vmatprep.subr.bf16.mxu0 0
      %2064 = vmatpush1.bf16.msra.mxu0 0
      %2065 = vmatprep.subr.bf16.mxu0 0
      %2066 = vmatpush1.bf16.msra.mxu0 0
      %2067 = vmatprep.subr.bf16.mxu0 0
      %2068 = vmatpush1.bf16.msra.mxu0 0
      %2069 = vmatprep.subr.bf16.mxu0 0
      %2070 = vmatpush1.bf16.msra.mxu0 0
      %2071 = vmatprep.subr.bf16.mxu0 0
      %2072 = vmatpush1.bf16.msra.mxu0 0
      %2073 = vmatprep.subr.bf16.mxu0 0
      %2074 = vmatpush1.bf16.msra.mxu0 0
      %2075 = vmatprep.subr.bf16.mxu0 0
      %2076 = vmatpush1.bf16.msra.mxu0 0
      %2077 = vmatprep.subr.bf16.mxu0 0
      %2078 = vmatpush1.bf16.msra.mxu0 0
      %2079 = vmatprep.subr.bf16.mxu0 0
      %2080 = vmatpush1.bf16.msra.mxu0 0
      %2081 = vmatprep.subr.bf16.mxu0 0
      %2082 = vmatpush1.bf16.msra.mxu0 0
      %2083 = vmatprep.subr.bf16.mxu0 0
      %2084 = vmatpush1.bf16.msra.mxu0 0
      %2085 = vmatprep.subr.bf16.mxu0 0
      %2086 = vmatpush1.bf16.msra.mxu0 0
      %2087 = vmatprep.subr.bf16.mxu0 0
      %2088 = vmatpush1.bf16.msra.mxu0 0
      %2089 = vmatprep.subr.bf16.mxu0 0
      %2090 = vmatpush1.bf16.msra.mxu0 0
      %2091 = vmatprep.mubr.bf16.mxu0 0
      %2092 = vmatmul.mubr.bf16.gmra.mrb[0].mxu0 %v2003
      %v2093 = vpop.f32.mrb[0].mxu0
      %v2094 = vadd.f32 0.0, %v2093
      %v2095 = vpop.f32.mrb[0].mxu0
      %v2096 = vpop.f32.mrb[0].mxu0
      %v2097 = vadd.f32 0.0, %v2096
      %v2098 = vpop.f32.mrb[0].mxu0
      %2099 = vmatprep.mubr.bf16.mxu0 0
      %2100 = vmatmul.mubr.bf16.gmra.mrb[0].mxu0 %v2006
      %v2101 = vpop.f32.mrb[0].mxu0
      %v2102 = vadd.f32 0.0, %v2101
      %v2103 = vpop.f32.mrb[0].mxu0
      %v2104 = vpop.f32.mrb[0].mxu0
      %v2105 = vadd.f32 0.0, %v2104
      %v2106 = vpop.f32.mrb[0].mxu0
      %2107 = vmatprep.mubr.bf16.mxu0 0
      %2108 = vmatmul.mubr.bf16.gmra.mrb[0].mxu0 %v2009
      %v2109 = vpop.f32.mrb[0].mxu0
      %v2110 = vadd.f32 0.0, %v2109
      %v2111 = vpop.f32.mrb[0].mxu0
      %v2112 = vpop.f32.mrb[0].mxu0
      %v2113 = vadd.f32 0.0, %v2112
      %v2114 = vpop.f32.mrb[0].mxu0
      %2115 = vmatprep.mubr.bf16.mxu0 0
      %2116 = vmatmul.mubr.bf16.gmra.mrb[0].mxu0 %v2012
      %v2117 = vpop.f32.mrb[0].mxu0
      %v2118 = vadd.f32 0.0, %v2117
      %v2119 = vpop.f32.mrb[0].mxu0
      %v2120 = vpop.f32.mrb[0].mxu0
      %v2121 = vadd.f32 0.0, %v2120
      %v2122 = vpop.f32.mrb[0].mxu0
      %2123 = vmatprep.mubr.bf16.mxu0 0
      %2124 = vmatmul.mubr.bf16.gmra.mrb[0].mxu0 %v2015
      %v2125 = vpop.f32.mrb[0].mxu0
      %v2126 = vadd.f32 0.0, %v2125
      %v2127 = vpop.f32.mrb[0].mxu0
      %v2128 = vpop.f32.mrb[0].mxu0
      %v2129 = vadd.f32 0.0, %v2128
      %v2130 = vpop.f32.mrb[0].mxu0
      %2131 = vmatprep.mubr.bf16.mxu0 0
      %2132 = vmatmul.mubr.bf16.gmra.mrb[0].mxu0 %v2018
      %v2133 = vpop.f32.mrb[0].mxu0
      %v2134 = vadd.f32 0.0, %v2133
      %v2135 = vpop.f32.mrb[0].mxu0
      %v2136 = vpop.f32.mrb[0].mxu0
      %v2137 = vadd.f32 0.0, %v2136
      %v2138 = vpop.f32.mrb[0].mxu0
      %2139 = vmatprep.mubr.bf16.mxu0 0
      %2140 = vmatmul.mubr.bf16.gmra.mrb[0].mxu0 %v2021
      %v2141 = vpop.f32.mrb[0].mxu0
      %v2142 = vadd.f32 0.0, %v2141
      %v2143 = vpop.f32.mrb[0].mxu0
      %v2144 = vpop.f32.mrb[0].mxu0
      %v2145 = vadd.f32 0.0, %v2144
      %v2146 = vpop.f32.mrb[0].mxu0
      %2147 = vmatprep.mubr.bf16.mxu0 0
      %2148 = vmatmul.mubr.bf16.gmra.mrb[0].mxu0 %v2024
      %v2149 = vpop.f32.mrb[0].mxu0
      %v2150 = vadd.f32 0.0, %v2149
      %v2151 = vpop.f32.mrb[0].mxu0
      %v2152 = vpop.f32.mrb[0].mxu0
      %v2153 = vadd.f32 0.0, %v2152
      %v2154 = vpop.f32.mrb[0].mxu0
      %2155 = vmatprep.mubr.bf16.mxu0 0
      %2156 = vmatmul.mubr.bf16.gmra.mrb[0].mxu0 %v2027
      %v2157 = vpop.f32.mrb[0].mxu0
      %v2158 = vadd.f32 0.0, %v2157
      %v2159 = vpop.f32.mrb[0].mxu0
      %v2160 = vpop.f32.mrb[0].mxu0
      %v2161 = vadd.f32 0.0, %v2160
      %v2162 = vpop.f32.mrb[0].mxu0
      %2163 = vmatprep.mubr.bf16.mxu0 0
      %2164 = vmatmul.mubr.bf16.gmra.mrb[0].mxu0 %v2030
      %v2165 = vpop.f32.mrb[0].mxu0
      %v2166 = vadd.f32 0.0, %v2165
      %v2167 = vpop.f32.mrb[0].mxu0
      %v2168 = vpop.f32.mrb[0].mxu0
      %v2169 = vadd.f32 0.0, %v2168
      %v2170 = vpop.f32.mrb[0].mxu0
      %2171 = vmatprep.mubr.bf16.mxu0 0
      %2172 = vmatmul.mubr.bf16.gmra.mrb[0].mxu0 %v2033
      %v2173 = vpop.f32.mrb[0].mxu0
      %v2174 = vadd.f32 0.0, %v2173
      %v2175 = vpop.f32.mrb[0].mxu0
      %v2176 = vpop.f32.mrb[0].mxu0
      %v2177 = vadd.f32 0.0, %v2176
      %v2178 = vpop.f32.mrb[0].mxu0
      %2179 = vmatprep.mubr.bf16.mxu0 0
      %2180 = vmatmul.mubr.bf16.gmra.mrb[0].mxu0 %v2036
      %v2181 = vpop.f32.mrb[0].mxu0
      %v2182 = vadd.f32 0.0, %v2181
      %v2183 = vpop.f32.mrb[0].mxu0
      %v2184 = vpop.f32.mrb[0].mxu0
      %v2185 = vadd.f32 0.0, %v2184
      %v2186 = vpop.f32.mrb[0].mxu0
      %2187 = vmatprep.mubr.bf16.mxu0 0
      %2188 = vmatmul.mubr.bf16.gmra.mrb[0].mxu0 %v2039
      %v2189 = vpop.f32.mrb[0].mxu0
      %v2190 = vadd.f32 0.0, %v2189
      %v2191 = vpop.f32.mrb[0].mxu0
      %v2192 = vpop.f32.mrb[0].mxu0
      %v2193 = vadd.f32 0.0, %v2192
      %v2194 = vpop.f32.mrb[0].mxu0
      %2195 = vmatprep.mubr.bf16.mxu0 0
      %2196 = vmatmul.mubr.bf16.gmra.mrb[0].mxu0 %v2042
      %v2197 = vpop.f32.mrb[0].mxu0
      %v2198 = vadd.f32 0.0, %v2197
      %v2199 = vpop.f32.mrb[0].mxu0
      %v2200 = vpop.f32.mrb[0].mxu0
      %v2201 = vadd.f32 0.0, %v2200
      %v2202 = vpop.f32.mrb[0].mxu0
      %2203 = vmatprep.mubr.bf16.mxu0 0
      %2204 = vmatmul.mubr.bf16.gmra.mrb[0].mxu0 %v2045
      %v2205 = vpop.f32.mrb[0].mxu0
      %v2206 = vadd.f32 0.0, %v2205
      %v2207 = vpop.f32.mrb[0].mxu0
      %v2208 = vpop.f32.mrb[0].mxu0
      %v2209 = vadd.f32 0.0, %v2208
      %v2210 = vpop.f32.mrb[0].mxu0
      %2211 = vmatprep.mubr.bf16.mxu0 0
      %2212 = vmatmul.mubr.bf16.gmra.mrb[0].mxu0 %v2048
      %v2213 = vpop.f32.mrb[0].mxu0
      %v2214 = vadd.f32 0.0, %v2213
      %v2215 = vpop.f32.mrb[0].mxu0
      %v2216 = vpop.f32.mrb[0].mxu0
      %v2217 = vadd.f32 0.0, %v2216
      %v2218 = vpop.f32.mrb[0].mxu0
      %2219 = vmatprep.mubr.bf16.mxu0 0
      %2220 = vmatmul.mubr.bf16.gmra.mrb[0].mxu0 %v2051
      %v2221 = vpop.f32.mrb[0].mxu0
      %v2222 = vadd.f32 0.0, %v2221
      %v2223 = vpop.f32.mrb[0].mxu0
      %v2224 = vpop.f32.mrb[0].mxu0
      %v2225 = vadd.f32 0.0, %v2224
      %v2226 = vpop.f32.mrb[0].mxu0
      %2227 = vmatprep.mubr.bf16.mxu0 0
      %2228 = vmatmul.mubr.bf16.gmra.mrb[0].mxu0 %v2054
      %v2229 = vpop.f32.mrb[0].mxu0
      %v2230 = vadd.f32 0.0, %v2229
      %v2231 = vpop.f32.mrb[0].mxu0
      %v2232 = vpop.f32.mrb[0].mxu0
      %v2233 = vadd.f32 0.0, %v2232
      %v2234 = vpop.f32.mrb[0].mxu0
      %2235 = vdwg.mxu0
      %v2236 = vadd.f32 %v1834, %v2094
      %v2237 = vadd.f32 %v1835, %v2097
      %v2238 = vadd.f32 %v1836, %v2102
      %v2239 = vadd.f32 %v1837, %v2105
      %v2240 = vadd.f32 %v1838, %v2110
      %v2241 = vadd.f32 %v1839, %v2113
      %v2242 = vadd.f32 %v1840, %v2118
      %v2243 = vadd.f32 %v1841, %v2121
      %v2244 = vadd.f32 %v1842, %v2126
      %v2245 = vadd.f32 %v1843, %v2129
      %v2246 = vadd.f32 %v1844, %v2134
      %v2247 = vadd.f32 %v1845, %v2137
      %v2248 = vadd.f32 %v1846, %v2142
      %v2249 = vadd.f32 %v1847, %v2145
      %v2250 = vadd.f32 %v1848, %v2150
      %v2251 = vadd.f32 %v1849, %v2153
      %v2252 = vadd.f32 %v1850, %v2158
      %v2253 = vadd.f32 %v1851, %v2161
      %v2254 = vadd.f32 %v1852, %v2166
      %v2255 = vadd.f32 %v1853, %v2169
      %v2256 = vadd.f32 %v1854, %v2174
      %v2257 = vadd.f32 %v1855, %v2177
      %v2258 = vadd.f32 %v1856, %v2182
      %v2259 = vadd.f32 %v1857, %v2185
      %v2260 = vadd.f32 %v1858, %v2190
      %v2261 = vadd.f32 %v1859, %v2193
      %v2262 = vadd.f32 %v1860, %v2198
      %v2263 = vadd.f32 %v1861, %v2201
      %v2264 = vadd.f32 %v1862, %v2206
      %v2265 = vadd.f32 %v1863, %v2209
      %v2266 = vadd.f32 %v1864, %v2214
      %v2267 = vadd.f32 %v1865, %v2217
      %v2268 = vadd.f32 %v1866, %v2222
      %v2269 = vadd.f32 %v1867, %v2225
      %v2270 = vadd.f32 %v1868, %v2230
      %v2271 = vadd.f32 %v1869, %v2233
      %v2272 = vld [vmem:[%s1873] sm:$0xf]
      %v2273 = vld [vmem:[%s1873 + $0x4] sm:$0xf]
      %v2274 = vld [vmem:[%s1873 + $0x8] sm:$0x1]
      %v2275 = vld [vmem:[%s1873 + $0xc] sm:$0xf]
      %v2276 = vld [vmem:[%s1873 + $0x10] sm:$0xf]
      %v2277 = vld [vmem:[%s1873 + $0x14] sm:$0x1]
      %v2278 = vld [vmem:[%s1873 + $0x18] sm:$0xf]
      %v2279 = vld [vmem:[%s1873 + $0x1c] sm:$0xf]
      %v2280 = vld [vmem:[%s1873 + $0x20] sm:$0x1]
      %v2281 = vld [vmem:[%s1873 + $0x24] sm:$0xf]
      %v2282 = vld [vmem:[%s1873 + $0x28] sm:$0xf]
      %v2283 = vld [vmem:[%s1873 + $0x2c] sm:$0x1]
      %v2284 = vld [vmem:[%s1873 + $0x30] sm:$0xf]
      %v2285 = vld [vmem:[%s1873 + $0x34] sm:$0xf]
      %v2286 = vld [vmem:[%s1873 + $0x38] sm:$0x1]
      %v2287 = vld [vmem:[%s1873 + $0x3c] sm:$0xf]
      %v2288 = vld [vmem:[%s1873 + $0x40] sm:$0xf]
      %v2289 = vld [vmem:[%s1873 + $0x44] sm:$0x1]
      %v2290 = vld [vmem:[%s1873 + $0x48] sm:$0xf]
      %v2291 = vld [vmem:[%s1873 + $0x4c] sm:$0xf]
      %v2292 = vld [vmem:[%s1873 + $0x50] sm:$0x1]
      %v2293 = vld [vmem:[%s1873 + $0x54] sm:$0xf]
      %v2294 = vld [vmem:[%s1873 + $0x58] sm:$0xf]
      %v2295 = vld [vmem:[%s1873 + $0x5c] sm:$0x1]
      %v2296 = vld [vmem:[%s1873 + $0x60] sm:$0xf]
      %v2297 = vld [vmem:[%s1873 + $0x64] sm:$0xf]
      %v2298 = vld [vmem:[%s1873 + $0x68] sm:$0x1]
      %v2299 = vld [vmem:[%s1873 + $0x6c] sm:$0xf]
      %v2300 = vld [vmem:[%s1873 + $0x70] sm:$0xf]
      %v2301 = vld [vmem:[%s1873 + $0x74] sm:$0x1]
      %v2302 = vld [vmem:[%s1873 + $0x78] sm:$0xf]
      %v2303 = vld [vmem:[%s1873 + $0x7c] sm:$0xf]
      %v2304 = vld [vmem:[%s1873 + $0x80] sm:$0x1]
      %v2305 = vld [vmem:[%s1873 + $0x84] sm:$0xf]
      %v2306 = vld [vmem:[%s1873 + $0x88] sm:$0xf]
      %v2307 = vld [vmem:[%s1873 + $0x8c] sm:$0x1]
      %v2308 = vld [vmem:[%s1873 + $0x90] sm:$0xf]
      %v2309 = vld [vmem:[%s1873 + $0x94] sm:$0xf]
      %v2310 = vld [vmem:[%s1873 + $0x98] sm:$0x1]
      %v2311 = vld [vmem:[%s1873 + $0x9c] sm:$0xf]
      %v2312 = vld [vmem:[%s1873 + $0xa0] sm:$0xf]
      %v2313 = vld [vmem:[%s1873 + $0xa4] sm:$0x1]
      %v2314 = vld [vmem:[%s1873 + $0xa8] sm:$0xf]
      %v2315 = vld [vmem:[%s1873 + $0xac] sm:$0xf]
      %v2316 = vld [vmem:[%s1873 + $0xb0] sm:$0x1]
      %v2317 = vld [vmem:[%s1873 + $0xb4] sm:$0xf]
      %v2318 = vld [vmem:[%s1873 + $0xb8] sm:$0xf]
      %v2319 = vld [vmem:[%s1873 + $0xbc] sm:$0x1]
      %v2320 = vld [vmem:[%s1873 + $0xc0] sm:$0xf]
      %v2321 = vld [vmem:[%s1873 + $0xc4] sm:$0xf]
      %v2322 = vld [vmem:[%s1873 + $0xc8] sm:$0x1]
      %v2323 = vld [vmem:[%s1873 + $0xcc] sm:$0xf]
      %v2324 = vld [vmem:[%s1873 + $0xd0] sm:$0xf]
      %v2325 = vld [vmem:[%s1873 + $0xd4] sm:$0x1]
      %v2327 = vshrl.u32 %v2272, 16
      %v2329 = vrot.slane %v2327, 4
      %v2330 = vshll.u32 %v2272, 16
      %v2332 = vrot.slane %v2330, 5
      %v2333 = vor.u32 %v2329, %v2332
      %v2334 = vrot.slane %v2333, 4
      %v2336 = vshll.u32 %v2273, 16
      %v2338 = vrot.slane %v2336, 5
      %v2339 = vsel %vm312, %v2334, %v2338
      %v2340 = vshrl.u32 %v2273, 16
      %v2342 = vrot.slane %v2340, 4
      %v2343 = vor.u32 %v2342, %v2338
      %v2344 = vrot.slane %v2343, 4
      %v2346 = vshll.u32 %v2274, 16
      %v2348 = vrot.slane %v2346, 5
      %v2349 = vsel %vm312, %v2344, %v2348
      %v2351 = vshrl.u32 %v2275, 16
      %v2353 = vrot.slane %v2351, 4
      %v2354 = vshll.u32 %v2275, 16
      %v2356 = vrot.slane %v2354, 5
      %v2357 = vor.u32 %v2353, %v2356
      %v2358 = vrot.slane %v2357, 4
      %v2360 = vshll.u32 %v2276, 16
      %v2362 = vrot.slane %v2360, 5
      %v2363 = vsel %vm312, %v2358, %v2362
      %v2364 = vshrl.u32 %v2276, 16
      %v2366 = vrot.slane %v2364, 4
      %v2367 = vor.u32 %v2366, %v2362
      %v2368 = vrot.slane %v2367, 4
      %v2370 = vshll.u32 %v2277, 16
      %v2372 = vrot.slane %v2370, 5
      %v2373 = vsel %vm312, %v2368, %v2372
      %v2375 = vshrl.u32 %v2278, 16
      %v2377 = vrot.slane %v2375, 4
      %v2378 = vshll.u32 %v2278, 16
      %v2380 = vrot.slane %v2378, 5
      %v2381 = vor.u32 %v2377, %v2380
      %v2382 = vrot.slane %v2381, 4
      %v2384 = vshll.u32 %v2279, 16
      %v2386 = vrot.slane %v2384, 5
      %v2387 = vsel %vm312, %v2382, %v2386
      %v2388 = vshrl.u32 %v2279, 16
      %v2390 = vrot.slane %v2388, 4
      %v2391 = vor.u32 %v2390, %v2386
      %v2392 = vrot.slane %v2391, 4
      %v2394 = vshll.u32 %v2280, 16
      %v2396 = vrot.slane %v2394, 5
      %v2397 = vsel %vm312, %v2392, %v2396
      %v2399 = vshrl.u32 %v2281, 16
      %v2401 = vrot.slane %v2399, 4
      %v2402 = vshll.u32 %v2281, 16
      %v2404 = vrot.slane %v2402, 5
      %v2405 = vor.u32 %v2401, %v2404
      %v2406 = vrot.slane %v2405, 4
      %v2408 = vshll.u32 %v2282, 16
      %v2410 = vrot.slane %v2408, 5
      %v2411 = vsel %vm312, %v2406, %v2410
      %v2412 = vshrl.u32 %v2282, 16
      %v2414 = vrot.slane %v2412, 4
      %v2415 = vor.u32 %v2414, %v2410
      %v2416 = vrot.slane %v2415, 4
      %v2418 = vshll.u32 %v2283, 16
      %v2420 = vrot.slane %v2418, 5
      %v2421 = vsel %vm312, %v2416, %v2420
      %v2423 = vshrl.u32 %v2284, 16
      %v2425 = vrot.slane %v2423, 4
      %v2426 = vshll.u32 %v2284, 16
      %v2428 = vrot.slane %v2426, 5
      %v2429 = vor.u32 %v2425, %v2428
      %v2430 = vrot.slane %v2429, 4
      %v2432 = vshll.u32 %v2285, 16
      %v2434 = vrot.slane %v2432, 5
      %v2435 = vsel %vm312, %v2430, %v2434
      %v2436 = vshrl.u32 %v2285, 16
      %v2438 = vrot.slane %v2436, 4
      %v2439 = vor.u32 %v2438, %v2434
      %v2440 = vrot.slane %v2439, 4
      %v2442 = vshll.u32 %v2286, 16
      %v2444 = vrot.slane %v2442, 5
      %v2445 = vsel %vm312, %v2440, %v2444
      %v2447 = vshrl.u32 %v2287, 16
      %v2449 = vrot.slane %v2447, 4
      %v2450 = vshll.u32 %v2287, 16
      %v2452 = vrot.slane %v2450, 5
      %v2453 = vor.u32 %v2449, %v2452
      %v2454 = vrot.slane %v2453, 4
      %v2456 = vshll.u32 %v2288, 16
      %v2458 = vrot.slane %v2456, 5
      %v2459 = vsel %vm312, %v2454, %v2458
      %v2460 = vshrl.u32 %v2288, 16
      %v2462 = vrot.slane %v2460, 4
      %v2463 = vor.u32 %v2462, %v2458
      %v2464 = vrot.slane %v2463, 4
      %v2466 = vshll.u32 %v2289, 16
      %v2468 = vrot.slane %v2466, 5
      %v2469 = vsel %vm312, %v2464, %v2468
      %v2471 = vshrl.u32 %v2290, 16
      %v2473 = vrot.slane %v2471, 4
      %v2474 = vshll.u32 %v2290, 16
      %v2476 = vrot.slane %v2474, 5
      %v2477 = vor.u32 %v2473, %v2476
      %v2478 = vrot.slane %v2477, 4
      %v2480 = vshll.u32 %v2291, 16
      %v2482 = vrot.slane %v2480, 5
      %v2483 = vsel %vm312, %v2478, %v2482
      %v2484 = vshrl.u32 %v2291, 16
      %v2486 = vrot.slane %v2484, 4
      %v2487 = vor.u32 %v2486, %v2482
      %v2488 = vrot.slane %v2487, 4
      %v2490 = vshll.u32 %v2292, 16
      %v2492 = vrot.slane %v2490, 5
      %v2493 = vsel %vm312, %v2488, %v2492
      %v2495 = vshrl.u32 %v2293, 16
      %v2497 = vrot.slane %v2495, 4
      %v2498 = vshll.u32 %v2293, 16
      %v2500 = vrot.slane %v2498, 5
      %v2501 = vor.u32 %v2497, %v2500
      %v2502 = vrot.slane %v2501, 4
      %v2504 = vshll.u32 %v2294, 16
      %v2506 = vrot.slane %v2504, 5
      %v2507 = vsel %vm312, %v2502, %v2506
      %v2508 = vshrl.u32 %v2294, 16
      %v2510 = vrot.slane %v2508, 4
      %v2511 = vor.u32 %v2510, %v2506
      %v2512 = vrot.slane %v2511, 4
      %v2514 = vshll.u32 %v2295, 16
      %v2516 = vrot.slane %v2514, 5
      %v2517 = vsel %vm312, %v2512, %v2516
      %v2519 = vshrl.u32 %v2296, 16
      %v2521 = vrot.slane %v2519, 4
      %v2522 = vshll.u32 %v2296, 16
      %v2524 = vrot.slane %v2522, 5
      %v2525 = vor.u32 %v2521, %v2524
      %v2526 = vrot.slane %v2525, 4
      %v2528 = vshll.u32 %v2297, 16
      %v2530 = vrot.slane %v2528, 5
      %v2531 = vsel %vm312, %v2526, %v2530
      %v2532 = vshrl.u32 %v2297, 16
      %v2534 = vrot.slane %v2532, 4
      %v2535 = vor.u32 %v2534, %v2530
      %v2536 = vrot.slane %v2535, 4
      %v2538 = vshll.u32 %v2298, 16
      %v2540 = vrot.slane %v2538, 5
      %v2541 = vsel %vm312, %v2536, %v2540
      %v2543 = vshrl.u32 %v2299, 16
      %v2545 = vrot.slane %v2543, 4
      %v2546 = vshll.u32 %v2299, 16
      %v2548 = vrot.slane %v2546, 5
      %v2549 = vor.u32 %v2545, %v2548
      %v2550 = vrot.slane %v2549, 4
      %v2552 = vshll.u32 %v2300, 16
      %v2554 = vrot.slane %v2552, 5
      %v2555 = vsel %vm312, %v2550, %v2554
      %v2556 = vshrl.u32 %v2300, 16
      %v2558 = vrot.slane %v2556, 4
      %v2559 = vor.u32 %v2558, %v2554
      %v2560 = vrot.slane %v2559, 4
      %v2562 = vshll.u32 %v2301, 16
      %v2564 = vrot.slane %v2562, 5
      %v2565 = vsel %vm312, %v2560, %v2564
      %v2567 = vshrl.u32 %v2302, 16
      %v2569 = vrot.slane %v2567, 4
      %v2570 = vshll.u32 %v2302, 16
      %v2572 = vrot.slane %v2570, 5
      %v2573 = vor.u32 %v2569, %v2572
      %v2574 = vrot.slane %v2573, 4
      %v2576 = vshll.u32 %v2303, 16
      %v2578 = vrot.slane %v2576, 5
      %v2579 = vsel %vm312, %v2574, %v2578
      %v2580 = vshrl.u32 %v2303, 16
      %v2582 = vrot.slane %v2580, 4
      %v2583 = vor.u32 %v2582, %v2578
      %v2584 = vrot.slane %v2583, 4
      %v2586 = vshll.u32 %v2304, 16
      %v2588 = vrot.slane %v2586, 5
      %v2589 = vsel %vm312, %v2584, %v2588
      %v2591 = vshrl.u32 %v2305, 16
      %v2593 = vrot.slane %v2591, 4
      %v2594 = vshll.u32 %v2305, 16
      %v2596 = vrot.slane %v2594, 5
      %v2597 = vor.u32 %v2593, %v2596
      %v2598 = vrot.slane %v2597, 4
      %v2600 = vshll.u32 %v2306, 16
      %v2602 = vrot.slane %v2600, 5
      %v2603 = vsel %vm312, %v2598, %v2602
      %v2604 = vshrl.u32 %v2306, 16
      %v2606 = vrot.slane %v2604, 4
      %v2607 = vor.u32 %v2606, %v2602
      %v2608 = vrot.slane %v2607, 4
      %v2610 = vshll.u32 %v2307, 16
      %v2612 = vrot.slane %v2610, 5
      %v2613 = vsel %vm312, %v2608, %v2612
      %v2615 = vshrl.u32 %v2308, 16
      %v2617 = vrot.slane %v2615, 4
      %v2618 = vshll.u32 %v2308, 16
      %v2620 = vrot.slane %v2618, 5
      %v2621 = vor.u32 %v2617, %v2620
      %v2622 = vrot.slane %v2621, 4
      %v2624 = vshll.u32 %v2309, 16
      %v2626 = vrot.slane %v2624, 5
      %v2627 = vsel %vm312, %v2622, %v2626
      %v2628 = vshrl.u32 %v2309, 16
      %v2630 = vrot.slane %v2628, 4
      %v2631 = vor.u32 %v2630, %v2626
      %v2632 = vrot.slane %v2631, 4
      %v2634 = vshll.u32 %v2310, 16
      %v2636 = vrot.slane %v2634, 5
      %v2637 = vsel %vm312, %v2632, %v2636
      %v2639 = vshrl.u32 %v2311, 16
      %v2641 = vrot.slane %v2639, 4
      %v2642 = vshll.u32 %v2311, 16
      %v2644 = vrot.slane %v2642, 5
      %v2645 = vor.u32 %v2641, %v2644
      %v2646 = vrot.slane %v2645, 4
      %v2648 = vshll.u32 %v2312, 16
      %v2650 = vrot.slane %v2648, 5
      %v2651 = vsel %vm312, %v2646, %v2650
      %v2652 = vshrl.u32 %v2312, 16
      %v2654 = vrot.slane %v2652, 4
      %v2655 = vor.u32 %v2654, %v2650
      %v2656 = vrot.slane %v2655, 4
      %v2658 = vshll.u32 %v2313, 16
      %v2660 = vrot.slane %v2658, 5
      %v2661 = vsel %vm312, %v2656, %v2660
      %v2663 = vshrl.u32 %v2314, 16
      %v2665 = vrot.slane %v2663, 4
      %v2666 = vshll.u32 %v2314, 16
      %v2668 = vrot.slane %v2666, 5
      %v2669 = vor.u32 %v2665, %v2668
      %v2670 = vrot.slane %v2669, 4
      %v2672 = vshll.u32 %v2315, 16
      %v2674 = vrot.slane %v2672, 5
      %v2675 = vsel %vm312, %v2670, %v2674
      %v2676 = vshrl.u32 %v2315, 16
      %v2678 = vrot.slane %v2676, 4
      %v2679 = vor.u32 %v2678, %v2674
      %v2680 = vrot.slane %v2679, 4
      %v2682 = vshll.u32 %v2316, 16
      %v2684 = vrot.slane %v2682, 5
      %v2685 = vsel %vm312, %v2680, %v2684
      %v2687 = vshrl.u32 %v2317, 16
      %v2689 = vrot.slane %v2687, 4
      %v2690 = vshll.u32 %v2317, 16
      %v2692 = vrot.slane %v2690, 5
      %v2693 = vor.u32 %v2689, %v2692
      %v2694 = vrot.slane %v2693, 4
      %v2696 = vshll.u32 %v2318, 16
      %v2698 = vrot.slane %v2696, 5
      %v2699 = vsel %vm312, %v2694, %v2698
      %v2700 = vshrl.u32 %v2318, 16
      %v2702 = vrot.slane %v2700, 4
      %v2703 = vor.u32 %v2702, %v2698
      %v2704 = vrot.slane %v2703, 4
      %v2706 = vshll.u32 %v2319, 16
      %v2708 = vrot.slane %v2706, 5
      %v2709 = vsel %vm312, %v2704, %v2708
      %v2711 = vshrl.u32 %v2320, 16
      %v2713 = vrot.slane %v2711, 4
      %v2714 = vshll.u32 %v2320, 16
      %v2716 = vrot.slane %v2714, 5
      %v2717 = vor.u32 %v2713, %v2716
      %v2718 = vrot.slane %v2717, 4
      %v2720 = vshll.u32 %v2321, 16
      %v2722 = vrot.slane %v2720, 5
      %v2723 = vsel %vm312, %v2718, %v2722
      %v2724 = vshrl.u32 %v2321, 16
      %v2726 = vrot.slane %v2724, 4
      %v2727 = vor.u32 %v2726, %v2722
      %v2728 = vrot.slane %v2727, 4
      %v2730 = vshll.u32 %v2322, 16
      %v2732 = vrot.slane %v2730, 5
      %v2733 = vsel %vm312, %v2728, %v2732
      %v2735 = vshrl.u32 %v2323, 16
      %v2737 = vrot.slane %v2735, 4
      %v2738 = vshll.u32 %v2323, 16
      %v2740 = vrot.slane %v2738, 5
      %v2741 = vor.u32 %v2737, %v2740
      %v2742 = vrot.slane %v2741, 4
      %v2744 = vshll.u32 %v2324, 16
      %v2746 = vrot.slane %v2744, 5
      %v2747 = vsel %vm312, %v2742, %v2746
      %v2748 = vshrl.u32 %v2324, 16
      %v2750 = vrot.slane %v2748, 4
      %v2751 = vor.u32 %v2750, %v2746
      %v2752 = vrot.slane %v2751, 4
      %v2754 = vshll.u32 %v2325, 16
      %v2756 = vrot.slane %v2754, 5
      %v2757 = vsel %vm312, %v2752, %v2756
      %s2758 = scalar_lea.vmem %s1, 8
      %v2759 = vld [vmem:[%s2758] sm:$0x3]
      %v2760 = vunpack.c.l.b16 %v2339
      %v2761 = vunpack.c.l.b16 %v2349
      %v2762 = vunpack.c.l.b16 %v2363
      %v2763 = vunpack.c.l.b16 %v2373
      %v2764 = vunpack.c.l.b16 %v2387
      %v2765 = vunpack.c.l.b16 %v2397
      %v2766 = vunpack.c.l.b16 %v2411
      %v2767 = vunpack.c.l.b16 %v2421
      %v2768 = vunpack.c.l.b16 %v2435
      %v2769 = vunpack.c.l.b16 %v2445
      %v2770 = vunpack.c.l.b16 %v2459
      %v2771 = vunpack.c.l.b16 %v2469
      %v2772 = vunpack.c.l.b16 %v2483
      %v2773 = vunpack.c.l.b16 %v2493
      %v2774 = vunpack.c.l.b16 %v2507
      %v2775 = vunpack.c.l.b16 %v2517
      %v2776 = vunpack.c.l.b16 %v2531
      %v2777 = vunpack.c.l.b16 %v2541
      %v2778 = vunpack.c.l.b16 %v2555
      %v2779 = vunpack.c.l.b16 %v2565
      %v2780 = vunpack.c.l.b16 %v2579
      %v2781 = vunpack.c.l.b16 %v2589
      %v2782 = vunpack.c.l.b16 %v2603
      %v2783 = vunpack.c.l.b16 %v2613
      %v2784 = vunpack.c.l.b16 %v2627
      %v2785 = vunpack.c.l.b16 %v2637
      %v2786 = vunpack.c.l.b16 %v2651
      %v2787 = vunpack.c.l.b16 %v2661
      %v2788 = vunpack.c.l.b16 %v2675
      %v2789 = vunpack.c.l.b16 %v2685
      %v2790 = vunpack.c.l.b16 %v2699
      %v2791 = vunpack.c.l.b16 %v2709
      %v2792 = vunpack.c.l.b16 %v2723
      %v2793 = vunpack.c.l.b16 %v2733
      %v2794 = vunpack.c.l.b16 %v2747
      %v2795 = vunpack.c.l.b16 %v2757
      %v2796 = vpack.c.b16 %v2761, %v2760
      %v2797 = vpack.c.b16 %v2763, %v2762
      %v2798 = vpack.c.b16 %v2765, %v2764
      %v2799 = vpack.c.b16 %v2767, %v2766
      %v2800 = vpack.c.b16 %v2769, %v2768
      %v2801 = vpack.c.b16 %v2771, %v2770
      %v2802 = vpack.c.b16 %v2773, %v2772
      %v2803 = vpack.c.b16 %v2775, %v2774
      %v2804 = vpack.c.b16 %v2777, %v2776
      %v2805 = vpack.c.b16 %v2779, %v2778
      %v2806 = vpack.c.b16 %v2781, %v2780
      %v2807 = vpack.c.b16 %v2783, %v2782
      %v2808 = vpack.c.b16 %v2785, %v2784
      %v2809 = vpack.c.b16 %v2787, %v2786
      %v2810 = vpack.c.b16 %v2789, %v2788
      %v2811 = vpack.c.b16 %v2791, %v2790
      %v2812 = vpack.c.b16 %v2793, %v2792
      %v2813 = vpack.c.b16 %v2795, %v2794
      %v2815 = vsel %vm801, %v2796, 0
      %v2818 = vsel %vm801, %v2797, 0
      %v2821 = vsel %vm801, %v2798, 0
      %v2824 = vsel %vm801, %v2799, 0
      %v2827 = vsel %vm801, %v2800, 0
      %v2830 = vsel %vm801, %v2801, 0
      %v2833 = vsel %vm801, %v2802, 0
      %v2836 = vsel %vm801, %v2803, 0
      %v2839 = vsel %vm801, %v2804, 0
      %v2842 = vsel %vm801, %v2805, 0
      %v2845 = vsel %vm801, %v2806, 0
      %v2848 = vsel %vm801, %v2807, 0
      %v2851 = vsel %vm801, %v2808, 0
      %v2854 = vsel %vm801, %v2809, 0
      %v2857 = vsel %vm801, %v2810, 0
      %v2860 = vsel %vm801, %v2811, 0
      %v2863 = vsel %vm801, %v2812, 0
      %v2866 = vsel %vm801, %v2813, 0
      %v2869 = vsel %vm856, %v2759, 0
      %2871 = vmatprep.subr.bf16.mxu0 0
      %2872 = vmatpush1.bf16.msra.mxu0 %v2869
      %2873 = vmatprep.subr.bf16.mxu0 0
      %2874 = vmatpush1.bf16.msra.mxu0 0
      %2875 = vmatprep.subr.bf16.mxu0 0
      %2876 = vmatpush1.bf16.msra.mxu0 0
      %2877 = vmatprep.subr.bf16.mxu0 0
      %2878 = vmatpush1.bf16.msra.mxu0 0
      %2879 = vmatprep.subr.bf16.mxu0 0
      %2880 = vmatpush1.bf16.msra.mxu0 0
      %2881 = vmatprep.subr.bf16.mxu0 0
      %2882 = vmatpush1.bf16.msra.mxu0 0
      %2883 = vmatprep.subr.bf16.mxu0 0
      %2884 = vmatpush1.bf16.msra.mxu0 0
      %2885 = vmatprep.subr.bf16.mxu0 0
      %2886 = vmatpush1.bf16.msra.mxu0 0
      %2887 = vmatprep.subr.bf16.mxu0 0
      %2888 = vmatpush1.bf16.msra.mxu0 0
      %2889 = vmatprep.subr.bf16.mxu0 0
      %2890 = vmatpush1.bf16.msra.mxu0 0
      %2891 = vmatprep.subr.bf16.mxu0 0
      %2892 = vmatpush1.bf16.msra.mxu0 0
      %2893 = vmatprep.subr.bf16.mxu0 0
      %2894 = vmatpush1.bf16.msra.mxu0 0
      %2895 = vmatprep.subr.bf16.mxu0 0
      %2896 = vmatpush1.bf16.msra.mxu0 0
      %2897 = vmatprep.subr.bf16.mxu0 0
      %2898 = vmatpush1.bf16.msra.mxu0 0
      %2899 = vmatprep.subr.bf16.mxu0 0
      %2900 = vmatpush1.bf16.msra.mxu0 0
      %2901 = vmatprep.subr.bf16.mxu0 0
      %2902 = vmatpush1.bf16.msra.mxu0 0
      %2903 = vmatprep.mubr.bf16.mxu0 0
      %2904 = vmatmul.mubr.bf16.gmra.mrb[0].mxu0 %v2815
      %v2905 = vpop.f32.mrb[0].mxu0
      %v2906 = vadd.f32 0.0, %v2905
      %v2907 = vpop.f32.mrb[0].mxu0
      %v2908 = vpop.f32.mrb[0].mxu0
      %v2909 = vadd.f32 0.0, %v2908
      %v2910 = vpop.f32.mrb[0].mxu0
      %2911 = vmatprep.mubr.bf16.mxu0 0
      %2912 = vmatmul.mubr.bf16.gmra.mrb[0].mxu0 %v2818
      %v2913 = vpop.f32.mrb[0].mxu0
      %v2914 = vadd.f32 0.0, %v2913
      %v2915 = vpop.f32.mrb[0].mxu0
      %v2916 = vpop.f32.mrb[0].mxu0
      %v2917 = vadd.f32 0.0, %v2916
      %v2918 = vpop.f32.mrb[0].mxu0
      %2919 = vmatprep.mubr.bf16.mxu0 0
      %2920 = vmatmul.mubr.bf16.gmra.mrb[0].mxu0 %v2821
      %v2921 = vpop.f32.mrb[0].mxu0
      %v2922 = vadd.f32 0.0, %v2921
      %v2923 = vpop.f32.mrb[0].mxu0
      %v2924 = vpop.f32.mrb[0].mxu0
      %v2925 = vadd.f32 0.0, %v2924
      %v2926 = vpop.f32.mrb[0].mxu0
      %2927 = vmatprep.mubr.bf16.mxu0 0
      %2928 = vmatmul.mubr.bf16.gmra.mrb[0].mxu0 %v2824
      %v2929 = vpop.f32.mrb[0].mxu0
      %v2930 = vadd.f32 0.0, %v2929
      %v2931 = vpop.f32.mrb[0].mxu0
      %v2932 = vpop.f32.mrb[0].mxu0
      %v2933 = vadd.f32 0.0, %v2932
      %v2934 = vpop.f32.mrb[0].mxu0
      %2935 = vmatprep.mubr.bf16.mxu0 0
      %2936 = vmatmul.mubr.bf16.gmra.mrb[0].mxu0 %v2827
      %v2937 = vpop.f32.mrb[0].mxu0
      %v2938 = vadd.f32 0.0, %v2937
      %v2939 = vpop.f32.mrb[0].mxu0
      %v2940 = vpop.f32.mrb[0].mxu0
      %v2941 = vadd.f32 0.0, %v2940
      %v2942 = vpop.f32.mrb[0].mxu0
      %2943 = vmatprep.mubr.bf16.mxu0 0
      %2944 = vmatmul.mubr.bf16.gmra.mrb[0].mxu0 %v2830
      %v2945 = vpop.f32.mrb[0].mxu0
      %v2946 = vadd.f32 0.0, %v2945
      %v2947 = vpop.f32.mrb[0].mxu0
      %v2948 = vpop.f32.mrb[0].mxu0
      %v2949 = vadd.f32 0.0, %v2948
      %v2950 = vpop.f32.mrb[0].mxu0
      %2951 = vmatprep.mubr.bf16.mxu0 0
      %2952 = vmatmul.mubr.bf16.gmra.mrb[0].mxu0 %v2833
      %v2953 = vpop.f32.mrb[0].mxu0
      %v2954 = vadd.f32 0.0, %v2953
      %v2955 = vpop.f32.mrb[0].mxu0
      %v2956 = vpop.f32.mrb[0].mxu0
      %v2957 = vadd.f32 0.0, %v2956
      %v2958 = vpop.f32.mrb[0].mxu0
      %2959 = vmatprep.mubr.bf16.mxu0 0
      %2960 = vmatmul.mubr.bf16.gmra.mrb[0].mxu0 %v2836
      %v2961 = vpop.f32.mrb[0].mxu0
      %v2962 = vadd.f32 0.0, %v2961
      %v2963 = vpop.f32.mrb[0].mxu0
      %v2964 = vpop.f32.mrb[0].mxu0
      %v2965 = vadd.f32 0.0, %v2964
      %v2966 = vpop.f32.mrb[0].mxu0
      %2967 = vmatprep.mubr.bf16.mxu0 0
      %2968 = vmatmul.mubr.bf16.gmra.mrb[0].mxu0 %v2839
      %v2969 = vpop.f32.mrb[0].mxu0
      %v2970 = vadd.f32 0.0, %v2969
      %v2971 = vpop.f32.mrb[0].mxu0
      %v2972 = vpop.f32.mrb[0].mxu0
      %v2973 = vadd.f32 0.0, %v2972
      %v2974 = vpop.f32.mrb[0].mxu0
      %2975 = vmatprep.mubr.bf16.mxu0 0
      %2976 = vmatmul.mubr.bf16.gmra.mrb[0].mxu0 %v2842
      %v2977 = vpop.f32.mrb[0].mxu0
      %v2978 = vadd.f32 0.0, %v2977
      %v2979 = vpop.f32.mrb[0].mxu0
      %v2980 = vpop.f32.mrb[0].mxu0
      %v2981 = vadd.f32 0.0, %v2980
      %v2982 = vpop.f32.mrb[0].mxu0
      %2983 = vmatprep.mubr.bf16.mxu0 0
      %2984 = vmatmul.mubr.bf16.gmra.mrb[0].mxu0 %v2845
      %v2985 = vpop.f32.mrb[0].mxu0
      %v2986 = vadd.f32 0.0, %v2985
      %v2987 = vpop.f32.mrb[0].mxu0
      %v2988 = vpop.f32.mrb[0].mxu0
      %v2989 = vadd.f32 0.0, %v2988
      %v2990 = vpop.f32.mrb[0].mxu0
      %2991 = vmatprep.mubr.bf16.mxu0 0
      %2992 = vmatmul.mubr.bf16.gmra.mrb[0].mxu0 %v2848
      %v2993 = vpop.f32.mrb[0].mxu0
      %v2994 = vadd.f32 0.0, %v2993
      %v2995 = vpop.f32.mrb[0].mxu0
      %v2996 = vpop.f32.mrb[0].mxu0
      %v2997 = vadd.f32 0.0, %v2996
      %v2998 = vpop.f32.mrb[0].mxu0
      %2999 = vmatprep.mubr.bf16.mxu0 0
      %3000 = vmatmul.mubr.bf16.gmra.mrb[0].mxu0 %v2851
      %v3001 = vpop.f32.mrb[0].mxu0
      %v3002 = vadd.f32 0.0, %v3001
      %v3003 = vpop.f32.mrb[0].mxu0
      %v3004 = vpop.f32.mrb[0].mxu0
      %v3005 = vadd.f32 0.0, %v3004
      %v3006 = vpop.f32.mrb[0].mxu0
      %3007 = vmatprep.mubr.bf16.mxu0 0
      %3008 = vmatmul.mubr.bf16.gmra.mrb[0].mxu0 %v2854
      %v3009 = vpop.f32.mrb[0].mxu0
      %v3010 = vadd.f32 0.0, %v3009
      %v3011 = vpop.f32.mrb[0].mxu0
      %v3012 = vpop.f32.mrb[0].mxu0
      %v3013 = vadd.f32 0.0, %v3012
      %v3014 = vpop.f32.mrb[0].mxu0
      %3015 = vmatprep.mubr.bf16.mxu0 0
      %3016 = vmatmul.mubr.bf16.gmra.mrb[0].mxu0 %v2857
      %v3017 = vpop.f32.mrb[0].mxu0
      %v3018 = vadd.f32 0.0, %v3017
      %v3019 = vpop.f32.mrb[0].mxu0
      %v3020 = vpop.f32.mrb[0].mxu0
      %v3021 = vadd.f32 0.0, %v3020
      %v3022 = vpop.f32.mrb[0].mxu0
      %3023 = vmatprep.mubr.bf16.mxu0 0
      %3024 = vmatmul.mubr.bf16.gmra.mrb[0].mxu0 %v2860
      %v3025 = vpop.f32.mrb[0].mxu0
      %v3026 = vadd.f32 0.0, %v3025
      %v3027 = vpop.f32.mrb[0].mxu0
      %v3028 = vpop.f32.mrb[0].mxu0
      %v3029 = vadd.f32 0.0, %v3028
      %v3030 = vpop.f32.mrb[0].mxu0
      %3031 = vmatprep.mubr.bf16.mxu0 0
      %3032 = vmatmul.mubr.bf16.gmra.mrb[0].mxu0 %v2863
      %v3033 = vpop.f32.mrb[0].mxu0
      %v3034 = vadd.f32 0.0, %v3033
      %v3035 = vpop.f32.mrb[0].mxu0
      %v3036 = vpop.f32.mrb[0].mxu0
      %v3037 = vadd.f32 0.0, %v3036
      %v3038 = vpop.f32.mrb[0].mxu0
      %3039 = vmatprep.mubr.bf16.mxu0 0
      %3040 = vmatmul.mubr.bf16.gmra.mrb[0].mxu0 %v2866
      %v3041 = vpop.f32.mrb[0].mxu0
      %v3042 = vadd.f32 0.0, %v3041
      %v3043 = vpop.f32.mrb[0].mxu0
      %v3044 = vpop.f32.mrb[0].mxu0
      %v3045 = vadd.f32 0.0, %v3044
      %v3046 = vpop.f32.mrb[0].mxu0
      %3047 = vdwg.mxu0
      %v3048 = vadd.f32 %v2236, %v2906
      %v3049 = vadd.f32 %v2237, %v2909
      %v3050 = vadd.f32 %v2238, %v2914
      %v3051 = vadd.f32 %v2239, %v2917
      %v3052 = vadd.f32 %v2240, %v2922
      %v3053 = vadd.f32 %v2241, %v2925
      %v3054 = vadd.f32 %v2242, %v2930
      %v3055 = vadd.f32 %v2243, %v2933
      %v3056 = vadd.f32 %v2244, %v2938
      %v3057 = vadd.f32 %v2245, %v2941
      %v3058 = vadd.f32 %v2246, %v2946
      %v3059 = vadd.f32 %v2247, %v2949
      %v3060 = vadd.f32 %v2248, %v2954
      %v3061 = vadd.f32 %v2249, %v2957
      %v3062 = vadd.f32 %v2250, %v2962
      %v3063 = vadd.f32 %v2251, %v2965
      %v3064 = vadd.f32 %v2252, %v2970
      %v3065 = vadd.f32 %v2253, %v2973
      %v3066 = vadd.f32 %v2254, %v2978
      %v3067 = vadd.f32 %v2255, %v2981
      %v3068 = vadd.f32 %v2256, %v2986
      %v3069 = vadd.f32 %v2257, %v2989
      %v3070 = vadd.f32 %v2258, %v2994
      %v3071 = vadd.f32 %v2259, %v2997
      %v3072 = vadd.f32 %v2260, %v3002
      %v3073 = vadd.f32 %v2261, %v3005
      %v3074 = vadd.f32 %v2262, %v3010
      %v3075 = vadd.f32 %v2263, %v3013
      %v3076 = vadd.f32 %v2264, %v3018
      %v3077 = vadd.f32 %v2265, %v3021
      %v3078 = vadd.f32 %v2266, %v3026
      %v3079 = vadd.f32 %v2267, %v3029
      %v3080 = vadd.f32 %v2268, %v3034
      %v3081 = vadd.f32 %v2269, %v3037
      %v3082 = vadd.f32 %v2270, %v3042
      %v3083 = vadd.f32 %v2271, %v3045
      %v3084 = vld [vmem:[%s1873] sm:$0xe]
      %v3085 = vld [vmem:[%s1873 + $0xc] sm:$0xe]
      %v3086 = vld [vmem:[%s1873 + $0x18] sm:$0xe]
      %v3087 = vld [vmem:[%s1873 + $0x24] sm:$0xe]
      %v3088 = vld [vmem:[%s1873 + $0x30] sm:$0xe]
      %v3089 = vld [vmem:[%s1873 + $0x3c] sm:$0xe]
      %v3090 = vld [vmem:[%s1873 + $0x48] sm:$0xe]
      %v3091 = vld [vmem:[%s1873 + $0x54] sm:$0xe]
      %v3092 = vld [vmem:[%s1873 + $0x60] sm:$0xe]
      %v3093 = vld [vmem:[%s1873 + $0x6c] sm:$0xe]
      %v3094 = vld [vmem:[%s1873 + $0x78] sm:$0xe]
      %v3095 = vld [vmem:[%s1873 + $0x84] sm:$0xe]
      %v3096 = vld [vmem:[%s1873 + $0x90] sm:$0xe]
      %v3097 = vld [vmem:[%s1873 + $0x9c] sm:$0xe]
      %v3098 = vld [vmem:[%s1873 + $0xa8] sm:$0xe]
      %v3099 = vld [vmem:[%s1873 + $0xb4] sm:$0xe]
      %v3100 = vld [vmem:[%s1873 + $0xc0] sm:$0xe]
      %v3101 = vld [vmem:[%s1873 + $0xcc] sm:$0xe]
      %v3156 = vrot.slane %v3084, 5
      %v3157 = vrot.slane %v3156, 4
      %v3158 = vrot.slane %v2273, 5
      %v3159 = vsel %vm1417, %v3157, %v3158
      %v3160 = vrot.slane %v3158, 4
      %v3161 = vrot.slane %v2274, 5
      %v3162 = vsel %vm1417, %v3160, %v3161
      %v3163 = vrot.slane %v3085, 5
      %v3164 = vrot.slane %v3163, 4
      %v3165 = vrot.slane %v2276, 5
      %v3166 = vsel %vm1417, %v3164, %v3165
      %v3167 = vrot.slane %v3165, 4
      %v3168 = vrot.slane %v2277, 5
      %v3169 = vsel %vm1417, %v3167, %v3168
      %v3170 = vrot.slane %v3086, 5
      %v3171 = vrot.slane %v3170, 4
      %v3172 = vrot.slane %v2279, 5
      %v3173 = vsel %vm1417, %v3171, %v3172
      %v3174 = vrot.slane %v3172, 4
      %v3175 = vrot.slane %v2280, 5
      %v3176 = vsel %vm1417, %v3174, %v3175
      %v3177 = vrot.slane %v3087, 5
      %v3178 = vrot.slane %v3177, 4
      %v3179 = vrot.slane %v2282, 5
      %v3180 = vsel %vm1417, %v3178, %v3179
      %v3181 = vrot.slane %v3179, 4
      %v3182 = vrot.slane %v2283, 5
      %v3183 = vsel %vm1417, %v3181, %v3182
      %v3184 = vrot.slane %v3088, 5
      %v3185 = vrot.slane %v3184, 4
      %v3186 = vrot.slane %v2285, 5
      %v3187 = vsel %vm1417, %v3185, %v3186
      %v3188 = vrot.slane %v3186, 4
      %v3189 = vrot.slane %v2286, 5
      %v3190 = vsel %vm1417, %v3188, %v3189
      %v3191 = vrot.slane %v3089, 5
      %v3192 = vrot.slane %v3191, 4
      %v3193 = vrot.slane %v2288, 5
      %v3194 = vsel %vm1417, %v3192, %v3193
      %v3195 = vrot.slane %v3193, 4
      %v3196 = vrot.slane %v2289, 5
      %v3197 = vsel %vm1417, %v3195, %v3196
      %v3198 = vrot.slane %v3090, 5
      %v3199 = vrot.slane %v3198, 4
      %v3200 = vrot.slane %v2291, 5
      %v3201 = vsel %vm1417, %v3199, %v3200
      %v3202 = vrot.slane %v3200, 4
      %v3203 = vrot.slane %v2292, 5
      %v3204 = vsel %vm1417, %v3202, %v3203
      %v3205 = vrot.slane %v3091, 5
      %v3206 = vrot.slane %v3205, 4
      %v3207 = vrot.slane %v2294, 5
      %v3208 = vsel %vm1417, %v3206, %v3207
      %v3209 = vrot.slane %v3207, 4
      %v3210 = vrot.slane %v2295, 5
      %v3211 = vsel %vm1417, %v3209, %v3210
      %v3212 = vrot.slane %v3092, 5
      %v3213 = vrot.slane %v3212, 4
      %v3214 = vrot.slane %v2297, 5
      %v3215 = vsel %vm1417, %v3213, %v3214
      %v3216 = vrot.slane %v3214, 4
      %v3217 = vrot.slane %v2298, 5
      %v3218 = vsel %vm1417, %v3216, %v3217
      %v3219 = vrot.slane %v3093, 5
      %v3220 = vrot.slane %v3219, 4
      %v3221 = vrot.slane %v2300, 5
      %v3222 = vsel %vm1417, %v3220, %v3221
      %v3223 = vrot.slane %v3221, 4
      %v3224 = vrot.slane %v2301, 5
      %v3225 = vsel %vm1417, %v3223, %v3224
      %v3226 = vrot.slane %v3094, 5
      %v3227 = vrot.slane %v3226, 4
      %v3228 = vrot.slane %v2303, 5
      %v3229 = vsel %vm1417, %v3227, %v3228
      %v3230 = vrot.slane %v3228, 4
      %v3231 = vrot.slane %v2304, 5
      %v3232 = vsel %vm1417, %v3230, %v3231
      %v3233 = vrot.slane %v3095, 5
      %v3234 = vrot.slane %v3233, 4
      %v3235 = vrot.slane %v2306, 5
      %v3236 = vsel %vm1417, %v3234, %v3235
      %v3237 = vrot.slane %v3235, 4
      %v3238 = vrot.slane %v2307, 5
      %v3239 = vsel %vm1417, %v3237, %v3238
      %v3240 = vrot.slane %v3096, 5
      %v3241 = vrot.slane %v3240, 4
      %v3242 = vrot.slane %v2309, 5
      %v3243 = vsel %vm1417, %v3241, %v3242
      %v3244 = vrot.slane %v3242, 4
      %v3245 = vrot.slane %v2310, 5
      %v3246 = vsel %vm1417, %v3244, %v3245
      %v3247 = vrot.slane %v3097, 5
      %v3248 = vrot.slane %v3247, 4
      %v3249 = vrot.slane %v2312, 5
      %v3250 = vsel %vm1417, %v3248, %v3249
      %v3251 = vrot.slane %v3249, 4
      %v3252 = vrot.slane %v2313, 5
      %v3253 = vsel %vm1417, %v3251, %v3252
      %v3254 = vrot.slane %v3098, 5
      %v3255 = vrot.slane %v3254, 4
      %v3256 = vrot.slane %v2315, 5
      %v3257 = vsel %vm1417, %v3255, %v3256
      %v3258 = vrot.slane %v3256, 4
      %v3259 = vrot.slane %v2316, 5
      %v3260 = vsel %vm1417, %v3258, %v3259
      %v3261 = vrot.slane %v3099, 5
      %v3262 = vrot.slane %v3261, 4
      %v3263 = vrot.slane %v2318, 5
      %v3264 = vsel %vm1417, %v3262, %v3263
      %v3265 = vrot.slane %v3263, 4
      %v3266 = vrot.slane %v2319, 5
      %v3267 = vsel %vm1417, %v3265, %v3266
      %v3268 = vrot.slane %v3100, 5
      %v3269 = vrot.slane %v3268, 4
      %v3270 = vrot.slane %v2321, 5
      %v3271 = vsel %vm1417, %v3269, %v3270
      %v3272 = vrot.slane %v3270, 4
      %v3273 = vrot.slane %v2322, 5
      %v3274 = vsel %vm1417, %v3272, %v3273
      %v3275 = vrot.slane %v3101, 5
      %v3276 = vrot.slane %v3275, 4
      %v3277 = vrot.slane %v2324, 5
      %v3278 = vsel %vm1417, %v3276, %v3277
      %v3279 = vrot.slane %v3277, 4
      %v3280 = vrot.slane %v2325, 5
      %v3281 = vsel %vm1417, %v3279, %v3280
      %s3282 = scalar_lea.vmem %s1, 10
      %v3283 = vld [vmem:[%s3282] sm:$0x3]
      %v3284 = vunpack.c.l.b16 %v3159
      %v3285 = vunpack.c.l.b16 %v3162
      %v3286 = vunpack.c.l.b16 %v3166
      %v3287 = vunpack.c.l.b16 %v3169
      %v3288 = vunpack.c.l.b16 %v3173
      %v3289 = vunpack.c.l.b16 %v3176
      %v3290 = vunpack.c.l.b16 %v3180
      %v3291 = vunpack.c.l.b16 %v3183
      %v3292 = vunpack.c.l.b16 %v3187
      %v3293 = vunpack.c.l.b16 %v3190
      %v3294 = vunpack.c.l.b16 %v3194
      %v3295 = vunpack.c.l.b16 %v3197
      %v3296 = vunpack.c.l.b16 %v3201
      %v3297 = vunpack.c.l.b16 %v3204
      %v3298 = vunpack.c.l.b16 %v3208
      %v3299 = vunpack.c.l.b16 %v3211
      %v3300 = vunpack.c.l.b16 %v3215
      %v3301 = vunpack.c.l.b16 %v3218
      %v3302 = vunpack.c.l.b16 %v3222
      %v3303 = vunpack.c.l.b16 %v3225
      %v3304 = vunpack.c.l.b16 %v3229
      %v3305 = vunpack.c.l.b16 %v3232
      %v3306 = vunpack.c.l.b16 %v3236
      %v3307 = vunpack.c.l.b16 %v3239
      %v3308 = vunpack.c.l.b16 %v3243
      %v3309 = vunpack.c.l.b16 %v3246
      %v3310 = vunpack.c.l.b16 %v3250
      %v3311 = vunpack.c.l.b16 %v3253
      %v3312 = vunpack.c.l.b16 %v3257
      %v3313 = vunpack.c.l.b16 %v3260
      %v3314 = vunpack.c.l.b16 %v3264
      %v3315 = vunpack.c.l.b16 %v3267
      %v3316 = vunpack.c.l.b16 %v3271
      %v3317 = vunpack.c.l.b16 %v3274
      %v3318 = vunpack.c.l.b16 %v3278
      %v3319 = vunpack.c.l.b16 %v3281
      %v3320 = vpack.c.b16 %v3285, %v3284
      %v3321 = vpack.c.b16 %v3287, %v3286
      %v3322 = vpack.c.b16 %v3289, %v3288
      %v3323 = vpack.c.b16 %v3291, %v3290
      %v3324 = vpack.c.b16 %v3293, %v3292
      %v3325 = vpack.c.b16 %v3295, %v3294
      %v3326 = vpack.c.b16 %v3297, %v3296
      %v3327 = vpack.c.b16 %v3299, %v3298
      %v3328 = vpack.c.b16 %v3301, %v3300
      %v3329 = vpack.c.b16 %v3303, %v3302
      %v3330 = vpack.c.b16 %v3305, %v3304
      %v3331 = vpack.c.b16 %v3307, %v3306
      %v3332 = vpack.c.b16 %v3309, %v3308
      %v3333 = vpack.c.b16 %v3311, %v3310
      %v3334 = vpack.c.b16 %v3313, %v3312
      %v3335 = vpack.c.b16 %v3315, %v3314
      %v3336 = vpack.c.b16 %v3317, %v3316
      %v3337 = vpack.c.b16 %v3319, %v3318
      %v3339 = vsel %vm801, %v3320, 0
      %v3342 = vsel %vm801, %v3321, 0
      %v3345 = vsel %vm801, %v3322, 0
      %v3348 = vsel %vm801, %v3323, 0
      %v3351 = vsel %vm801, %v3324, 0
      %v3354 = vsel %vm801, %v3325, 0
      %v3357 = vsel %vm801, %v3326, 0
      %v3360 = vsel %vm801, %v3327, 0
      %v3363 = vsel %vm801, %v3328, 0
      %v3366 = vsel %vm801, %v3329, 0
      %v3369 = vsel %vm801, %v3330, 0
      %v3372 = vsel %vm801, %v3331, 0
      %v3375 = vsel %vm801, %v3332, 0
      %v3378 = vsel %vm801, %v3333, 0
      %v3381 = vsel %vm801, %v3334, 0
      %v3384 = vsel %vm801, %v3335, 0
      %v3387 = vsel %vm801, %v3336, 0
      %v3390 = vsel %vm801, %v3337, 0
      %v3393 = vsel %vm856, %v3283, 0
      %3395 = vmatprep.subr.bf16.mxu0 0
      %3396 = vmatpush1.bf16.msra.mxu0 %v3393
      %3397 = vmatprep.subr.bf16.mxu0 0
      %3398 = vmatpush1.bf16.msra.mxu0 0
      %3399 = vmatprep.subr.bf16.mxu0 0
      %3400 = vmatpush1.bf16.msra.mxu0 0
      %3401 = vmatprep.subr.bf16.mxu0 0
      %3402 = vmatpush1.bf16.msra.mxu0 0
      %3403 = vmatprep.subr.bf16.mxu0 0
      %3404 = vmatpush1.bf16.msra.mxu0 0
      %3405 = vmatprep.subr.bf16.mxu0 0
      %3406 = vmatpush1.bf16.msra.mxu0 0
      %3407 = vmatprep.subr.bf16.mxu0 0
      %3408 = vmatpush1.bf16.msra.mxu0 0
      %3409 = vmatprep.subr.bf16.mxu0 0
      %3410 = vmatpush1.bf16.msra.mxu0 0
      %3411 = vmatprep.subr.bf16.mxu0 0
      %3412 = vmatpush1.bf16.msra.mxu0 0
      %3413 = vmatprep.subr.bf16.mxu0 0
      %3414 = vmatpush1.bf16.msra.mxu0 0
      %3415 = vmatprep.subr.bf16.mxu0 0
      %3416 = vmatpush1.bf16.msra.mxu0 0
      %3417 = vmatprep.subr.bf16.mxu0 0
      %3418 = vmatpush1.bf16.msra.mxu0 0
      %3419 = vmatprep.subr.bf16.mxu0 0
      %3420 = vmatpush1.bf16.msra.mxu0 0
      %3421 = vmatprep.subr.bf16.mxu0 0
      %3422 = vmatpush1.bf16.msra.mxu0 0
      %3423 = vmatprep.subr.bf16.mxu0 0
      %3424 = vmatpush1.bf16.msra.mxu0 0
      %3425 = vmatprep.subr.bf16.mxu0 0
      %3426 = vmatpush1.bf16.msra.mxu0 0
      %3427 = vmatprep.mubr.bf16.mxu0 0
      %3428 = vmatmul.mubr.bf16.gmra.mrb[0].mxu0 %v3339
      %v3429 = vpop.f32.mrb[0].mxu0
      %v3430 = vadd.f32 0.0, %v3429
      %v3431 = vpop.f32.mrb[0].mxu0
      %v3432 = vpop.f32.mrb[0].mxu0
      %v3433 = vadd.f32 0.0, %v3432
      %v3434 = vpop.f32.mrb[0].mxu0
      %3435 = vmatprep.mubr.bf16.mxu0 0
      %3436 = vmatmul.mubr.bf16.gmra.mrb[0].mxu0 %v3342
      %v3437 = vpop.f32.mrb[0].mxu0
      %v3438 = vadd.f32 0.0, %v3437
      %v3439 = vpop.f32.mrb[0].mxu0
      %v3440 = vpop.f32.mrb[0].mxu0
      %v3441 = vadd.f32 0.0, %v3440
      %v3442 = vpop.f32.mrb[0].mxu0
      %3443 = vmatprep.mubr.bf16.mxu0 0
      %3444 = vmatmul.mubr.bf16.gmra.mrb[0].mxu0 %v3345
      %v3445 = vpop.f32.mrb[0].mxu0
      %v3446 = vadd.f32 0.0, %v3445
      %v3447 = vpop.f32.mrb[0].mxu0
      %v3448 = vpop.f32.mrb[0].mxu0
      %v3449 = vadd.f32 0.0, %v3448
      %v3450 = vpop.f32.mrb[0].mxu0
      %3451 = vmatprep.mubr.bf16.mxu0 0
      %3452 = vmatmul.mubr.bf16.gmra.mrb[0].mxu0 %v3348
      %v3453 = vpop.f32.mrb[0].mxu0
      %v3454 = vadd.f32 0.0, %v3453
      %v3455 = vpop.f32.mrb[0].mxu0
      %v3456 = vpop.f32.mrb[0].mxu0
      %v3457 = vadd.f32 0.0, %v3456
      %v3458 = vpop.f32.mrb[0].mxu0
      %3459 = vmatprep.mubr.bf16.mxu0 0
      %3460 = vmatmul.mubr.bf16.gmra.mrb[0].mxu0 %v3351
      %v3461 = vpop.f32.mrb[0].mxu0
      %v3462 = vadd.f32 0.0, %v3461
      %v3463 = vpop.f32.mrb[0].mxu0
      %v3464 = vpop.f32.mrb[0].mxu0
      %v3465 = vadd.f32 0.0, %v3464
      %v3466 = vpop.f32.mrb[0].mxu0
      %3467 = vmatprep.mubr.bf16.mxu0 0
      %3468 = vmatmul.mubr.bf16.gmra.mrb[0].mxu0 %v3354
      %v3469 = vpop.f32.mrb[0].mxu0
      %v3470 = vadd.f32 0.0, %v3469
      %v3471 = vpop.f32.mrb[0].mxu0
      %v3472 = vpop.f32.mrb[0].mxu0
      %v3473 = vadd.f32 0.0, %v3472
      %v3474 = vpop.f32.mrb[0].mxu0
      %3475 = vmatprep.mubr.bf16.mxu0 0
      %3476 = vmatmul.mubr.bf16.gmra.mrb[0].mxu0 %v3357
      %v3477 = vpop.f32.mrb[0].mxu0
      %v3478 = vadd.f32 0.0, %v3477
      %v3479 = vpop.f32.mrb[0].mxu0
      %v3480 = vpop.f32.mrb[0].mxu0
      %v3481 = vadd.f32 0.0, %v3480
      %v3482 = vpop.f32.mrb[0].mxu0
      %3483 = vmatprep.mubr.bf16.mxu0 0
      %3484 = vmatmul.mubr.bf16.gmra.mrb[0].mxu0 %v3360
      %v3485 = vpop.f32.mrb[0].mxu0
      %v3486 = vadd.f32 0.0, %v3485
      %v3487 = vpop.f32.mrb[0].mxu0
      %v3488 = vpop.f32.mrb[0].mxu0
      %v3489 = vadd.f32 0.0, %v3488
      %v3490 = vpop.f32.mrb[0].mxu0
      %3491 = vmatprep.mubr.bf16.mxu0 0
      %3492 = vmatmul.mubr.bf16.gmra.mrb[0].mxu0 %v3363
      %v3493 = vpop.f32.mrb[0].mxu0
      %v3494 = vadd.f32 0.0, %v3493
      %v3495 = vpop.f32.mrb[0].mxu0
      %v3496 = vpop.f32.mrb[0].mxu0
      %v3497 = vadd.f32 0.0, %v3496
      %v3498 = vpop.f32.mrb[0].mxu0
      %3499 = vmatprep.mubr.bf16.mxu0 0
      %3500 = vmatmul.mubr.bf16.gmra.mrb[0].mxu0 %v3366
      %v3501 = vpop.f32.mrb[0].mxu0
      %v3502 = vadd.f32 0.0, %v3501
      %v3503 = vpop.f32.mrb[0].mxu0
      %v3504 = vpop.f32.mrb[0].mxu0
      %v3505 = vadd.f32 0.0, %v3504
      %v3506 = vpop.f32.mrb[0].mxu0
      %3507 = vmatprep.mubr.bf16.mxu0 0
      %3508 = vmatmul.mubr.bf16.gmra.mrb[0].mxu0 %v3369
      %v3509 = vpop.f32.mrb[0].mxu0
      %v3510 = vadd.f32 0.0, %v3509
      %v3511 = vpop.f32.mrb[0].mxu0
      %v3512 = vpop.f32.mrb[0].mxu0
      %v3513 = vadd.f32 0.0, %v3512
      %v3514 = vpop.f32.mrb[0].mxu0
      %3515 = vmatprep.mubr.bf16.mxu0 0
      %3516 = vmatmul.mubr.bf16.gmra.mrb[0].mxu0 %v3372
      %v3517 = vpop.f32.mrb[0].mxu0
      %v3518 = vadd.f32 0.0, %v3517
      %v3519 = vpop.f32.mrb[0].mxu0
      %v3520 = vpop.f32.mrb[0].mxu0
      %v3521 = vadd.f32 0.0, %v3520
      %v3522 = vpop.f32.mrb[0].mxu0
      %3523 = vmatprep.mubr.bf16.mxu0 0
      %3524 = vmatmul.mubr.bf16.gmra.mrb[0].mxu0 %v3375
      %v3525 = vpop.f32.mrb[0].mxu0
      %v3526 = vadd.f32 0.0, %v3525
      %v3527 = vpop.f32.mrb[0].mxu0
      %v3528 = vpop.f32.mrb[0].mxu0
      %v3529 = vadd.f32 0.0, %v3528
      %v3530 = vpop.f32.mrb[0].mxu0
      %3531 = vmatprep.mubr.bf16.mxu0 0
      %3532 = vmatmul.mubr.bf16.gmra.mrb[0].mxu0 %v3378
      %v3533 = vpop.f32.mrb[0].mxu0
      %v3534 = vadd.f32 0.0, %v3533
      %v3535 = vpop.f32.mrb[0].mxu0
      %v3536 = vpop.f32.mrb[0].mxu0
      %v3537 = vadd.f32 0.0, %v3536
      %v3538 = vpop.f32.mrb[0].mxu0
      %3539 = vmatprep.mubr.bf16.mxu0 0
      %3540 = vmatmul.mubr.bf16.gmra.mrb[0].mxu0 %v3381
      %v3541 = vpop.f32.mrb[0].mxu0
      %v3542 = vadd.f32 0.0, %v3541
      %v3543 = vpop.f32.mrb[0].mxu0
      %v3544 = vpop.f32.mrb[0].mxu0
      %v3545 = vadd.f32 0.0, %v3544
      %v3546 = vpop.f32.mrb[0].mxu0
      %3547 = vmatprep.mubr.bf16.mxu0 0
      %3548 = vmatmul.mubr.bf16.gmra.mrb[0].mxu0 %v3384
      %v3549 = vpop.f32.mrb[0].mxu0
      %v3550 = vadd.f32 0.0, %v3549
      %v3551 = vpop.f32.mrb[0].mxu0
      %v3552 = vpop.f32.mrb[0].mxu0
      %v3553 = vadd.f32 0.0, %v3552
      %v3554 = vpop.f32.mrb[0].mxu0
      %3555 = vmatprep.mubr.bf16.mxu0 0
      %3556 = vmatmul.mubr.bf16.gmra.mrb[0].mxu0 %v3387
      %v3557 = vpop.f32.mrb[0].mxu0
      %v3558 = vadd.f32 0.0, %v3557
      %v3559 = vpop.f32.mrb[0].mxu0
      %v3560 = vpop.f32.mrb[0].mxu0
      %v3561 = vadd.f32 0.0, %v3560
      %v3562 = vpop.f32.mrb[0].mxu0
      %3563 = vmatprep.mubr.bf16.mxu0 0
      %3564 = vmatmul.mubr.bf16.gmra.mrb[0].mxu0 %v3390
      %v3565 = vpop.f32.mrb[0].mxu0
      %v3566 = vadd.f32 0.0, %v3565
      %v3567 = vpop.f32.mrb[0].mxu0
      %v3568 = vpop.f32.mrb[0].mxu0
      %v3569 = vadd.f32 0.0, %v3568
      %v3570 = vpop.f32.mrb[0].mxu0
      %3571 = vdwg.mxu0
      %v3572 = vadd.f32 %v3048, %v3430
      %v3573 = vadd.f32 %v3049, %v3433
      %v3574 = vadd.f32 %v3050, %v3438
      %v3575 = vadd.f32 %v3051, %v3441
      %v3576 = vadd.f32 %v3052, %v3446
      %v3577 = vadd.f32 %v3053, %v3449
      %v3578 = vadd.f32 %v3054, %v3454
      %v3579 = vadd.f32 %v3055, %v3457
      %v3580 = vadd.f32 %v3056, %v3462
      %v3581 = vadd.f32 %v3057, %v3465
      %v3582 = vadd.f32 %v3058, %v3470
      %v3583 = vadd.f32 %v3059, %v3473
      %v3584 = vadd.f32 %v3060, %v3478
      %v3585 = vadd.f32 %v3061, %v3481
      %v3586 = vadd.f32 %v3062, %v3486
      %v3587 = vadd.f32 %v3063, %v3489
      %v3588 = vadd.f32 %v3064, %v3494
      %v3589 = vadd.f32 %v3065, %v3497
      %v3590 = vadd.f32 %v3066, %v3502
      %v3591 = vadd.f32 %v3067, %v3505
      %v3592 = vadd.f32 %v3068, %v3510
      %v3593 = vadd.f32 %v3069, %v3513
      %v3594 = vadd.f32 %v3070, %v3518
      %v3595 = vadd.f32 %v3071, %v3521
      %v3596 = vadd.f32 %v3072, %v3526
      %v3597 = vadd.f32 %v3073, %v3529
      %v3598 = vadd.f32 %v3074, %v3534
      %v3599 = vadd.f32 %v3075, %v3537
      %v3600 = vadd.f32 %v3076, %v3542
      %v3601 = vadd.f32 %v3077, %v3545
      %v3602 = vadd.f32 %v3078, %v3550
      %v3603 = vadd.f32 %v3079, %v3553
      %v3604 = vadd.f32 %v3080, %v3558
      %v3605 = vadd.f32 %v3081, %v3561
      %v3606 = vadd.f32 %v3082, %v3566
      %v3607 = vadd.f32 %v3083, %v3569
      %s3608 = sadd.s32 %s251, 2
      %s3609 = smul.u32 %s3608, 3
      %s3610 = smul.addr %s3609, 4
      %s3611 = scalar_lea.vmem %s238, %s3610
      %v3612 = vld [vmem:[%s3611] sm:$0xf]
      %v3613 = vld [vmem:[%s3611 + $0x4] sm:$0xf]
      %v3614 = vld [vmem:[%s3611 + $0xc] sm:$0xf]
      %v3615 = vld [vmem:[%s3611 + $0x10] sm:$0xf]
      %v3616 = vld [vmem:[%s3611 + $0x18] sm:$0xf]
      %v3617 = vld [vmem:[%s3611 + $0x1c] sm:$0xf]
      %v3618 = vld [vmem:[%s3611 + $0x24] sm:$0xf]
      %v3619 = vld [vmem:[%s3611 + $0x28] sm:$0xf]
      %v3620 = vld [vmem:[%s3611 + $0x30] sm:$0xf]
      %v3621 = vld [vmem:[%s3611 + $0x34] sm:$0xf]
      %v3622 = vld [vmem:[%s3611 + $0x3c] sm:$0xf]
      %v3623 = vld [vmem:[%s3611 + $0x40] sm:$0xf]
      %v3624 = vld [vmem:[%s3611 + $0x48] sm:$0xf]
      %v3625 = vld [vmem:[%s3611 + $0x4c] sm:$0xf]
      %v3626 = vld [vmem:[%s3611 + $0x54] sm:$0xf]
      %v3627 = vld [vmem:[%s3611 + $0x58] sm:$0xf]
      %v3628 = vld [vmem:[%s3611 + $0x60] sm:$0xf]
      %v3629 = vld [vmem:[%s3611 + $0x64] sm:$0xf]
      %v3630 = vld [vmem:[%s3611 + $0x6c] sm:$0xf]
      %v3631 = vld [vmem:[%s3611 + $0x70] sm:$0xf]
      %v3632 = vld [vmem:[%s3611 + $0x78] sm:$0xf]
      %v3633 = vld [vmem:[%s3611 + $0x7c] sm:$0xf]
      %v3634 = vld [vmem:[%s3611 + $0x84] sm:$0xf]
      %v3635 = vld [vmem:[%s3611 + $0x88] sm:$0xf]
      %v3636 = vld [vmem:[%s3611 + $0x90] sm:$0xf]
      %v3637 = vld [vmem:[%s3611 + $0x94] sm:$0xf]
      %v3638 = vld [vmem:[%s3611 + $0x9c] sm:$0xf]
      %v3639 = vld [vmem:[%s3611 + $0xa0] sm:$0xf]
      %v3640 = vld [vmem:[%s3611 + $0xa8] sm:$0xf]
      %v3641 = vld [vmem:[%s3611 + $0xac] sm:$0xf]
      %v3642 = vld [vmem:[%s3611 + $0xb4] sm:$0xf]
      %v3643 = vld [vmem:[%s3611 + $0xb8] sm:$0xf]
      %v3644 = vld [vmem:[%s3611 + $0xc0] sm:$0xf]
      %v3645 = vld [vmem:[%s3611 + $0xc4] sm:$0xf]
      %v3646 = vld [vmem:[%s3611 + $0xcc] sm:$0xf]
      %v3647 = vld [vmem:[%s3611 + $0xd0] sm:$0xf]
      %s3648 = scalar_lea.vmem %s1, 12
      %v3649 = vld [vmem:[%s3648] sm:$0x3]
      %v3686 = vunpack.c.l.b16 %v3612
      %v3687 = vunpack.c.l.b16 %v3613
      %v3688 = vunpack.c.l.b16 %v3614
      %v3689 = vunpack.c.l.b16 %v3615
      %v3690 = vunpack.c.l.b16 %v3616
      %v3691 = vunpack.c.l.b16 %v3617
      %v3692 = vunpack.c.l.b16 %v3618
      %v3693 = vunpack.c.l.b16 %v3619
      %v3694 = vunpack.c.l.b16 %v3620
      %v3695 = vunpack.c.l.b16 %v3621
      %v3696 = vunpack.c.l.b16 %v3622
      %v3697 = vunpack.c.l.b16 %v3623
      %v3698 = vunpack.c.l.b16 %v3624
      %v3699 = vunpack.c.l.b16 %v3625
      %v3700 = vunpack.c.l.b16 %v3626
      %v3701 = vunpack.c.l.b16 %v3627
      %v3702 = vunpack.c.l.b16 %v3628
      %v3703 = vunpack.c.l.b16 %v3629
      %v3704 = vunpack.c.l.b16 %v3630
      %v3705 = vunpack.c.l.b16 %v3631
      %v3706 = vunpack.c.l.b16 %v3632
      %v3707 = vunpack.c.l.b16 %v3633
      %v3708 = vunpack.c.l.b16 %v3634
      %v3709 = vunpack.c.l.b16 %v3635
      %v3710 = vunpack.c.l.b16 %v3636
      %v3711 = vunpack.c.l.b16 %v3637
      %v3712 = vunpack.c.l.b16 %v3638
      %v3713 = vunpack.c.l.b16 %v3639
      %v3714 = vunpack.c.l.b16 %v3640
      %v3715 = vunpack.c.l.b16 %v3641
      %v3716 = vunpack.c.l.b16 %v3642
      %v3717 = vunpack.c.l.b16 %v3643
      %v3718 = vunpack.c.l.b16 %v3644
      %v3719 = vunpack.c.l.b16 %v3645
      %v3720 = vunpack.c.l.b16 %v3646
      %v3721 = vunpack.c.l.b16 %v3647
      %v3722 = vpack.c.b16 %v3687, %v3686
      %v3723 = vpack.c.b16 %v3689, %v3688
      %v3724 = vpack.c.b16 %v3691, %v3690
      %v3725 = vpack.c.b16 %v3693, %v3692
      %v3726 = vpack.c.b16 %v3695, %v3694
      %v3727 = vpack.c.b16 %v3697, %v3696
      %v3728 = vpack.c.b16 %v3699, %v3698
      %v3729 = vpack.c.b16 %v3701, %v3700
      %v3730 = vpack.c.b16 %v3703, %v3702
      %v3731 = vpack.c.b16 %v3705, %v3704
      %v3732 = vpack.c.b16 %v3707, %v3706
      %v3733 = vpack.c.b16 %v3709, %v3708
      %v3734 = vpack.c.b16 %v3711, %v3710
      %v3735 = vpack.c.b16 %v3713, %v3712
      %v3736 = vpack.c.b16 %v3715, %v3714
      %v3737 = vpack.c.b16 %v3717, %v3716
      %v3738 = vpack.c.b16 %v3719, %v3718
      %v3739 = vpack.c.b16 %v3721, %v3720
      %v3741 = vsel %vm801, %v3722, 0
      %v3744 = vsel %vm801, %v3723, 0
      %v3747 = vsel %vm801, %v3724, 0
      %v3750 = vsel %vm801, %v3725, 0
      %v3753 = vsel %vm801, %v3726, 0
      %v3756 = vsel %vm801, %v3727, 0
      %v3759 = vsel %vm801, %v3728, 0
      %v3762 = vsel %vm801, %v3729, 0
      %v3765 = vsel %vm801, %v3730, 0
      %v3768 = vsel %vm801, %v3731, 0
      %v3771 = vsel %vm801, %v3732, 0
      %v3774 = vsel %vm801, %v3733, 0
      %v3777 = vsel %vm801, %v3734, 0
      %v3780 = vsel %vm801, %v3735, 0
      %v3783 = vsel %vm801, %v3736, 0
      %v3786 = vsel %vm801, %v3737, 0
      %v3789 = vsel %vm801, %v3738, 0
      %v3792 = vsel %vm801, %v3739, 0
      %v3795 = vsel %vm856, %v3649, 0
      %3797 = vmatprep.subr.bf16.mxu0 0
      %3798 = vmatpush1.bf16.msra.mxu0 %v3795
      %3799 = vmatprep.subr.bf16.mxu0 0
      %3800 = vmatpush1.bf16.msra.mxu0 0
      %3801 = vmatprep.subr.bf16.mxu0 0
      %3802 = vmatpush1.bf16.msra.mxu0 0
      %3803 = vmatprep.subr.bf16.mxu0 0
      %3804 = vmatpush1.bf16.msra.mxu0 0
      %3805 = vmatprep.subr.bf16.mxu0 0
      %3806 = vmatpush1.bf16.msra.mxu0 0
      %3807 = vmatprep.subr.bf16.mxu0 0
      %3808 = vmatpush1.bf16.msra.mxu0 0
      %3809 = vmatprep.subr.bf16.mxu0 0
      %3810 = vmatpush1.bf16.msra.mxu0 0
      %3811 = vmatprep.subr.bf16.mxu0 0
      %3812 = vmatpush1.bf16.msra.mxu0 0
      %3813 = vmatprep.subr.bf16.mxu0 0
      %3814 = vmatpush1.bf16.msra.mxu0 0
      %3815 = vmatprep.subr.bf16.mxu0 0
      %3816 = vmatpush1.bf16.msra.mxu0 0
      %3817 = vmatprep.subr.bf16.mxu0 0
      %3818 = vmatpush1.bf16.msra.mxu0 0
      %3819 = vmatprep.subr.bf16.mxu0 0
      %3820 = vmatpush1.bf16.msra.mxu0 0
      %3821 = vmatprep.subr.bf16.mxu0 0
      %3822 = vmatpush1.bf16.msra.mxu0 0
      %3823 = vmatprep.subr.bf16.mxu0 0
      %3824 = vmatpush1.bf16.msra.mxu0 0
      %3825 = vmatprep.subr.bf16.mxu0 0
      %3826 = vmatpush1.bf16.msra.mxu0 0
      %3827 = vmatprep.subr.bf16.mxu0 0
      %3828 = vmatpush1.bf16.msra.mxu0 0
      %3829 = vmatprep.mubr.bf16.mxu0 0
      %3830 = vmatmul.mubr.bf16.gmra.mrb[0].mxu0 %v3741
      %v3831 = vpop.f32.mrb[0].mxu0
      %v3832 = vadd.f32 0.0, %v3831
      %v3833 = vpop.f32.mrb[0].mxu0
      %v3834 = vpop.f32.mrb[0].mxu0
      %v3835 = vadd.f32 0.0, %v3834
      %v3836 = vpop.f32.mrb[0].mxu0
      %3837 = vmatprep.mubr.bf16.mxu0 0
      %3838 = vmatmul.mubr.bf16.gmra.mrb[0].mxu0 %v3744
      %v3839 = vpop.f32.mrb[0].mxu0
      %v3840 = vadd.f32 0.0, %v3839
      %v3841 = vpop.f32.mrb[0].mxu0
      %v3842 = vpop.f32.mrb[0].mxu0
      %v3843 = vadd.f32 0.0, %v3842
      %v3844 = vpop.f32.mrb[0].mxu0
      %3845 = vmatprep.mubr.bf16.mxu0 0
      %3846 = vmatmul.mubr.bf16.gmra.mrb[0].mxu0 %v3747
      %v3847 = vpop.f32.mrb[0].mxu0
      %v3848 = vadd.f32 0.0, %v3847
      %v3849 = vpop.f32.mrb[0].mxu0
      %v3850 = vpop.f32.mrb[0].mxu0
      %v3851 = vadd.f32 0.0, %v3850
      %v3852 = vpop.f32.mrb[0].mxu0
      %3853 = vmatprep.mubr.bf16.mxu0 0
      %3854 = vmatmul.mubr.bf16.gmra.mrb[0].mxu0 %v3750
      %v3855 = vpop.f32.mrb[0].mxu0
      %v3856 = vadd.f32 0.0, %v3855
      %v3857 = vpop.f32.mrb[0].mxu0
      %v3858 = vpop.f32.mrb[0].mxu0
      %v3859 = vadd.f32 0.0, %v3858
      %v3860 = vpop.f32.mrb[0].mxu0
      %3861 = vmatprep.mubr.bf16.mxu0 0
      %3862 = vmatmul.mubr.bf16.gmra.mrb[0].mxu0 %v3753
      %v3863 = vpop.f32.mrb[0].mxu0
      %v3864 = vadd.f32 0.0, %v3863
      %v3865 = vpop.f32.mrb[0].mxu0
      %v3866 = vpop.f32.mrb[0].mxu0
      %v3867 = vadd.f32 0.0, %v3866
      %v3868 = vpop.f32.mrb[0].mxu0
      %3869 = vmatprep.mubr.bf16.mxu0 0
      %3870 = vmatmul.mubr.bf16.gmra.mrb[0].mxu0 %v3756
      %v3871 = vpop.f32.mrb[0].mxu0
      %v3872 = vadd.f32 0.0, %v3871
      %v3873 = vpop.f32.mrb[0].mxu0
      %v3874 = vpop.f32.mrb[0].mxu0
      %v3875 = vadd.f32 0.0, %v3874
      %v3876 = vpop.f32.mrb[0].mxu0
      %3877 = vmatprep.mubr.bf16.mxu0 0
      %3878 = vmatmul.mubr.bf16.gmra.mrb[0].mxu0 %v3759
      %v3879 = vpop.f32.mrb[0].mxu0
      %v3880 = vadd.f32 0.0, %v3879
      %v3881 = vpop.f32.mrb[0].mxu0
      %v3882 = vpop.f32.mrb[0].mxu0
      %v3883 = vadd.f32 0.0, %v3882
      %v3884 = vpop.f32.mrb[0].mxu0
      %3885 = vmatprep.mubr.bf16.mxu0 0
      %3886 = vmatmul.mubr.bf16.gmra.mrb[0].mxu0 %v3762
      %v3887 = vpop.f32.mrb[0].mxu0
      %v3888 = vadd.f32 0.0, %v3887
      %v3889 = vpop.f32.mrb[0].mxu0
      %v3890 = vpop.f32.mrb[0].mxu0
      %v3891 = vadd.f32 0.0, %v3890
      %v3892 = vpop.f32.mrb[0].mxu0
      %3893 = vmatprep.mubr.bf16.mxu0 0
      %3894 = vmatmul.mubr.bf16.gmra.mrb[0].mxu0 %v3765
      %v3895 = vpop.f32.mrb[0].mxu0
      %v3896 = vadd.f32 0.0, %v3895
      %v3897 = vpop.f32.mrb[0].mxu0
      %v3898 = vpop.f32.mrb[0].mxu0
      %v3899 = vadd.f32 0.0, %v3898
      %v3900 = vpop.f32.mrb[0].mxu0
      %3901 = vmatprep.mubr.bf16.mxu0 0
      %3902 = vmatmul.mubr.bf16.gmra.mrb[0].mxu0 %v3768
      %v3903 = vpop.f32.mrb[0].mxu0
      %v3904 = vadd.f32 0.0, %v3903
      %v3905 = vpop.f32.mrb[0].mxu0
      %v3906 = vpop.f32.mrb[0].mxu0
      %v3907 = vadd.f32 0.0, %v3906
      %v3908 = vpop.f32.mrb[0].mxu0
      %3909 = vmatprep.mubr.bf16.mxu0 0
      %3910 = vmatmul.mubr.bf16.gmra.mrb[0].mxu0 %v3771
      %v3911 = vpop.f32.mrb[0].mxu0
      %v3912 = vadd.f32 0.0, %v3911
      %v3913 = vpop.f32.mrb[0].mxu0
      %v3914 = vpop.f32.mrb[0].mxu0
      %v3915 = vadd.f32 0.0, %v3914
      %v3916 = vpop.f32.mrb[0].mxu0
      %3917 = vmatprep.mubr.bf16.mxu0 0
      %3918 = vmatmul.mubr.bf16.gmra.mrb[0].mxu0 %v3774
      %v3919 = vpop.f32.mrb[0].mxu0
      %v3920 = vadd.f32 0.0, %v3919
      %v3921 = vpop.f32.mrb[0].mxu0
      %v3922 = vpop.f32.mrb[0].mxu0
      %v3923 = vadd.f32 0.0, %v3922
      %v3924 = vpop.f32.mrb[0].mxu0
      %3925 = vmatprep.mubr.bf16.mxu0 0
      %3926 = vmatmul.mubr.bf16.gmra.mrb[0].mxu0 %v3777
      %v3927 = vpop.f32.mrb[0].mxu0
      %v3928 = vadd.f32 0.0, %v3927
      %v3929 = vpop.f32.mrb[0].mxu0
      %v3930 = vpop.f32.mrb[0].mxu0
      %v3931 = vadd.f32 0.0, %v3930
      %v3932 = vpop.f32.mrb[0].mxu0
      %3933 = vmatprep.mubr.bf16.mxu0 0
      %3934 = vmatmul.mubr.bf16.gmra.mrb[0].mxu0 %v3780
      %v3935 = vpop.f32.mrb[0].mxu0
      %v3936 = vadd.f32 0.0, %v3935
      %v3937 = vpop.f32.mrb[0].mxu0
      %v3938 = vpop.f32.mrb[0].mxu0
      %v3939 = vadd.f32 0.0, %v3938
      %v3940 = vpop.f32.mrb[0].mxu0
      %3941 = vmatprep.mubr.bf16.mxu0 0
      %3942 = vmatmul.mubr.bf16.gmra.mrb[0].mxu0 %v3783
      %v3943 = vpop.f32.mrb[0].mxu0
      %v3944 = vadd.f32 0.0, %v3943
      %v3945 = vpop.f32.mrb[0].mxu0
      %v3946 = vpop.f32.mrb[0].mxu0
      %v3947 = vadd.f32 0.0, %v3946
      %v3948 = vpop.f32.mrb[0].mxu0
      %3949 = vmatprep.mubr.bf16.mxu0 0
      %3950 = vmatmul.mubr.bf16.gmra.mrb[0].mxu0 %v3786
      %v3951 = vpop.f32.mrb[0].mxu0
      %v3952 = vadd.f32 0.0, %v3951
      %v3953 = vpop.f32.mrb[0].mxu0
      %v3954 = vpop.f32.mrb[0].mxu0
      %v3955 = vadd.f32 0.0, %v3954
      %v3956 = vpop.f32.mrb[0].mxu0
      %3957 = vmatprep.mubr.bf16.mxu0 0
      %3958 = vmatmul.mubr.bf16.gmra.mrb[0].mxu0 %v3789
      %v3959 = vpop.f32.mrb[0].mxu0
      %v3960 = vadd.f32 0.0, %v3959
      %v3961 = vpop.f32.mrb[0].mxu0
      %v3962 = vpop.f32.mrb[0].mxu0
      %v3963 = vadd.f32 0.0, %v3962
      %v3964 = vpop.f32.mrb[0].mxu0
      %3965 = vmatprep.mubr.bf16.mxu0 0
      %3966 = vmatmul.mubr.bf16.gmra.mrb[0].mxu0 %v3792
      %v3967 = vpop.f32.mrb[0].mxu0
      %v3968 = vadd.f32 0.0, %v3967
      %v3969 = vpop.f32.mrb[0].mxu0
      %v3970 = vpop.f32.mrb[0].mxu0
      %v3971 = vadd.f32 0.0, %v3970
      %v3972 = vpop.f32.mrb[0].mxu0
      %3973 = vdwg.mxu0
      %v3974 = vadd.f32 %v3572, %v3832
      %v3975 = vadd.f32 %v3573, %v3835
      %v3976 = vadd.f32 %v3574, %v3840
      %v3977 = vadd.f32 %v3575, %v3843
      %v3978 = vadd.f32 %v3576, %v3848
      %v3979 = vadd.f32 %v3577, %v3851
      %v3980 = vadd.f32 %v3578, %v3856
      %v3981 = vadd.f32 %v3579, %v3859
      %v3982 = vadd.f32 %v3580, %v3864
      %v3983 = vadd.f32 %v3581, %v3867
      %v3984 = vadd.f32 %v3582, %v3872
      %v3985 = vadd.f32 %v3583, %v3875
      %v3986 = vadd.f32 %v3584, %v3880
      %v3987 = vadd.f32 %v3585, %v3883
      %v3988 = vadd.f32 %v3586, %v3888
      %v3989 = vadd.f32 %v3587, %v3891
      %v3990 = vadd.f32 %v3588, %v3896
      %v3991 = vadd.f32 %v3589, %v3899
      %v3992 = vadd.f32 %v3590, %v3904
      %v3993 = vadd.f32 %v3591, %v3907
      %v3994 = vadd.f32 %v3592, %v3912
      %v3995 = vadd.f32 %v3593, %v3915
      %v3996 = vadd.f32 %v3594, %v3920
      %v3997 = vadd.f32 %v3595, %v3923
      %v3998 = vadd.f32 %v3596, %v3928
      %v3999 = vadd.f32 %v3597, %v3931
      %v4000 = vadd.f32 %v3598, %v3936
      %v4001 = vadd.f32 %v3599, %v3939
      %v4002 = vadd.f32 %v3600, %v3944
      %v4003 = vadd.f32 %v3601, %v3947
      %v4004 = vadd.f32 %v3602, %v3952
      %v4005 = vadd.f32 %v3603, %v3955
      %v4006 = vadd.f32 %v3604, %v3960
      %v4007 = vadd.f32 %v3605, %v3963
      %v4008 = vadd.f32 %v3606, %v3968
      %v4009 = vadd.f32 %v3607, %v3971
      %v4010 = vld [vmem:[%s3611] sm:$0xf]
      %v4011 = vld [vmem:[%s3611 + $0x4] sm:$0xf]
      %v4012 = vld [vmem:[%s3611 + $0x8] sm:$0x1]
      %v4013 = vld [vmem:[%s3611 + $0xc] sm:$0xf]
      %v4014 = vld [vmem:[%s3611 + $0x10] sm:$0xf]
      %v4015 = vld [vmem:[%s3611 + $0x14] sm:$0x1]
      %v4016 = vld [vmem:[%s3611 + $0x18] sm:$0xf]
      %v4017 = vld [vmem:[%s3611 + $0x1c] sm:$0xf]
      %v4018 = vld [vmem:[%s3611 + $0x20] sm:$0x1]
      %v4019 = vld [vmem:[%s3611 + $0x24] sm:$0xf]
      %v4020 = vld [vmem:[%s3611 + $0x28] sm:$0xf]
      %v4021 = vld [vmem:[%s3611 + $0x2c] sm:$0x1]
      %v4022 = vld [vmem:[%s3611 + $0x30] sm:$0xf]
      %v4023 = vld [vmem:[%s3611 + $0x34] sm:$0xf]
      %v4024 = vld [vmem:[%s3611 + $0x38] sm:$0x1]
      %v4025 = vld [vmem:[%s3611 + $0x3c] sm:$0xf]
      %v4026 = vld [vmem:[%s3611 + $0x40] sm:$0xf]
      %v4027 = vld [vmem:[%s3611 + $0x44] sm:$0x1]
      %v4028 = vld [vmem:[%s3611 + $0x48] sm:$0xf]
      %v4029 = vld [vmem:[%s3611 + $0x4c] sm:$0xf]
      %v4030 = vld [vmem:[%s3611 + $0x50] sm:$0x1]
      %v4031 = vld [vmem:[%s3611 + $0x54] sm:$0xf]
      %v4032 = vld [vmem:[%s3611 + $0x58] sm:$0xf]
      %v4033 = vld [vmem:[%s3611 + $0x5c] sm:$0x1]
      %v4034 = vld [vmem:[%s3611 + $0x60] sm:$0xf]
      %v4035 = vld [vmem:[%s3611 + $0x64] sm:$0xf]
      %v4036 = vld [vmem:[%s3611 + $0x68] sm:$0x1]
      %v4037 = vld [vmem:[%s3611 + $0x6c] sm:$0xf]
      %v4038 = vld [vmem:[%s3611 + $0x70] sm:$0xf]
      %v4039 = vld [vmem:[%s3611 + $0x74] sm:$0x1]
      %v4040 = vld [vmem:[%s3611 + $0x78] sm:$0xf]
      %v4041 = vld [vmem:[%s3611 + $0x7c] sm:$0xf]
      %v4042 = vld [vmem:[%s3611 + $0x80] sm:$0x1]
      %v4043 = vld [vmem:[%s3611 + $0x84] sm:$0xf]
      %v4044 = vld [vmem:[%s3611 + $0x88] sm:$0xf]
      %v4045 = vld [vmem:[%s3611 + $0x8c] sm:$0x1]
      %v4046 = vld [vmem:[%s3611 + $0x90] sm:$0xf]
      %v4047 = vld [vmem:[%s3611 + $0x94] sm:$0xf]
      %v4048 = vld [vmem:[%s3611 + $0x98] sm:$0x1]
      %v4049 = vld [vmem:[%s3611 + $0x9c] sm:$0xf]
      %v4050 = vld [vmem:[%s3611 + $0xa0] sm:$0xf]
      %v4051 = vld [vmem:[%s3611 + $0xa4] sm:$0x1]
      %v4052 = vld [vmem:[%s3611 + $0xa8] sm:$0xf]
      %v4053 = vld [vmem:[%s3611 + $0xac] sm:$0xf]
      %v4054 = vld [vmem:[%s3611 + $0xb0] sm:$0x1]
      %v4055 = vld [vmem:[%s3611 + $0xb4] sm:$0xf]
      %v4056 = vld [vmem:[%s3611 + $0xb8] sm:$0xf]
      %v4057 = vld [vmem:[%s3611 + $0xbc] sm:$0x1]
      %v4058 = vld [vmem:[%s3611 + $0xc0] sm:$0xf]
      %v4059 = vld [vmem:[%s3611 + $0xc4] sm:$0xf]
      %v4060 = vld [vmem:[%s3611 + $0xc8] sm:$0x1]
      %v4061 = vld [vmem:[%s3611 + $0xcc] sm:$0xf]
      %v4062 = vld [vmem:[%s3611 + $0xd0] sm:$0xf]
      %v4063 = vld [vmem:[%s3611 + $0xd4] sm:$0x1]
      %v4065 = vshrl.u32 %v4010, 16
      %v4067 = vrot.slane %v4065, 4
      %v4068 = vshll.u32 %v4010, 16
      %v4070 = vrot.slane %v4068, 5
      %v4071 = vor.u32 %v4067, %v4070
      %v4072 = vrot.slane %v4071, 4
      %v4074 = vshll.u32 %v4011, 16
      %v4076 = vrot.slane %v4074, 5
      %v4077 = vsel %vm312, %v4072, %v4076
      %v4078 = vshrl.u32 %v4011, 16
      %v4080 = vrot.slane %v4078, 4
      %v4081 = vor.u32 %v4080, %v4076
      %v4082 = vrot.slane %v4081, 4
      %v4084 = vshll.u32 %v4012, 16
      %v4086 = vrot.slane %v4084, 5
      %v4087 = vsel %vm312, %v4082, %v4086
      %v4089 = vshrl.u32 %v4013, 16
      %v4091 = vrot.slane %v4089, 4
      %v4092 = vshll.u32 %v4013, 16
      %v4094 = vrot.slane %v4092, 5
      %v4095 = vor.u32 %v4091, %v4094
      %v4096 = vrot.slane %v4095, 4
      %v4098 = vshll.u32 %v4014, 16
      %v4100 = vrot.slane %v4098, 5
      %v4101 = vsel %vm312, %v4096, %v4100
      %v4102 = vshrl.u32 %v4014, 16
      %v4104 = vrot.slane %v4102, 4
      %v4105 = vor.u32 %v4104, %v4100
      %v4106 = vrot.slane %v4105, 4
      %v4108 = vshll.u32 %v4015, 16
      %v4110 = vrot.slane %v4108, 5
      %v4111 = vsel %vm312, %v4106, %v4110
      %v4113 = vshrl.u32 %v4016, 16
      %v4115 = vrot.slane %v4113, 4
      %v4116 = vshll.u32 %v4016, 16
      %v4118 = vrot.slane %v4116, 5
      %v4119 = vor.u32 %v4115, %v4118
      %v4120 = vrot.slane %v4119, 4
      %v4122 = vshll.u32 %v4017, 16
      %v4124 = vrot.slane %v4122, 5
      %v4125 = vsel %vm312, %v4120, %v4124
      %v4126 = vshrl.u32 %v4017, 16
      %v4128 = vrot.slane %v4126, 4
      %v4129 = vor.u32 %v4128, %v4124
      %v4130 = vrot.slane %v4129, 4
      %v4132 = vshll.u32 %v4018, 16
      %v4134 = vrot.slane %v4132, 5
      %v4135 = vsel %vm312, %v4130, %v4134
      %v4137 = vshrl.u32 %v4019, 16
      %v4139 = vrot.slane %v4137, 4
      %v4140 = vshll.u32 %v4019, 16
      %v4142 = vrot.slane %v4140, 5
      %v4143 = vor.u32 %v4139, %v4142
      %v4144 = vrot.slane %v4143, 4
      %v4146 = vshll.u32 %v4020, 16
      %v4148 = vrot.slane %v4146, 5
      %v4149 = vsel %vm312, %v4144, %v4148
      %v4150 = vshrl.u32 %v4020, 16
      %v4152 = vrot.slane %v4150, 4
      %v4153 = vor.u32 %v4152, %v4148
      %v4154 = vrot.slane %v4153, 4
      %v4156 = vshll.u32 %v4021, 16
      %v4158 = vrot.slane %v4156, 5
      %v4159 = vsel %vm312, %v4154, %v4158
      %v4161 = vshrl.u32 %v4022, 16
      %v4163 = vrot.slane %v4161, 4
      %v4164 = vshll.u32 %v4022, 16
      %v4166 = vrot.slane %v4164, 5
      %v4167 = vor.u32 %v4163, %v4166
      %v4168 = vrot.slane %v4167, 4
      %v4170 = vshll.u32 %v4023, 16
      %v4172 = vrot.slane %v4170, 5
      %v4173 = vsel %vm312, %v4168, %v4172
      %v4174 = vshrl.u32 %v4023, 16
      %v4176 = vrot.slane %v4174, 4
      %v4177 = vor.u32 %v4176, %v4172
      %v4178 = vrot.slane %v4177, 4
      %v4180 = vshll.u32 %v4024, 16
      %v4182 = vrot.slane %v4180, 5
      %v4183 = vsel %vm312, %v4178, %v4182
      %v4185 = vshrl.u32 %v4025, 16
      %v4187 = vrot.slane %v4185, 4
      %v4188 = vshll.u32 %v4025, 16
      %v4190 = vrot.slane %v4188, 5
      %v4191 = vor.u32 %v4187, %v4190
      %v4192 = vrot.slane %v4191, 4
      %v4194 = vshll.u32 %v4026, 16
      %v4196 = vrot.slane %v4194, 5
      %v4197 = vsel %vm312, %v4192, %v4196
      %v4198 = vshrl.u32 %v4026, 16
      %v4200 = vrot.slane %v4198, 4
      %v4201 = vor.u32 %v4200, %v4196
      %v4202 = vrot.slane %v4201, 4
      %v4204 = vshll.u32 %v4027, 16
      %v4206 = vrot.slane %v4204, 5
      %v4207 = vsel %vm312, %v4202, %v4206
      %v4209 = vshrl.u32 %v4028, 16
      %v4211 = vrot.slane %v4209, 4
      %v4212 = vshll.u32 %v4028, 16
      %v4214 = vrot.slane %v4212, 5
      %v4215 = vor.u32 %v4211, %v4214
      %v4216 = vrot.slane %v4215, 4
      %v4218 = vshll.u32 %v4029, 16
      %v4220 = vrot.slane %v4218, 5
      %v4221 = vsel %vm312, %v4216, %v4220
      %v4222 = vshrl.u32 %v4029, 16
      %v4224 = vrot.slane %v4222, 4
      %v4225 = vor.u32 %v4224, %v4220
      %v4226 = vrot.slane %v4225, 4
      %v4228 = vshll.u32 %v4030, 16
      %v4230 = vrot.slane %v4228, 5
      %v4231 = vsel %vm312, %v4226, %v4230
      %v4233 = vshrl.u32 %v4031, 16
      %v4235 = vrot.slane %v4233, 4
      %v4236 = vshll.u32 %v4031, 16
      %v4238 = vrot.slane %v4236, 5
      %v4239 = vor.u32 %v4235, %v4238
      %v4240 = vrot.slane %v4239, 4
      %v4242 = vshll.u32 %v4032, 16
      %v4244 = vrot.slane %v4242, 5
      %v4245 = vsel %vm312, %v4240, %v4244
      %v4246 = vshrl.u32 %v4032, 16
      %v4248 = vrot.slane %v4246, 4
      %v4249 = vor.u32 %v4248, %v4244
      %v4250 = vrot.slane %v4249, 4
      %v4252 = vshll.u32 %v4033, 16
      %v4254 = vrot.slane %v4252, 5
      %v4255 = vsel %vm312, %v4250, %v4254
      %v4257 = vshrl.u32 %v4034, 16
      %v4259 = vrot.slane %v4257, 4
      %v4260 = vshll.u32 %v4034, 16
      %v4262 = vrot.slane %v4260, 5
      %v4263 = vor.u32 %v4259, %v4262
      %v4264 = vrot.slane %v4263, 4
      %v4266 = vshll.u32 %v4035, 16
      %v4268 = vrot.slane %v4266, 5
      %v4269 = vsel %vm312, %v4264, %v4268
      %v4270 = vshrl.u32 %v4035, 16
      %v4272 = vrot.slane %v4270, 4
      %v4273 = vor.u32 %v4272, %v4268
      %v4274 = vrot.slane %v4273, 4
      %v4276 = vshll.u32 %v4036, 16
      %v4278 = vrot.slane %v4276, 5
      %v4279 = vsel %vm312, %v4274, %v4278
      %v4281 = vshrl.u32 %v4037, 16
      %v4283 = vrot.slane %v4281, 4
      %v4284 = vshll.u32 %v4037, 16
      %v4286 = vrot.slane %v4284, 5
      %v4287 = vor.u32 %v4283, %v4286
      %v4288 = vrot.slane %v4287, 4
      %v4290 = vshll.u32 %v4038, 16
      %v4292 = vrot.slane %v4290, 5
      %v4293 = vsel %vm312, %v4288, %v4292
      %v4294 = vshrl.u32 %v4038, 16
      %v4296 = vrot.slane %v4294, 4
      %v4297 = vor.u32 %v4296, %v4292
      %v4298 = vrot.slane %v4297, 4
      %v4300 = vshll.u32 %v4039, 16
      %v4302 = vrot.slane %v4300, 5
      %v4303 = vsel %vm312, %v4298, %v4302
      %v4305 = vshrl.u32 %v4040, 16
      %v4307 = vrot.slane %v4305, 4
      %v4308 = vshll.u32 %v4040, 16
      %v4310 = vrot.slane %v4308, 5
      %v4311 = vor.u32 %v4307, %v4310
      %v4312 = vrot.slane %v4311, 4
      %v4314 = vshll.u32 %v4041, 16
      %v4316 = vrot.slane %v4314, 5
      %v4317 = vsel %vm312, %v4312, %v4316
      %v4318 = vshrl.u32 %v4041, 16
      %v4320 = vrot.slane %v4318, 4
      %v4321 = vor.u32 %v4320, %v4316
      %v4322 = vrot.slane %v4321, 4
      %v4324 = vshll.u32 %v4042, 16
      %v4326 = vrot.slane %v4324, 5
      %v4327 = vsel %vm312, %v4322, %v4326
      %v4329 = vshrl.u32 %v4043, 16
      %v4331 = vrot.slane %v4329, 4
      %v4332 = vshll.u32 %v4043, 16
      %v4334 = vrot.slane %v4332, 5
      %v4335 = vor.u32 %v4331, %v4334
      %v4336 = vrot.slane %v4335, 4
      %v4338 = vshll.u32 %v4044, 16
      %v4340 = vrot.slane %v4338, 5
      %v4341 = vsel %vm312, %v4336, %v4340
      %v4342 = vshrl.u32 %v4044, 16
      %v4344 = vrot.slane %v4342, 4
      %v4345 = vor.u32 %v4344, %v4340
      %v4346 = vrot.slane %v4345, 4
      %v4348 = vshll.u32 %v4045, 16
      %v4350 = vrot.slane %v4348, 5
      %v4351 = vsel %vm312, %v4346, %v4350
      %v4353 = vshrl.u32 %v4046, 16
      %v4355 = vrot.slane %v4353, 4
      %v4356 = vshll.u32 %v4046, 16
      %v4358 = vrot.slane %v4356, 5
      %v4359 = vor.u32 %v4355, %v4358
      %v4360 = vrot.slane %v4359, 4
      %v4362 = vshll.u32 %v4047, 16
      %v4364 = vrot.slane %v4362, 5
      %v4365 = vsel %vm312, %v4360, %v4364
      %v4366 = vshrl.u32 %v4047, 16
      %v4368 = vrot.slane %v4366, 4
      %v4369 = vor.u32 %v4368, %v4364
      %v4370 = vrot.slane %v4369, 4
      %v4372 = vshll.u32 %v4048, 16
      %v4374 = vrot.slane %v4372, 5
      %v4375 = vsel %vm312, %v4370, %v4374
      %v4377 = vshrl.u32 %v4049, 16
      %v4379 = vrot.slane %v4377, 4
      %v4380 = vshll.u32 %v4049, 16
      %v4382 = vrot.slane %v4380, 5
      %v4383 = vor.u32 %v4379, %v4382
      %v4384 = vrot.slane %v4383, 4
      %v4386 = vshll.u32 %v4050, 16
      %v4388 = vrot.slane %v4386, 5
      %v4389 = vsel %vm312, %v4384, %v4388
      %v4390 = vshrl.u32 %v4050, 16
      %v4392 = vrot.slane %v4390, 4
      %v4393 = vor.u32 %v4392, %v4388
      %v4394 = vrot.slane %v4393, 4
      %v4396 = vshll.u32 %v4051, 16
      %v4398 = vrot.slane %v4396, 5
      %v4399 = vsel %vm312, %v4394, %v4398
      %v4401 = vshrl.u32 %v4052, 16
      %v4403 = vrot.slane %v4401, 4
      %v4404 = vshll.u32 %v4052, 16
      %v4406 = vrot.slane %v4404, 5
      %v4407 = vor.u32 %v4403, %v4406
      %v4408 = vrot.slane %v4407, 4
      %v4410 = vshll.u32 %v4053, 16
      %v4412 = vrot.slane %v4410, 5
      %v4413 = vsel %vm312, %v4408, %v4412
      %v4414 = vshrl.u32 %v4053, 16
      %v4416 = vrot.slane %v4414, 4
      %v4417 = vor.u32 %v4416, %v4412
      %v4418 = vrot.slane %v4417, 4
      %v4420 = vshll.u32 %v4054, 16
      %v4422 = vrot.slane %v4420, 5
      %v4423 = vsel %vm312, %v4418, %v4422
      %v4425 = vshrl.u32 %v4055, 16
      %v4427 = vrot.slane %v4425, 4
      %v4428 = vshll.u32 %v4055, 16
      %v4430 = vrot.slane %v4428, 5
      %v4431 = vor.u32 %v4427, %v4430
      %v4432 = vrot.slane %v4431, 4
      %v4434 = vshll.u32 %v4056, 16
      %v4436 = vrot.slane %v4434, 5
      %v4437 = vsel %vm312, %v4432, %v4436
      %v4438 = vshrl.u32 %v4056, 16
      %v4440 = vrot.slane %v4438, 4
      %v4441 = vor.u32 %v4440, %v4436
      %v4442 = vrot.slane %v4441, 4
      %v4444 = vshll.u32 %v4057, 16
      %v4446 = vrot.slane %v4444, 5
      %v4447 = vsel %vm312, %v4442, %v4446
      %v4449 = vshrl.u32 %v4058, 16
      %v4451 = vrot.slane %v4449, 4
      %v4452 = vshll.u32 %v4058, 16
      %v4454 = vrot.slane %v4452, 5
      %v4455 = vor.u32 %v4451, %v4454
      %v4456 = vrot.slane %v4455, 4
      %v4458 = vshll.u32 %v4059, 16
      %v4460 = vrot.slane %v4458, 5
      %v4461 = vsel %vm312, %v4456, %v4460
      %v4462 = vshrl.u32 %v4059, 16
      %v4464 = vrot.slane %v4462, 4
      %v4465 = vor.u32 %v4464, %v4460
      %v4466 = vrot.slane %v4465, 4
      %v4468 = vshll.u32 %v4060, 16
      %v4470 = vrot.slane %v4468, 5
      %v4471 = vsel %vm312, %v4466, %v4470
      %v4473 = vshrl.u32 %v4061, 16
      %v4475 = vrot.slane %v4473, 4
      %v4476 = vshll.u32 %v4061, 16
      %v4478 = vrot.slane %v4476, 5
      %v4479 = vor.u32 %v4475, %v4478
      %v4480 = vrot.slane %v4479, 4
      %v4482 = vshll.u32 %v4062, 16
      %v4484 = vrot.slane %v4482, 5
      %v4485 = vsel %vm312, %v4480, %v4484
      %v4486 = vshrl.u32 %v4062, 16
      %v4488 = vrot.slane %v4486, 4
      %v4489 = vor.u32 %v4488, %v4484
      %v4490 = vrot.slane %v4489, 4
      %v4492 = vshll.u32 %v4063, 16
      %v4494 = vrot.slane %v4492, 5
      %v4495 = vsel %vm312, %v4490, %v4494
      %s4496 = scalar_lea.vmem %s1, 14
      %v4497 = vld [vmem:[%s4496] sm:$0x3]
      %v4498 = vunpack.c.l.b16 %v4077
      %v4499 = vunpack.c.l.b16 %v4087
      %v4500 = vunpack.c.l.b16 %v4101
      %v4501 = vunpack.c.l.b16 %v4111
      %v4502 = vunpack.c.l.b16 %v4125
      %v4503 = vunpack.c.l.b16 %v4135
      %v4504 = vunpack.c.l.b16 %v4149
      %v4505 = vunpack.c.l.b16 %v4159
      %v4506 = vunpack.c.l.b16 %v4173
      %v4507 = vunpack.c.l.b16 %v4183
      %v4508 = vunpack.c.l.b16 %v4197
      %v4509 = vunpack.c.l.b16 %v4207
      %v4510 = vunpack.c.l.b16 %v4221
      %v4511 = vunpack.c.l.b16 %v4231
      %v4512 = vunpack.c.l.b16 %v4245
      %v4513 = vunpack.c.l.b16 %v4255
      %v4514 = vunpack.c.l.b16 %v4269
      %v4515 = vunpack.c.l.b16 %v4279
      %v4516 = vunpack.c.l.b16 %v4293
      %v4517 = vunpack.c.l.b16 %v4303
      %v4518 = vunpack.c.l.b16 %v4317
      %v4519 = vunpack.c.l.b16 %v4327
      %v4520 = vunpack.c.l.b16 %v4341
      %v4521 = vunpack.c.l.b16 %v4351
      %v4522 = vunpack.c.l.b16 %v4365
      %v4523 = vunpack.c.l.b16 %v4375
      %v4524 = vunpack.c.l.b16 %v4389
      %v4525 = vunpack.c.l.b16 %v4399
      %v4526 = vunpack.c.l.b16 %v4413
      %v4527 = vunpack.c.l.b16 %v4423
      %v4528 = vunpack.c.l.b16 %v4437
      %v4529 = vunpack.c.l.b16 %v4447
      %v4530 = vunpack.c.l.b16 %v4461
      %v4531 = vunpack.c.l.b16 %v4471
      %v4532 = vunpack.c.l.b16 %v4485
      %v4533 = vunpack.c.l.b16 %v4495
      %v4534 = vpack.c.b16 %v4499, %v4498
      %v4535 = vpack.c.b16 %v4501, %v4500
      %v4536 = vpack.c.b16 %v4503, %v4502
      %v4537 = vpack.c.b16 %v4505, %v4504
      %v4538 = vpack.c.b16 %v4507, %v4506
      %v4539 = vpack.c.b16 %v4509, %v4508
      %v4540 = vpack.c.b16 %v4511, %v4510
      %v4541 = vpack.c.b16 %v4513, %v4512
      %v4542 = vpack.c.b16 %v4515, %v4514
      %v4543 = vpack.c.b16 %v4517, %v4516
      %v4544 = vpack.c.b16 %v4519, %v4518
      %v4545 = vpack.c.b16 %v4521, %v4520
      %v4546 = vpack.c.b16 %v4523, %v4522
      %v4547 = vpack.c.b16 %v4525, %v4524
      %v4548 = vpack.c.b16 %v4527, %v4526
      %v4549 = vpack.c.b16 %v4529, %v4528
      %v4550 = vpack.c.b16 %v4531, %v4530
      %v4551 = vpack.c.b16 %v4533, %v4532
      %v4553 = vsel %vm801, %v4534, 0
      %v4556 = vsel %vm801, %v4535, 0
      %v4559 = vsel %vm801, %v4536, 0
      %v4562 = vsel %vm801, %v4537, 0
      %v4565 = vsel %vm801, %v4538, 0
      %v4568 = vsel %vm801, %v4539, 0
      %v4571 = vsel %vm801, %v4540, 0
      %v4574 = vsel %vm801, %v4541, 0
      %v4577 = vsel %vm801, %v4542, 0
      %v4580 = vsel %vm801, %v4543, 0
      %v4583 = vsel %vm801, %v4544, 0
      %v4586 = vsel %vm801, %v4545, 0
      %v4589 = vsel %vm801, %v4546, 0
      %v4592 = vsel %vm801, %v4547, 0
      %v4595 = vsel %vm801, %v4548, 0
      %v4598 = vsel %vm801, %v4549, 0
      %v4601 = vsel %vm801, %v4550, 0
      %v4604 = vsel %vm801, %v4551, 0
      %v4607 = vsel %vm856, %v4497, 0
      %4609 = vmatprep.subr.bf16.mxu0 0
      %4610 = vmatpush1.bf16.msra.mxu0 %v4607
      %4611 = vmatprep.subr.bf16.mxu0 0
      %4612 = vmatpush1.bf16.msra.mxu0 0
      %4613 = vmatprep.subr.bf16.mxu0 0
      %4614 = vmatpush1.bf16.msra.mxu0 0
      %4615 = vmatprep.subr.bf16.mxu0 0
      %4616 = vmatpush1.bf16.msra.mxu0 0
      %4617 = vmatprep.subr.bf16.mxu0 0
      %4618 = vmatpush1.bf16.msra.mxu0 0
      %4619 = vmatprep.subr.bf16.mxu0 0
      %4620 = vmatpush1.bf16.msra.mxu0 0
      %4621 = vmatprep.subr.bf16.mxu0 0
      %4622 = vmatpush1.bf16.msra.mxu0 0
      %4623 = vmatprep.subr.bf16.mxu0 0
      %4624 = vmatpush1.bf16.msra.mxu0 0
      %4625 = vmatprep.subr.bf16.mxu0 0
      %4626 = vmatpush1.bf16.msra.mxu0 0
      %4627 = vmatprep.subr.bf16.mxu0 0
      %4628 = vmatpush1.bf16.msra.mxu0 0
      %4629 = vmatprep.subr.bf16.mxu0 0
      %4630 = vmatpush1.bf16.msra.mxu0 0
      %4631 = vmatprep.subr.bf16.mxu0 0
      %4632 = vmatpush1.bf16.msra.mxu0 0
      %4633 = vmatprep.subr.bf16.mxu0 0
      %4634 = vmatpush1.bf16.msra.mxu0 0
      %4635 = vmatprep.subr.bf16.mxu0 0
      %4636 = vmatpush1.bf16.msra.mxu0 0
      %4637 = vmatprep.subr.bf16.mxu0 0
      %4638 = vmatpush1.bf16.msra.mxu0 0
      %4639 = vmatprep.subr.bf16.mxu0 0
      %4640 = vmatpush1.bf16.msra.mxu0 0
      %4641 = vmatprep.mubr.bf16.mxu0 0
      %4642 = vmatmul.mubr.bf16.gmra.mrb[0].mxu0 %v4553
      %v4643 = vpop.f32.mrb[0].mxu0
      %v4644 = vadd.f32 0.0, %v4643
      %v4645 = vpop.f32.mrb[0].mxu0
      %v4646 = vpop.f32.mrb[0].mxu0
      %v4647 = vadd.f32 0.0, %v4646
      %v4648 = vpop.f32.mrb[0].mxu0
      %4649 = vmatprep.mubr.bf16.mxu0 0
      %4650 = vmatmul.mubr.bf16.gmra.mrb[0].mxu0 %v4556
      %v4651 = vpop.f32.mrb[0].mxu0
      %v4652 = vadd.f32 0.0, %v4651
      %v4653 = vpop.f32.mrb[0].mxu0
      %v4654 = vpop.f32.mrb[0].mxu0
      %v4655 = vadd.f32 0.0, %v4654
      %v4656 = vpop.f32.mrb[0].mxu0
      %4657 = vmatprep.mubr.bf16.mxu0 0
      %4658 = vmatmul.mubr.bf16.gmra.mrb[0].mxu0 %v4559
      %v4659 = vpop.f32.mrb[0].mxu0
      %v4660 = vadd.f32 0.0, %v4659
      %v4661 = vpop.f32.mrb[0].mxu0
      %v4662 = vpop.f32.mrb[0].mxu0
      %v4663 = vadd.f32 0.0, %v4662
      %v4664 = vpop.f32.mrb[0].mxu0
      %4665 = vmatprep.mubr.bf16.mxu0 0
      %4666 = vmatmul.mubr.bf16.gmra.mrb[0].mxu0 %v4562
      %v4667 = vpop.f32.mrb[0].mxu0
      %v4668 = vadd.f32 0.0, %v4667
      %v4669 = vpop.f32.mrb[0].mxu0
      %v4670 = vpop.f32.mrb[0].mxu0
      %v4671 = vadd.f32 0.0, %v4670
      %v4672 = vpop.f32.mrb[0].mxu0
      %4673 = vmatprep.mubr.bf16.mxu0 0
      %4674 = vmatmul.mubr.bf16.gmra.mrb[0].mxu0 %v4565
      %v4675 = vpop.f32.mrb[0].mxu0
      %v4676 = vadd.f32 0.0, %v4675
      %v4677 = vpop.f32.mrb[0].mxu0
      %v4678 = vpop.f32.mrb[0].mxu0
      %v4679 = vadd.f32 0.0, %v4678
      %v4680 = vpop.f32.mrb[0].mxu0
      %4681 = vmatprep.mubr.bf16.mxu0 0
      %4682 = vmatmul.mubr.bf16.gmra.mrb[0].mxu0 %v4568
      %v4683 = vpop.f32.mrb[0].mxu0
      %v4684 = vadd.f32 0.0, %v4683
      %v4685 = vpop.f32.mrb[0].mxu0
      %v4686 = vpop.f32.mrb[0].mxu0
      %v4687 = vadd.f32 0.0, %v4686
      %v4688 = vpop.f32.mrb[0].mxu0
      %4689 = vmatprep.mubr.bf16.mxu0 0
      %4690 = vmatmul.mubr.bf16.gmra.mrb[0].mxu0 %v4571
      %v4691 = vpop.f32.mrb[0].mxu0
      %v4692 = vadd.f32 0.0, %v4691
      %v4693 = vpop.f32.mrb[0].mxu0
      %v4694 = vpop.f32.mrb[0].mxu0
      %v4695 = vadd.f32 0.0, %v4694
      %v4696 = vpop.f32.mrb[0].mxu0
      %4697 = vmatprep.mubr.bf16.mxu0 0
      %4698 = vmatmul.mubr.bf16.gmra.mrb[0].mxu0 %v4574
      %v4699 = vpop.f32.mrb[0].mxu0
      %v4700 = vadd.f32 0.0, %v4699
      %v4701 = vpop.f32.mrb[0].mxu0
      %v4702 = vpop.f32.mrb[0].mxu0
      %v4703 = vadd.f32 0.0, %v4702
      %v4704 = vpop.f32.mrb[0].mxu0
      %4705 = vmatprep.mubr.bf16.mxu0 0
      %4706 = vmatmul.mubr.bf16.gmra.mrb[0].mxu0 %v4577
      %v4707 = vpop.f32.mrb[0].mxu0
      %v4708 = vadd.f32 0.0, %v4707
      %v4709 = vpop.f32.mrb[0].mxu0
      %v4710 = vpop.f32.mrb[0].mxu0
      %v4711 = vadd.f32 0.0, %v4710
      %v4712 = vpop.f32.mrb[0].mxu0
      %4713 = vmatprep.mubr.bf16.mxu0 0
      %4714 = vmatmul.mubr.bf16.gmra.mrb[0].mxu0 %v4580
      %v4715 = vpop.f32.mrb[0].mxu0
      %v4716 = vadd.f32 0.0, %v4715
      %v4717 = vpop.f32.mrb[0].mxu0
      %v4718 = vpop.f32.mrb[0].mxu0
      %v4719 = vadd.f32 0.0, %v4718
      %v4720 = vpop.f32.mrb[0].mxu0
      %4721 = vmatprep.mubr.bf16.mxu0 0
      %4722 = vmatmul.mubr.bf16.gmra.mrb[0].mxu0 %v4583
      %v4723 = vpop.f32.mrb[0].mxu0
      %v4724 = vadd.f32 0.0, %v4723
      %v4725 = vpop.f32.mrb[0].mxu0
      %v4726 = vpop.f32.mrb[0].mxu0
      %v4727 = vadd.f32 0.0, %v4726
      %v4728 = vpop.f32.mrb[0].mxu0
      %4729 = vmatprep.mubr.bf16.mxu0 0
      %4730 = vmatmul.mubr.bf16.gmra.mrb[0].mxu0 %v4586
      %v4731 = vpop.f32.mrb[0].mxu0
      %v4732 = vadd.f32 0.0, %v4731
      %v4733 = vpop.f32.mrb[0].mxu0
      %v4734 = vpop.f32.mrb[0].mxu0
      %v4735 = vadd.f32 0.0, %v4734
      %v4736 = vpop.f32.mrb[0].mxu0
      %4737 = vmatprep.mubr.bf16.mxu0 0
      %4738 = vmatmul.mubr.bf16.gmra.mrb[0].mxu0 %v4589
      %v4739 = vpop.f32.mrb[0].mxu0
      %v4740 = vadd.f32 0.0, %v4739
      %v4741 = vpop.f32.mrb[0].mxu0
      %v4742 = vpop.f32.mrb[0].mxu0
      %v4743 = vadd.f32 0.0, %v4742
      %v4744 = vpop.f32.mrb[0].mxu0
      %4745 = vmatprep.mubr.bf16.mxu0 0
      %4746 = vmatmul.mubr.bf16.gmra.mrb[0].mxu0 %v4592
      %v4747 = vpop.f32.mrb[0].mxu0
      %v4748 = vadd.f32 0.0, %v4747
      %v4749 = vpop.f32.mrb[0].mxu0
      %v4750 = vpop.f32.mrb[0].mxu0
      %v4751 = vadd.f32 0.0, %v4750
      %v4752 = vpop.f32.mrb[0].mxu0
      %4753 = vmatprep.mubr.bf16.mxu0 0
      %4754 = vmatmul.mubr.bf16.gmra.mrb[0].mxu0 %v4595
      %v4755 = vpop.f32.mrb[0].mxu0
      %v4756 = vadd.f32 0.0, %v4755
      %v4757 = vpop.f32.mrb[0].mxu0
      %v4758 = vpop.f32.mrb[0].mxu0
      %v4759 = vadd.f32 0.0, %v4758
      %v4760 = vpop.f32.mrb[0].mxu0
      %4761 = vmatprep.mubr.bf16.mxu0 0
      %4762 = vmatmul.mubr.bf16.gmra.mrb[0].mxu0 %v4598
      %v4763 = vpop.f32.mrb[0].mxu0
      %v4764 = vadd.f32 0.0, %v4763
      %v4765 = vpop.f32.mrb[0].mxu0
      %v4766 = vpop.f32.mrb[0].mxu0
      %v4767 = vadd.f32 0.0, %v4766
      %v4768 = vpop.f32.mrb[0].mxu0
      %4769 = vmatprep.mubr.bf16.mxu0 0
      %4770 = vmatmul.mubr.bf16.gmra.mrb[0].mxu0 %v4601
      %v4771 = vpop.f32.mrb[0].mxu0
      %v4772 = vadd.f32 0.0, %v4771
      %v4773 = vpop.f32.mrb[0].mxu0
      %v4774 = vpop.f32.mrb[0].mxu0
      %v4775 = vadd.f32 0.0, %v4774
      %v4776 = vpop.f32.mrb[0].mxu0
      %4777 = vmatprep.mubr.bf16.mxu0 0
      %4778 = vmatmul.mubr.bf16.gmra.mrb[0].mxu0 %v4604
      %v4779 = vpop.f32.mrb[0].mxu0
      %v4780 = vadd.f32 0.0, %v4779
      %v4781 = vpop.f32.mrb[0].mxu0
      %v4782 = vpop.f32.mrb[0].mxu0
      %v4783 = vadd.f32 0.0, %v4782
      %v4784 = vpop.f32.mrb[0].mxu0
      %4785 = vdwg.mxu0
      %v4786 = vadd.f32 %v3974, %v4644
      %v4787 = vadd.f32 %v3975, %v4647
      %v4788 = vadd.f32 %v3976, %v4652
      %v4789 = vadd.f32 %v3977, %v4655
      %v4790 = vadd.f32 %v3978, %v4660
      %v4791 = vadd.f32 %v3979, %v4663
      %v4792 = vadd.f32 %v3980, %v4668
      %v4793 = vadd.f32 %v3981, %v4671
      %v4794 = vadd.f32 %v3982, %v4676
      %v4795 = vadd.f32 %v3983, %v4679
      %v4796 = vadd.f32 %v3984, %v4684
      %v4797 = vadd.f32 %v3985, %v4687
      %v4798 = vadd.f32 %v3986, %v4692
      %v4799 = vadd.f32 %v3987, %v4695
      %v4800 = vadd.f32 %v3988, %v4700
      %v4801 = vadd.f32 %v3989, %v4703
      %v4802 = vadd.f32 %v3990, %v4708
      %v4803 = vadd.f32 %v3991, %v4711
      %v4804 = vadd.f32 %v3992, %v4716
      %v4805 = vadd.f32 %v3993, %v4719
      %v4806 = vadd.f32 %v3994, %v4724
      %v4807 = vadd.f32 %v3995, %v4727
      %v4808 = vadd.f32 %v3996, %v4732
      %v4809 = vadd.f32 %v3997, %v4735
      %v4810 = vadd.f32 %v3998, %v4740
      %v4811 = vadd.f32 %v3999, %v4743
      %v4812 = vadd.f32 %v4000, %v4748
      %v4813 = vadd.f32 %v4001, %v4751
      %v4814 = vadd.f32 %v4002, %v4756
      %v4815 = vadd.f32 %v4003, %v4759
      %v4816 = vadd.f32 %v4004, %v4764
      %v4817 = vadd.f32 %v4005, %v4767
      %v4818 = vadd.f32 %v4006, %v4772
      %v4819 = vadd.f32 %v4007, %v4775
      %v4820 = vadd.f32 %v4008, %v4780
      %v4821 = vadd.f32 %v4009, %v4783
      %v4822 = vld [vmem:[%s3611] sm:$0xe]
      %v4823 = vld [vmem:[%s3611 + $0xc] sm:$0xe]
      %v4824 = vld [vmem:[%s3611 + $0x18] sm:$0xe]
      %v4825 = vld [vmem:[%s3611 + $0x24] sm:$0xe]
      %v4826 = vld [vmem:[%s3611 + $0x30] sm:$0xe]
      %v4827 = vld [vmem:[%s3611 + $0x3c] sm:$0xe]
      %v4828 = vld [vmem:[%s3611 + $0x48] sm:$0xe]
      %v4829 = vld [vmem:[%s3611 + $0x54] sm:$0xe]
      %v4830 = vld [vmem:[%s3611 + $0x60] sm:$0xe]
      %v4831 = vld [vmem:[%s3611 + $0x6c] sm:$0xe]
      %v4832 = vld [vmem:[%s3611 + $0x78] sm:$0xe]
      %v4833 = vld [vmem:[%s3611 + $0x84] sm:$0xe]
      %v4834 = vld [vmem:[%s3611 + $0x90] sm:$0xe]
      %v4835 = vld [vmem:[%s3611 + $0x9c] sm:$0xe]
      %v4836 = vld [vmem:[%s3611 + $0xa8] sm:$0xe]
      %v4837 = vld [vmem:[%s3611 + $0xb4] sm:$0xe]
      %v4838 = vld [vmem:[%s3611 + $0xc0] sm:$0xe]
      %v4839 = vld [vmem:[%s3611 + $0xcc] sm:$0xe]
      %v4894 = vrot.slane %v4822, 5
      %v4895 = vrot.slane %v4894, 4
      %v4896 = vrot.slane %v4011, 5
      %v4897 = vsel %vm1417, %v4895, %v4896
      %v4898 = vrot.slane %v4896, 4
      %v4899 = vrot.slane %v4012, 5
      %v4900 = vsel %vm1417, %v4898, %v4899
      %v4901 = vrot.slane %v4823, 5
      %v4902 = vrot.slane %v4901, 4
      %v4903 = vrot.slane %v4014, 5
      %v4904 = vsel %vm1417, %v4902, %v4903
      %v4905 = vrot.slane %v4903, 4
      %v4906 = vrot.slane %v4015, 5
      %v4907 = vsel %vm1417, %v4905, %v4906
      %v4908 = vrot.slane %v4824, 5
      %v4909 = vrot.slane %v4908, 4
      %v4910 = vrot.slane %v4017, 5
      %v4911 = vsel %vm1417, %v4909, %v4910
      %v4912 = vrot.slane %v4910, 4
      %v4913 = vrot.slane %v4018, 5
      %v4914 = vsel %vm1417, %v4912, %v4913
      %v4915 = vrot.slane %v4825, 5
      %v4916 = vrot.slane %v4915, 4
      %v4917 = vrot.slane %v4020, 5
      %v4918 = vsel %vm1417, %v4916, %v4917
      %v4919 = vrot.slane %v4917, 4
      %v4920 = vrot.slane %v4021, 5
      %v4921 = vsel %vm1417, %v4919, %v4920
      %v4922 = vrot.slane %v4826, 5
      %v4923 = vrot.slane %v4922, 4
      %v4924 = vrot.slane %v4023, 5
      %v4925 = vsel %vm1417, %v4923, %v4924
      %v4926 = vrot.slane %v4924, 4
      %v4927 = vrot.slane %v4024, 5
      %v4928 = vsel %vm1417, %v4926, %v4927
      %v4929 = vrot.slane %v4827, 5
      %v4930 = vrot.slane %v4929, 4
      %v4931 = vrot.slane %v4026, 5
      %v4932 = vsel %vm1417, %v4930, %v4931
      %v4933 = vrot.slane %v4931, 4
      %v4934 = vrot.slane %v4027, 5
      %v4935 = vsel %vm1417, %v4933, %v4934
      %v4936 = vrot.slane %v4828, 5
      %v4937 = vrot.slane %v4936, 4
      %v4938 = vrot.slane %v4029, 5
      %v4939 = vsel %vm1417, %v4937, %v4938
      %v4940 = vrot.slane %v4938, 4
      %v4941 = vrot.slane %v4030, 5
      %v4942 = vsel %vm1417, %v4940, %v4941
      %v4943 = vrot.slane %v4829, 5
      %v4944 = vrot.slane %v4943, 4
      %v4945 = vrot.slane %v4032, 5
      %v4946 = vsel %vm1417, %v4944, %v4945
      %v4947 = vrot.slane %v4945, 4
      %v4948 = vrot.slane %v4033, 5
      %v4949 = vsel %vm1417, %v4947, %v4948
      %v4950 = vrot.slane %v4830, 5
      %v4951 = vrot.slane %v4950, 4
      %v4952 = vrot.slane %v4035, 5
      %v4953 = vsel %vm1417, %v4951, %v4952
      %v4954 = vrot.slane %v4952, 4
      %v4955 = vrot.slane %v4036, 5
      %v4956 = vsel %vm1417, %v4954, %v4955
      %v4957 = vrot.slane %v4831, 5
      %v4958 = vrot.slane %v4957, 4
      %v4959 = vrot.slane %v4038, 5
      %v4960 = vsel %vm1417, %v4958, %v4959
      %v4961 = vrot.slane %v4959, 4
      %v4962 = vrot.slane %v4039, 5
      %v4963 = vsel %vm1417, %v4961, %v4962
      %v4964 = vrot.slane %v4832, 5
      %v4965 = vrot.slane %v4964, 4
      %v4966 = vrot.slane %v4041, 5
      %v4967 = vsel %vm1417, %v4965, %v4966
      %v4968 = vrot.slane %v4966, 4
      %v4969 = vrot.slane %v4042, 5
      %v4970 = vsel %vm1417, %v4968, %v4969
      %v4971 = vrot.slane %v4833, 5
      %v4972 = vrot.slane %v4971, 4
      %v4973 = vrot.slane %v4044, 5
      %v4974 = vsel %vm1417, %v4972, %v4973
      %v4975 = vrot.slane %v4973, 4
      %v4976 = vrot.slane %v4045, 5
      %v4977 = vsel %vm1417, %v4975, %v4976
      %v4978 = vrot.slane %v4834, 5
      %v4979 = vrot.slane %v4978, 4
      %v4980 = vrot.slane %v4047, 5
      %v4981 = vsel %vm1417, %v4979, %v4980
      %v4982 = vrot.slane %v4980, 4
      %v4983 = vrot.slane %v4048, 5
      %v4984 = vsel %vm1417, %v4982, %v4983
      %v4985 = vrot.slane %v4835, 5
      %v4986 = vrot.slane %v4985, 4
      %v4987 = vrot.slane %v4050, 5
      %v4988 = vsel %vm1417, %v4986, %v4987
      %v4989 = vrot.slane %v4987, 4
      %v4990 = vrot.slane %v4051, 5
      %v4991 = vsel %vm1417, %v4989, %v4990
      %v4992 = vrot.slane %v4836, 5
      %v4993 = vrot.slane %v4992, 4
      %v4994 = vrot.slane %v4053, 5
      %v4995 = vsel %vm1417, %v4993, %v4994
      %v4996 = vrot.slane %v4994, 4
      %v4997 = vrot.slane %v4054, 5
      %v4998 = vsel %vm1417, %v4996, %v4997
      %v4999 = vrot.slane %v4837, 5
      %v5000 = vrot.slane %v4999, 4
      %v5001 = vrot.slane %v4056, 5
      %v5002 = vsel %vm1417, %v5000, %v5001
      %v5003 = vrot.slane %v5001, 4
      %v5004 = vrot.slane %v4057, 5
      %v5005 = vsel %vm1417, %v5003, %v5004
      %v5006 = vrot.slane %v4838, 5
      %v5007 = vrot.slane %v5006, 4
      %v5008 = vrot.slane %v4059, 5
      %v5009 = vsel %vm1417, %v5007, %v5008
      %v5010 = vrot.slane %v5008, 4
      %v5011 = vrot.slane %v4060, 5
      %v5012 = vsel %vm1417, %v5010, %v5011
      %v5013 = vrot.slane %v4839, 5
      %v5014 = vrot.slane %v5013, 4
      %v5015 = vrot.slane %v4062, 5
      %v5016 = vsel %vm1417, %v5014, %v5015
      %v5017 = vrot.slane %v5015, 4
      %v5018 = vrot.slane %v4063, 5
      %v5019 = vsel %vm1417, %v5017, %v5018
      %s5020 = scalar_lea.vmem %s1, 16
      %v5021 = vld [vmem:[%s5020] sm:$0x3]
      %v5022 = vunpack.c.l.b16 %v4897
      %v5023 = vunpack.c.l.b16 %v4900
      %v5024 = vunpack.c.l.b16 %v4904
      %v5025 = vunpack.c.l.b16 %v4907
      %v5026 = vunpack.c.l.b16 %v4911
      %v5027 = vunpack.c.l.b16 %v4914
      %v5028 = vunpack.c.l.b16 %v4918
      %v5029 = vunpack.c.l.b16 %v4921
      %v5030 = vunpack.c.l.b16 %v4925
      %v5031 = vunpack.c.l.b16 %v4928
      %v5032 = vunpack.c.l.b16 %v4932
      %v5033 = vunpack.c.l.b16 %v4935
      %v5034 = vunpack.c.l.b16 %v4939
      %v5035 = vunpack.c.l.b16 %v4942
      %v5036 = vunpack.c.l.b16 %v4946
      %v5037 = vunpack.c.l.b16 %v4949
      %v5038 = vunpack.c.l.b16 %v4953
      %v5039 = vunpack.c.l.b16 %v4956
      %v5040 = vunpack.c.l.b16 %v4960
      %v5041 = vunpack.c.l.b16 %v4963
      %v5042 = vunpack.c.l.b16 %v4967
      %v5043 = vunpack.c.l.b16 %v4970
      %v5044 = vunpack.c.l.b16 %v4974
      %v5045 = vunpack.c.l.b16 %v4977
      %v5046 = vunpack.c.l.b16 %v4981
      %v5047 = vunpack.c.l.b16 %v4984
      %v5048 = vunpack.c.l.b16 %v4988
      %v5049 = vunpack.c.l.b16 %v4991
      %v5050 = vunpack.c.l.b16 %v4995
      %v5051 = vunpack.c.l.b16 %v4998
      %v5052 = vunpack.c.l.b16 %v5002
      %v5053 = vunpack.c.l.b16 %v5005
      %v5054 = vunpack.c.l.b16 %v5009
      %v5055 = vunpack.c.l.b16 %v5012
      %v5056 = vunpack.c.l.b16 %v5016
      %v5057 = vunpack.c.l.b16 %v5019
      %v5058 = vpack.c.b16 %v5023, %v5022
      %v5059 = vpack.c.b16 %v5025, %v5024
      %v5060 = vpack.c.b16 %v5027, %v5026
      %v5061 = vpack.c.b16 %v5029, %v5028
      %v5062 = vpack.c.b16 %v5031, %v5030
      %v5063 = vpack.c.b16 %v5033, %v5032
      %v5064 = vpack.c.b16 %v5035, %v5034
      %v5065 = vpack.c.b16 %v5037, %v5036
      %v5066 = vpack.c.b16 %v5039, %v5038
      %v5067 = vpack.c.b16 %v5041, %v5040
      %v5068 = vpack.c.b16 %v5043, %v5042
      %v5069 = vpack.c.b16 %v5045, %v5044
      %v5070 = vpack.c.b16 %v5047, %v5046
      %v5071 = vpack.c.b16 %v5049, %v5048
      %v5072 = vpack.c.b16 %v5051, %v5050
      %v5073 = vpack.c.b16 %v5053, %v5052
      %v5074 = vpack.c.b16 %v5055, %v5054
      %v5075 = vpack.c.b16 %v5057, %v5056
      %v5077 = vsel %vm801, %v5058, 0
      %v5080 = vsel %vm801, %v5059, 0
      %v5083 = vsel %vm801, %v5060, 0
      %v5086 = vsel %vm801, %v5061, 0
      %v5089 = vsel %vm801, %v5062, 0
      %v5092 = vsel %vm801, %v5063, 0
      %v5095 = vsel %vm801, %v5064, 0
      %v5098 = vsel %vm801, %v5065, 0
      %v5101 = vsel %vm801, %v5066, 0
      %v5104 = vsel %vm801, %v5067, 0
      %v5107 = vsel %vm801, %v5068, 0
      %v5110 = vsel %vm801, %v5069, 0
      %v5113 = vsel %vm801, %v5070, 0
      %v5116 = vsel %vm801, %v5071, 0
      %v5119 = vsel %vm801, %v5072, 0
      %v5122 = vsel %vm801, %v5073, 0
      %v5125 = vsel %vm801, %v5074, 0
      %v5128 = vsel %vm801, %v5075, 0
      %v5131 = vsel %vm856, %v5021, 0
      %5133 = vmatprep.subr.bf16.mxu0 0
      %5134 = vmatpush1.bf16.msra.mxu0 %v5131
      %5135 = vmatprep.subr.bf16.mxu0 0
      %5136 = vmatpush1.bf16.msra.mxu0 0
      %5137 = vmatprep.subr.bf16.mxu0 0
      %5138 = vmatpush1.bf16.msra.mxu0 0
      %5139 = vmatprep.subr.bf16.mxu0 0
      %5140 = vmatpush1.bf16.msra.mxu0 0
      %5141 = vmatprep.subr.bf16.mxu0 0
      %5142 = vmatpush1.bf16.msra.mxu0 0
      %5143 = vmatprep.subr.bf16.mxu0 0
      %5144 = vmatpush1.bf16.msra.mxu0 0
      %5145 = vmatprep.subr.bf16.mxu0 0
      %5146 = vmatpush1.bf16.msra.mxu0 0
      %5147 = vmatprep.subr.bf16.mxu0 0
      %5148 = vmatpush1.bf16.msra.mxu0 0
      %5149 = vmatprep.subr.bf16.mxu0 0
      %5150 = vmatpush1.bf16.msra.mxu0 0
      %5151 = vmatprep.subr.bf16.mxu0 0
      %5152 = vmatpush1.bf16.msra.mxu0 0
      %5153 = vmatprep.subr.bf16.mxu0 0
      %5154 = vmatpush1.bf16.msra.mxu0 0
      %5155 = vmatprep.subr.bf16.mxu0 0
      %5156 = vmatpush1.bf16.msra.mxu0 0
      %5157 = vmatprep.subr.bf16.mxu0 0
      %5158 = vmatpush1.bf16.msra.mxu0 0
      %5159 = vmatprep.subr.bf16.mxu0 0
      %5160 = vmatpush1.bf16.msra.mxu0 0
      %5161 = vmatprep.subr.bf16.mxu0 0
      %5162 = vmatpush1.bf16.msra.mxu0 0
      %5163 = vmatprep.subr.bf16.mxu0 0
      %5164 = vmatpush1.bf16.msra.mxu0 0
      %5165 = vmatprep.mubr.bf16.mxu0 0
      %5166 = vmatmul.mubr.bf16.gmra.mrb[0].mxu0 %v5077
      %v5167 = vpop.f32.mrb[0].mxu0
      %v5168 = vadd.f32 0.0, %v5167
      %v5169 = vpop.f32.mrb[0].mxu0
      %v5170 = vpop.f32.mrb[0].mxu0
      %v5171 = vadd.f32 0.0, %v5170
      %v5172 = vpop.f32.mrb[0].mxu0
      %5173 = vmatprep.mubr.bf16.mxu0 0
      %5174 = vmatmul.mubr.bf16.gmra.mrb[0].mxu0 %v5080
      %v5175 = vpop.f32.mrb[0].mxu0
      %v5176 = vadd.f32 0.0, %v5175
      %v5177 = vpop.f32.mrb[0].mxu0
      %v5178 = vpop.f32.mrb[0].mxu0
      %v5179 = vadd.f32 0.0, %v5178
      %v5180 = vpop.f32.mrb[0].mxu0
      %5181 = vmatprep.mubr.bf16.mxu0 0
      %5182 = vmatmul.mubr.bf16.gmra.mrb[0].mxu0 %v5083
      %v5183 = vpop.f32.mrb[0].mxu0
      %v5184 = vadd.f32 0.0, %v5183
      %v5185 = vpop.f32.mrb[0].mxu0
      %v5186 = vpop.f32.mrb[0].mxu0
      %v5187 = vadd.f32 0.0, %v5186
      %v5188 = vpop.f32.mrb[0].mxu0
      %5189 = vmatprep.mubr.bf16.mxu0 0
      %5190 = vmatmul.mubr.bf16.gmra.mrb[0].mxu0 %v5086
      %v5191 = vpop.f32.mrb[0].mxu0
      %v5192 = vadd.f32 0.0, %v5191
      %v5193 = vpop.f32.mrb[0].mxu0
      %v5194 = vpop.f32.mrb[0].mxu0
      %v5195 = vadd.f32 0.0, %v5194
      %v5196 = vpop.f32.mrb[0].mxu0
      %5197 = vmatprep.mubr.bf16.mxu0 0
      %5198 = vmatmul.mubr.bf16.gmra.mrb[0].mxu0 %v5089
      %v5199 = vpop.f32.mrb[0].mxu0
      %v5200 = vadd.f32 0.0, %v5199
      %v5201 = vpop.f32.mrb[0].mxu0
      %v5202 = vpop.f32.mrb[0].mxu0
      %v5203 = vadd.f32 0.0, %v5202
      %v5204 = vpop.f32.mrb[0].mxu0
      %5205 = vmatprep.mubr.bf16.mxu0 0
      %5206 = vmatmul.mubr.bf16.gmra.mrb[0].mxu0 %v5092
      %v5207 = vpop.f32.mrb[0].mxu0
      %v5208 = vadd.f32 0.0, %v5207
      %v5209 = vpop.f32.mrb[0].mxu0
      %v5210 = vpop.f32.mrb[0].mxu0
      %v5211 = vadd.f32 0.0, %v5210
      %v5212 = vpop.f32.mrb[0].mxu0
      %5213 = vmatprep.mubr.bf16.mxu0 0
      %5214 = vmatmul.mubr.bf16.gmra.mrb[0].mxu0 %v5095
      %v5215 = vpop.f32.mrb[0].mxu0
      %v5216 = vadd.f32 0.0, %v5215
      %v5217 = vpop.f32.mrb[0].mxu0
      %v5218 = vpop.f32.mrb[0].mxu0
      %v5219 = vadd.f32 0.0, %v5218
      %v5220 = vpop.f32.mrb[0].mxu0
      %5221 = vmatprep.mubr.bf16.mxu0 0
      %5222 = vmatmul.mubr.bf16.gmra.mrb[0].mxu0 %v5098
      %v5223 = vpop.f32.mrb[0].mxu0
      %v5224 = vadd.f32 0.0, %v5223
      %v5225 = vpop.f32.mrb[0].mxu0
      %v5226 = vpop.f32.mrb[0].mxu0
      %v5227 = vadd.f32 0.0, %v5226
      %v5228 = vpop.f32.mrb[0].mxu0
      %5229 = vmatprep.mubr.bf16.mxu0 0
      %5230 = vmatmul.mubr.bf16.gmra.mrb[0].mxu0 %v5101
      %v5231 = vpop.f32.mrb[0].mxu0
      %v5232 = vadd.f32 0.0, %v5231
      %v5233 = vpop.f32.mrb[0].mxu0
      %v5234 = vpop.f32.mrb[0].mxu0
      %v5235 = vadd.f32 0.0, %v5234
      %v5236 = vpop.f32.mrb[0].mxu0
      %5237 = vmatprep.mubr.bf16.mxu0 0
      %5238 = vmatmul.mubr.bf16.gmra.mrb[0].mxu0 %v5104
      %v5239 = vpop.f32.mrb[0].mxu0
      %v5240 = vadd.f32 0.0, %v5239
      %v5241 = vpop.f32.mrb[0].mxu0
      %v5242 = vpop.f32.mrb[0].mxu0
      %v5243 = vadd.f32 0.0, %v5242
      %v5244 = vpop.f32.mrb[0].mxu0
      %5245 = vmatprep.mubr.bf16.mxu0 0
      %5246 = vmatmul.mubr.bf16.gmra.mrb[0].mxu0 %v5107
      %v5247 = vpop.f32.mrb[0].mxu0
      %v5248 = vadd.f32 0.0, %v5247
      %v5249 = vpop.f32.mrb[0].mxu0
      %v5250 = vpop.f32.mrb[0].mxu0
      %v5251 = vadd.f32 0.0, %v5250
      %v5252 = vpop.f32.mrb[0].mxu0
      %5253 = vmatprep.mubr.bf16.mxu0 0
      %5254 = vmatmul.mubr.bf16.gmra.mrb[0].mxu0 %v5110
      %v5255 = vpop.f32.mrb[0].mxu0
      %v5256 = vadd.f32 0.0, %v5255
      %v5257 = vpop.f32.mrb[0].mxu0
      %v5258 = vpop.f32.mrb[0].mxu0
      %v5259 = vadd.f32 0.0, %v5258
      %v5260 = vpop.f32.mrb[0].mxu0
      %5261 = vmatprep.mubr.bf16.mxu0 0
      %5262 = vmatmul.mubr.bf16.gmra.mrb[0].mxu0 %v5113
      %v5263 = vpop.f32.mrb[0].mxu0
      %v5264 = vadd.f32 0.0, %v5263
      %v5265 = vpop.f32.mrb[0].mxu0
      %v5266 = vpop.f32.mrb[0].mxu0
      %v5267 = vadd.f32 0.0, %v5266
      %v5268 = vpop.f32.mrb[0].mxu0
      %5269 = vmatprep.mubr.bf16.mxu0 0
      %5270 = vmatmul.mubr.bf16.gmra.mrb[0].mxu0 %v5116
      %v5271 = vpop.f32.mrb[0].mxu0
      %v5272 = vadd.f32 0.0, %v5271
      %v5273 = vpop.f32.mrb[0].mxu0
      %v5274 = vpop.f32.mrb[0].mxu0
      %v5275 = vadd.f32 0.0, %v5274
      %v5276 = vpop.f32.mrb[0].mxu0
      %5277 = vmatprep.mubr.bf16.mxu0 0
      %5278 = vmatmul.mubr.bf16.gmra.mrb[0].mxu0 %v5119
      %v5279 = vpop.f32.mrb[0].mxu0
      %v5280 = vadd.f32 0.0, %v5279
      %v5281 = vpop.f32.mrb[0].mxu0
      %v5282 = vpop.f32.mrb[0].mxu0
      %v5283 = vadd.f32 0.0, %v5282
      %v5284 = vpop.f32.mrb[0].mxu0
      %5285 = vmatprep.mubr.bf16.mxu0 0
      %5286 = vmatmul.mubr.bf16.gmra.mrb[0].mxu0 %v5122
      %v5287 = vpop.f32.mrb[0].mxu0
      %v5288 = vadd.f32 0.0, %v5287
      %v5289 = vpop.f32.mrb[0].mxu0
      %v5290 = vpop.f32.mrb[0].mxu0
      %v5291 = vadd.f32 0.0, %v5290
      %v5292 = vpop.f32.mrb[0].mxu0
      %5293 = vmatprep.mubr.bf16.mxu0 0
      %5294 = vmatmul.mubr.bf16.gmra.mrb[0].mxu0 %v5125
      %v5295 = vpop.f32.mrb[0].mxu0
      %v5296 = vadd.f32 0.0, %v5295
      %v5297 = vpop.f32.mrb[0].mxu0
      %v5298 = vpop.f32.mrb[0].mxu0
      %v5299 = vadd.f32 0.0, %v5298
      %v5300 = vpop.f32.mrb[0].mxu0
      %5301 = vmatprep.mubr.bf16.mxu0 0
      %5302 = vmatmul.mubr.bf16.gmra.mrb[0].mxu0 %v5128
      %v5303 = vpop.f32.mrb[0].mxu0
      %v5304 = vadd.f32 0.0, %v5303
      %v5305 = vpop.f32.mrb[0].mxu0
      %v5306 = vpop.f32.mrb[0].mxu0
      %v5307 = vadd.f32 0.0, %v5306
      %v5308 = vpop.f32.mrb[0].mxu0
      %5309 = vdwg.mxu0
      %v5310 = vadd.f32 %v4786, %v5168
      %v5311 = vadd.f32 %v4787, %v5171
      %v5312 = vadd.f32 %v4788, %v5176
      %v5313 = vadd.f32 %v4789, %v5179
      %v5314 = vadd.f32 %v4790, %v5184
      %v5315 = vadd.f32 %v4791, %v5187
      %v5316 = vadd.f32 %v4792, %v5192
      %v5317 = vadd.f32 %v4793, %v5195
      %v5318 = vadd.f32 %v4794, %v5200
      %v5319 = vadd.f32 %v4795, %v5203
      %v5320 = vadd.f32 %v4796, %v5208
      %v5321 = vadd.f32 %v4797, %v5211
      %v5322 = vadd.f32 %v4798, %v5216
      %v5323 = vadd.f32 %v4799, %v5219
      %v5324 = vadd.f32 %v4800, %v5224
      %v5325 = vadd.f32 %v4801, %v5227
      %v5326 = vadd.f32 %v4802, %v5232
      %v5327 = vadd.f32 %v4803, %v5235
      %v5328 = vadd.f32 %v4804, %v5240
      %v5329 = vadd.f32 %v4805, %v5243
      %v5330 = vadd.f32 %v4806, %v5248
      %v5331 = vadd.f32 %v4807, %v5251
      %v5332 = vadd.f32 %v4808, %v5256
      %v5333 = vadd.f32 %v4809, %v5259
      %v5334 = vadd.f32 %v4810, %v5264
      %v5335 = vadd.f32 %v4811, %v5267
      %v5336 = vadd.f32 %v4812, %v5272
      %v5337 = vadd.f32 %v4813, %v5275
      %v5338 = vadd.f32 %v4814, %v5280
      %v5339 = vadd.f32 %v4815, %v5283
      %v5340 = vadd.f32 %v4816, %v5288
      %v5341 = vadd.f32 %v4817, %v5291
      %v5342 = vadd.f32 %v4818, %v5296
      %v5343 = vadd.f32 %v4819, %v5299
      %v5344 = vadd.f32 %v4820, %v5304
      %v5345 = vadd.f32 %v4821, %v5307
      %v5346 = vld [vmem:[%s2] sm:$0x1]
      %v5348 = vlaneseq
      %v5349 = vshrl.u32 %v5348, 7
      %v5350 = vsub.s32 0, %v5349
      %v5351 = vrot.slane %v5346, %v5350
      %v5353 = vadd.f32 %v5310, %v5351
      %v5354 = vadd.f32 %v5311, %v5351
      %v5355 = vadd.f32 %v5312, %v5351
      %v5356 = vadd.f32 %v5313, %v5351
      %v5357 = vadd.f32 %v5314, %v5351
      %v5358 = vadd.f32 %v5315, %v5351
      %v5359 = vadd.f32 %v5316, %v5351
      %v5360 = vadd.f32 %v5317, %v5351
      %v5361 = vadd.f32 %v5318, %v5351
      %v5362 = vadd.f32 %v5319, %v5351
      %v5363 = vadd.f32 %v5320, %v5351
      %v5364 = vadd.f32 %v5321, %v5351
      %v5365 = vadd.f32 %v5322, %v5351
      %v5366 = vadd.f32 %v5323, %v5351
      %v5367 = vadd.f32 %v5324, %v5351
      %v5368 = vadd.f32 %v5325, %v5351
      %v5369 = vadd.f32 %v5326, %v5351
      %v5370 = vadd.f32 %v5327, %v5351
      %v5371 = vadd.f32 %v5328, %v5351
      %v5372 = vadd.f32 %v5329, %v5351
      %v5373 = vadd.f32 %v5330, %v5351
      %v5374 = vadd.f32 %v5331, %v5351
      %v5375 = vadd.f32 %v5332, %v5351
      %v5376 = vadd.f32 %v5333, %v5351
      %v5377 = vadd.f32 %v5334, %v5351
      %v5378 = vadd.f32 %v5335, %v5351
      %v5379 = vadd.f32 %v5336, %v5351
      %v5380 = vadd.f32 %v5337, %v5351
      %v5381 = vadd.f32 %v5338, %v5351
      %v5382 = vadd.f32 %v5339, %v5351
      %v5383 = vadd.f32 %v5340, %v5351
      %v5384 = vadd.f32 %v5341, %v5351
      %v5385 = vadd.f32 %v5342, %v5351
      %v5386 = vadd.f32 %v5343, %v5351
      %v5387 = vadd.f32 %v5344, %v5351
      %v5388 = vadd.f32 %v5345, %v5351
      %v5389 = vmax.f32 %v5353, 0.0
      %v5390 = vmax.f32 %v5354, 0.0
      %v5391 = vmax.f32 %v5355, 0.0
      %v5392 = vmax.f32 %v5356, 0.0
      %v5393 = vmax.f32 %v5357, 0.0
      %v5394 = vmax.f32 %v5358, 0.0
      %v5395 = vmax.f32 %v5359, 0.0
      %v5396 = vmax.f32 %v5360, 0.0
      %v5397 = vmax.f32 %v5361, 0.0
      %v5398 = vmax.f32 %v5362, 0.0
      %v5399 = vmax.f32 %v5363, 0.0
      %v5400 = vmax.f32 %v5364, 0.0
      %v5401 = vmax.f32 %v5365, 0.0
      %v5402 = vmax.f32 %v5366, 0.0
      %v5403 = vmax.f32 %v5367, 0.0
      %v5404 = vmax.f32 %v5368, 0.0
      %v5405 = vmax.f32 %v5369, 0.0
      %v5406 = vmax.f32 %v5370, 0.0
      %v5407 = vmax.f32 %v5371, 0.0
      %v5408 = vmax.f32 %v5372, 0.0
      %v5409 = vmax.f32 %v5373, 0.0
      %v5410 = vmax.f32 %v5374, 0.0
      %v5411 = vmax.f32 %v5375, 0.0
      %v5412 = vmax.f32 %v5376, 0.0
      %v5413 = vmax.f32 %v5377, 0.0
      %v5414 = vmax.f32 %v5378, 0.0
      %v5415 = vmax.f32 %v5379, 0.0
      %v5416 = vmax.f32 %v5380, 0.0
      %v5417 = vmax.f32 %v5381, 0.0
      %v5418 = vmax.f32 %v5382, 0.0
      %v5419 = vmax.f32 %v5383, 0.0
      %v5420 = vmax.f32 %v5384, 0.0
      %v5421 = vmax.f32 %v5385, 0.0
      %v5422 = vmax.f32 %v5386, 0.0
      %v5423 = vmax.f32 %v5387, 0.0
      %v5424 = vmax.f32 %v5388, 0.0
      %vm5425 = vcmask 24576
      %vm5426 = vsmask.f32 256
      %vm5427 = vmand %vm5425, %vm5426
      %v5428 = vld [vmem:[#allocation2] sm:$0x1]
      %v5429 = vsel %vm5427, 0, %v5428
      %5430 = vst [vmem:[#allocation2] sm:$0x1] %v5429
      %v5431 = vld [vmem:[#allocation2 + $0xc] sm:$0x1]
      %v5432 = vsel %vm5427, 0, %v5431
      %5433 = vst [vmem:[#allocation2 + $0xc] sm:$0x1] %v5432
      %v5434 = vld [vmem:[#allocation2 + $0x18] sm:$0x1]
      %v5435 = vsel %vm5427, 0, %v5434
      %5436 = vst [vmem:[#allocation2 + $0x18] sm:$0x1] %v5435
      %v5437 = vld [vmem:[#allocation2 + $0x24] sm:$0x1]
      %v5438 = vsel %vm5427, 0, %v5437
      %5439 = vst [vmem:[#allocation2 + $0x24] sm:$0x1] %v5438
      %v5440 = vld [vmem:[#allocation2 + $0x30] sm:$0x1]
      %v5441 = vsel %vm5427, 0, %v5440
      %5442 = vst [vmem:[#allocation2 + $0x30] sm:$0x1] %v5441
      %v5443 = vld [vmem:[#allocation2 + $0x3c] sm:$0x1]
      %v5444 = vsel %vm5427, 0, %v5443
      %5445 = vst [vmem:[#allocation2 + $0x3c] sm:$0x1] %v5444
      %v5446 = vld [vmem:[#allocation2 + $0x48] sm:$0x1]
      %v5447 = vsel %vm5427, 0, %v5446
      %5448 = vst [vmem:[#allocation2 + $0x48] sm:$0x1] %v5447
      %v5449 = vld [vmem:[#allocation2 + $0x54] sm:$0x1]
      %v5450 = vsel %vm5427, 0, %v5449
      %5451 = vst [vmem:[#allocation2 + $0x54] sm:$0x1] %v5450
      %v5452 = vld [vmem:[#allocation2 + $0x60] sm:$0x1]
      %v5453 = vsel %vm5427, 0, %v5452
      %5454 = vst [vmem:[#allocation2 + $0x60] sm:$0x1] %v5453
      %v5455 = vld [vmem:[#allocation2 + $0x6c] sm:$0x1]
      %v5456 = vsel %vm5427, 0, %v5455
      %5457 = vst [vmem:[#allocation2 + $0x6c] sm:$0x1] %v5456
      %v5458 = vld [vmem:[#allocation2 + $0x78] sm:$0x1]
      %v5459 = vsel %vm5427, 0, %v5458
      %5460 = vst [vmem:[#allocation2 + $0x78] sm:$0x1] %v5459
      %v5461 = vld [vmem:[#allocation2 + $0x84] sm:$0x1]
      %v5462 = vsel %vm5427, 0, %v5461
      %5463 = vst [vmem:[#allocation2 + $0x84] sm:$0x1] %v5462
      %v5464 = vld [vmem:[#allocation2 + $0x90] sm:$0x1]
      %v5465 = vsel %vm5427, 0, %v5464
      %5466 = vst [vmem:[#allocation2 + $0x90] sm:$0x1] %v5465
      %v5467 = vld [vmem:[#allocation2 + $0x9c] sm:$0x1]
      %v5468 = vsel %vm5427, 0, %v5467
      %5469 = vst [vmem:[#allocation2 + $0x9c] sm:$0x1] %v5468
      %v5470 = vld [vmem:[#allocation2 + $0xa8] sm:$0x1]
      %v5471 = vsel %vm5427, 0, %v5470
      %5472 = vst [vmem:[#allocation2 + $0xa8] sm:$0x1] %v5471
      %v5473 = vld [vmem:[#allocation2 + $0xb4] sm:$0x1]
      %v5474 = vsel %vm5427, 0, %v5473
      %5475 = vst [vmem:[#allocation2 + $0xb4] sm:$0x1] %v5474
      %v5476 = vld [vmem:[#allocation2 + $0xc0] sm:$0x1]
      %v5477 = vsel %vm5427, 0, %v5476
      %5478 = vst [vmem:[#allocation2 + $0xc0] sm:$0x1] %v5477
      %v5479 = vld [vmem:[#allocation2 + $0xcc] sm:$0x1]
      %v5480 = vsel %vm5427, 0, %v5479
      %5481 = vst [vmem:[#allocation2 + $0xcc] sm:$0x1] %v5480
      %vm5482 = vsmask.f32 7938
      %vm5483 = vmand %vm5425, %vm5482
      %v5484 = vld [vmem:[#allocation2 + $0x8] sm:$0x1]
      %v5485 = vsel %vm5483, 0, %v5484
      %5486 = vst [vmem:[#allocation2 + $0x8] sm:$0x1] %v5485
      %v5487 = vld [vmem:[#allocation2 + $0x14] sm:$0x1]
      %v5488 = vsel %vm5483, 0, %v5487
      %5489 = vst [vmem:[#allocation2 + $0x14] sm:$0x1] %v5488
      %v5490 = vld [vmem:[#allocation2 + $0x20] sm:$0x1]
      %v5491 = vsel %vm5483, 0, %v5490
      %5492 = vst [vmem:[#allocation2 + $0x20] sm:$0x1] %v5491
      %v5493 = vld [vmem:[#allocation2 + $0x2c] sm:$0x1]
      %v5494 = vsel %vm5483, 0, %v5493
      %5495 = vst [vmem:[#allocation2 + $0x2c] sm:$0x1] %v5494
      %v5496 = vld [vmem:[#allocation2 + $0x38] sm:$0x1]
      %v5497 = vsel %vm5483, 0, %v5496
      %5498 = vst [vmem:[#allocation2 + $0x38] sm:$0x1] %v5497
      %v5499 = vld [vmem:[#allocation2 + $0x44] sm:$0x1]
      %v5500 = vsel %vm5483, 0, %v5499
      %5501 = vst [vmem:[#allocation2 + $0x44] sm:$0x1] %v5500
      %v5502 = vld [vmem:[#allocation2 + $0x50] sm:$0x1]
      %v5503 = vsel %vm5483, 0, %v5502
      %5504 = vst [vmem:[#allocation2 + $0x50] sm:$0x1] %v5503
      %v5505 = vld [vmem:[#allocation2 + $0x5c] sm:$0x1]
      %v5506 = vsel %vm5483, 0, %v5505
      %5507 = vst [vmem:[#allocation2 + $0x5c] sm:$0x1] %v5506
      %v5508 = vld [vmem:[#allocation2 + $0x68] sm:$0x1]
      %v5509 = vsel %vm5483, 0, %v5508
      %5510 = vst [vmem:[#allocation2 + $0x68] sm:$0x1] %v5509
      %v5511 = vld [vmem:[#allocation2 + $0x74] sm:$0x1]
      %v5512 = vsel %vm5483, 0, %v5511
      %5513 = vst [vmem:[#allocation2 + $0x74] sm:$0x1] %v5512
      %v5514 = vld [vmem:[#allocation2 + $0x80] sm:$0x1]
      %v5515 = vsel %vm5483, 0, %v5514
      %5516 = vst [vmem:[#allocation2 + $0x80] sm:$0x1] %v5515
      %v5517 = vld [vmem:[#allocation2 + $0x8c] sm:$0x1]
      %v5518 = vsel %vm5483, 0, %v5517
      %5519 = vst [vmem:[#allocation2 + $0x8c] sm:$0x1] %v5518
      %v5520 = vld [vmem:[#allocation2 + $0x98] sm:$0x1]
      %v5521 = vsel %vm5483, 0, %v5520
      %5522 = vst [vmem:[#allocation2 + $0x98] sm:$0x1] %v5521
      %v5523 = vld [vmem:[#allocation2 + $0xa4] sm:$0x1]
      %v5524 = vsel %vm5483, 0, %v5523
      %5525 = vst [vmem:[#allocation2 + $0xa4] sm:$0x1] %v5524
      %v5526 = vld [vmem:[#allocation2 + $0xb0] sm:$0x1]
      %v5527 = vsel %vm5483, 0, %v5526
      %5528 = vst [vmem:[#allocation2 + $0xb0] sm:$0x1] %v5527
      %v5529 = vld [vmem:[#allocation2 + $0xbc] sm:$0x1]
      %v5530 = vsel %vm5483, 0, %v5529
      %5531 = vst [vmem:[#allocation2 + $0xbc] sm:$0x1] %v5530
      %v5532 = vld [vmem:[#allocation2 + $0xc8] sm:$0x1]
      %v5533 = vsel %vm5483, 0, %v5532
      %5534 = vst [vmem:[#allocation2 + $0xc8] sm:$0x1] %v5533
      %v5535 = vld [vmem:[#allocation2 + $0xd4] sm:$0x1]
      %v5536 = vsel %vm5483, 0, %v5535
      %5537 = vst [vmem:[#allocation2 + $0xd4] sm:$0x1] %v5536
      %v5538 = vpack.c.bf16 %v5390, %v5389
      %v5539 = vpack.c.bf16 %v5392, %v5391
      %v5540 = vpack.c.bf16 %v5394, %v5393
      %v5541 = vpack.c.bf16 %v5396, %v5395
      %v5542 = vpack.c.bf16 %v5398, %v5397
      %v5543 = vpack.c.bf16 %v5400, %v5399
      %v5544 = vpack.c.bf16 %v5402, %v5401
      %v5545 = vpack.c.bf16 %v5404, %v5403
      %v5546 = vpack.c.bf16 %v5406, %v5405
      %v5547 = vpack.c.bf16 %v5408, %v5407
      %v5548 = vpack.c.bf16 %v5410, %v5409
      %v5549 = vpack.c.bf16 %v5412, %v5411
      %v5550 = vpack.c.bf16 %v5414, %v5413
      %v5551 = vpack.c.bf16 %v5416, %v5415
      %v5552 = vpack.c.bf16 %v5418, %v5417
      %v5553 = vpack.c.bf16 %v5420, %v5419
      %v5554 = vpack.c.bf16 %v5422, %v5421
      %v5555 = vpack.c.bf16 %v5424, %v5423
      %v5574 = vunpack.c.l.b16 %v5538
      %v5575 = vunpack.c.h.b16 %v5538
      %v5576 = vunpack.c.l.b16 %v5539
      %v5577 = vunpack.c.h.b16 %v5539
      %v5578 = vunpack.c.l.b16 %v5540
      %v5579 = vunpack.c.h.b16 %v5540
      %v5580 = vunpack.c.l.b16 %v5541
      %v5581 = vunpack.c.h.b16 %v5541
      %v5582 = vunpack.c.l.b16 %v5542
      %v5583 = vunpack.c.h.b16 %v5542
      %v5584 = vunpack.c.l.b16 %v5543
      %v5585 = vunpack.c.h.b16 %v5543
      %v5586 = vunpack.c.l.b16 %v5544
      %v5587 = vunpack.c.h.b16 %v5544
      %v5588 = vunpack.c.l.b16 %v5545
      %v5589 = vunpack.c.h.b16 %v5545
      %v5590 = vunpack.c.l.b16 %v5546
      %v5591 = vunpack.c.h.b16 %v5546
      %v5592 = vunpack.c.l.b16 %v5547
      %v5593 = vunpack.c.h.b16 %v5547
      %v5594 = vunpack.c.l.b16 %v5548
      %v5595 = vunpack.c.h.b16 %v5548
      %v5596 = vunpack.c.l.b16 %v5549
      %v5597 = vunpack.c.h.b16 %v5549
      %v5598 = vunpack.c.l.b16 %v5550
      %v5599 = vunpack.c.h.b16 %v5550
      %v5600 = vunpack.c.l.b16 %v5551
      %v5601 = vunpack.c.h.b16 %v5551
      %v5602 = vunpack.c.l.b16 %v5552
      %v5603 = vunpack.c.h.b16 %v5552
      %v5604 = vunpack.c.l.b16 %v5553
      %v5605 = vunpack.c.h.b16 %v5553
      %v5606 = vunpack.c.l.b16 %v5554
      %v5607 = vunpack.c.h.b16 %v5554
      %v5608 = vunpack.c.l.b16 %v5555
      %v5609 = vunpack.c.h.b16 %v5555
      %v5610 = vpack.c.b16 %v5574, %v5574
      %v5611 = vpack.c.b16 %v5575, %v5575
      %v5612 = vpack.c.b16 %v5576, %v5576
      %v5613 = vpack.c.b16 %v5577, %v5577
      %v5614 = vpack.c.b16 %v5578, %v5578
      %v5615 = vpack.c.b16 %v5579, %v5579
      %v5616 = vpack.c.b16 %v5580, %v5580
      %v5617 = vpack.c.b16 %v5581, %v5581
      %v5618 = vpack.c.b16 %v5582, %v5582
      %v5619 = vpack.c.b16 %v5583, %v5583
      %v5620 = vpack.c.b16 %v5584, %v5584
      %v5621 = vpack.c.b16 %v5585, %v5585
      %v5622 = vpack.c.b16 %v5586, %v5586
      %v5623 = vpack.c.b16 %v5587, %v5587
      %v5624 = vpack.c.b16 %v5588, %v5588
      %v5625 = vpack.c.b16 %v5589, %v5589
      %v5626 = vpack.c.b16 %v5590, %v5590
      %v5627 = vpack.c.b16 %v5591, %v5591
      %v5628 = vpack.c.b16 %v5592, %v5592
      %v5629 = vpack.c.b16 %v5593, %v5593
      %v5630 = vpack.c.b16 %v5594, %v5594
      %v5631 = vpack.c.b16 %v5595, %v5595
      %v5632 = vpack.c.b16 %v5596, %v5596
      %v5633 = vpack.c.b16 %v5597, %v5597
      %v5634 = vpack.c.b16 %v5598, %v5598
      %v5635 = vpack.c.b16 %v5599, %v5599
      %v5636 = vpack.c.b16 %v5600, %v5600
      %v5637 = vpack.c.b16 %v5601, %v5601
      %v5638 = vpack.c.b16 %v5602, %v5602
      %v5639 = vpack.c.b16 %v5603, %v5603
      %v5640 = vpack.c.b16 %v5604, %v5604
      %v5641 = vpack.c.b16 %v5605, %v5605
      %v5642 = vpack.c.b16 %v5606, %v5606
      %v5643 = vpack.c.b16 %v5607, %v5607
      %v5644 = vpack.c.b16 %v5608, %v5608
      %v5645 = vpack.c.b16 %v5609, %v5609
      %vm5646 = vsmask.f32 4368
      %vm5647 = vmor %vm5426, %vm5646
      %v5649 = vshrl.u32 %v5610, 16
      %v5651 = vrot.slane %v5649, 7
      %v5652 = vshll.u32 %v5610, 16
      %v5654 = vor.u32 %v5651, %v5652
      %v5655 = vrot.slane %v5651, 4
      %v5657 = vshrl.u32 %v5611, 16
      %v5659 = vrot.slane %v5657, 7
      %v5660 = vshll.u32 %v5611, 16
      %v5662 = vor.u32 %v5659, %v5660
      %v5663 = vsel %vm5647, %v5655, %v5662
      %v5664 = vrot.slane %v5659, 4
      %v5666 = vshrl.u32 %v5612, 16
      %v5668 = vrot.slane %v5666, 7
      %v5669 = vshll.u32 %v5612, 16
      %v5671 = vor.u32 %v5668, %v5669
      %v5672 = vrot.slane %v5668, 4
      %v5674 = vshrl.u32 %v5613, 16
      %v5676 = vrot.slane %v5674, 7
      %v5677 = vshll.u32 %v5613, 16
      %v5679 = vor.u32 %v5676, %v5677
      %v5680 = vsel %vm5647, %v5672, %v5679
      %v5681 = vrot.slane %v5676, 4
      %v5683 = vshrl.u32 %v5614, 16
      %v5685 = vrot.slane %v5683, 7
      %v5686 = vshll.u32 %v5614, 16
      %v5688 = vor.u32 %v5685, %v5686
      %v5689 = vrot.slane %v5685, 4
      %v5691 = vshrl.u32 %v5615, 16
      %v5693 = vrot.slane %v5691, 7
      %v5694 = vshll.u32 %v5615, 16
      %v5696 = vor.u32 %v5693, %v5694
      %v5697 = vsel %vm5647, %v5689, %v5696
      %v5698 = vrot.slane %v5693, 4
      %v5700 = vshrl.u32 %v5616, 16
      %v5702 = vrot.slane %v5700, 7
      %v5703 = vshll.u32 %v5616, 16
      %v5705 = vor.u32 %v5702, %v5703
      %v5706 = vrot.slane %v5702, 4
      %v5708 = vshrl.u32 %v5617, 16
      %v5710 = vrot.slane %v5708, 7
      %v5711 = vshll.u32 %v5617, 16
      %v5713 = vor.u32 %v5710, %v5711
      %v5714 = vsel %vm5647, %v5706, %v5713
      %v5715 = vrot.slane %v5710, 4
      %v5717 = vshrl.u32 %v5618, 16
      %v5719 = vrot.slane %v5717, 7
      %v5720 = vshll.u32 %v5618, 16
      %v5722 = vor.u32 %v5719, %v5720
      %v5723 = vrot.slane %v5719, 4
      %v5725 = vshrl.u32 %v5619, 16
      %v5727 = vrot.slane %v5725, 7
      %v5728 = vshll.u32 %v5619, 16
      %v5730 = vor.u32 %v5727, %v5728
      %v5731 = vsel %vm5647, %v5723, %v5730
      %v5732 = vrot.slane %v5727, 4
      %v5734 = vshrl.u32 %v5620, 16
      %v5736 = vrot.slane %v5734, 7
      %v5737 = vshll.u32 %v5620, 16
      %v5739 = vor.u32 %v5736, %v5737
      %v5740 = vrot.slane %v5736, 4
      %v5742 = vshrl.u32 %v5621, 16
      %v5744 = vrot.slane %v5742, 7
      %v5745 = vshll.u32 %v5621, 16
      %v5747 = vor.u32 %v5744, %v5745
      %v5748 = vsel %vm5647, %v5740, %v5747
      %v5749 = vrot.slane %v5744, 4
      %v5751 = vshrl.u32 %v5622, 16
      %v5753 = vrot.slane %v5751, 7
      %v5754 = vshll.u32 %v5622, 16
      %v5756 = vor.u32 %v5753, %v5754
      %v5757 = vrot.slane %v5753, 4
      %v5759 = vshrl.u32 %v5623, 16
      %v5761 = vrot.slane %v5759, 7
      %v5762 = vshll.u32 %v5623, 16
      %v5764 = vor.u32 %v5761, %v5762
      %v5765 = vsel %vm5647, %v5757, %v5764
      %v5766 = vrot.slane %v5761, 4
      %v5768 = vshrl.u32 %v5624, 16
      %v5770 = vrot.slane %v5768, 7
      %v5771 = vshll.u32 %v5624, 16
      %v5773 = vor.u32 %v5770, %v5771
      %v5774 = vrot.slane %v5770, 4
      %v5776 = vshrl.u32 %v5625, 16
      %v5778 = vrot.slane %v5776, 7
      %v5779 = vshll.u32 %v5625, 16
      %v5781 = vor.u32 %v5778, %v5779
      %v5782 = vsel %vm5647, %v5774, %v5781
      %v5783 = vrot.slane %v5778, 4
      %v5785 = vshrl.u32 %v5626, 16
      %v5787 = vrot.slane %v5785, 7
      %v5788 = vshll.u32 %v5626, 16
      %v5790 = vor.u32 %v5787, %v5788
      %v5791 = vrot.slane %v5787, 4
      %v5793 = vshrl.u32 %v5627, 16
      %v5795 = vrot.slane %v5793, 7
      %v5796 = vshll.u32 %v5627, 16
      %v5798 = vor.u32 %v5795, %v5796
      %v5799 = vsel %vm5647, %v5791, %v5798
      %v5800 = vrot.slane %v5795, 4
      %v5802 = vshrl.u32 %v5628, 16
      %v5804 = vrot.slane %v5802, 7
      %v5805 = vshll.u32 %v5628, 16
      %v5807 = vor.u32 %v5804, %v5805
      %v5808 = vrot.slane %v5804, 4
      %v5810 = vshrl.u32 %v5629, 16
      %v5812 = vrot.slane %v5810, 7
      %v5813 = vshll.u32 %v5629, 16
      %v5815 = vor.u32 %v5812, %v5813
      %v5816 = vsel %vm5647, %v5808, %v5815
      %v5817 = vrot.slane %v5812, 4
      %v5819 = vshrl.u32 %v5630, 16
      %v5821 = vrot.slane %v5819, 7
      %v5822 = vshll.u32 %v5630, 16
      %v5824 = vor.u32 %v5821, %v5822
      %v5825 = vrot.slane %v5821, 4
      %v5827 = vshrl.u32 %v5631, 16
      %v5829 = vrot.slane %v5827, 7
      %v5830 = vshll.u32 %v5631, 16
      %v5832 = vor.u32 %v5829, %v5830
      %v5833 = vsel %vm5647, %v5825, %v5832
      %v5834 = vrot.slane %v5829, 4
      %v5836 = vshrl.u32 %v5632, 16
      %v5838 = vrot.slane %v5836, 7
      %v5839 = vshll.u32 %v5632, 16
      %v5841 = vor.u32 %v5838, %v5839
      %v5842 = vrot.slane %v5838, 4
      %v5844 = vshrl.u32 %v5633, 16
      %v5846 = vrot.slane %v5844, 7
      %v5847 = vshll.u32 %v5633, 16
      %v5849 = vor.u32 %v5846, %v5847
      %v5850 = vsel %vm5647, %v5842, %v5849
      %v5851 = vrot.slane %v5846, 4
      %v5853 = vshrl.u32 %v5634, 16
      %v5855 = vrot.slane %v5853, 7
      %v5856 = vshll.u32 %v5634, 16
      %v5858 = vor.u32 %v5855, %v5856
      %v5859 = vrot.slane %v5855, 4
      %v5861 = vshrl.u32 %v5635, 16
      %v5863 = vrot.slane %v5861, 7
      %v5864 = vshll.u32 %v5635, 16
      %v5866 = vor.u32 %v5863, %v5864
      %v5867 = vsel %vm5647, %v5859, %v5866
      %v5868 = vrot.slane %v5863, 4
      %v5870 = vshrl.u32 %v5636, 16
      %v5872 = vrot.slane %v5870, 7
      %v5873 = vshll.u32 %v5636, 16
      %v5875 = vor.u32 %v5872, %v5873
      %v5876 = vrot.slane %v5872, 4
      %v5878 = vshrl.u32 %v5637, 16
      %v5880 = vrot.slane %v5878, 7
      %v5881 = vshll.u32 %v5637, 16
      %v5883 = vor.u32 %v5880, %v5881
      %v5884 = vsel %vm5647, %v5876, %v5883
      %v5885 = vrot.slane %v5880, 4
      %v5887 = vshrl.u32 %v5638, 16
      %v5889 = vrot.slane %v5887, 7
      %v5890 = vshll.u32 %v5638, 16
      %v5892 = vor.u32 %v5889, %v5890
      %v5893 = vrot.slane %v5889, 4
      %v5895 = vshrl.u32 %v5639, 16
      %v5897 = vrot.slane %v5895, 7
      %v5898 = vshll.u32 %v5639, 16
      %v5900 = vor.u32 %v5897, %v5898
      %v5901 = vsel %vm5647, %v5893, %v5900
      %v5902 = vrot.slane %v5897, 4
      %v5904 = vshrl.u32 %v5640, 16
      %v5906 = vrot.slane %v5904, 7
      %v5907 = vshll.u32 %v5640, 16
      %v5909 = vor.u32 %v5906, %v5907
      %v5910 = vrot.slane %v5906, 4
      %v5912 = vshrl.u32 %v5641, 16
      %v5914 = vrot.slane %v5912, 7
      %v5915 = vshll.u32 %v5641, 16
      %v5917 = vor.u32 %v5914, %v5915
      %v5918 = vsel %vm5647, %v5910, %v5917
      %v5919 = vrot.slane %v5914, 4
      %v5921 = vshrl.u32 %v5642, 16
      %v5923 = vrot.slane %v5921, 7
      %v5924 = vshll.u32 %v5642, 16
      %v5926 = vor.u32 %v5923, %v5924
      %v5927 = vrot.slane %v5923, 4
      %v5929 = vshrl.u32 %v5643, 16
      %v5931 = vrot.slane %v5929, 7
      %v5932 = vshll.u32 %v5643, 16
      %v5934 = vor.u32 %v5931, %v5932
      %v5935 = vsel %vm5647, %v5927, %v5934
      %v5936 = vrot.slane %v5931, 4
      %v5938 = vshrl.u32 %v5644, 16
      %v5940 = vrot.slane %v5938, 7
      %v5941 = vshll.u32 %v5644, 16
      %v5943 = vor.u32 %v5940, %v5941
      %v5944 = vrot.slane %v5940, 4
      %v5946 = vshrl.u32 %v5645, 16
      %v5948 = vrot.slane %v5946, 7
      %v5949 = vshll.u32 %v5645, 16
      %v5951 = vor.u32 %v5948, %v5949
      %v5952 = vsel %vm5647, %v5944, %v5951
      %v5953 = vrot.slane %v5948, 4
      %vm6008 = vcmask 27648
      %vm6009 = vmand %vm6008, %vm5482
      %v6010 = vld [vmem:[#allocation2] sm:$0xf]
      %v6011 = vsel %vm6009, %v5654, %v6010
      %6012 = vst [vmem:[#allocation2] sm:$0xf] %v6011
      %vm6013 = vcmask 27648
      %6014 = vst.msk [vmem:[#allocation2 + $0x4] sm:$0xf] %vm6013, %v5663
      %v6015 = vld [vmem:[#allocation2 + $0x8] sm:$0x1]
      %v6016 = vsel %vm5427, %v5664, %v6015
      %6017 = vst [vmem:[#allocation2 + $0x8] sm:$0x1] %v6016
      %v6018 = vld [vmem:[#allocation2 + $0xc] sm:$0xf]
      %v6019 = vsel %vm6009, %v5671, %v6018
      %6020 = vst [vmem:[#allocation2 + $0xc] sm:$0xf] %v6019
      %6021 = vst.msk [vmem:[#allocation2 + $0x10] sm:$0xf] %vm6013, %v5680
      %v6022 = vld [vmem:[#allocation2 + $0x14] sm:$0x1]
      %v6023 = vsel %vm5427, %v5681, %v6022
      %6024 = vst [vmem:[#allocation2 + $0x14] sm:$0x1] %v6023
      %v6025 = vld [vmem:[#allocation2 + $0x18] sm:$0xf]
      %v6026 = vsel %vm6009, %v5688, %v6025
      %6027 = vst [vmem:[#allocation2 + $0x18] sm:$0xf] %v6026
      %6028 = vst.msk [vmem:[#allocation2 + $0x1c] sm:$0xf] %vm6013, %v5697
      %v6029 = vld [vmem:[#allocation2 + $0x20] sm:$0x1]
      %v6030 = vsel %vm5427, %v5698, %v6029
      %6031 = vst [vmem:[#allocation2 + $0x20] sm:$0x1] %v6030
      %v6032 = vld [vmem:[#allocation2 + $0x24] sm:$0xf]
      %v6033 = vsel %vm6009, %v5705, %v6032
      %6034 = vst [vmem:[#allocation2 + $0x24] sm:$0xf] %v6033
      %6035 = vst.msk [vmem:[#allocation2 + $0x28] sm:$0xf] %vm6013, %v5714
      %v6036 = vld [vmem:[#allocation2 + $0x2c] sm:$0x1]
      %v6037 = vsel %vm5427, %v5715, %v6036
      %6038 = vst [vmem:[#allocation2 + $0x2c] sm:$0x1] %v6037
      %v6039 = vld [vmem:[#allocation2 + $0x30] sm:$0xf]
      %v6040 = vsel %vm6009, %v5722, %v6039
      %6041 = vst [vmem:[#allocation2 + $0x30] sm:$0xf] %v6040
      %6042 = vst.msk [vmem:[#allocation2 + $0x34] sm:$0xf] %vm6013, %v5731
      %v6043 = vld [vmem:[#allocation2 + $0x38] sm:$0x1]
      %v6044 = vsel %vm5427, %v5732, %v6043
      %6045 = vst [vmem:[#allocation2 + $0x38] sm:$0x1] %v6044
      %v6046 = vld [vmem:[#allocation2 + $0x3c] sm:$0xf]
      %v6047 = vsel %vm6009, %v5739, %v6046
      %6048 = vst [vmem:[#allocation2 + $0x3c] sm:$0xf] %v6047
      %6049 = vst.msk [vmem:[#allocation2 + $0x40] sm:$0xf] %vm6013, %v5748
      %v6050 = vld [vmem:[#allocation2 + $0x44] sm:$0x1]
      %v6051 = vsel %vm5427, %v5749, %v6050
      %6052 = vst [vmem:[#allocation2 + $0x44] sm:$0x1] %v6051
      %v6053 = vld [vmem:[#allocation2 + $0x48] sm:$0xf]
      %v6054 = vsel %vm6009, %v5756, %v6053
      %6055 = vst [vmem:[#allocation2 + $0x48] sm:$0xf] %v6054
      %6056 = vst.msk [vmem:[#allocation2 + $0x4c] sm:$0xf] %vm6013, %v5765
      %v6057 = vld [vmem:[#allocation2 + $0x50] sm:$0x1]
      %v6058 = vsel %vm5427, %v5766, %v6057
      %6059 = vst [vmem:[#allocation2 + $0x50] sm:$0x1] %v6058
      %v6060 = vld [vmem:[#allocation2 + $0x54] sm:$0xf]
      %v6061 = vsel %vm6009, %v5773, %v6060
      %6062 = vst [vmem:[#allocation2 + $0x54] sm:$0xf] %v6061
      %6063 = vst.msk [vmem:[#allocation2 + $0x58] sm:$0xf] %vm6013, %v5782
      %v6064 = vld [vmem:[#allocation2 + $0x5c] sm:$0x1]
      %v6065 = vsel %vm5427, %v5783, %v6064
      %6066 = vst [vmem:[#allocation2 + $0x5c] sm:$0x1] %v6065
      %v6067 = vld [vmem:[#allocation2 + $0x60] sm:$0xf]
      %v6068 = vsel %vm6009, %v5790, %v6067
      %6069 = vst [vmem:[#allocation2 + $0x60] sm:$0xf] %v6068
      %6070 = vst.msk [vmem:[#allocation2 + $0x64] sm:$0xf] %vm6013, %v5799
      %v6071 = vld [vmem:[#allocation2 + $0x68] sm:$0x1]
      %v6072 = vsel %vm5427, %v5800, %v6071
      %6073 = vst [vmem:[#allocation2 + $0x68] sm:$0x1] %v6072
      %v6074 = vld [vmem:[#allocation2 + $0x6c] sm:$0xf]
      %v6075 = vsel %vm6009, %v5807, %v6074
      %6076 = vst [vmem:[#allocation2 + $0x6c] sm:$0xf] %v6075
      %6077 = vst.msk [vmem:[#allocation2 + $0x70] sm:$0xf] %vm6013, %v5816
      %v6078 = vld [vmem:[#allocation2 + $0x74] sm:$0x1]
      %v6079 = vsel %vm5427, %v5817, %v6078
      %6080 = vst [vmem:[#allocation2 + $0x74] sm:$0x1] %v6079
      %v6081 = vld [vmem:[#allocation2 + $0x78] sm:$0xf]
      %v6082 = vsel %vm6009, %v5824, %v6081
      %6083 = vst [vmem:[#allocation2 + $0x78] sm:$0xf] %v6082
      %6084 = vst.msk [vmem:[#allocation2 + $0x7c] sm:$0xf] %vm6013, %v5833
      %v6085 = vld [vmem:[#allocation2 + $0x80] sm:$0x1]
      %v6086 = vsel %vm5427, %v5834, %v6085
      %6087 = vst [vmem:[#allocation2 + $0x80] sm:$0x1] %v6086
      %v6088 = vld [vmem:[#allocation2 + $0x84] sm:$0xf]
      %v6089 = vsel %vm6009, %v5841, %v6088
      %6090 = vst [vmem:[#allocation2 + $0x84] sm:$0xf] %v6089
      %6091 = vst.msk [vmem:[#allocation2 + $0x88] sm:$0xf] %vm6013, %v5850
      %v6092 = vld [vmem:[#allocation2 + $0x8c] sm:$0x1]
      %v6093 = vsel %vm5427, %v5851, %v6092
      %6094 = vst [vmem:[#allocation2 + $0x8c] sm:$0x1] %v6093
      %v6095 = vld [vmem:[#allocation2 + $0x90] sm:$0xf]
      %v6096 = vsel %vm6009, %v5858, %v6095
      %6097 = vst [vmem:[#allocation2 + $0x90] sm:$0xf] %v6096
      %6098 = vst.msk [vmem:[#allocation2 + $0x94] sm:$0xf] %vm6013, %v5867
      %v6099 = vld [vmem:[#allocation2 + $0x98] sm:$0x1]
      %v6100 = vsel %vm5427, %v5868, %v6099
      %6101 = vst [vmem:[#allocation2 + $0x98] sm:$0x1] %v6100
      %v6102 = vld [vmem:[#allocation2 + $0x9c] sm:$0xf]
      %v6103 = vsel %vm6009, %v5875, %v6102
      %6104 = vst [vmem:[#allocation2 + $0x9c] sm:$0xf] %v6103
      %6105 = vst.msk [vmem:[#allocation2 + $0xa0] sm:$0xf] %vm6013, %v5884
      %v6106 = vld [vmem:[#allocation2 + $0xa4] sm:$0x1]
      %v6107 = vsel %vm5427, %v5885, %v6106
      %6108 = vst [vmem:[#allocation2 + $0xa4] sm:$0x1] %v6107
      %v6109 = vld [vmem:[#allocation2 + $0xa8] sm:$0xf]
      %v6110 = vsel %vm6009, %v5892, %v6109
      %6111 = vst [vmem:[#allocation2 + $0xa8] sm:$0xf] %v6110
      %6112 = vst.msk [vmem:[#allocation2 + $0xac] sm:$0xf] %vm6013, %v5901
      %v6113 = vld [vmem:[#allocation2 + $0xb0] sm:$0x1]
      %v6114 = vsel %vm5427, %v5902, %v6113
      %6115 = vst [vmem:[#allocation2 + $0xb0] sm:$0x1] %v6114
      %v6116 = vld [vmem:[#allocation2 + $0xb4] sm:$0xf]
      %v6117 = vsel %vm6009, %v5909, %v6116
      %6118 = vst [vmem:[#allocation2 + $0xb4] sm:$0xf] %v6117
      %6119 = vst.msk [vmem:[#allocation2 + $0xb8] sm:$0xf] %vm6013, %v5918
      %v6120 = vld [vmem:[#allocation2 + $0xbc] sm:$0x1]
      %v6121 = vsel %vm5427, %v5919, %v6120
      %6122 = vst [vmem:[#allocation2 + $0xbc] sm:$0x1] %v6121
      %v6123 = vld [vmem:[#allocation2 + $0xc0] sm:$0xf]
      %v6124 = vsel %vm6009, %v5926, %v6123
      %6125 = vst [vmem:[#allocation2 + $0xc0] sm:$0xf] %v6124
      %6126 = vst.msk [vmem:[#allocation2 + $0xc4] sm:$0xf] %vm6013, %v5935
      %v6127 = vld [vmem:[#allocation2 + $0xc8] sm:$0x1]
      %v6128 = vsel %vm5427, %v5936, %v6127
      %6129 = vst [vmem:[#allocation2 + $0xc8] sm:$0x1] %v6128
      %v6130 = vld [vmem:[#allocation2 + $0xcc] sm:$0xf]
      %v6131 = vsel %vm6009, %v5943, %v6130
      %6132 = vst [vmem:[#allocation2 + $0xcc] sm:$0xf] %v6131
      %6133 = vst.msk [vmem:[#allocation2 + $0xd0] sm:$0xf] %vm6013, %v5952
      %v6134 = vld [vmem:[#allocation2 + $0xd4] sm:$0x1]
      %v6135 = vsel %vm5427, %v5953, %v6134
      %6136 = vst [vmem:[#allocation2 + $0xd4] sm:$0x1] %v6135
      %p6137 = scmp.eq.s32.totalorder %s21, 0
      // Predicated region
      $region41: #{basic_block_pallas_nhwc.1} parent=39 // pred_check
        %p6138 = pneg %p6137
      $region42: #{basic_block_pallas_nhwc.1} parent=39 // pred_check_branch
        %6140 = sbr.rel (%p6138) target = $region44
      $region43: #{basic_block_pallas_nhwc.1} parent=39 // pred_region
        %6141 = vst.msk [vmem:[#allocation2] sm:$0xf] %vm6013, 0
        %6142 = vst.msk [vmem:[#allocation2 + $0x4] sm:$0xf] %vm6013, 0
        %vm6143 = vcmask 24576
        %6144 = vst.msk [vmem:[#allocation2 + $0x8] sm:$0x1] %vm6143, 0
        %s6145 = scalar_lea.vmem [#allocation2], 204
        %6146 = vst.msk [vmem:[%s6145] sm:$0xf] %vm6013, 0
        %6147 = vst.msk [vmem:[%s6145 + $0x4] sm:$0xf] %vm6013, 0
        %6148 = vst.msk [vmem:[%s6145 + $0x8] sm:$0x1] %vm6143, 0
      $region44: #{basic_block_pallas_nhwc.1} parent=39 // pred_fallthru
        _
      %v6149 = vld [vmem:[#allocation2] sm:$0xf]
      %v6150 = vld [vmem:[#allocation2 + $0x4] sm:$0xf]
      %v6151 = vld [vmem:[#allocation2 + $0xc] sm:$0xf]
      %v6152 = vld [vmem:[#allocation2 + $0x10] sm:$0xf]
      %v6153 = vld [vmem:[#allocation2 + $0x18] sm:$0xf]
      %v6154 = vld [vmem:[#allocation2 + $0x1c] sm:$0xf]
      %v6155 = vld [vmem:[#allocation2 + $0x24] sm:$0xf]
      %v6156 = vld [vmem:[#allocation2 + $0x28] sm:$0xf]
      %v6157 = vld [vmem:[#allocation2 + $0x30] sm:$0xf]
      %v6158 = vld [vmem:[#allocation2 + $0x34] sm:$0xf]
      %v6159 = vld [vmem:[#allocation2 + $0x3c] sm:$0xf]
      %v6160 = vld [vmem:[#allocation2 + $0x40] sm:$0xf]
      %v6161 = vld [vmem:[#allocation2 + $0x48] sm:$0xf]
      %v6162 = vld [vmem:[#allocation2 + $0x4c] sm:$0xf]
      %v6163 = vld [vmem:[#allocation2 + $0x54] sm:$0xf]
      %v6164 = vld [vmem:[#allocation2 + $0x58] sm:$0xf]
      %v6165 = vld [vmem:[#allocation2 + $0x60] sm:$0xf]
      %v6166 = vld [vmem:[#allocation2 + $0x64] sm:$0xf]
      %v6167 = vld [vmem:[#allocation2 + $0x6c] sm:$0xf]
      %v6168 = vld [vmem:[#allocation2 + $0x70] sm:$0xf]
      %v6169 = vld [vmem:[#allocation2 + $0x78] sm:$0xf]
      %v6170 = vld [vmem:[#allocation2 + $0x7c] sm:$0xf]
      %v6171 = vld [vmem:[#allocation2 + $0x84] sm:$0xf]
      %v6172 = vld [vmem:[#allocation2 + $0x88] sm:$0xf]
      %v6173 = vld [vmem:[#allocation2 + $0x90] sm:$0xf]
      %v6174 = vld [vmem:[#allocation2 + $0x94] sm:$0xf]
      %v6175 = vld [vmem:[#allocation2 + $0x9c] sm:$0xf]
      %v6176 = vld [vmem:[#allocation2 + $0xa0] sm:$0xf]
      %v6177 = vld [vmem:[#allocation2 + $0xa8] sm:$0xf]
      %v6178 = vld [vmem:[#allocation2 + $0xac] sm:$0xf]
      %v6179 = vld [vmem:[#allocation2 + $0xb4] sm:$0xf]
      %v6180 = vld [vmem:[#allocation2 + $0xb8] sm:$0xf]
      %v6181 = vld [vmem:[%s3] sm:$0x3]
      %v6182 = vld [vmem:[#allocation2 + $0x8] sm:$0x1]
      %v6183 = vld [vmem:[#allocation2 + $0x14] sm:$0x1]
      %v6184 = vld [vmem:[#allocation2 + $0x20] sm:$0x1]
      %v6185 = vld [vmem:[#allocation2 + $0x2c] sm:$0x1]
      %v6186 = vld [vmem:[#allocation2 + $0x38] sm:$0x1]
      %v6187 = vld [vmem:[#allocation2 + $0x44] sm:$0x1]
      %v6188 = vld [vmem:[#allocation2 + $0x50] sm:$0x1]
      %v6189 = vld [vmem:[#allocation2 + $0x5c] sm:$0x1]
      %v6190 = vld [vmem:[#allocation2 + $0x68] sm:$0x1]
      %v6191 = vld [vmem:[#allocation2 + $0x74] sm:$0x1]
      %v6192 = vld [vmem:[#allocation2 + $0x80] sm:$0x1]
      %v6193 = vld [vmem:[#allocation2 + $0x8c] sm:$0x1]
      %v6194 = vld [vmem:[#allocation2 + $0x98] sm:$0x1]
      %v6195 = vld [vmem:[#allocation2 + $0xa4] sm:$0x1]
      %v6196 = vld [vmem:[#allocation2 + $0xb0] sm:$0x1]
      %v6197 = vld [vmem:[#allocation2 + $0xbc] sm:$0x1]
      %v6199 = vshrl.u32 %v6149, 16
      %v6201 = vrot.slane %v6199, 4
      %v6202 = vshll.u32 %v6149, 16
      %v6204 = vrot.slane %v6202, 5
      %v6205 = vor.u32 %v6201, %v6204
      %v6206 = vrot.slane %v6205, 4
      %v6208 = vshll.u32 %v6150, 16
      %v6210 = vrot.slane %v6208, 5
      %v6211 = vsel %vm312, %v6206, %v6210
      %v6212 = vshrl.u32 %v6150, 16
      %v6214 = vrot.slane %v6212, 4
      %v6215 = vor.u32 %v6214, %v6210
      %v6216 = vrot.slane %v6215, 4
      %v6218 = vshll.u32 %v6182, 16
      %v6220 = vrot.slane %v6218, 5
      %v6221 = vsel %vm312, %v6216, %v6220
      %v6223 = vshrl.u32 %v6151, 16
      %v6225 = vrot.slane %v6223, 4
      %v6226 = vshll.u32 %v6151, 16
      %v6228 = vrot.slane %v6226, 5
      %v6229 = vor.u32 %v6225, %v6228
      %v6230 = vrot.slane %v6229, 4
      %v6232 = vshll.u32 %v6152, 16
      %v6234 = vrot.slane %v6232, 5
      %v6235 = vsel %vm312, %v6230, %v6234
      %v6236 = vshrl.u32 %v6152, 16
      %v6238 = vrot.slane %v6236, 4
      %v6239 = vor.u32 %v6238, %v6234
      %v6240 = vrot.slane %v6239, 4
      %v6242 = vshll.u32 %v6183, 16
      %v6244 = vrot.slane %v6242, 5
      %v6245 = vsel %vm312, %v6240, %v6244
      %v6247 = vshrl.u32 %v6153, 16
      %v6249 = vrot.slane %v6247, 4
      %v6250 = vshll.u32 %v6153, 16
      %v6252 = vrot.slane %v6250, 5
      %v6253 = vor.u32 %v6249, %v6252
      %v6254 = vrot.slane %v6253, 4
      %v6256 = vshll.u32 %v6154, 16
      %v6258 = vrot.slane %v6256, 5
      %v6259 = vsel %vm312, %v6254, %v6258
      %v6260 = vshrl.u32 %v6154, 16
      %v6262 = vrot.slane %v6260, 4
      %v6263 = vor.u32 %v6262, %v6258
      %v6264 = vrot.slane %v6263, 4
      %v6266 = vshll.u32 %v6184, 16
      %v6268 = vrot.slane %v6266, 5
      %v6269 = vsel %vm312, %v6264, %v6268
      %v6271 = vshrl.u32 %v6155, 16
      %v6273 = vrot.slane %v6271, 4
      %v6274 = vshll.u32 %v6155, 16
      %v6276 = vrot.slane %v6274, 5
      %v6277 = vor.u32 %v6273, %v6276
      %v6278 = vrot.slane %v6277, 4
      %v6280 = vshll.u32 %v6156, 16
      %v6282 = vrot.slane %v6280, 5
      %v6283 = vsel %vm312, %v6278, %v6282
      %v6284 = vshrl.u32 %v6156, 16
      %v6286 = vrot.slane %v6284, 4
      %v6287 = vor.u32 %v6286, %v6282
      %v6288 = vrot.slane %v6287, 4
      %v6290 = vshll.u32 %v6185, 16
      %v6292 = vrot.slane %v6290, 5
      %v6293 = vsel %vm312, %v6288, %v6292
      %v6295 = vshrl.u32 %v6157, 16
      %v6297 = vrot.slane %v6295, 4
      %v6298 = vshll.u32 %v6157, 16
      %v6300 = vrot.slane %v6298, 5
      %v6301 = vor.u32 %v6297, %v6300
      %v6302 = vrot.slane %v6301, 4
      %v6304 = vshll.u32 %v6158, 16
      %v6306 = vrot.slane %v6304, 5
      %v6307 = vsel %vm312, %v6302, %v6306
      %v6308 = vshrl.u32 %v6158, 16
      %v6310 = vrot.slane %v6308, 4
      %v6311 = vor.u32 %v6310, %v6306
      %v6312 = vrot.slane %v6311, 4
      %v6314 = vshll.u32 %v6186, 16
      %v6316 = vrot.slane %v6314, 5
      %v6317 = vsel %vm312, %v6312, %v6316
      %v6319 = vshrl.u32 %v6159, 16
      %v6321 = vrot.slane %v6319, 4
      %v6322 = vshll.u32 %v6159, 16
      %v6324 = vrot.slane %v6322, 5
      %v6325 = vor.u32 %v6321, %v6324
      %v6326 = vrot.slane %v6325, 4
      %v6328 = vshll.u32 %v6160, 16
      %v6330 = vrot.slane %v6328, 5
      %v6331 = vsel %vm312, %v6326, %v6330
      %v6332 = vshrl.u32 %v6160, 16
      %v6334 = vrot.slane %v6332, 4
      %v6335 = vor.u32 %v6334, %v6330
      %v6336 = vrot.slane %v6335, 4
      %v6338 = vshll.u32 %v6187, 16
      %v6340 = vrot.slane %v6338, 5
      %v6341 = vsel %vm312, %v6336, %v6340
      %v6343 = vshrl.u32 %v6161, 16
      %v6345 = vrot.slane %v6343, 4
      %v6346 = vshll.u32 %v6161, 16
      %v6348 = vrot.slane %v6346, 5
      %v6349 = vor.u32 %v6345, %v6348
      %v6350 = vrot.slane %v6349, 4
      %v6352 = vshll.u32 %v6162, 16
      %v6354 = vrot.slane %v6352, 5
      %v6355 = vsel %vm312, %v6350, %v6354
      %v6356 = vshrl.u32 %v6162, 16
      %v6358 = vrot.slane %v6356, 4
      %v6359 = vor.u32 %v6358, %v6354
      %v6360 = vrot.slane %v6359, 4
      %v6362 = vshll.u32 %v6188, 16
      %v6364 = vrot.slane %v6362, 5
      %v6365 = vsel %vm312, %v6360, %v6364
      %v6367 = vshrl.u32 %v6163, 16
      %v6369 = vrot.slane %v6367, 4
      %v6370 = vshll.u32 %v6163, 16
      %v6372 = vrot.slane %v6370, 5
      %v6373 = vor.u32 %v6369, %v6372
      %v6374 = vrot.slane %v6373, 4
      %v6376 = vshll.u32 %v6164, 16
      %v6378 = vrot.slane %v6376, 5
      %v6379 = vsel %vm312, %v6374, %v6378
      %v6380 = vshrl.u32 %v6164, 16
      %v6382 = vrot.slane %v6380, 4
      %v6383 = vor.u32 %v6382, %v6378
      %v6384 = vrot.slane %v6383, 4
      %v6386 = vshll.u32 %v6189, 16
      %v6388 = vrot.slane %v6386, 5
      %v6389 = vsel %vm312, %v6384, %v6388
      %v6391 = vshrl.u32 %v6165, 16
      %v6393 = vrot.slane %v6391, 4
      %v6394 = vshll.u32 %v6165, 16
      %v6396 = vrot.slane %v6394, 5
      %v6397 = vor.u32 %v6393, %v6396
      %v6398 = vrot.slane %v6397, 4
      %v6400 = vshll.u32 %v6166, 16
      %v6402 = vrot.slane %v6400, 5
      %v6403 = vsel %vm312, %v6398, %v6402
      %v6404 = vshrl.u32 %v6166, 16
      %v6406 = vrot.slane %v6404, 4
      %v6407 = vor.u32 %v6406, %v6402
      %v6408 = vrot.slane %v6407, 4
      %v6410 = vshll.u32 %v6190, 16
      %v6412 = vrot.slane %v6410, 5
      %v6413 = vsel %vm312, %v6408, %v6412
      %v6415 = vshrl.u32 %v6167, 16
      %v6417 = vrot.slane %v6415, 4
      %v6418 = vshll.u32 %v6167, 16
      %v6420 = vrot.slane %v6418, 5
      %v6421 = vor.u32 %v6417, %v6420
      %v6422 = vrot.slane %v6421, 4
      %v6424 = vshll.u32 %v6168, 16
      %v6426 = vrot.slane %v6424, 5
      %v6427 = vsel %vm312, %v6422, %v6426
      %v6428 = vshrl.u32 %v6168, 16
      %v6430 = vrot.slane %v6428, 4
      %v6431 = vor.u32 %v6430, %v6426
      %v6432 = vrot.slane %v6431, 4
      %v6434 = vshll.u32 %v6191, 16
      %v6436 = vrot.slane %v6434, 5
      %v6437 = vsel %vm312, %v6432, %v6436
      %v6439 = vshrl.u32 %v6169, 16
      %v6441 = vrot.slane %v6439, 4
      %v6442 = vshll.u32 %v6169, 16
      %v6444 = vrot.slane %v6442, 5
      %v6445 = vor.u32 %v6441, %v6444
      %v6446 = vrot.slane %v6445, 4
      %v6448 = vshll.u32 %v6170, 16
      %v6450 = vrot.slane %v6448, 5
      %v6451 = vsel %vm312, %v6446, %v6450
      %v6452 = vshrl.u32 %v6170, 16
      %v6454 = vrot.slane %v6452, 4
      %v6455 = vor.u32 %v6454, %v6450
      %v6456 = vrot.slane %v6455, 4
      %v6458 = vshll.u32 %v6192, 16
      %v6460 = vrot.slane %v6458, 5
      %v6461 = vsel %vm312, %v6456, %v6460
      %v6463 = vshrl.u32 %v6171, 16
      %v6465 = vrot.slane %v6463, 4
      %v6466 = vshll.u32 %v6171, 16
      %v6468 = vrot.slane %v6466, 5
      %v6469 = vor.u32 %v6465, %v6468
      %v6470 = vrot.slane %v6469, 4
      %v6472 = vshll.u32 %v6172, 16
      %v6474 = vrot.slane %v6472, 5
      %v6475 = vsel %vm312, %v6470, %v6474
      %v6476 = vshrl.u32 %v6172, 16
      %v6478 = vrot.slane %v6476, 4
      %v6479 = vor.u32 %v6478, %v6474
      %v6480 = vrot.slane %v6479, 4
      %v6482 = vshll.u32 %v6193, 16
      %v6484 = vrot.slane %v6482, 5
      %v6485 = vsel %vm312, %v6480, %v6484
      %v6487 = vshrl.u32 %v6173, 16
      %v6489 = vrot.slane %v6487, 4
      %v6490 = vshll.u32 %v6173, 16
      %v6492 = vrot.slane %v6490, 5
      %v6493 = vor.u32 %v6489, %v6492
      %v6494 = vrot.slane %v6493, 4
      %v6496 = vshll.u32 %v6174, 16
      %v6498 = vrot.slane %v6496, 5
      %v6499 = vsel %vm312, %v6494, %v6498
      %v6500 = vshrl.u32 %v6174, 16
      %v6502 = vrot.slane %v6500, 4
      %v6503 = vor.u32 %v6502, %v6498
      %v6504 = vrot.slane %v6503, 4
      %v6506 = vshll.u32 %v6194, 16
      %v6508 = vrot.slane %v6506, 5
      %v6509 = vsel %vm312, %v6504, %v6508
      %v6511 = vshrl.u32 %v6175, 16
      %v6513 = vrot.slane %v6511, 4
      %v6514 = vshll.u32 %v6175, 16
      %v6516 = vrot.slane %v6514, 5
      %v6517 = vor.u32 %v6513, %v6516
      %v6518 = vrot.slane %v6517, 4
      %v6520 = vshll.u32 %v6176, 16
      %v6522 = vrot.slane %v6520, 5
      %v6523 = vsel %vm312, %v6518, %v6522
      %v6524 = vshrl.u32 %v6176, 16
      %v6526 = vrot.slane %v6524, 4
      %v6527 = vor.u32 %v6526, %v6522
      %v6528 = vrot.slane %v6527, 4
      %v6530 = vshll.u32 %v6195, 16
      %v6532 = vrot.slane %v6530, 5
      %v6533 = vsel %vm312, %v6528, %v6532
      %v6535 = vshrl.u32 %v6177, 16
      %v6537 = vrot.slane %v6535, 4
      %v6538 = vshll.u32 %v6177, 16
      %v6540 = vrot.slane %v6538, 5
      %v6541 = vor.u32 %v6537, %v6540
      %v6542 = vrot.slane %v6541, 4
      %v6544 = vshll.u32 %v6178, 16
      %v6546 = vrot.slane %v6544, 5
      %v6547 = vsel %vm312, %v6542, %v6546
      %v6548 = vshrl.u32 %v6178, 16
      %v6550 = vrot.slane %v6548, 4
      %v6551 = vor.u32 %v6550, %v6546
      %v6552 = vrot.slane %v6551, 4
      %v6554 = vshll.u32 %v6196, 16
      %v6556 = vrot.slane %v6554, 5
      %v6557 = vsel %vm312, %v6552, %v6556
      %v6559 = vshrl.u32 %v6179, 16
      %v6561 = vrot.slane %v6559, 4
      %v6562 = vshll.u32 %v6179, 16
      %v6564 = vrot.slane %v6562, 5
      %v6565 = vor.u32 %v6561, %v6564
      %v6566 = vrot.slane %v6565, 4
      %v6568 = vshll.u32 %v6180, 16
      %v6570 = vrot.slane %v6568, 5
      %v6571 = vsel %vm312, %v6566, %v6570
      %v6572 = vshrl.u32 %v6180, 16
      %v6574 = vrot.slane %v6572, 4
      %v6575 = vor.u32 %v6574, %v6570
      %v6576 = vrot.slane %v6575, 4
      %v6578 = vshll.u32 %v6197, 16
      %v6580 = vrot.slane %v6578, 5
      %v6581 = vsel %vm312, %v6576, %v6580
      %s6582 = scalar_lea.vmem %s3, 2
      %v6583 = vld [vmem:[%s6582] sm:$0x3]
      %v6584 = vunpack.c.l.b16 %v6211
      %v6585 = vunpack.c.l.b16 %v6221
      %v6586 = vunpack.c.l.b16 %v6235
      %v6587 = vunpack.c.l.b16 %v6245
      %v6588 = vunpack.c.l.b16 %v6259
      %v6589 = vunpack.c.l.b16 %v6269
      %v6590 = vunpack.c.l.b16 %v6283
      %v6591 = vunpack.c.l.b16 %v6293
      %v6592 = vunpack.c.l.b16 %v6307
      %v6593 = vunpack.c.l.b16 %v6317
      %v6594 = vunpack.c.l.b16 %v6331
      %v6595 = vunpack.c.l.b16 %v6341
      %v6596 = vunpack.c.l.b16 %v6355
      %v6597 = vunpack.c.l.b16 %v6365
      %v6598 = vunpack.c.l.b16 %v6379
      %v6599 = vunpack.c.l.b16 %v6389
      %v6600 = vunpack.c.l.b16 %v6403
      %v6601 = vunpack.c.l.b16 %v6413
      %v6602 = vunpack.c.l.b16 %v6427
      %v6603 = vunpack.c.l.b16 %v6437
      %v6604 = vunpack.c.l.b16 %v6451
      %v6605 = vunpack.c.l.b16 %v6461
      %v6606 = vunpack.c.l.b16 %v6475
      %v6607 = vunpack.c.l.b16 %v6485
      %v6608 = vunpack.c.l.b16 %v6499
      %v6609 = vunpack.c.l.b16 %v6509
      %v6610 = vunpack.c.l.b16 %v6523
      %v6611 = vunpack.c.l.b16 %v6533
      %v6612 = vunpack.c.l.b16 %v6547
      %v6613 = vunpack.c.l.b16 %v6557
      %v6614 = vunpack.c.l.b16 %v6571
      %v6615 = vunpack.c.l.b16 %v6581
      %v6616 = vpack.c.b16 %v6585, %v6584
      %v6617 = vpack.c.b16 %v6587, %v6586
      %v6618 = vpack.c.b16 %v6589, %v6588
      %v6619 = vpack.c.b16 %v6591, %v6590
      %v6620 = vpack.c.b16 %v6593, %v6592
      %v6621 = vpack.c.b16 %v6595, %v6594
      %v6622 = vpack.c.b16 %v6597, %v6596
      %v6623 = vpack.c.b16 %v6599, %v6598
      %v6624 = vpack.c.b16 %v6601, %v6600
      %v6625 = vpack.c.b16 %v6603, %v6602
      %v6626 = vpack.c.b16 %v6605, %v6604
      %v6627 = vpack.c.b16 %v6607, %v6606
      %v6628 = vpack.c.b16 %v6609, %v6608
      %v6629 = vpack.c.b16 %v6611, %v6610
      %v6630 = vpack.c.b16 %v6613, %v6612
      %v6631 = vpack.c.b16 %v6615, %v6614
      %v6633 = vsel %vm801, %v6616, 0
      %v6636 = vsel %vm801, %v6617, 0
      %v6639 = vsel %vm801, %v6618, 0
      %v6642 = vsel %vm801, %v6619, 0
      %v6645 = vsel %vm801, %v6620, 0
      %v6648 = vsel %vm801, %v6621, 0
      %v6651 = vsel %vm801, %v6622, 0
      %v6654 = vsel %vm801, %v6623, 0
      %v6657 = vsel %vm801, %v6624, 0
      %v6660 = vsel %vm801, %v6625, 0
      %v6663 = vsel %vm801, %v6626, 0
      %v6666 = vsel %vm801, %v6627, 0
      %v6669 = vsel %vm801, %v6628, 0
      %v6672 = vsel %vm801, %v6629, 0
      %v6675 = vsel %vm801, %v6630, 0
      %v6678 = vsel %vm801, %v6631, 0
      %v6681 = vsel %vm856, %v6583, 0
      %6683 = vmatprep.subr.bf16.mxu0 0
      %6684 = vmatpush1.bf16.msra.mxu0 %v6681
      %6685 = vmatprep.subr.bf16.mxu0 0
      %6686 = vmatpush1.bf16.msra.mxu0 0
      %6687 = vmatprep.subr.bf16.mxu0 0
      %6688 = vmatpush1.bf16.msra.mxu0 0
      %6689 = vmatprep.subr.bf16.mxu0 0
      %6690 = vmatpush1.bf16.msra.mxu0 0
      %6691 = vmatprep.subr.bf16.mxu0 0
      %6692 = vmatpush1.bf16.msra.mxu0 0
      %6693 = vmatprep.subr.bf16.mxu0 0
      %6694 = vmatpush1.bf16.msra.mxu0 0
      %6695 = vmatprep.subr.bf16.mxu0 0
      %6696 = vmatpush1.bf16.msra.mxu0 0
      %6697 = vmatprep.subr.bf16.mxu0 0
      %6698 = vmatpush1.bf16.msra.mxu0 0
      %6699 = vmatprep.subr.bf16.mxu0 0
      %6700 = vmatpush1.bf16.msra.mxu0 0
      %6701 = vmatprep.subr.bf16.mxu0 0
      %6702 = vmatpush1.bf16.msra.mxu0 0
      %6703 = vmatprep.subr.bf16.mxu0 0
      %6704 = vmatpush1.bf16.msra.mxu0 0
      %6705 = vmatprep.subr.bf16.mxu0 0
      %6706 = vmatpush1.bf16.msra.mxu0 0
      %6707 = vmatprep.subr.bf16.mxu0 0
      %6708 = vmatpush1.bf16.msra.mxu0 0
      %6709 = vmatprep.subr.bf16.mxu0 0
      %6710 = vmatpush1.bf16.msra.mxu0 0
      %6711 = vmatprep.subr.bf16.mxu0 0
      %6712 = vmatpush1.bf16.msra.mxu0 0
      %6713 = vmatprep.subr.bf16.mxu0 0
      %6714 = vmatpush1.bf16.msra.mxu0 0
      %6715 = vmatprep.mubr.bf16.mxu0 0
      %6716 = vmatmul.mubr.bf16.gmra.mrb[0].mxu0 %v6633
      %v6717 = vpop.f32.mrb[0].mxu0
      %v6718 = vadd.f32 0.0, %v6717
      %v6719 = vpop.f32.mrb[0].mxu0
      %v6720 = vpop.f32.mrb[0].mxu0
      %v6721 = vadd.f32 0.0, %v6720
      %v6722 = vpop.f32.mrb[0].mxu0
      %6723 = vmatprep.mubr.bf16.mxu0 0
      %6724 = vmatmul.mubr.bf16.gmra.mrb[0].mxu0 %v6636
      %v6725 = vpop.f32.mrb[0].mxu0
      %v6726 = vadd.f32 0.0, %v6725
      %v6727 = vpop.f32.mrb[0].mxu0
      %v6728 = vpop.f32.mrb[0].mxu0
      %v6729 = vadd.f32 0.0, %v6728
      %v6730 = vpop.f32.mrb[0].mxu0
      %6731 = vmatprep.mubr.bf16.mxu0 0
      %6732 = vmatmul.mubr.bf16.gmra.mrb[0].mxu0 %v6639
      %v6733 = vpop.f32.mrb[0].mxu0
      %v6734 = vadd.f32 0.0, %v6733
      %v6735 = vpop.f32.mrb[0].mxu0
      %v6736 = vpop.f32.mrb[0].mxu0
      %v6737 = vadd.f32 0.0, %v6736
      %v6738 = vpop.f32.mrb[0].mxu0
      %6739 = vmatprep.mubr.bf16.mxu0 0
      %6740 = vmatmul.mubr.bf16.gmra.mrb[0].mxu0 %v6642
      %v6741 = vpop.f32.mrb[0].mxu0
      %v6742 = vadd.f32 0.0, %v6741
      %v6743 = vpop.f32.mrb[0].mxu0
      %v6744 = vpop.f32.mrb[0].mxu0
      %v6745 = vadd.f32 0.0, %v6744
      %v6746 = vpop.f32.mrb[0].mxu0
      %6747 = vmatprep.mubr.bf16.mxu0 0
      %6748 = vmatmul.mubr.bf16.gmra.mrb[0].mxu0 %v6645
      %v6749 = vpop.f32.mrb[0].mxu0
      %v6750 = vadd.f32 0.0, %v6749
      %v6751 = vpop.f32.mrb[0].mxu0
      %v6752 = vpop.f32.mrb[0].mxu0
      %v6753 = vadd.f32 0.0, %v6752
      %v6754 = vpop.f32.mrb[0].mxu0
      %6755 = vmatprep.mubr.bf16.mxu0 0
      %6756 = vmatmul.mubr.bf16.gmra.mrb[0].mxu0 %v6648
      %v6757 = vpop.f32.mrb[0].mxu0
      %v6758 = vadd.f32 0.0, %v6757
      %v6759 = vpop.f32.mrb[0].mxu0
      %v6760 = vpop.f32.mrb[0].mxu0
      %v6761 = vadd.f32 0.0, %v6760
      %v6762 = vpop.f32.mrb[0].mxu0
      %6763 = vmatprep.mubr.bf16.mxu0 0
      %6764 = vmatmul.mubr.bf16.gmra.mrb[0].mxu0 %v6651
      %v6765 = vpop.f32.mrb[0].mxu0
      %v6766 = vadd.f32 0.0, %v6765
      %v6767 = vpop.f32.mrb[0].mxu0
      %v6768 = vpop.f32.mrb[0].mxu0
      %v6769 = vadd.f32 0.0, %v6768
      %v6770 = vpop.f32.mrb[0].mxu0
      %6771 = vmatprep.mubr.bf16.mxu0 0
      %6772 = vmatmul.mubr.bf16.gmra.mrb[0].mxu0 %v6654
      %v6773 = vpop.f32.mrb[0].mxu0
      %v6774 = vadd.f32 0.0, %v6773
      %v6775 = vpop.f32.mrb[0].mxu0
      %v6776 = vpop.f32.mrb[0].mxu0
      %v6777 = vadd.f32 0.0, %v6776
      %v6778 = vpop.f32.mrb[0].mxu0
      %6779 = vmatprep.mubr.bf16.mxu0 0
      %6780 = vmatmul.mubr.bf16.gmra.mrb[0].mxu0 %v6657
      %v6781 = vpop.f32.mrb[0].mxu0
      %v6782 = vadd.f32 0.0, %v6781
      %v6783 = vpop.f32.mrb[0].mxu0
      %v6784 = vpop.f32.mrb[0].mxu0
      %v6785 = vadd.f32 0.0, %v6784
      %v6786 = vpop.f32.mrb[0].mxu0
      %6787 = vmatprep.mubr.bf16.mxu0 0
      %6788 = vmatmul.mubr.bf16.gmra.mrb[0].mxu0 %v6660
      %v6789 = vpop.f32.mrb[0].mxu0
      %v6790 = vadd.f32 0.0, %v6789
      %v6791 = vpop.f32.mrb[0].mxu0
      %v6792 = vpop.f32.mrb[0].mxu0
      %v6793 = vadd.f32 0.0, %v6792
      %v6794 = vpop.f32.mrb[0].mxu0
      %6795 = vmatprep.mubr.bf16.mxu0 0
      %6796 = vmatmul.mubr.bf16.gmra.mrb[0].mxu0 %v6663
      %v6797 = vpop.f32.mrb[0].mxu0
      %v6798 = vadd.f32 0.0, %v6797
      %v6799 = vpop.f32.mrb[0].mxu0
      %v6800 = vpop.f32.mrb[0].mxu0
      %v6801 = vadd.f32 0.0, %v6800
      %v6802 = vpop.f32.mrb[0].mxu0
      %6803 = vmatprep.mubr.bf16.mxu0 0
      %6804 = vmatmul.mubr.bf16.gmra.mrb[0].mxu0 %v6666
      %v6805 = vpop.f32.mrb[0].mxu0
      %v6806 = vadd.f32 0.0, %v6805
      %v6807 = vpop.f32.mrb[0].mxu0
      %v6808 = vpop.f32.mrb[0].mxu0
      %v6809 = vadd.f32 0.0, %v6808
      %v6810 = vpop.f32.mrb[0].mxu0
      %6811 = vmatprep.mubr.bf16.mxu0 0
      %6812 = vmatmul.mubr.bf16.gmra.mrb[0].mxu0 %v6669
      %v6813 = vpop.f32.mrb[0].mxu0
      %v6814 = vadd.f32 0.0, %v6813
      %v6815 = vpop.f32.mrb[0].mxu0
      %v6816 = vpop.f32.mrb[0].mxu0
      %v6817 = vadd.f32 0.0, %v6816
      %v6818 = vpop.f32.mrb[0].mxu0
      %6819 = vmatprep.mubr.bf16.mxu0 0
      %6820 = vmatmul.mubr.bf16.gmra.mrb[0].mxu0 %v6672
      %v6821 = vpop.f32.mrb[0].mxu0
      %v6822 = vadd.f32 0.0, %v6821
      %v6823 = vpop.f32.mrb[0].mxu0
      %v6824 = vpop.f32.mrb[0].mxu0
      %v6825 = vadd.f32 0.0, %v6824
      %v6826 = vpop.f32.mrb[0].mxu0
      %6827 = vmatprep.mubr.bf16.mxu0 0
      %6828 = vmatmul.mubr.bf16.gmra.mrb[0].mxu0 %v6675
      %v6829 = vpop.f32.mrb[0].mxu0
      %v6830 = vadd.f32 0.0, %v6829
      %v6831 = vpop.f32.mrb[0].mxu0
      %v6832 = vpop.f32.mrb[0].mxu0
      %v6833 = vadd.f32 0.0, %v6832
      %v6834 = vpop.f32.mrb[0].mxu0
      %6835 = vmatprep.mubr.bf16.mxu0 0
      %6836 = vmatmul.mubr.bf16.gmra.mrb[0].mxu0 %v6678
      %v6837 = vpop.f32.mrb[0].mxu0
      %v6838 = vadd.f32 0.0, %v6837
      %v6839 = vpop.f32.mrb[0].mxu0
      %v6840 = vpop.f32.mrb[0].mxu0
      %v6841 = vadd.f32 0.0, %v6840
      %v6842 = vpop.f32.mrb[0].mxu0
      %6843 = vdwg.mxu0
      %v6876 = vunpack.c.l.b16 %v6149
      %v6877 = vunpack.c.l.b16 %v6150
      %v6878 = vunpack.c.l.b16 %v6151
      %v6879 = vunpack.c.l.b16 %v6152
      %v6880 = vunpack.c.l.b16 %v6153
      %v6881 = vunpack.c.l.b16 %v6154
      %v6882 = vunpack.c.l.b16 %v6155
      %v6883 = vunpack.c.l.b16 %v6156
      %v6884 = vunpack.c.l.b16 %v6157
      %v6885 = vunpack.c.l.b16 %v6158
      %v6886 = vunpack.c.l.b16 %v6159
      %v6887 = vunpack.c.l.b16 %v6160
      %v6888 = vunpack.c.l.b16 %v6161
      %v6889 = vunpack.c.l.b16 %v6162
      %v6890 = vunpack.c.l.b16 %v6163
      %v6891 = vunpack.c.l.b16 %v6164
      %v6892 = vunpack.c.l.b16 %v6165
      %v6893 = vunpack.c.l.b16 %v6166
      %v6894 = vunpack.c.l.b16 %v6167
      %v6895 = vunpack.c.l.b16 %v6168
      %v6896 = vunpack.c.l.b16 %v6169
      %v6897 = vunpack.c.l.b16 %v6170
      %v6898 = vunpack.c.l.b16 %v6171
      %v6899 = vunpack.c.l.b16 %v6172
      %v6900 = vunpack.c.l.b16 %v6173
      %v6901 = vunpack.c.l.b16 %v6174
      %v6902 = vunpack.c.l.b16 %v6175
      %v6903 = vunpack.c.l.b16 %v6176
      %v6904 = vunpack.c.l.b16 %v6177
      %v6905 = vunpack.c.l.b16 %v6178
      %v6906 = vunpack.c.l.b16 %v6179
      %v6907 = vunpack.c.l.b16 %v6180
      %v6908 = vpack.c.b16 %v6877, %v6876
      %v6909 = vpack.c.b16 %v6879, %v6878
      %v6910 = vpack.c.b16 %v6881, %v6880
      %v6911 = vpack.c.b16 %v6883, %v6882
      %v6912 = vpack.c.b16 %v6885, %v6884
      %v6913 = vpack.c.b16 %v6887, %v6886
      %v6914 = vpack.c.b16 %v6889, %v6888
      %v6915 = vpack.c.b16 %v6891, %v6890
      %v6916 = vpack.c.b16 %v6893, %v6892
      %v6917 = vpack.c.b16 %v6895, %v6894
      %v6918 = vpack.c.b16 %v6897, %v6896
      %v6919 = vpack.c.b16 %v6899, %v6898
      %v6920 = vpack.c.b16 %v6901, %v6900
      %v6921 = vpack.c.b16 %v6903, %v6902
      %v6922 = vpack.c.b16 %v6905, %v6904
      %v6923 = vpack.c.b16 %v6907, %v6906
      %v6925 = vsel %vm801, %v6908, 0
      %v6928 = vsel %vm801, %v6909, 0
      %v6931 = vsel %vm801, %v6910, 0
      %v6934 = vsel %vm801, %v6911, 0
      %v6937 = vsel %vm801, %v6912, 0
      %v6940 = vsel %vm801, %v6913, 0
      %v6943 = vsel %vm801, %v6914, 0
      %v6946 = vsel %vm801, %v6915, 0
      %v6949 = vsel %vm801, %v6916, 0
      %v6952 = vsel %vm801, %v6917, 0
      %v6955 = vsel %vm801, %v6918, 0
      %v6958 = vsel %vm801, %v6919, 0
      %v6961 = vsel %vm801, %v6920, 0
      %v6964 = vsel %vm801, %v6921, 0
      %v6967 = vsel %vm801, %v6922, 0
      %v6970 = vsel %vm801, %v6923, 0
      %v6973 = vsel %vm856, %v6181, 0
      %6975 = vmatprep.subr.bf16.mxu0 0
      %6976 = vmatpush1.bf16.msra.mxu0 %v6973
      %6977 = vmatprep.subr.bf16.mxu0 0
      %6978 = vmatpush1.bf16.msra.mxu0 0
      %6979 = vmatprep.subr.bf16.mxu0 0
      %6980 = vmatpush1.bf16.msra.mxu0 0
      %6981 = vmatprep.subr.bf16.mxu0 0
      %6982 = vmatpush1.bf16.msra.mxu0 0
      %6983 = vmatprep.subr.bf16.mxu0 0
      %6984 = vmatpush1.bf16.msra.mxu0 0
      %6985 = vmatprep.subr.bf16.mxu0 0
      %6986 = vmatpush1.bf16.msra.mxu0 0
      %6987 = vmatprep.subr.bf16.mxu0 0
      %6988 = vmatpush1.bf16.msra.mxu0 0
      %6989 = vmatprep.subr.bf16.mxu0 0
      %6990 = vmatpush1.bf16.msra.mxu0 0
      %6991 = vmatprep.subr.bf16.mxu0 0
      %6992 = vmatpush1.bf16.msra.mxu0 0
      %6993 = vmatprep.subr.bf16.mxu0 0
      %6994 = vmatpush1.bf16.msra.mxu0 0
      %6995 = vmatprep.subr.bf16.mxu0 0
      %6996 = vmatpush1.bf16.msra.mxu0 0
      %6997 = vmatprep.subr.bf16.mxu0 0
      %6998 = vmatpush1.bf16.msra.mxu0 0
      %6999 = vmatprep.subr.bf16.mxu0 0
      %7000 = vmatpush1.bf16.msra.mxu0 0
      %7001 = vmatprep.subr.bf16.mxu0 0
      %7002 = vmatpush1.bf16.msra.mxu0 0
      %7003 = vmatprep.subr.bf16.mxu0 0
      %7004 = vmatpush1.bf16.msra.mxu0 0
      %7005 = vmatprep.subr.bf16.mxu0 0
      %7006 = vmatpush1.bf16.msra.mxu0 0
      %7007 = vmatprep.mubr.bf16.mxu0 0
      %7008 = vmatmul.mubr.bf16.gmra.mrb[0].mxu0 %v6925
      %v7009 = vpop.f32.mrb[0].mxu0
      %v7010 = vadd.f32 %v6718, %v7009
      %v7011 = vpop.f32.mrb[0].mxu0
      %v7012 = vpop.f32.mrb[0].mxu0
      %v7013 = vadd.f32 %v6721, %v7012
      %v7014 = vpop.f32.mrb[0].mxu0
      %7015 = vmatprep.mubr.bf16.mxu0 0
      %7016 = vmatmul.mubr.bf16.gmra.mrb[0].mxu0 %v6928
      %v7017 = vpop.f32.mrb[0].mxu0
      %v7018 = vadd.f32 %v6726, %v7017
      %v7019 = vpop.f32.mrb[0].mxu0
      %v7020 = vpop.f32.mrb[0].mxu0
      %v7021 = vadd.f32 %v6729, %v7020
      %v7022 = vpop.f32.mrb[0].mxu0
      %7023 = vmatprep.mubr.bf16.mxu0 0
      %7024 = vmatmul.mubr.bf16.gmra.mrb[0].mxu0 %v6931
      %v7025 = vpop.f32.mrb[0].mxu0
      %v7026 = vadd.f32 %v6734, %v7025
      %v7027 = vpop.f32.mrb[0].mxu0
      %v7028 = vpop.f32.mrb[0].mxu0
      %v7029 = vadd.f32 %v6737, %v7028
      %v7030 = vpop.f32.mrb[0].mxu0
      %7031 = vmatprep.mubr.bf16.mxu0 0
      %7032 = vmatmul.mubr.bf16.gmra.mrb[0].mxu0 %v6934
      %v7033 = vpop.f32.mrb[0].mxu0
      %v7034 = vadd.f32 %v6742, %v7033
      %v7035 = vpop.f32.mrb[0].mxu0
      %v7036 = vpop.f32.mrb[0].mxu0
      %v7037 = vadd.f32 %v6745, %v7036
      %v7038 = vpop.f32.mrb[0].mxu0
      %7039 = vmatprep.mubr.bf16.mxu0 0
      %7040 = vmatmul.mubr.bf16.gmra.mrb[0].mxu0 %v6937
      %v7041 = vpop.f32.mrb[0].mxu0
      %v7042 = vadd.f32 %v6750, %v7041
      %v7043 = vpop.f32.mrb[0].mxu0
      %v7044 = vpop.f32.mrb[0].mxu0
      %v7045 = vadd.f32 %v6753, %v7044
      %v7046 = vpop.f32.mrb[0].mxu0
      %7047 = vmatprep.mubr.bf16.mxu0 0
      %7048 = vmatmul.mubr.bf16.gmra.mrb[0].mxu0 %v6940
      %v7049 = vpop.f32.mrb[0].mxu0
      %v7050 = vadd.f32 %v6758, %v7049
      %v7051 = vpop.f32.mrb[0].mxu0
      %v7052 = vpop.f32.mrb[0].mxu0
      %v7053 = vadd.f32 %v6761, %v7052
      %v7054 = vpop.f32.mrb[0].mxu0
      %7055 = vmatprep.mubr.bf16.mxu0 0
      %7056 = vmatmul.mubr.bf16.gmra.mrb[0].mxu0 %v6943
      %v7057 = vpop.f32.mrb[0].mxu0
      %v7058 = vadd.f32 %v6766, %v7057
      %v7059 = vpop.f32.mrb[0].mxu0
      %v7060 = vpop.f32.mrb[0].mxu0
      %v7061 = vadd.f32 %v6769, %v7060
      %v7062 = vpop.f32.mrb[0].mxu0
      %7063 = vmatprep.mubr.bf16.mxu0 0
      %7064 = vmatmul.mubr.bf16.gmra.mrb[0].mxu0 %v6946
      %v7065 = vpop.f32.mrb[0].mxu0
      %v7066 = vadd.f32 %v6774, %v7065
      %v7067 = vpop.f32.mrb[0].mxu0
      %v7068 = vpop.f32.mrb[0].mxu0
      %v7069 = vadd.f32 %v6777, %v7068
      %v7070 = vpop.f32.mrb[0].mxu0
      %7071 = vmatprep.mubr.bf16.mxu0 0
      %7072 = vmatmul.mubr.bf16.gmra.mrb[0].mxu0 %v6949
      %v7073 = vpop.f32.mrb[0].mxu0
      %v7074 = vadd.f32 %v6782, %v7073
      %v7075 = vpop.f32.mrb[0].mxu0
      %v7076 = vpop.f32.mrb[0].mxu0
      %v7077 = vadd.f32 %v6785, %v7076
      %v7078 = vpop.f32.mrb[0].mxu0
      %7079 = vmatprep.mubr.bf16.mxu0 0
      %7080 = vmatmul.mubr.bf16.gmra.mrb[0].mxu0 %v6952
      %v7081 = vpop.f32.mrb[0].mxu0
      %v7082 = vadd.f32 %v6790, %v7081
      %v7083 = vpop.f32.mrb[0].mxu0
      %v7084 = vpop.f32.mrb[0].mxu0
      %v7085 = vadd.f32 %v6793, %v7084
      %v7086 = vpop.f32.mrb[0].mxu0
      %7087 = vmatprep.mubr.bf16.mxu0 0
      %7088 = vmatmul.mubr.bf16.gmra.mrb[0].mxu0 %v6955
      %v7089 = vpop.f32.mrb[0].mxu0
      %v7090 = vadd.f32 %v6798, %v7089
      %v7091 = vpop.f32.mrb[0].mxu0
      %v7092 = vpop.f32.mrb[0].mxu0
      %v7093 = vadd.f32 %v6801, %v7092
      %v7094 = vpop.f32.mrb[0].mxu0
      %7095 = vmatprep.mubr.bf16.mxu0 0
      %7096 = vmatmul.mubr.bf16.gmra.mrb[0].mxu0 %v6958
      %v7097 = vpop.f32.mrb[0].mxu0
      %v7098 = vadd.f32 %v6806, %v7097
      %v7099 = vpop.f32.mrb[0].mxu0
      %v7100 = vpop.f32.mrb[0].mxu0
      %v7101 = vadd.f32 %v6809, %v7100
      %v7102 = vpop.f32.mrb[0].mxu0
      %7103 = vmatprep.mubr.bf16.mxu0 0
      %7104 = vmatmul.mubr.bf16.gmra.mrb[0].mxu0 %v6961
      %v7105 = vpop.f32.mrb[0].mxu0
      %v7106 = vadd.f32 %v6814, %v7105
      %v7107 = vpop.f32.mrb[0].mxu0
      %v7108 = vpop.f32.mrb[0].mxu0
      %v7109 = vadd.f32 %v6817, %v7108
      %v7110 = vpop.f32.mrb[0].mxu0
      %7111 = vmatprep.mubr.bf16.mxu0 0
      %7112 = vmatmul.mubr.bf16.gmra.mrb[0].mxu0 %v6964
      %v7113 = vpop.f32.mrb[0].mxu0
      %v7114 = vadd.f32 %v6822, %v7113
      %v7115 = vpop.f32.mrb[0].mxu0
      %v7116 = vpop.f32.mrb[0].mxu0
      %v7117 = vadd.f32 %v6825, %v7116
      %v7118 = vpop.f32.mrb[0].mxu0
      %7119 = vmatprep.mubr.bf16.mxu0 0
      %7120 = vmatmul.mubr.bf16.gmra.mrb[0].mxu0 %v6967
      %v7121 = vpop.f32.mrb[0].mxu0
      %v7122 = vadd.f32 %v6830, %v7121
      %v7123 = vpop.f32.mrb[0].mxu0
      %v7124 = vpop.f32.mrb[0].mxu0
      %v7125 = vadd.f32 %v6833, %v7124
      %v7126 = vpop.f32.mrb[0].mxu0
      %7127 = vmatprep.mubr.bf16.mxu0 0
      %7128 = vmatmul.mubr.bf16.gmra.mrb[0].mxu0 %v6970
      %v7129 = vpop.f32.mrb[0].mxu0
      %v7130 = vadd.f32 %v6838, %v7129
      %v7131 = vpop.f32.mrb[0].mxu0
      %v7132 = vpop.f32.mrb[0].mxu0
      %v7133 = vadd.f32 %v6841, %v7132
      %v7134 = vpop.f32.mrb[0].mxu0
      %7135 = vdwg.mxu0
      %v7136 = vld [vmem:[#allocation2] sm:$0xe]
      %v7137 = vld [vmem:[#allocation2 + $0xc] sm:$0xe]
      %v7138 = vld [vmem:[#allocation2 + $0x18] sm:$0xe]
      %v7139 = vld [vmem:[#allocation2 + $0x24] sm:$0xe]
      %v7140 = vld [vmem:[#allocation2 + $0x30] sm:$0xe]
      %v7141 = vld [vmem:[#allocation2 + $0x3c] sm:$0xe]
      %v7142 = vld [vmem:[#allocation2 + $0x48] sm:$0xe]
      %v7143 = vld [vmem:[#allocation2 + $0x54] sm:$0xe]
      %v7144 = vld [vmem:[#allocation2 + $0x60] sm:$0xe]
      %v7145 = vld [vmem:[#allocation2 + $0x6c] sm:$0xe]
      %v7146 = vld [vmem:[#allocation2 + $0x78] sm:$0xe]
      %v7147 = vld [vmem:[#allocation2 + $0x84] sm:$0xe]
      %v7148 = vld [vmem:[#allocation2 + $0x90] sm:$0xe]
      %v7149 = vld [vmem:[#allocation2 + $0x9c] sm:$0xe]
      %v7150 = vld [vmem:[#allocation2 + $0xa8] sm:$0xe]
      %v7151 = vld [vmem:[#allocation2 + $0xb4] sm:$0xe]
      %v7184 = vrot.slane %v7136, 5
      %v7185 = vrot.slane %v7184, 4
      %v7186 = vrot.slane %v6150, 5
      %v7187 = vsel %vm1417, %v7185, %v7186
      %v7188 = vrot.slane %v7186, 4
      %v7189 = vrot.slane %v6182, 5
      %v7190 = vsel %vm1417, %v7188, %v7189
      %v7191 = vrot.slane %v7137, 5
      %v7192 = vrot.slane %v7191, 4
      %v7193 = vrot.slane %v6152, 5
      %v7194 = vsel %vm1417, %v7192, %v7193
      %v7195 = vrot.slane %v7193, 4
      %v7196 = vrot.slane %v6183, 5
      %v7197 = vsel %vm1417, %v7195, %v7196
      %v7198 = vrot.slane %v7138, 5
      %v7199 = vrot.slane %v7198, 4
      %v7200 = vrot.slane %v6154, 5
      %v7201 = vsel %vm1417, %v7199, %v7200
      %v7202 = vrot.slane %v7200, 4
      %v7203 = vrot.slane %v6184, 5
      %v7204 = vsel %vm1417, %v7202, %v7203
      %v7205 = vrot.slane %v7139, 5
      %v7206 = vrot.slane %v7205, 4
      %v7207 = vrot.slane %v6156, 5
      %v7208 = vsel %vm1417, %v7206, %v7207
      %v7209 = vrot.slane %v7207, 4
      %v7210 = vrot.slane %v6185, 5
      %v7211 = vsel %vm1417, %v7209, %v7210
      %v7212 = vrot.slane %v7140, 5
      %v7213 = vrot.slane %v7212, 4
      %v7214 = vrot.slane %v6158, 5
      %v7215 = vsel %vm1417, %v7213, %v7214
      %v7216 = vrot.slane %v7214, 4
      %v7217 = vrot.slane %v6186, 5
      %v7218 = vsel %vm1417, %v7216, %v7217
      %v7219 = vrot.slane %v7141, 5
      %v7220 = vrot.slane %v7219, 4
      %v7221 = vrot.slane %v6160, 5
      %v7222 = vsel %vm1417, %v7220, %v7221
      %v7223 = vrot.slane %v7221, 4
      %v7224 = vrot.slane %v6187, 5
      %v7225 = vsel %vm1417, %v7223, %v7224
      %v7226 = vrot.slane %v7142, 5
      %v7227 = vrot.slane %v7226, 4
      %v7228 = vrot.slane %v6162, 5
      %v7229 = vsel %vm1417, %v7227, %v7228
      %v7230 = vrot.slane %v7228, 4
      %v7231 = vrot.slane %v6188, 5
      %v7232 = vsel %vm1417, %v7230, %v7231
      %v7233 = vrot.slane %v7143, 5
      %v7234 = vrot.slane %v7233, 4
      %v7235 = vrot.slane %v6164, 5
      %v7236 = vsel %vm1417, %v7234, %v7235
      %v7237 = vrot.slane %v7235, 4
      %v7238 = vrot.slane %v6189, 5
      %v7239 = vsel %vm1417, %v7237, %v7238
      %v7240 = vrot.slane %v7144, 5
      %v7241 = vrot.slane %v7240, 4
      %v7242 = vrot.slane %v6166, 5
      %v7243 = vsel %vm1417, %v7241, %v7242
      %v7244 = vrot.slane %v7242, 4
      %v7245 = vrot.slane %v6190, 5
      %v7246 = vsel %vm1417, %v7244, %v7245
      %v7247 = vrot.slane %v7145, 5
      %v7248 = vrot.slane %v7247, 4
      %v7249 = vrot.slane %v6168, 5
      %v7250 = vsel %vm1417, %v7248, %v7249
      %v7251 = vrot.slane %v7249, 4
      %v7252 = vrot.slane %v6191, 5
      %v7253 = vsel %vm1417, %v7251, %v7252
      %v7254 = vrot.slane %v7146, 5
      %v7255 = vrot.slane %v7254, 4
      %v7256 = vrot.slane %v6170, 5
      %v7257 = vsel %vm1417, %v7255, %v7256
      %v7258 = vrot.slane %v7256, 4
      %v7259 = vrot.slane %v6192, 5
      %v7260 = vsel %vm1417, %v7258, %v7259
      %v7261 = vrot.slane %v7147, 5
      %v7262 = vrot.slane %v7261, 4
      %v7263 = vrot.slane %v6172, 5
      %v7264 = vsel %vm1417, %v7262, %v7263
      %v7265 = vrot.slane %v7263, 4
      %v7266 = vrot.slane %v6193, 5
      %v7267 = vsel %vm1417, %v7265, %v7266
      %v7268 = vrot.slane %v7148, 5
      %v7269 = vrot.slane %v7268, 4
      %v7270 = vrot.slane %v6174, 5
      %v7271 = vsel %vm1417, %v7269, %v7270
      %v7272 = vrot.slane %v7270, 4
      %v7273 = vrot.slane %v6194, 5
      %v7274 = vsel %vm1417, %v7272, %v7273
      %v7275 = vrot.slane %v7149, 5
      %v7276 = vrot.slane %v7275, 4
      %v7277 = vrot.slane %v6176, 5
      %v7278 = vsel %vm1417, %v7276, %v7277
      %v7279 = vrot.slane %v7277, 4
      %v7280 = vrot.slane %v6195, 5
      %v7281 = vsel %vm1417, %v7279, %v7280
      %v7282 = vrot.slane %v7150, 5
      %v7283 = vrot.slane %v7282, 4
      %v7284 = vrot.slane %v6178, 5
      %v7285 = vsel %vm1417, %v7283, %v7284
      %v7286 = vrot.slane %v7284, 4
      %v7287 = vrot.slane %v6196, 5
      %v7288 = vsel %vm1417, %v7286, %v7287
      %v7289 = vrot.slane %v7151, 5
      %v7290 = vrot.slane %v7289, 4
      %v7291 = vrot.slane %v6180, 5
      %v7292 = vsel %vm1417, %v7290, %v7291
      %v7293 = vrot.slane %v7291, 4
      %v7294 = vrot.slane %v6197, 5
      %v7295 = vsel %vm1417, %v7293, %v7294
      %s7296 = scalar_lea.vmem %s3, 4
      %v7297 = vld [vmem:[%s7296] sm:$0x3]
      %v7298 = vunpack.c.l.b16 %v7187
      %v7299 = vunpack.c.l.b16 %v7190
      %v7300 = vunpack.c.l.b16 %v7194
      %v7301 = vunpack.c.l.b16 %v7197
      %v7302 = vunpack.c.l.b16 %v7201
      %v7303 = vunpack.c.l.b16 %v7204
      %v7304 = vunpack.c.l.b16 %v7208
      %v7305 = vunpack.c.l.b16 %v7211
      %v7306 = vunpack.c.l.b16 %v7215
      %v7307 = vunpack.c.l.b16 %v7218
      %v7308 = vunpack.c.l.b16 %v7222
      %v7309 = vunpack.c.l.b16 %v7225
      %v7310 = vunpack.c.l.b16 %v7229
      %v7311 = vunpack.c.l.b16 %v7232
      %v7312 = vunpack.c.l.b16 %v7236
      %v7313 = vunpack.c.l.b16 %v7239
      %v7314 = vunpack.c.l.b16 %v7243
      %v7315 = vunpack.c.l.b16 %v7246
      %v7316 = vunpack.c.l.b16 %v7250
      %v7317 = vunpack.c.l.b16 %v7253
      %v7318 = vunpack.c.l.b16 %v7257
      %v7319 = vunpack.c.l.b16 %v7260
      %v7320 = vunpack.c.l.b16 %v7264
      %v7321 = vunpack.c.l.b16 %v7267
      %v7322 = vunpack.c.l.b16 %v7271
      %v7323 = vunpack.c.l.b16 %v7274
      %v7324 = vunpack.c.l.b16 %v7278
      %v7325 = vunpack.c.l.b16 %v7281
      %v7326 = vunpack.c.l.b16 %v7285
      %v7327 = vunpack.c.l.b16 %v7288
      %v7328 = vunpack.c.l.b16 %v7292
      %v7329 = vunpack.c.l.b16 %v7295
      %v7330 = vpack.c.b16 %v7299, %v7298
      %v7331 = vpack.c.b16 %v7301, %v7300
      %v7332 = vpack.c.b16 %v7303, %v7302
      %v7333 = vpack.c.b16 %v7305, %v7304
      %v7334 = vpack.c.b16 %v7307, %v7306
      %v7335 = vpack.c.b16 %v7309, %v7308
      %v7336 = vpack.c.b16 %v7311, %v7310
      %v7337 = vpack.c.b16 %v7313, %v7312
      %v7338 = vpack.c.b16 %v7315, %v7314
      %v7339 = vpack.c.b16 %v7317, %v7316
      %v7340 = vpack.c.b16 %v7319, %v7318
      %v7341 = vpack.c.b16 %v7321, %v7320
      %v7342 = vpack.c.b16 %v7323, %v7322
      %v7343 = vpack.c.b16 %v7325, %v7324
      %v7344 = vpack.c.b16 %v7327, %v7326
      %v7345 = vpack.c.b16 %v7329, %v7328
      %v7347 = vsel %vm801, %v7330, 0
      %v7350 = vsel %vm801, %v7331, 0
      %v7353 = vsel %vm801, %v7332, 0
      %v7356 = vsel %vm801, %v7333, 0
      %v7359 = vsel %vm801, %v7334, 0
      %v7362 = vsel %vm801, %v7335, 0
      %v7365 = vsel %vm801, %v7336, 0
      %v7368 = vsel %vm801, %v7337, 0
      %v7371 = vsel %vm801, %v7338, 0
      %v7374 = vsel %vm801, %v7339, 0
      %v7377 = vsel %vm801, %v7340, 0
      %v7380 = vsel %vm801, %v7341, 0
      %v7383 = vsel %vm801, %v7342, 0
      %v7386 = vsel %vm801, %v7343, 0
      %v7389 = vsel %vm801, %v7344, 0
      %v7392 = vsel %vm801, %v7345, 0
      %v7395 = vsel %vm856, %v7297, 0
      %7397 = vmatprep.subr.bf16.mxu0 0
      %7398 = vmatpush1.bf16.msra.mxu0 %v7395
      %7399 = vmatprep.subr.bf16.mxu0 0
      %7400 = vmatpush1.bf16.msra.mxu0 0
      %7401 = vmatprep.subr.bf16.mxu0 0
      %7402 = vmatpush1.bf16.msra.mxu0 0
      %7403 = vmatprep.subr.bf16.mxu0 0
      %7404 = vmatpush1.bf16.msra.mxu0 0
      %7405 = vmatprep.subr.bf16.mxu0 0
      %7406 = vmatpush1.bf16.msra.mxu0 0
      %7407 = vmatprep.subr.bf16.mxu0 0
      %7408 = vmatpush1.bf16.msra.mxu0 0
      %7409 = vmatprep.subr.bf16.mxu0 0
      %7410 = vmatpush1.bf16.msra.mxu0 0
      %7411 = vmatprep.subr.bf16.mxu0 0
      %7412 = vmatpush1.bf16.msra.mxu0 0
      %7413 = vmatprep.subr.bf16.mxu0 0
      %7414 = vmatpush1.bf16.msra.mxu0 0
      %7415 = vmatprep.subr.bf16.mxu0 0
      %7416 = vmatpush1.bf16.msra.mxu0 0
      %7417 = vmatprep.subr.bf16.mxu0 0
      %7418 = vmatpush1.bf16.msra.mxu0 0
      %7419 = vmatprep.subr.bf16.mxu0 0
      %7420 = vmatpush1.bf16.msra.mxu0 0
      %7421 = vmatprep.subr.bf16.mxu0 0
      %7422 = vmatpush1.bf16.msra.mxu0 0
      %7423 = vmatprep.subr.bf16.mxu0 0
      %7424 = vmatpush1.bf16.msra.mxu0 0
      %7425 = vmatprep.subr.bf16.mxu0 0
      %7426 = vmatpush1.bf16.msra.mxu0 0
      %7427 = vmatprep.subr.bf16.mxu0 0
      %7428 = vmatpush1.bf16.msra.mxu0 0
      %7429 = vmatprep.mubr.bf16.mxu0 0
      %7430 = vmatmul.mubr.bf16.gmra.mrb[0].mxu0 %v7347
      %v7431 = vpop.f32.mrb[0].mxu0
      %v7432 = vadd.f32 0.0, %v7431
      %v7433 = vpop.f32.mrb[0].mxu0
      %v7434 = vpop.f32.mrb[0].mxu0
      %v7435 = vadd.f32 0.0, %v7434
      %v7436 = vpop.f32.mrb[0].mxu0
      %7437 = vmatprep.mubr.bf16.mxu0 0
      %7438 = vmatmul.mubr.bf16.gmra.mrb[0].mxu0 %v7350
      %v7439 = vpop.f32.mrb[0].mxu0
      %v7440 = vadd.f32 0.0, %v7439
      %v7441 = vpop.f32.mrb[0].mxu0
      %v7442 = vpop.f32.mrb[0].mxu0
      %v7443 = vadd.f32 0.0, %v7442
      %v7444 = vpop.f32.mrb[0].mxu0
      %7445 = vmatprep.mubr.bf16.mxu0 0
      %7446 = vmatmul.mubr.bf16.gmra.mrb[0].mxu0 %v7353
      %v7447 = vpop.f32.mrb[0].mxu0
      %v7448 = vadd.f32 0.0, %v7447
      %v7449 = vpop.f32.mrb[0].mxu0
      %v7450 = vpop.f32.mrb[0].mxu0
      %v7451 = vadd.f32 0.0, %v7450
      %v7452 = vpop.f32.mrb[0].mxu0
      %7453 = vmatprep.mubr.bf16.mxu0 0
      %7454 = vmatmul.mubr.bf16.gmra.mrb[0].mxu0 %v7356
      %v7455 = vpop.f32.mrb[0].mxu0
      %v7456 = vadd.f32 0.0, %v7455
      %v7457 = vpop.f32.mrb[0].mxu0
      %v7458 = vpop.f32.mrb[0].mxu0
      %v7459 = vadd.f32 0.0, %v7458
      %v7460 = vpop.f32.mrb[0].mxu0
      %7461 = vmatprep.mubr.bf16.mxu0 0
      %7462 = vmatmul.mubr.bf16.gmra.mrb[0].mxu0 %v7359
      %v7463 = vpop.f32.mrb[0].mxu0
      %v7464 = vadd.f32 0.0, %v7463
      %v7465 = vpop.f32.mrb[0].mxu0
      %v7466 = vpop.f32.mrb[0].mxu0
      %v7467 = vadd.f32 0.0, %v7466
      %v7468 = vpop.f32.mrb[0].mxu0
      %7469 = vmatprep.mubr.bf16.mxu0 0
      %7470 = vmatmul.mubr.bf16.gmra.mrb[0].mxu0 %v7362
      %v7471 = vpop.f32.mrb[0].mxu0
      %v7472 = vadd.f32 0.0, %v7471
      %v7473 = vpop.f32.mrb[0].mxu0
      %v7474 = vpop.f32.mrb[0].mxu0
      %v7475 = vadd.f32 0.0, %v7474
      %v7476 = vpop.f32.mrb[0].mxu0
      %7477 = vmatprep.mubr.bf16.mxu0 0
      %7478 = vmatmul.mubr.bf16.gmra.mrb[0].mxu0 %v7365
      %v7479 = vpop.f32.mrb[0].mxu0
      %v7480 = vadd.f32 0.0, %v7479
      %v7481 = vpop.f32.mrb[0].mxu0
      %v7482 = vpop.f32.mrb[0].mxu0
      %v7483 = vadd.f32 0.0, %v7482
      %v7484 = vpop.f32.mrb[0].mxu0
      %7485 = vmatprep.mubr.bf16.mxu0 0
      %7486 = vmatmul.mubr.bf16.gmra.mrb[0].mxu0 %v7368
      %v7487 = vpop.f32.mrb[0].mxu0
      %v7488 = vadd.f32 0.0, %v7487
      %v7489 = vpop.f32.mrb[0].mxu0
      %v7490 = vpop.f32.mrb[0].mxu0
      %v7491 = vadd.f32 0.0, %v7490
      %v7492 = vpop.f32.mrb[0].mxu0
      %7493 = vmatprep.mubr.bf16.mxu0 0
      %7494 = vmatmul.mubr.bf16.gmra.mrb[0].mxu0 %v7371
      %v7495 = vpop.f32.mrb[0].mxu0
      %v7496 = vadd.f32 0.0, %v7495
      %v7497 = vpop.f32.mrb[0].mxu0
      %v7498 = vpop.f32.mrb[0].mxu0
      %v7499 = vadd.f32 0.0, %v7498
      %v7500 = vpop.f32.mrb[0].mxu0
      %7501 = vmatprep.mubr.bf16.mxu0 0
      %7502 = vmatmul.mubr.bf16.gmra.mrb[0].mxu0 %v7374
      %v7503 = vpop.f32.mrb[0].mxu0
      %v7504 = vadd.f32 0.0, %v7503
      %v7505 = vpop.f32.mrb[0].mxu0
      %v7506 = vpop.f32.mrb[0].mxu0
      %v7507 = vadd.f32 0.0, %v7506
      %v7508 = vpop.f32.mrb[0].mxu0
      %7509 = vmatprep.mubr.bf16.mxu0 0
      %7510 = vmatmul.mubr.bf16.gmra.mrb[0].mxu0 %v7377
      %v7511 = vpop.f32.mrb[0].mxu0
      %v7512 = vadd.f32 0.0, %v7511
      %v7513 = vpop.f32.mrb[0].mxu0
      %v7514 = vpop.f32.mrb[0].mxu0
      %v7515 = vadd.f32 0.0, %v7514
      %v7516 = vpop.f32.mrb[0].mxu0
      %7517 = vmatprep.mubr.bf16.mxu0 0
      %7518 = vmatmul.mubr.bf16.gmra.mrb[0].mxu0 %v7380
      %v7519 = vpop.f32.mrb[0].mxu0
      %v7520 = vadd.f32 0.0, %v7519
      %v7521 = vpop.f32.mrb[0].mxu0
      %v7522 = vpop.f32.mrb[0].mxu0
      %v7523 = vadd.f32 0.0, %v7522
      %v7524 = vpop.f32.mrb[0].mxu0
      %7525 = vmatprep.mubr.bf16.mxu0 0
      %7526 = vmatmul.mubr.bf16.gmra.mrb[0].mxu0 %v7383
      %v7527 = vpop.f32.mrb[0].mxu0
      %v7528 = vadd.f32 0.0, %v7527
      %v7529 = vpop.f32.mrb[0].mxu0
      %v7530 = vpop.f32.mrb[0].mxu0
      %v7531 = vadd.f32 0.0, %v7530
      %v7532 = vpop.f32.mrb[0].mxu0
      %7533 = vmatprep.mubr.bf16.mxu0 0
      %7534 = vmatmul.mubr.bf16.gmra.mrb[0].mxu0 %v7386
      %v7535 = vpop.f32.mrb[0].mxu0
      %v7536 = vadd.f32 0.0, %v7535
      %v7537 = vpop.f32.mrb[0].mxu0
      %v7538 = vpop.f32.mrb[0].mxu0
      %v7539 = vadd.f32 0.0, %v7538
      %v7540 = vpop.f32.mrb[0].mxu0
      %7541 = vmatprep.mubr.bf16.mxu0 0
      %7542 = vmatmul.mubr.bf16.gmra.mrb[0].mxu0 %v7389
      %v7543 = vpop.f32.mrb[0].mxu0
      %v7544 = vadd.f32 0.0, %v7543
      %v7545 = vpop.f32.mrb[0].mxu0
      %v7546 = vpop.f32.mrb[0].mxu0
      %v7547 = vadd.f32 0.0, %v7546
      %v7548 = vpop.f32.mrb[0].mxu0
      %7549 = vmatprep.mubr.bf16.mxu0 0
      %7550 = vmatmul.mubr.bf16.gmra.mrb[0].mxu0 %v7392
      %v7551 = vpop.f32.mrb[0].mxu0
      %v7552 = vadd.f32 0.0, %v7551
      %v7553 = vpop.f32.mrb[0].mxu0
      %v7554 = vpop.f32.mrb[0].mxu0
      %v7555 = vadd.f32 0.0, %v7554
      %v7556 = vpop.f32.mrb[0].mxu0
      %7557 = vdwg.mxu0
      %v7558 = vadd.f32 %v7010, %v7432
      %v7559 = vadd.f32 %v7013, %v7435
      %v7560 = vadd.f32 %v7018, %v7440
      %v7561 = vadd.f32 %v7021, %v7443
      %v7562 = vadd.f32 %v7026, %v7448
      %v7563 = vadd.f32 %v7029, %v7451
      %v7564 = vadd.f32 %v7034, %v7456
      %v7565 = vadd.f32 %v7037, %v7459
      %v7566 = vadd.f32 %v7042, %v7464
      %v7567 = vadd.f32 %v7045, %v7467
      %v7568 = vadd.f32 %v7050, %v7472
      %v7569 = vadd.f32 %v7053, %v7475
      %v7570 = vadd.f32 %v7058, %v7480
      %v7571 = vadd.f32 %v7061, %v7483
      %v7572 = vadd.f32 %v7066, %v7488
      %v7573 = vadd.f32 %v7069, %v7491
      %v7574 = vadd.f32 %v7074, %v7496
      %v7575 = vadd.f32 %v7077, %v7499
      %v7576 = vadd.f32 %v7082, %v7504
      %v7577 = vadd.f32 %v7085, %v7507
      %v7578 = vadd.f32 %v7090, %v7512
      %v7579 = vadd.f32 %v7093, %v7515
      %v7580 = vadd.f32 %v7098, %v7520
      %v7581 = vadd.f32 %v7101, %v7523
      %v7582 = vadd.f32 %v7106, %v7528
      %v7583 = vadd.f32 %v7109, %v7531
      %v7584 = vadd.f32 %v7114, %v7536
      %v7585 = vadd.f32 %v7117, %v7539
      %v7586 = vadd.f32 %v7122, %v7544
      %v7587 = vadd.f32 %v7125, %v7547
      %v7588 = vadd.f32 %v7130, %v7552
      %v7589 = vadd.f32 %v7133, %v7555
      %s7590 = scalar_lea.vmem [#allocation2], 12
      %v7591 = vld [vmem:[%s7590] sm:$0xf]
      %v7592 = vld [vmem:[%s7590 + $0x4] sm:$0xf]
      %v7593 = vld [vmem:[%s7590 + $0xc] sm:$0xf]
      %v7594 = vld [vmem:[%s7590 + $0x10] sm:$0xf]
      %v7595 = vld [vmem:[%s7590 + $0x18] sm:$0xf]
      %v7596 = vld [vmem:[%s7590 + $0x1c] sm:$0xf]
      %v7597 = vld [vmem:[%s7590 + $0x24] sm:$0xf]
      %v7598 = vld [vmem:[%s7590 + $0x28] sm:$0xf]
      %v7599 = vld [vmem:[%s7590 + $0x30] sm:$0xf]
      %v7600 = vld [vmem:[%s7590 + $0x34] sm:$0xf]
      %v7601 = vld [vmem:[%s7590 + $0x3c] sm:$0xf]
      %v7602 = vld [vmem:[%s7590 + $0x40] sm:$0xf]
      %v7603 = vld [vmem:[%s7590 + $0x48] sm:$0xf]
      %v7604 = vld [vmem:[%s7590 + $0x4c] sm:$0xf]
      %v7605 = vld [vmem:[%s7590 + $0x54] sm:$0xf]
      %v7606 = vld [vmem:[%s7590 + $0x58] sm:$0xf]
      %v7607 = vld [vmem:[%s7590 + $0x60] sm:$0xf]
      %v7608 = vld [vmem:[%s7590 + $0x64] sm:$0xf]
      %v7609 = vld [vmem:[%s7590 + $0x6c] sm:$0xf]
      %v7610 = vld [vmem:[%s7590 + $0x70] sm:$0xf]
      %v7611 = vld [vmem:[%s7590 + $0x78] sm:$0xf]
      %v7612 = vld [vmem:[%s7590 + $0x7c] sm:$0xf]
      %v7613 = vld [vmem:[%s7590 + $0x84] sm:$0xf]
      %v7614 = vld [vmem:[%s7590 + $0x88] sm:$0xf]
      %v7615 = vld [vmem:[%s7590 + $0x90] sm:$0xf]
      %v7616 = vld [vmem:[%s7590 + $0x94] sm:$0xf]
      %v7617 = vld [vmem:[%s7590 + $0x9c] sm:$0xf]
      %v7618 = vld [vmem:[%s7590 + $0xa0] sm:$0xf]
      %v7619 = vld [vmem:[%s7590 + $0xa8] sm:$0xf]
      %v7620 = vld [vmem:[%s7590 + $0xac] sm:$0xf]
      %v7621 = vld [vmem:[%s7590 + $0xb4] sm:$0xf]
      %v7622 = vld [vmem:[%s7590 + $0xb8] sm:$0xf]
      %s7623 = scalar_lea.vmem %s3, 6
      %v7624 = vld [vmem:[%s7623] sm:$0x3]
      %v7657 = vunpack.c.l.b16 %v7591
      %v7658 = vunpack.c.l.b16 %v7592
      %v7659 = vunpack.c.l.b16 %v7593
      %v7660 = vunpack.c.l.b16 %v7594
      %v7661 = vunpack.c.l.b16 %v7595
      %v7662 = vunpack.c.l.b16 %v7596
      %v7663 = vunpack.c.l.b16 %v7597
      %v7664 = vunpack.c.l.b16 %v7598
      %v7665 = vunpack.c.l.b16 %v7599
      %v7666 = vunpack.c.l.b16 %v7600
      %v7667 = vunpack.c.l.b16 %v7601
      %v7668 = vunpack.c.l.b16 %v7602
      %v7669 = vunpack.c.l.b16 %v7603
      %v7670 = vunpack.c.l.b16 %v7604
      %v7671 = vunpack.c.l.b16 %v7605
      %v7672 = vunpack.c.l.b16 %v7606
      %v7673 = vunpack.c.l.b16 %v7607
      %v7674 = vunpack.c.l.b16 %v7608
      %v7675 = vunpack.c.l.b16 %v7609
      %v7676 = vunpack.c.l.b16 %v7610
      %v7677 = vunpack.c.l.b16 %v7611
      %v7678 = vunpack.c.l.b16 %v7612
      %v7679 = vunpack.c.l.b16 %v7613
      %v7680 = vunpack.c.l.b16 %v7614
      %v7681 = vunpack.c.l.b16 %v7615
      %v7682 = vunpack.c.l.b16 %v7616
      %v7683 = vunpack.c.l.b16 %v7617
      %v7684 = vunpack.c.l.b16 %v7618
      %v7685 = vunpack.c.l.b16 %v7619
      %v7686 = vunpack.c.l.b16 %v7620
      %v7687 = vunpack.c.l.b16 %v7621
      %v7688 = vunpack.c.l.b16 %v7622
      %v7689 = vpack.c.b16 %v7658, %v7657
      %v7690 = vpack.c.b16 %v7660, %v7659
      %v7691 = vpack.c.b16 %v7662, %v7661
      %v7692 = vpack.c.b16 %v7664, %v7663
      %v7693 = vpack.c.b16 %v7666, %v7665
      %v7694 = vpack.c.b16 %v7668, %v7667
      %v7695 = vpack.c.b16 %v7670, %v7669
      %v7696 = vpack.c.b16 %v7672, %v7671
      %v7697 = vpack.c.b16 %v7674, %v7673
      %v7698 = vpack.c.b16 %v7676, %v7675
      %v7699 = vpack.c.b16 %v7678, %v7677
      %v7700 = vpack.c.b16 %v7680, %v7679
      %v7701 = vpack.c.b16 %v7682, %v7681
      %v7702 = vpack.c.b16 %v7684, %v7683
      %v7703 = vpack.c.b16 %v7686, %v7685
      %v7704 = vpack.c.b16 %v7688, %v7687
      %v7706 = vsel %vm801, %v7689, 0
      %v7709 = vsel %vm801, %v7690, 0
      %v7712 = vsel %vm801, %v7691, 0
      %v7715 = vsel %vm801, %v7692, 0
      %v7718 = vsel %vm801, %v7693, 0
      %v7721 = vsel %vm801, %v7694, 0
      %v7724 = vsel %vm801, %v7695, 0
      %v7727 = vsel %vm801, %v7696, 0
      %v7730 = vsel %vm801, %v7697, 0
      %v7733 = vsel %vm801, %v7698, 0
      %v7736 = vsel %vm801, %v7699, 0
      %v7739 = vsel %vm801, %v7700, 0
      %v7742 = vsel %vm801, %v7701, 0
      %v7745 = vsel %vm801, %v7702, 0
      %v7748 = vsel %vm801, %v7703, 0
      %v7751 = vsel %vm801, %v7704, 0
      %v7754 = vsel %vm856, %v7624, 0
      %7756 = vmatprep.subr.bf16.mxu0 0
      %7757 = vmatpush1.bf16.msra.mxu0 %v7754
      %7758 = vmatprep.subr.bf16.mxu0 0
      %7759 = vmatpush1.bf16.msra.mxu0 0
      %7760 = vmatprep.subr.bf16.mxu0 0
      %7761 = vmatpush1.bf16.msra.mxu0 0
      %7762 = vmatprep.subr.bf16.mxu0 0
      %7763 = vmatpush1.bf16.msra.mxu0 0
      %7764 = vmatprep.subr.bf16.mxu0 0
      %7765 = vmatpush1.bf16.msra.mxu0 0
      %7766 = vmatprep.subr.bf16.mxu0 0
      %7767 = vmatpush1.bf16.msra.mxu0 0
      %7768 = vmatprep.subr.bf16.mxu0 0
      %7769 = vmatpush1.bf16.msra.mxu0 0
      %7770 = vmatprep.subr.bf16.mxu0 0
      %7771 = vmatpush1.bf16.msra.mxu0 0
      %7772 = vmatprep.subr.bf16.mxu0 0
      %7773 = vmatpush1.bf16.msra.mxu0 0
      %7774 = vmatprep.subr.bf16.mxu0 0
      %7775 = vmatpush1.bf16.msra.mxu0 0
      %7776 = vmatprep.subr.bf16.mxu0 0
      %7777 = vmatpush1.bf16.msra.mxu0 0
      %7778 = vmatprep.subr.bf16.mxu0 0
      %7779 = vmatpush1.bf16.msra.mxu0 0
      %7780 = vmatprep.subr.bf16.mxu0 0
      %7781 = vmatpush1.bf16.msra.mxu0 0
      %7782 = vmatprep.subr.bf16.mxu0 0
      %7783 = vmatpush1.bf16.msra.mxu0 0
      %7784 = vmatprep.subr.bf16.mxu0 0
      %7785 = vmatpush1.bf16.msra.mxu0 0
      %7786 = vmatprep.subr.bf16.mxu0 0
      %7787 = vmatpush1.bf16.msra.mxu0 0
      %7788 = vmatprep.mubr.bf16.mxu0 0
      %7789 = vmatmul.mubr.bf16.gmra.mrb[0].mxu0 %v7706
      %v7790 = vpop.f32.mrb[0].mxu0
      %v7791 = vadd.f32 0.0, %v7790
      %v7792 = vpop.f32.mrb[0].mxu0
      %v7793 = vpop.f32.mrb[0].mxu0
      %v7794 = vadd.f32 0.0, %v7793
      %v7795 = vpop.f32.mrb[0].mxu0
      %7796 = vmatprep.mubr.bf16.mxu0 0
      %7797 = vmatmul.mubr.bf16.gmra.mrb[0].mxu0 %v7709
      %v7798 = vpop.f32.mrb[0].mxu0
      %v7799 = vadd.f32 0.0, %v7798
      %v7800 = vpop.f32.mrb[0].mxu0
      %v7801 = vpop.f32.mrb[0].mxu0
      %v7802 = vadd.f32 0.0, %v7801
      %v7803 = vpop.f32.mrb[0].mxu0
      %7804 = vmatprep.mubr.bf16.mxu0 0
      %7805 = vmatmul.mubr.bf16.gmra.mrb[0].mxu0 %v7712
      %v7806 = vpop.f32.mrb[0].mxu0
      %v7807 = vadd.f32 0.0, %v7806
      %v7808 = vpop.f32.mrb[0].mxu0
      %v7809 = vpop.f32.mrb[0].mxu0
      %v7810 = vadd.f32 0.0, %v7809
      %v7811 = vpop.f32.mrb[0].mxu0
      %7812 = vmatprep.mubr.bf16.mxu0 0
      %7813 = vmatmul.mubr.bf16.gmra.mrb[0].mxu0 %v7715
      %v7814 = vpop.f32.mrb[0].mxu0
      %v7815 = vadd.f32 0.0, %v7814
      %v7816 = vpop.f32.mrb[0].mxu0
      %v7817 = vpop.f32.mrb[0].mxu0
      %v7818 = vadd.f32 0.0, %v7817
      %v7819 = vpop.f32.mrb[0].mxu0
      %7820 = vmatprep.mubr.bf16.mxu0 0
      %7821 = vmatmul.mubr.bf16.gmra.mrb[0].mxu0 %v7718
      %v7822 = vpop.f32.mrb[0].mxu0
      %v7823 = vadd.f32 0.0, %v7822
      %v7824 = vpop.f32.mrb[0].mxu0
      %v7825 = vpop.f32.mrb[0].mxu0
      %v7826 = vadd.f32 0.0, %v7825
      %v7827 = vpop.f32.mrb[0].mxu0
      %7828 = vmatprep.mubr.bf16.mxu0 0
      %7829 = vmatmul.mubr.bf16.gmra.mrb[0].mxu0 %v7721
      %v7830 = vpop.f32.mrb[0].mxu0
      %v7831 = vadd.f32 0.0, %v7830
      %v7832 = vpop.f32.mrb[0].mxu0
      %v7833 = vpop.f32.mrb[0].mxu0
      %v7834 = vadd.f32 0.0, %v7833
      %v7835 = vpop.f32.mrb[0].mxu0
      %7836 = vmatprep.mubr.bf16.mxu0 0
      %7837 = vmatmul.mubr.bf16.gmra.mrb[0].mxu0 %v7724
      %v7838 = vpop.f32.mrb[0].mxu0
      %v7839 = vadd.f32 0.0, %v7838
      %v7840 = vpop.f32.mrb[0].mxu0
      %v7841 = vpop.f32.mrb[0].mxu0
      %v7842 = vadd.f32 0.0, %v7841
      %v7843 = vpop.f32.mrb[0].mxu0
      %7844 = vmatprep.mubr.bf16.mxu0 0
      %7845 = vmatmul.mubr.bf16.gmra.mrb[0].mxu0 %v7727
      %v7846 = vpop.f32.mrb[0].mxu0
      %v7847 = vadd.f32 0.0, %v7846
      %v7848 = vpop.f32.mrb[0].mxu0
      %v7849 = vpop.f32.mrb[0].mxu0
      %v7850 = vadd.f32 0.0, %v7849
      %v7851 = vpop.f32.mrb[0].mxu0
      %7852 = vmatprep.mubr.bf16.mxu0 0
      %7853 = vmatmul.mubr.bf16.gmra.mrb[0].mxu0 %v7730
      %v7854 = vpop.f32.mrb[0].mxu0
      %v7855 = vadd.f32 0.0, %v7854
      %v7856 = vpop.f32.mrb[0].mxu0
      %v7857 = vpop.f32.mrb[0].mxu0
      %v7858 = vadd.f32 0.0, %v7857
      %v7859 = vpop.f32.mrb[0].mxu0
      %7860 = vmatprep.mubr.bf16.mxu0 0
      %7861 = vmatmul.mubr.bf16.gmra.mrb[0].mxu0 %v7733
      %v7862 = vpop.f32.mrb[0].mxu0
      %v7863 = vadd.f32 0.0, %v7862
      %v7864 = vpop.f32.mrb[0].mxu0
      %v7865 = vpop.f32.mrb[0].mxu0
      %v7866 = vadd.f32 0.0, %v7865
      %v7867 = vpop.f32.mrb[0].mxu0
      %7868 = vmatprep.mubr.bf16.mxu0 0
      %7869 = vmatmul.mubr.bf16.gmra.mrb[0].mxu0 %v7736
      %v7870 = vpop.f32.mrb[0].mxu0
      %v7871 = vadd.f32 0.0, %v7870
      %v7872 = vpop.f32.mrb[0].mxu0
      %v7873 = vpop.f32.mrb[0].mxu0
      %v7874 = vadd.f32 0.0, %v7873
      %v7875 = vpop.f32.mrb[0].mxu0
      %7876 = vmatprep.mubr.bf16.mxu0 0
      %7877 = vmatmul.mubr.bf16.gmra.mrb[0].mxu0 %v7739
      %v7878 = vpop.f32.mrb[0].mxu0
      %v7879 = vadd.f32 0.0, %v7878
      %v7880 = vpop.f32.mrb[0].mxu0
      %v7881 = vpop.f32.mrb[0].mxu0
      %v7882 = vadd.f32 0.0, %v7881
      %v7883 = vpop.f32.mrb[0].mxu0
      %7884 = vmatprep.mubr.bf16.mxu0 0
      %7885 = vmatmul.mubr.bf16.gmra.mrb[0].mxu0 %v7742
      %v7886 = vpop.f32.mrb[0].mxu0
      %v7887 = vadd.f32 0.0, %v7886
      %v7888 = vpop.f32.mrb[0].mxu0
      %v7889 = vpop.f32.mrb[0].mxu0
      %v7890 = vadd.f32 0.0, %v7889
      %v7891 = vpop.f32.mrb[0].mxu0
      %7892 = vmatprep.mubr.bf16.mxu0 0
      %7893 = vmatmul.mubr.bf16.gmra.mrb[0].mxu0 %v7745
      %v7894 = vpop.f32.mrb[0].mxu0
      %v7895 = vadd.f32 0.0, %v7894
      %v7896 = vpop.f32.mrb[0].mxu0
      %v7897 = vpop.f32.mrb[0].mxu0
      %v7898 = vadd.f32 0.0, %v7897
      %v7899 = vpop.f32.mrb[0].mxu0
      %7900 = vmatprep.mubr.bf16.mxu0 0
      %7901 = vmatmul.mubr.bf16.gmra.mrb[0].mxu0 %v7748
      %v7902 = vpop.f32.mrb[0].mxu0
      %v7903 = vadd.f32 0.0, %v7902
      %v7904 = vpop.f32.mrb[0].mxu0
      %v7905 = vpop.f32.mrb[0].mxu0
      %v7906 = vadd.f32 0.0, %v7905
      %v7907 = vpop.f32.mrb[0].mxu0
      %7908 = vmatprep.mubr.bf16.mxu0 0
      %7909 = vmatmul.mubr.bf16.gmra.mrb[0].mxu0 %v7751
      %v7910 = vpop.f32.mrb[0].mxu0
      %v7911 = vadd.f32 0.0, %v7910
      %v7912 = vpop.f32.mrb[0].mxu0
      %v7913 = vpop.f32.mrb[0].mxu0
      %v7914 = vadd.f32 0.0, %v7913
      %v7915 = vpop.f32.mrb[0].mxu0
      %7916 = vdwg.mxu0
      %v7917 = vadd.f32 %v7558, %v7791
      %v7918 = vadd.f32 %v7559, %v7794
      %v7919 = vadd.f32 %v7560, %v7799
      %v7920 = vadd.f32 %v7561, %v7802
      %v7921 = vadd.f32 %v7562, %v7807
      %v7922 = vadd.f32 %v7563, %v7810
      %v7923 = vadd.f32 %v7564, %v7815
      %v7924 = vadd.f32 %v7565, %v7818
      %v7925 = vadd.f32 %v7566, %v7823
      %v7926 = vadd.f32 %v7567, %v7826
      %v7927 = vadd.f32 %v7568, %v7831
      %v7928 = vadd.f32 %v7569, %v7834
      %v7929 = vadd.f32 %v7570, %v7839
      %v7930 = vadd.f32 %v7571, %v7842
      %v7931 = vadd.f32 %v7572, %v7847
      %v7932 = vadd.f32 %v7573, %v7850
      %v7933 = vadd.f32 %v7574, %v7855
      %v7934 = vadd.f32 %v7575, %v7858
      %v7935 = vadd.f32 %v7576, %v7863
      %v7936 = vadd.f32 %v7577, %v7866
      %v7937 = vadd.f32 %v7578, %v7871
      %v7938 = vadd.f32 %v7579, %v7874
      %v7939 = vadd.f32 %v7580, %v7879
      %v7940 = vadd.f32 %v7581, %v7882
      %v7941 = vadd.f32 %v7582, %v7887
      %v7942 = vadd.f32 %v7583, %v7890
      %v7943 = vadd.f32 %v7584, %v7895
      %v7944 = vadd.f32 %v7585, %v7898
      %v7945 = vadd.f32 %v7586, %v7903
      %v7946 = vadd.f32 %v7587, %v7906
      %v7947 = vadd.f32 %v7588, %v7911
      %v7948 = vadd.f32 %v7589, %v7914
      %v7949 = vld [vmem:[%s7590] sm:$0xf]
      %v7950 = vld [vmem:[%s7590 + $0x4] sm:$0xf]
      %v7951 = vld [vmem:[%s7590 + $0x8] sm:$0x1]
      %v7952 = vld [vmem:[%s7590 + $0xc] sm:$0xf]
      %v7953 = vld [vmem:[%s7590 + $0x10] sm:$0xf]
      %v7954 = vld [vmem:[%s7590 + $0x14] sm:$0x1]
      %v7955 = vld [vmem:[%s7590 + $0x18] sm:$0xf]
      %v7956 = vld [vmem:[%s7590 + $0x1c] sm:$0xf]
      %v7957 = vld [vmem:[%s7590 + $0x20] sm:$0x1]
      %v7958 = vld [vmem:[%s7590 + $0x24] sm:$0xf]
      %v7959 = vld [vmem:[%s7590 + $0x28] sm:$0xf]
      %v7960 = vld [vmem:[%s7590 + $0x2c] sm:$0x1]
      %v7961 = vld [vmem:[%s7590 + $0x30] sm:$0xf]
      %v7962 = vld [vmem:[%s7590 + $0x34] sm:$0xf]
      %v7963 = vld [vmem:[%s7590 + $0x38] sm:$0x1]
      %v7964 = vld [vmem:[%s7590 + $0x3c] sm:$0xf]
      %v7965 = vld [vmem:[%s7590 + $0x40] sm:$0xf]
      %v7966 = vld [vmem:[%s7590 + $0x44] sm:$0x1]
      %v7967 = vld [vmem:[%s7590 + $0x48] sm:$0xf]
      %v7968 = vld [vmem:[%s7590 + $0x4c] sm:$0xf]
      %v7969 = vld [vmem:[%s7590 + $0x50] sm:$0x1]
      %v7970 = vld [vmem:[%s7590 + $0x54] sm:$0xf]
      %v7971 = vld [vmem:[%s7590 + $0x58] sm:$0xf]
      %v7972 = vld [vmem:[%s7590 + $0x5c] sm:$0x1]
      %v7973 = vld [vmem:[%s7590 + $0x60] sm:$0xf]
      %v7974 = vld [vmem:[%s7590 + $0x64] sm:$0xf]
      %v7975 = vld [vmem:[%s7590 + $0x68] sm:$0x1]
      %v7976 = vld [vmem:[%s7590 + $0x6c] sm:$0xf]
      %v7977 = vld [vmem:[%s7590 + $0x70] sm:$0xf]
      %v7978 = vld [vmem:[%s7590 + $0x74] sm:$0x1]
      %v7979 = vld [vmem:[%s7590 + $0x78] sm:$0xf]
      %v7980 = vld [vmem:[%s7590 + $0x7c] sm:$0xf]
      %v7981 = vld [vmem:[%s7590 + $0x80] sm:$0x1]
      %v7982 = vld [vmem:[%s7590 + $0x84] sm:$0xf]
      %v7983 = vld [vmem:[%s7590 + $0x88] sm:$0xf]
      %v7984 = vld [vmem:[%s7590 + $0x8c] sm:$0x1]
      %v7985 = vld [vmem:[%s7590 + $0x90] sm:$0xf]
      %v7986 = vld [vmem:[%s7590 + $0x94] sm:$0xf]
      %v7987 = vld [vmem:[%s7590 + $0x98] sm:$0x1]
      %v7988 = vld [vmem:[%s7590 + $0x9c] sm:$0xf]
      %v7989 = vld [vmem:[%s7590 + $0xa0] sm:$0xf]
      %v7990 = vld [vmem:[%s7590 + $0xa4] sm:$0x1]
      %v7991 = vld [vmem:[%s7590 + $0xa8] sm:$0xf]
      %v7992 = vld [vmem:[%s7590 + $0xac] sm:$0xf]
      %v7993 = vld [vmem:[%s7590 + $0xb0] sm:$0x1]
      %v7994 = vld [vmem:[%s7590 + $0xb4] sm:$0xf]
      %v7995 = vld [vmem:[%s7590 + $0xb8] sm:$0xf]
      %v7996 = vld [vmem:[%s7590 + $0xbc] sm:$0x1]
      %v7998 = vshrl.u32 %v7949, 16
      %v8000 = vrot.slane %v7998, 4
      %v8001 = vshll.u32 %v7949, 16
      %v8003 = vrot.slane %v8001, 5
      %v8004 = vor.u32 %v8000, %v8003
      %v8005 = vrot.slane %v8004, 4
      %v8007 = vshll.u32 %v7950, 16
      %v8009 = vrot.slane %v8007, 5
      %v8010 = vsel %vm312, %v8005, %v8009
      %v8011 = vshrl.u32 %v7950, 16
      %v8013 = vrot.slane %v8011, 4
      %v8014 = vor.u32 %v8013, %v8009
      %v8015 = vrot.slane %v8014, 4
      %v8017 = vshll.u32 %v7951, 16
      %v8019 = vrot.slane %v8017, 5
      %v8020 = vsel %vm312, %v8015, %v8019
      %v8022 = vshrl.u32 %v7952, 16
      %v8024 = vrot.slane %v8022, 4
      %v8025 = vshll.u32 %v7952, 16
      %v8027 = vrot.slane %v8025, 5
      %v8028 = vor.u32 %v8024, %v8027
      %v8029 = vrot.slane %v8028, 4
      %v8031 = vshll.u32 %v7953, 16
      %v8033 = vrot.slane %v8031, 5
      %v8034 = vsel %vm312, %v8029, %v8033
      %v8035 = vshrl.u32 %v7953, 16
      %v8037 = vrot.slane %v8035, 4
      %v8038 = vor.u32 %v8037, %v8033
      %v8039 = vrot.slane %v8038, 4
      %v8041 = vshll.u32 %v7954, 16
      %v8043 = vrot.slane %v8041, 5
      %v8044 = vsel %vm312, %v8039, %v8043
      %v8046 = vshrl.u32 %v7955, 16
      %v8048 = vrot.slane %v8046, 4
      %v8049 = vshll.u32 %v7955, 16
      %v8051 = vrot.slane %v8049, 5
      %v8052 = vor.u32 %v8048, %v8051
      %v8053 = vrot.slane %v8052, 4
      %v8055 = vshll.u32 %v7956, 16
      %v8057 = vrot.slane %v8055, 5
      %v8058 = vsel %vm312, %v8053, %v8057
      %v8059 = vshrl.u32 %v7956, 16
      %v8061 = vrot.slane %v8059, 4
      %v8062 = vor.u32 %v8061, %v8057
      %v8063 = vrot.slane %v8062, 4
      %v8065 = vshll.u32 %v7957, 16
      %v8067 = vrot.slane %v8065, 5
      %v8068 = vsel %vm312, %v8063, %v8067
      %v8070 = vshrl.u32 %v7958, 16
      %v8072 = vrot.slane %v8070, 4
      %v8073 = vshll.u32 %v7958, 16
      %v8075 = vrot.slane %v8073, 5
      %v8076 = vor.u32 %v8072, %v8075
      %v8077 = vrot.slane %v8076, 4
      %v8079 = vshll.u32 %v7959, 16
      %v8081 = vrot.slane %v8079, 5
      %v8082 = vsel %vm312, %v8077, %v8081
      %v8083 = vshrl.u32 %v7959, 16
      %v8085 = vrot.slane %v8083, 4
      %v8086 = vor.u32 %v8085, %v8081
      %v8087 = vrot.slane %v8086, 4
      %v8089 = vshll.u32 %v7960, 16
      %v8091 = vrot.slane %v8089, 5
      %v8092 = vsel %vm312, %v8087, %v8091
      %v8094 = vshrl.u32 %v7961, 16
      %v8096 = vrot.slane %v8094, 4
      %v8097 = vshll.u32 %v7961, 16
      %v8099 = vrot.slane %v8097, 5
      %v8100 = vor.u32 %v8096, %v8099
      %v8101 = vrot.slane %v8100, 4
      %v8103 = vshll.u32 %v7962, 16
      %v8105 = vrot.slane %v8103, 5
      %v8106 = vsel %vm312, %v8101, %v8105
      %v8107 = vshrl.u32 %v7962, 16
      %v8109 = vrot.slane %v8107, 4
      %v8110 = vor.u32 %v8109, %v8105
      %v8111 = vrot.slane %v8110, 4
      %v8113 = vshll.u32 %v7963, 16
      %v8115 = vrot.slane %v8113, 5
      %v8116 = vsel %vm312, %v8111, %v8115
      %v8118 = vshrl.u32 %v7964, 16
      %v8120 = vrot.slane %v8118, 4
      %v8121 = vshll.u32 %v7964, 16
      %v8123 = vrot.slane %v8121, 5
      %v8124 = vor.u32 %v8120, %v8123
      %v8125 = vrot.slane %v8124, 4
      %v8127 = vshll.u32 %v7965, 16
      %v8129 = vrot.slane %v8127, 5
      %v8130 = vsel %vm312, %v8125, %v8129
      %v8131 = vshrl.u32 %v7965, 16
      %v8133 = vrot.slane %v8131, 4
      %v8134 = vor.u32 %v8133, %v8129
      %v8135 = vrot.slane %v8134, 4
      %v8137 = vshll.u32 %v7966, 16
      %v8139 = vrot.slane %v8137, 5
      %v8140 = vsel %vm312, %v8135, %v8139
      %v8142 = vshrl.u32 %v7967, 16
      %v8144 = vrot.slane %v8142, 4
      %v8145 = vshll.u32 %v7967, 16
      %v8147 = vrot.slane %v8145, 5
      %v8148 = vor.u32 %v8144, %v8147
      %v8149 = vrot.slane %v8148, 4
      %v8151 = vshll.u32 %v7968, 16
      %v8153 = vrot.slane %v8151, 5
      %v8154 = vsel %vm312, %v8149, %v8153
      %v8155 = vshrl.u32 %v7968, 16
      %v8157 = vrot.slane %v8155, 4
      %v8158 = vor.u32 %v8157, %v8153
      %v8159 = vrot.slane %v8158, 4
      %v8161 = vshll.u32 %v7969, 16
      %v8163 = vrot.slane %v8161, 5
      %v8164 = vsel %vm312, %v8159, %v8163
      %v8166 = vshrl.u32 %v7970, 16
      %v8168 = vrot.slane %v8166, 4
      %v8169 = vshll.u32 %v7970, 16
      %v8171 = vrot.slane %v8169, 5
      %v8172 = vor.u32 %v8168, %v8171
      %v8173 = vrot.slane %v8172, 4
      %v8175 = vshll.u32 %v7971, 16
      %v8177 = vrot.slane %v8175, 5
      %v8178 = vsel %vm312, %v8173, %v8177
      %v8179 = vshrl.u32 %v7971, 16
      %v8181 = vrot.slane %v8179, 4
      %v8182 = vor.u32 %v8181, %v8177
      %v8183 = vrot.slane %v8182, 4
      %v8185 = vshll.u32 %v7972, 16
      %v8187 = vrot.slane %v8185, 5
      %v8188 = vsel %vm312, %v8183, %v8187
      %v8190 = vshrl.u32 %v7973, 16
      %v8192 = vrot.slane %v8190, 4
      %v8193 = vshll.u32 %v7973, 16
      %v8195 = vrot.slane %v8193, 5
      %v8196 = vor.u32 %v8192, %v8195
      %v8197 = vrot.slane %v8196, 4
      %v8199 = vshll.u32 %v7974, 16
      %v8201 = vrot.slane %v8199, 5
      %v8202 = vsel %vm312, %v8197, %v8201
      %v8203 = vshrl.u32 %v7974, 16
      %v8205 = vrot.slane %v8203, 4
      %v8206 = vor.u32 %v8205, %v8201
      %v8207 = vrot.slane %v8206, 4
      %v8209 = vshll.u32 %v7975, 16
      %v8211 = vrot.slane %v8209, 5
      %v8212 = vsel %vm312, %v8207, %v8211
      %v8214 = vshrl.u32 %v7976, 16
      %v8216 = vrot.slane %v8214, 4
      %v8217 = vshll.u32 %v7976, 16
      %v8219 = vrot.slane %v8217, 5
      %v8220 = vor.u32 %v8216, %v8219
      %v8221 = vrot.slane %v8220, 4
      %v8223 = vshll.u32 %v7977, 16
      %v8225 = vrot.slane %v8223, 5
      %v8226 = vsel %vm312, %v8221, %v8225
      %v8227 = vshrl.u32 %v7977, 16
      %v8229 = vrot.slane %v8227, 4
      %v8230 = vor.u32 %v8229, %v8225
      %v8231 = vrot.slane %v8230, 4
      %v8233 = vshll.u32 %v7978, 16
      %v8235 = vrot.slane %v8233, 5
      %v8236 = vsel %vm312, %v8231, %v8235
      %v8238 = vshrl.u32 %v7979, 16
      %v8240 = vrot.slane %v8238, 4
      %v8241 = vshll.u32 %v7979, 16
      %v8243 = vrot.slane %v8241, 5
      %v8244 = vor.u32 %v8240, %v8243
      %v8245 = vrot.slane %v8244, 4
      %v8247 = vshll.u32 %v7980, 16
      %v8249 = vrot.slane %v8247, 5
      %v8250 = vsel %vm312, %v8245, %v8249
      %v8251 = vshrl.u32 %v7980, 16
      %v8253 = vrot.slane %v8251, 4
      %v8254 = vor.u32 %v8253, %v8249
      %v8255 = vrot.slane %v8254, 4
      %v8257 = vshll.u32 %v7981, 16
      %v8259 = vrot.slane %v8257, 5
      %v8260 = vsel %vm312, %v8255, %v8259
      %v8262 = vshrl.u32 %v7982, 16
      %v8264 = vrot.slane %v8262, 4
      %v8265 = vshll.u32 %v7982, 16
      %v8267 = vrot.slane %v8265, 5
      %v8268 = vor.u32 %v8264, %v8267
      %v8269 = vrot.slane %v8268, 4
      %v8271 = vshll.u32 %v7983, 16
      %v8273 = vrot.slane %v8271, 5
      %v8274 = vsel %vm312, %v8269, %v8273
      %v8275 = vshrl.u32 %v7983, 16
      %v8277 = vrot.slane %v8275, 4
      %v8278 = vor.u32 %v8277, %v8273
      %v8279 = vrot.slane %v8278, 4
      %v8281 = vshll.u32 %v7984, 16
      %v8283 = vrot.slane %v8281, 5
      %v8284 = vsel %vm312, %v8279, %v8283
      %v8286 = vshrl.u32 %v7985, 16
      %v8288 = vrot.slane %v8286, 4
      %v8289 = vshll.u32 %v7985, 16
      %v8291 = vrot.slane %v8289, 5
      %v8292 = vor.u32 %v8288, %v8291
      %v8293 = vrot.slane %v8292, 4
      %v8295 = vshll.u32 %v7986, 16
      %v8297 = vrot.slane %v8295, 5
      %v8298 = vsel %vm312, %v8293, %v8297
      %v8299 = vshrl.u32 %v7986, 16
      %v8301 = vrot.slane %v8299, 4
      %v8302 = vor.u32 %v8301, %v8297
      %v8303 = vrot.slane %v8302, 4
      %v8305 = vshll.u32 %v7987, 16
      %v8307 = vrot.slane %v8305, 5
      %v8308 = vsel %vm312, %v8303, %v8307
      %v8310 = vshrl.u32 %v7988, 16
      %v8312 = vrot.slane %v8310, 4
      %v8313 = vshll.u32 %v7988, 16
      %v8315 = vrot.slane %v8313, 5
      %v8316 = vor.u32 %v8312, %v8315
      %v8317 = vrot.slane %v8316, 4
      %v8319 = vshll.u32 %v7989, 16
      %v8321 = vrot.slane %v8319, 5
      %v8322 = vsel %vm312, %v8317, %v8321
      %v8323 = vshrl.u32 %v7989, 16
      %v8325 = vrot.slane %v8323, 4
      %v8326 = vor.u32 %v8325, %v8321
      %v8327 = vrot.slane %v8326, 4
      %v8329 = vshll.u32 %v7990, 16
      %v8331 = vrot.slane %v8329, 5
      %v8332 = vsel %vm312, %v8327, %v8331
      %v8334 = vshrl.u32 %v7991, 16
      %v8336 = vrot.slane %v8334, 4
      %v8337 = vshll.u32 %v7991, 16
      %v8339 = vrot.slane %v8337, 5
      %v8340 = vor.u32 %v8336, %v8339
      %v8341 = vrot.slane %v8340, 4
      %v8343 = vshll.u32 %v7992, 16
      %v8345 = vrot.slane %v8343, 5
      %v8346 = vsel %vm312, %v8341, %v8345
      %v8347 = vshrl.u32 %v7992, 16
      %v8349 = vrot.slane %v8347, 4
      %v8350 = vor.u32 %v8349, %v8345
      %v8351 = vrot.slane %v8350, 4
      %v8353 = vshll.u32 %v7993, 16
      %v8355 = vrot.slane %v8353, 5
      %v8356 = vsel %vm312, %v8351, %v8355
      %v8358 = vshrl.u32 %v7994, 16
      %v8360 = vrot.slane %v8358, 4
      %v8361 = vshll.u32 %v7994, 16
      %v8363 = vrot.slane %v8361, 5
      %v8364 = vor.u32 %v8360, %v8363
      %v8365 = vrot.slane %v8364, 4
      %v8367 = vshll.u32 %v7995, 16
      %v8369 = vrot.slane %v8367, 5
      %v8370 = vsel %vm312, %v8365, %v8369
      %v8371 = vshrl.u32 %v7995, 16
      %v8373 = vrot.slane %v8371, 4
      %v8374 = vor.u32 %v8373, %v8369
      %v8375 = vrot.slane %v8374, 4
      %v8377 = vshll.u32 %v7996, 16
      %v8379 = vrot.slane %v8377, 5
      %v8380 = vsel %vm312, %v8375, %v8379
      %s8381 = scalar_lea.vmem %s3, 8
      %v8382 = vld [vmem:[%s8381] sm:$0x3]
      %v8383 = vunpack.c.l.b16 %v8010
      %v8384 = vunpack.c.l.b16 %v8020
      %v8385 = vunpack.c.l.b16 %v8034
      %v8386 = vunpack.c.l.b16 %v8044
      %v8387 = vunpack.c.l.b16 %v8058
      %v8388 = vunpack.c.l.b16 %v8068
      %v8389 = vunpack.c.l.b16 %v8082
      %v8390 = vunpack.c.l.b16 %v8092
      %v8391 = vunpack.c.l.b16 %v8106
      %v8392 = vunpack.c.l.b16 %v8116
      %v8393 = vunpack.c.l.b16 %v8130
      %v8394 = vunpack.c.l.b16 %v8140
      %v8395 = vunpack.c.l.b16 %v8154
      %v8396 = vunpack.c.l.b16 %v8164
      %v8397 = vunpack.c.l.b16 %v8178
      %v8398 = vunpack.c.l.b16 %v8188
      %v8399 = vunpack.c.l.b16 %v8202
      %v8400 = vunpack.c.l.b16 %v8212
      %v8401 = vunpack.c.l.b16 %v8226
      %v8402 = vunpack.c.l.b16 %v8236
      %v8403 = vunpack.c.l.b16 %v8250
      %v8404 = vunpack.c.l.b16 %v8260
      %v8405 = vunpack.c.l.b16 %v8274
      %v8406 = vunpack.c.l.b16 %v8284
      %v8407 = vunpack.c.l.b16 %v8298
      %v8408 = vunpack.c.l.b16 %v8308
      %v8409 = vunpack.c.l.b16 %v8322
      %v8410 = vunpack.c.l.b16 %v8332
      %v8411 = vunpack.c.l.b16 %v8346
      %v8412 = vunpack.c.l.b16 %v8356
      %v8413 = vunpack.c.l.b16 %v8370
      %v8414 = vunpack.c.l.b16 %v8380
      %v8415 = vpack.c.b16 %v8384, %v8383
      %v8416 = vpack.c.b16 %v8386, %v8385
      %v8417 = vpack.c.b16 %v8388, %v8387
      %v8418 = vpack.c.b16 %v8390, %v8389
      %v8419 = vpack.c.b16 %v8392, %v8391
      %v8420 = vpack.c.b16 %v8394, %v8393
      %v8421 = vpack.c.b16 %v8396, %v8395
      %v8422 = vpack.c.b16 %v8398, %v8397
      %v8423 = vpack.c.b16 %v8400, %v8399
      %v8424 = vpack.c.b16 %v8402, %v8401
      %v8425 = vpack.c.b16 %v8404, %v8403
      %v8426 = vpack.c.b16 %v8406, %v8405
      %v8427 = vpack.c.b16 %v8408, %v8407
      %v8428 = vpack.c.b16 %v8410, %v8409
      %v8429 = vpack.c.b16 %v8412, %v8411
      %v8430 = vpack.c.b16 %v8414, %v8413
      %v8432 = vsel %vm801, %v8415, 0
      %v8435 = vsel %vm801, %v8416, 0
      %v8438 = vsel %vm801, %v8417, 0
      %v8441 = vsel %vm801, %v8418, 0
      %v8444 = vsel %vm801, %v8419, 0
      %v8447 = vsel %vm801, %v8420, 0
      %v8450 = vsel %vm801, %v8421, 0
      %v8453 = vsel %vm801, %v8422, 0
      %v8456 = vsel %vm801, %v8423, 0
      %v8459 = vsel %vm801, %v8424, 0
      %v8462 = vsel %vm801, %v8425, 0
      %v8465 = vsel %vm801, %v8426, 0
      %v8468 = vsel %vm801, %v8427, 0
      %v8471 = vsel %vm801, %v8428, 0
      %v8474 = vsel %vm801, %v8429, 0
      %v8477 = vsel %vm801, %v8430, 0
      %v8480 = vsel %vm856, %v8382, 0
      %8482 = vmatprep.subr.bf16.mxu0 0
      %8483 = vmatpush1.bf16.msra.mxu0 %v8480
      %8484 = vmatprep.subr.bf16.mxu0 0
      %8485 = vmatpush1.bf16.msra.mxu0 0
      %8486 = vmatprep.subr.bf16.mxu0 0
      %8487 = vmatpush1.bf16.msra.mxu0 0
      %8488 = vmatprep.subr.bf16.mxu0 0
      %8489 = vmatpush1.bf16.msra.mxu0 0
      %8490 = vmatprep.subr.bf16.mxu0 0
      %8491 = vmatpush1.bf16.msra.mxu0 0
      %8492 = vmatprep.subr.bf16.mxu0 0
      %8493 = vmatpush1.bf16.msra.mxu0 0
      %8494 = vmatprep.subr.bf16.mxu0 0
      %8495 = vmatpush1.bf16.msra.mxu0 0
      %8496 = vmatprep.subr.bf16.mxu0 0
      %8497 = vmatpush1.bf16.msra.mxu0 0
      %8498 = vmatprep.subr.bf16.mxu0 0
      %8499 = vmatpush1.bf16.msra.mxu0 0
      %8500 = vmatprep.subr.bf16.mxu0 0
      %8501 = vmatpush1.bf16.msra.mxu0 0
      %8502 = vmatprep.subr.bf16.mxu0 0
      %8503 = vmatpush1.bf16.msra.mxu0 0
      %8504 = vmatprep.subr.bf16.mxu0 0
      %8505 = vmatpush1.bf16.msra.mxu0 0
      %8506 = vmatprep.subr.bf16.mxu0 0
      %8507 = vmatpush1.bf16.msra.mxu0 0
      %8508 = vmatprep.subr.bf16.mxu0 0
      %8509 = vmatpush1.bf16.msra.mxu0 0
      %8510 = vmatprep.subr.bf16.mxu0 0
      %8511 = vmatpush1.bf16.msra.mxu0 0
      %8512 = vmatprep.subr.bf16.mxu0 0
      %8513 = vmatpush1.bf16.msra.mxu0 0
      %8514 = vmatprep.mubr.bf16.mxu0 0
      %8515 = vmatmul.mubr.bf16.gmra.mrb[0].mxu0 %v8432
      %v8516 = vpop.f32.mrb[0].mxu0
      %v8517 = vadd.f32 0.0, %v8516
      %v8518 = vpop.f32.mrb[0].mxu0
      %v8519 = vpop.f32.mrb[0].mxu0
      %v8520 = vadd.f32 0.0, %v8519
      %v8521 = vpop.f32.mrb[0].mxu0
      %8522 = vmatprep.mubr.bf16.mxu0 0
      %8523 = vmatmul.mubr.bf16.gmra.mrb[0].mxu0 %v8435
      %v8524 = vpop.f32.mrb[0].mxu0
      %v8525 = vadd.f32 0.0, %v8524
      %v8526 = vpop.f32.mrb[0].mxu0
      %v8527 = vpop.f32.mrb[0].mxu0
      %v8528 = vadd.f32 0.0, %v8527
      %v8529 = vpop.f32.mrb[0].mxu0
      %8530 = vmatprep.mubr.bf16.mxu0 0
      %8531 = vmatmul.mubr.bf16.gmra.mrb[0].mxu0 %v8438
      %v8532 = vpop.f32.mrb[0].mxu0
      %v8533 = vadd.f32 0.0, %v8532
      %v8534 = vpop.f32.mrb[0].mxu0
      %v8535 = vpop.f32.mrb[0].mxu0
      %v8536 = vadd.f32 0.0, %v8535
      %v8537 = vpop.f32.mrb[0].mxu0
      %8538 = vmatprep.mubr.bf16.mxu0 0
      %8539 = vmatmul.mubr.bf16.gmra.mrb[0].mxu0 %v8441
      %v8540 = vpop.f32.mrb[0].mxu0
      %v8541 = vadd.f32 0.0, %v8540
      %v8542 = vpop.f32.mrb[0].mxu0
      %v8543 = vpop.f32.mrb[0].mxu0
      %v8544 = vadd.f32 0.0, %v8543
      %v8545 = vpop.f32.mrb[0].mxu0
      %8546 = vmatprep.mubr.bf16.mxu0 0
      %8547 = vmatmul.mubr.bf16.gmra.mrb[0].mxu0 %v8444
      %v8548 = vpop.f32.mrb[0].mxu0
      %v8549 = vadd.f32 0.0, %v8548
      %v8550 = vpop.f32.mrb[0].mxu0
      %v8551 = vpop.f32.mrb[0].mxu0
      %v8552 = vadd.f32 0.0, %v8551
      %v8553 = vpop.f32.mrb[0].mxu0
      %8554 = vmatprep.mubr.bf16.mxu0 0
      %8555 = vmatmul.mubr.bf16.gmra.mrb[0].mxu0 %v8447
      %v8556 = vpop.f32.mrb[0].mxu0
      %v8557 = vadd.f32 0.0, %v8556
      %v8558 = vpop.f32.mrb[0].mxu0
      %v8559 = vpop.f32.mrb[0].mxu0
      %v8560 = vadd.f32 0.0, %v8559
      %v8561 = vpop.f32.mrb[0].mxu0
      %8562 = vmatprep.mubr.bf16.mxu0 0
      %8563 = vmatmul.mubr.bf16.gmra.mrb[0].mxu0 %v8450
      %v8564 = vpop.f32.mrb[0].mxu0
      %v8565 = vadd.f32 0.0, %v8564
      %v8566 = vpop.f32.mrb[0].mxu0
      %v8567 = vpop.f32.mrb[0].mxu0
      %v8568 = vadd.f32 0.0, %v8567
      %v8569 = vpop.f32.mrb[0].mxu0
      %8570 = vmatprep.mubr.bf16.mxu0 0
      %8571 = vmatmul.mubr.bf16.gmra.mrb[0].mxu0 %v8453
      %v8572 = vpop.f32.mrb[0].mxu0
      %v8573 = vadd.f32 0.0, %v8572
      %v8574 = vpop.f32.mrb[0].mxu0
      %v8575 = vpop.f32.mrb[0].mxu0
      %v8576 = vadd.f32 0.0, %v8575
      %v8577 = vpop.f32.mrb[0].mxu0
      %8578 = vmatprep.mubr.bf16.mxu0 0
      %8579 = vmatmul.mubr.bf16.gmra.mrb[0].mxu0 %v8456
      %v8580 = vpop.f32.mrb[0].mxu0
      %v8581 = vadd.f32 0.0, %v8580
      %v8582 = vpop.f32.mrb[0].mxu0
      %v8583 = vpop.f32.mrb[0].mxu0
      %v8584 = vadd.f32 0.0, %v8583
      %v8585 = vpop.f32.mrb[0].mxu0
      %8586 = vmatprep.mubr.bf16.mxu0 0
      %8587 = vmatmul.mubr.bf16.gmra.mrb[0].mxu0 %v8459
      %v8588 = vpop.f32.mrb[0].mxu0
      %v8589 = vadd.f32 0.0, %v8588
      %v8590 = vpop.f32.mrb[0].mxu0
      %v8591 = vpop.f32.mrb[0].mxu0
      %v8592 = vadd.f32 0.0, %v8591
      %v8593 = vpop.f32.mrb[0].mxu0
      %8594 = vmatprep.mubr.bf16.mxu0 0
      %8595 = vmatmul.mubr.bf16.gmra.mrb[0].mxu0 %v8462
      %v8596 = vpop.f32.mrb[0].mxu0
      %v8597 = vadd.f32 0.0, %v8596
      %v8598 = vpop.f32.mrb[0].mxu0
      %v8599 = vpop.f32.mrb[0].mxu0
      %v8600 = vadd.f32 0.0, %v8599
      %v8601 = vpop.f32.mrb[0].mxu0
      %8602 = vmatprep.mubr.bf16.mxu0 0
      %8603 = vmatmul.mubr.bf16.gmra.mrb[0].mxu0 %v8465
      %v8604 = vpop.f32.mrb[0].mxu0
      %v8605 = vadd.f32 0.0, %v8604
      %v8606 = vpop.f32.mrb[0].mxu0
      %v8607 = vpop.f32.mrb[0].mxu0
      %v8608 = vadd.f32 0.0, %v8607
      %v8609 = vpop.f32.mrb[0].mxu0
      %8610 = vmatprep.mubr.bf16.mxu0 0
      %8611 = vmatmul.mubr.bf16.gmra.mrb[0].mxu0 %v8468
      %v8612 = vpop.f32.mrb[0].mxu0
      %v8613 = vadd.f32 0.0, %v8612
      %v8614 = vpop.f32.mrb[0].mxu0
      %v8615 = vpop.f32.mrb[0].mxu0
      %v8616 = vadd.f32 0.0, %v8615
      %v8617 = vpop.f32.mrb[0].mxu0
      %8618 = vmatprep.mubr.bf16.mxu0 0
      %8619 = vmatmul.mubr.bf16.gmra.mrb[0].mxu0 %v8471
      %v8620 = vpop.f32.mrb[0].mxu0
      %v8621 = vadd.f32 0.0, %v8620
      %v8622 = vpop.f32.mrb[0].mxu0
      %v8623 = vpop.f32.mrb[0].mxu0
      %v8624 = vadd.f32 0.0, %v8623
      %v8625 = vpop.f32.mrb[0].mxu0
      %8626 = vmatprep.mubr.bf16.mxu0 0
      %8627 = vmatmul.mubr.bf16.gmra.mrb[0].mxu0 %v8474
      %v8628 = vpop.f32.mrb[0].mxu0
      %v8629 = vadd.f32 0.0, %v8628
      %v8630 = vpop.f32.mrb[0].mxu0
      %v8631 = vpop.f32.mrb[0].mxu0
      %v8632 = vadd.f32 0.0, %v8631
      %v8633 = vpop.f32.mrb[0].mxu0
      %8634 = vmatprep.mubr.bf16.mxu0 0
      %8635 = vmatmul.mubr.bf16.gmra.mrb[0].mxu0 %v8477
      %v8636 = vpop.f32.mrb[0].mxu0
      %v8637 = vadd.f32 0.0, %v8636
      %v8638 = vpop.f32.mrb[0].mxu0
      %v8639 = vpop.f32.mrb[0].mxu0
      %v8640 = vadd.f32 0.0, %v8639
      %v8641 = vpop.f32.mrb[0].mxu0
      %8642 = vdwg.mxu0
      %v8643 = vadd.f32 %v7917, %v8517
      %v8644 = vadd.f32 %v7918, %v8520
      %v8645 = vadd.f32 %v7919, %v8525
      %v8646 = vadd.f32 %v7920, %v8528
      %v8647 = vadd.f32 %v7921, %v8533
      %v8648 = vadd.f32 %v7922, %v8536
      %v8649 = vadd.f32 %v7923, %v8541
      %v8650 = vadd.f32 %v7924, %v8544
      %v8651 = vadd.f32 %v7925, %v8549
      %v8652 = vadd.f32 %v7926, %v8552
      %v8653 = vadd.f32 %v7927, %v8557
      %v8654 = vadd.f32 %v7928, %v8560
      %v8655 = vadd.f32 %v7929, %v8565
      %v8656 = vadd.f32 %v7930, %v8568
      %v8657 = vadd.f32 %v7931, %v8573
      %v8658 = vadd.f32 %v7932, %v8576
      %v8659 = vadd.f32 %v7933, %v8581
      %v8660 = vadd.f32 %v7934, %v8584
      %v8661 = vadd.f32 %v7935, %v8589
      %v8662 = vadd.f32 %v7936, %v8592
      %v8663 = vadd.f32 %v7937, %v8597
      %v8664 = vadd.f32 %v7938, %v8600
      %v8665 = vadd.f32 %v7939, %v8605
      %v8666 = vadd.f32 %v7940, %v8608
      %v8667 = vadd.f32 %v7941, %v8613
      %v8668 = vadd.f32 %v7942, %v8616
      %v8669 = vadd.f32 %v7943, %v8621
      %v8670 = vadd.f32 %v7944, %v8624
      %v8671 = vadd.f32 %v7945, %v8629
      %v8672 = vadd.f32 %v7946, %v8632
      %v8673 = vadd.f32 %v7947, %v8637
      %v8674 = vadd.f32 %v7948, %v8640
      %v8675 = vld [vmem:[%s7590] sm:$0xe]
      %v8676 = vld [vmem:[%s7590 + $0xc] sm:$0xe]
      %v8677 = vld [vmem:[%s7590 + $0x18] sm:$0xe]
      %v8678 = vld [vmem:[%s7590 + $0x24] sm:$0xe]
      %v8679 = vld [vmem:[%s7590 + $0x30] sm:$0xe]
      %v8680 = vld [vmem:[%s7590 + $0x3c] sm:$0xe]
      %v8681 = vld [vmem:[%s7590 + $0x48] sm:$0xe]
      %v8682 = vld [vmem:[%s7590 + $0x54] sm:$0xe]
      %v8683 = vld [vmem:[%s7590 + $0x60] sm:$0xe]
      %v8684 = vld [vmem:[%s7590 + $0x6c] sm:$0xe]
      %v8685 = vld [vmem:[%s7590 + $0x78] sm:$0xe]
      %v8686 = vld [vmem:[%s7590 + $0x84] sm:$0xe]
      %v8687 = vld [vmem:[%s7590 + $0x90] sm:$0xe]
      %v8688 = vld [vmem:[%s7590 + $0x9c] sm:$0xe]
      %v8689 = vld [vmem:[%s7590 + $0xa8] sm:$0xe]
      %v8690 = vld [vmem:[%s7590 + $0xb4] sm:$0xe]
      %v8739 = vrot.slane %v8675, 5
      %v8740 = vrot.slane %v8739, 4
      %v8741 = vrot.slane %v7950, 5
      %v8742 = vsel %vm1417, %v8740, %v8741
      %v8743 = vrot.slane %v8741, 4
      %v8744 = vrot.slane %v7951, 5
      %v8745 = vsel %vm1417, %v8743, %v8744
      %v8746 = vrot.slane %v8676, 5
      %v8747 = vrot.slane %v8746, 4
      %v8748 = vrot.slane %v7953, 5
      %v8749 = vsel %vm1417, %v8747, %v8748
      %v8750 = vrot.slane %v8748, 4
      %v8751 = vrot.slane %v7954, 5
      %v8752 = vsel %vm1417, %v8750, %v8751
      %v8753 = vrot.slane %v8677, 5
      %v8754 = vrot.slane %v8753, 4
      %v8755 = vrot.slane %v7956, 5
      %v8756 = vsel %vm1417, %v8754, %v8755
      %v8757 = vrot.slane %v8755, 4
      %v8758 = vrot.slane %v7957, 5
      %v8759 = vsel %vm1417, %v8757, %v8758
      %v8760 = vrot.slane %v8678, 5
      %v8761 = vrot.slane %v8760, 4
      %v8762 = vrot.slane %v7959, 5
      %v8763 = vsel %vm1417, %v8761, %v8762
      %v8764 = vrot.slane %v8762, 4
      %v8765 = vrot.slane %v7960, 5
      %v8766 = vsel %vm1417, %v8764, %v8765
      %v8767 = vrot.slane %v8679, 5
      %v8768 = vrot.slane %v8767, 4
      %v8769 = vrot.slane %v7962, 5
      %v8770 = vsel %vm1417, %v8768, %v8769
      %v8771 = vrot.slane %v8769, 4
      %v8772 = vrot.slane %v7963, 5
      %v8773 = vsel %vm1417, %v8771, %v8772
      %v8774 = vrot.slane %v8680, 5
      %v8775 = vrot.slane %v8774, 4
      %v8776 = vrot.slane %v7965, 5
      %v8777 = vsel %vm1417, %v8775, %v8776
      %v8778 = vrot.slane %v8776, 4
      %v8779 = vrot.slane %v7966, 5
      %v8780 = vsel %vm1417, %v8778, %v8779
      %v8781 = vrot.slane %v8681, 5
      %v8782 = vrot.slane %v8781, 4
      %v8783 = vrot.slane %v7968, 5
      %v8784 = vsel %vm1417, %v8782, %v8783
      %v8785 = vrot.slane %v8783, 4
      %v8786 = vrot.slane %v7969, 5
      %v8787 = vsel %vm1417, %v8785, %v8786
      %v8788 = vrot.slane %v8682, 5
      %v8789 = vrot.slane %v8788, 4
      %v8790 = vrot.slane %v7971, 5
      %v8791 = vsel %vm1417, %v8789, %v8790
      %v8792 = vrot.slane %v8790, 4
      %v8793 = vrot.slane %v7972, 5
      %v8794 = vsel %vm1417, %v8792, %v8793
      %v8795 = vrot.slane %v8683, 5
      %v8796 = vrot.slane %v8795, 4
      %v8797 = vrot.slane %v7974, 5
      %v8798 = vsel %vm1417, %v8796, %v8797
      %v8799 = vrot.slane %v8797, 4
      %v8800 = vrot.slane %v7975, 5
      %v8801 = vsel %vm1417, %v8799, %v8800
      %v8802 = vrot.slane %v8684, 5
      %v8803 = vrot.slane %v8802, 4
      %v8804 = vrot.slane %v7977, 5
      %v8805 = vsel %vm1417, %v8803, %v8804
      %v8806 = vrot.slane %v8804, 4
      %v8807 = vrot.slane %v7978, 5
      %v8808 = vsel %vm1417, %v8806, %v8807
      %v8809 = vrot.slane %v8685, 5
      %v8810 = vrot.slane %v8809, 4
      %v8811 = vrot.slane %v7980, 5
      %v8812 = vsel %vm1417, %v8810, %v8811
      %v8813 = vrot.slane %v8811, 4
      %v8814 = vrot.slane %v7981, 5
      %v8815 = vsel %vm1417, %v8813, %v8814
      %v8816 = vrot.slane %v8686, 5
      %v8817 = vrot.slane %v8816, 4
      %v8818 = vrot.slane %v7983, 5
      %v8819 = vsel %vm1417, %v8817, %v8818
      %v8820 = vrot.slane %v8818, 4
      %v8821 = vrot.slane %v7984, 5
      %v8822 = vsel %vm1417, %v8820, %v8821
      %v8823 = vrot.slane %v8687, 5
      %v8824 = vrot.slane %v8823, 4
      %v8825 = vrot.slane %v7986, 5
      %v8826 = vsel %vm1417, %v8824, %v8825
      %v8827 = vrot.slane %v8825, 4
      %v8828 = vrot.slane %v7987, 5
      %v8829 = vsel %vm1417, %v8827, %v8828
      %v8830 = vrot.slane %v8688, 5
      %v8831 = vrot.slane %v8830, 4
      %v8832 = vrot.slane %v7989, 5
      %v8833 = vsel %vm1417, %v8831, %v8832
      %v8834 = vrot.slane %v8832, 4
      %v8835 = vrot.slane %v7990, 5
      %v8836 = vsel %vm1417, %v8834, %v8835
      %v8837 = vrot.slane %v8689, 5
      %v8838 = vrot.slane %v8837, 4
      %v8839 = vrot.slane %v7992, 5
      %v8840 = vsel %vm1417, %v8838, %v8839
      %v8841 = vrot.slane %v8839, 4
      %v8842 = vrot.slane %v7993, 5
      %v8843 = vsel %vm1417, %v8841, %v8842
      %v8844 = vrot.slane %v8690, 5
      %v8845 = vrot.slane %v8844, 4
      %v8846 = vrot.slane %v7995, 5
      %v8847 = vsel %vm1417, %v8845, %v8846
      %v8848 = vrot.slane %v8846, 4
      %v8849 = vrot.slane %v7996, 5
      %v8850 = vsel %vm1417, %v8848, %v8849
      %s8851 = scalar_lea.vmem %s3, 10
      %v8852 = vld [vmem:[%s8851] sm:$0x3]
      %v8853 = vunpack.c.l.b16 %v8742
      %v8854 = vunpack.c.l.b16 %v8745
      %v8855 = vunpack.c.l.b16 %v8749
      %v8856 = vunpack.c.l.b16 %v8752
      %v8857 = vunpack.c.l.b16 %v8756
      %v8858 = vunpack.c.l.b16 %v8759
      %v8859 = vunpack.c.l.b16 %v8763
      %v8860 = vunpack.c.l.b16 %v8766
      %v8861 = vunpack.c.l.b16 %v8770
      %v8862 = vunpack.c.l.b16 %v8773
      %v8863 = vunpack.c.l.b16 %v8777
      %v8864 = vunpack.c.l.b16 %v8780
      %v8865 = vunpack.c.l.b16 %v8784
      %v8866 = vunpack.c.l.b16 %v8787
      %v8867 = vunpack.c.l.b16 %v8791
      %v8868 = vunpack.c.l.b16 %v8794
      %v8869 = vunpack.c.l.b16 %v8798
      %v8870 = vunpack.c.l.b16 %v8801
      %v8871 = vunpack.c.l.b16 %v8805
      %v8872 = vunpack.c.l.b16 %v8808
      %v8873 = vunpack.c.l.b16 %v8812
      %v8874 = vunpack.c.l.b16 %v8815
      %v8875 = vunpack.c.l.b16 %v8819
      %v8876 = vunpack.c.l.b16 %v8822
      %v8877 = vunpack.c.l.b16 %v8826
      %v8878 = vunpack.c.l.b16 %v8829
      %v8879 = vunpack.c.l.b16 %v8833
      %v8880 = vunpack.c.l.b16 %v8836
      %v8881 = vunpack.c.l.b16 %v8840
      %v8882 = vunpack.c.l.b16 %v8843
      %v8883 = vunpack.c.l.b16 %v8847
      %v8884 = vunpack.c.l.b16 %v8850
      %v8885 = vpack.c.b16 %v8854, %v8853
      %v8886 = vpack.c.b16 %v8856, %v8855
      %v8887 = vpack.c.b16 %v8858, %v8857
      %v8888 = vpack.c.b16 %v8860, %v8859
      %v8889 = vpack.c.b16 %v8862, %v8861
      %v8890 = vpack.c.b16 %v8864, %v8863
      %v8891 = vpack.c.b16 %v8866, %v8865
      %v8892 = vpack.c.b16 %v8868, %v8867
      %v8893 = vpack.c.b16 %v8870, %v8869
      %v8894 = vpack.c.b16 %v8872, %v8871
      %v8895 = vpack.c.b16 %v8874, %v8873
      %v8896 = vpack.c.b16 %v8876, %v8875
      %v8897 = vpack.c.b16 %v8878, %v8877
      %v8898 = vpack.c.b16 %v8880, %v8879
      %v8899 = vpack.c.b16 %v8882, %v8881
      %v8900 = vpack.c.b16 %v8884, %v8883
      %v8902 = vsel %vm801, %v8885, 0
      %v8905 = vsel %vm801, %v8886, 0
      %v8908 = vsel %vm801, %v8887, 0
      %v8911 = vsel %vm801, %v8888, 0
      %v8914 = vsel %vm801, %v8889, 0
      %v8917 = vsel %vm801, %v8890, 0
      %v8920 = vsel %vm801, %v8891, 0
      %v8923 = vsel %vm801, %v8892, 0
      %v8926 = vsel %vm801, %v8893, 0
      %v8929 = vsel %vm801, %v8894, 0
      %v8932 = vsel %vm801, %v8895, 0
      %v8935 = vsel %vm801, %v8896, 0
      %v8938 = vsel %vm801, %v8897, 0
      %v8941 = vsel %vm801, %v8898, 0
      %v8944 = vsel %vm801, %v8899, 0
      %v8947 = vsel %vm801, %v8900, 0
      %v8950 = vsel %vm856, %v8852, 0
      %8952 = vmatprep.subr.bf16.mxu0 0
      %8953 = vmatpush1.bf16.msra.mxu0 %v8950
      %8954 = vmatprep.subr.bf16.mxu0 0
      %8955 = vmatpush1.bf16.msra.mxu0 0
      %8956 = vmatprep.subr.bf16.mxu0 0
      %8957 = vmatpush1.bf16.msra.mxu0 0
      %8958 = vmatprep.subr.bf16.mxu0 0
      %8959 = vmatpush1.bf16.msra.mxu0 0
      %8960 = vmatprep.subr.bf16.mxu0 0
      %8961 = vmatpush1.bf16.msra.mxu0 0
      %8962 = vmatprep.subr.bf16.mxu0 0
      %8963 = vmatpush1.bf16.msra.mxu0 0
      %8964 = vmatprep.subr.bf16.mxu0 0
      %8965 = vmatpush1.bf16.msra.mxu0 0
      %8966 = vmatprep.subr.bf16.mxu0 0
      %8967 = vmatpush1.bf16.msra.mxu0 0
      %8968 = vmatprep.subr.bf16.mxu0 0
      %8969 = vmatpush1.bf16.msra.mxu0 0
      %8970 = vmatprep.subr.bf16.mxu0 0
      %8971 = vmatpush1.bf16.msra.mxu0 0
      %8972 = vmatprep.subr.bf16.mxu0 0
      %8973 = vmatpush1.bf16.msra.mxu0 0
      %8974 = vmatprep.subr.bf16.mxu0 0
      %8975 = vmatpush1.bf16.msra.mxu0 0
      %8976 = vmatprep.subr.bf16.mxu0 0
      %8977 = vmatpush1.bf16.msra.mxu0 0
      %8978 = vmatprep.subr.bf16.mxu0 0
      %8979 = vmatpush1.bf16.msra.mxu0 0
      %8980 = vmatprep.subr.bf16.mxu0 0
      %8981 = vmatpush1.bf16.msra.mxu0 0
      %8982 = vmatprep.subr.bf16.mxu0 0
      %8983 = vmatpush1.bf16.msra.mxu0 0
      %8984 = vmatprep.mubr.bf16.mxu0 0
      %8985 = vmatmul.mubr.bf16.gmra.mrb[0].mxu0 %v8902
      %v8986 = vpop.f32.mrb[0].mxu0
      %v8987 = vadd.f32 0.0, %v8986
      %v8988 = vpop.f32.mrb[0].mxu0
      %v8989 = vpop.f32.mrb[0].mxu0
      %v8990 = vadd.f32 0.0, %v8989
      %v8991 = vpop.f32.mrb[0].mxu0
      %8992 = vmatprep.mubr.bf16.mxu0 0
      %8993 = vmatmul.mubr.bf16.gmra.mrb[0].mxu0 %v8905
      %v8994 = vpop.f32.mrb[0].mxu0
      %v8995 = vadd.f32 0.0, %v8994
      %v8996 = vpop.f32.mrb[0].mxu0
      %v8997 = vpop.f32.mrb[0].mxu0
      %v8998 = vadd.f32 0.0, %v8997
      %v8999 = vpop.f32.mrb[0].mxu0
      %9000 = vmatprep.mubr.bf16.mxu0 0
      %9001 = vmatmul.mubr.bf16.gmra.mrb[0].mxu0 %v8908
      %v9002 = vpop.f32.mrb[0].mxu0
      %v9003 = vadd.f32 0.0, %v9002
      %v9004 = vpop.f32.mrb[0].mxu0
      %v9005 = vpop.f32.mrb[0].mxu0
      %v9006 = vadd.f32 0.0, %v9005
      %v9007 = vpop.f32.mrb[0].mxu0
      %9008 = vmatprep.mubr.bf16.mxu0 0
      %9009 = vmatmul.mubr.bf16.gmra.mrb[0].mxu0 %v8911
      %v9010 = vpop.f32.mrb[0].mxu0
      %v9011 = vadd.f32 0.0, %v9010
      %v9012 = vpop.f32.mrb[0].mxu0
      %v9013 = vpop.f32.mrb[0].mxu0
      %v9014 = vadd.f32 0.0, %v9013
      %v9015 = vpop.f32.mrb[0].mxu0
      %9016 = vmatprep.mubr.bf16.mxu0 0
      %9017 = vmatmul.mubr.bf16.gmra.mrb[0].mxu0 %v8914
      %v9018 = vpop.f32.mrb[0].mxu0
      %v9019 = vadd.f32 0.0, %v9018
      %v9020 = vpop.f32.mrb[0].mxu0
      %v9021 = vpop.f32.mrb[0].mxu0
      %v9022 = vadd.f32 0.0, %v9021
      %v9023 = vpop.f32.mrb[0].mxu0
      %9024 = vmatprep.mubr.bf16.mxu0 0
      %9025 = vmatmul.mubr.bf16.gmra.mrb[0].mxu0 %v8917
      %v9026 = vpop.f32.mrb[0].mxu0
      %v9027 = vadd.f32 0.0, %v9026
      %v9028 = vpop.f32.mrb[0].mxu0
      %v9029 = vpop.f32.mrb[0].mxu0
      %v9030 = vadd.f32 0.0, %v9029
      %v9031 = vpop.f32.mrb[0].mxu0
      %9032 = vmatprep.mubr.bf16.mxu0 0
      %9033 = vmatmul.mubr.bf16.gmra.mrb[0].mxu0 %v8920
      %v9034 = vpop.f32.mrb[0].mxu0
      %v9035 = vadd.f32 0.0, %v9034
      %v9036 = vpop.f32.mrb[0].mxu0
      %v9037 = vpop.f32.mrb[0].mxu0
      %v9038 = vadd.f32 0.0, %v9037
      %v9039 = vpop.f32.mrb[0].mxu0
      %9040 = vmatprep.mubr.bf16.mxu0 0
      %9041 = vmatmul.mubr.bf16.gmra.mrb[0].mxu0 %v8923
      %v9042 = vpop.f32.mrb[0].mxu0
      %v9043 = vadd.f32 0.0, %v9042
      %v9044 = vpop.f32.mrb[0].mxu0
      %v9045 = vpop.f32.mrb[0].mxu0
      %v9046 = vadd.f32 0.0, %v9045
      %v9047 = vpop.f32.mrb[0].mxu0
      %9048 = vmatprep.mubr.bf16.mxu0 0
      %9049 = vmatmul.mubr.bf16.gmra.mrb[0].mxu0 %v8926
      %v9050 = vpop.f32.mrb[0].mxu0
      %v9051 = vadd.f32 0.0, %v9050
      %v9052 = vpop.f32.mrb[0].mxu0
      %v9053 = vpop.f32.mrb[0].mxu0
      %v9054 = vadd.f32 0.0, %v9053
      %v9055 = vpop.f32.mrb[0].mxu0
      %9056 = vmatprep.mubr.bf16.mxu0 0
      %9057 = vmatmul.mubr.bf16.gmra.mrb[0].mxu0 %v8929
      %v9058 = vpop.f32.mrb[0].mxu0
      %v9059 = vadd.f32 0.0, %v9058
      %v9060 = vpop.f32.mrb[0].mxu0
      %v9061 = vpop.f32.mrb[0].mxu0
      %v9062 = vadd.f32 0.0, %v9061
      %v9063 = vpop.f32.mrb[0].mxu0
      %9064 = vmatprep.mubr.bf16.mxu0 0
      %9065 = vmatmul.mubr.bf16.gmra.mrb[0].mxu0 %v8932
      %v9066 = vpop.f32.mrb[0].mxu0
      %v9067 = vadd.f32 0.0, %v9066
      %v9068 = vpop.f32.mrb[0].mxu0
      %v9069 = vpop.f32.mrb[0].mxu0
      %v9070 = vadd.f32 0.0, %v9069
      %v9071 = vpop.f32.mrb[0].mxu0
      %9072 = vmatprep.mubr.bf16.mxu0 0
      %9073 = vmatmul.mubr.bf16.gmra.mrb[0].mxu0 %v8935
      %v9074 = vpop.f32.mrb[0].mxu0
      %v9075 = vadd.f32 0.0, %v9074
      %v9076 = vpop.f32.mrb[0].mxu0
      %v9077 = vpop.f32.mrb[0].mxu0
      %v9078 = vadd.f32 0.0, %v9077
      %v9079 = vpop.f32.mrb[0].mxu0
      %9080 = vmatprep.mubr.bf16.mxu0 0
      %9081 = vmatmul.mubr.bf16.gmra.mrb[0].mxu0 %v8938
      %v9082 = vpop.f32.mrb[0].mxu0
      %v9083 = vadd.f32 0.0, %v9082
      %v9084 = vpop.f32.mrb[0].mxu0
      %v9085 = vpop.f32.mrb[0].mxu0
      %v9086 = vadd.f32 0.0, %v9085
      %v9087 = vpop.f32.mrb[0].mxu0
      %9088 = vmatprep.mubr.bf16.mxu0 0
      %9089 = vmatmul.mubr.bf16.gmra.mrb[0].mxu0 %v8941
      %v9090 = vpop.f32.mrb[0].mxu0
      %v9091 = vadd.f32 0.0, %v9090
      %v9092 = vpop.f32.mrb[0].mxu0
      %v9093 = vpop.f32.mrb[0].mxu0
      %v9094 = vadd.f32 0.0, %v9093
      %v9095 = vpop.f32.mrb[0].mxu0
      %9096 = vmatprep.mubr.bf16.mxu0 0
      %9097 = vmatmul.mubr.bf16.gmra.mrb[0].mxu0 %v8944
      %v9098 = vpop.f32.mrb[0].mxu0
      %v9099 = vadd.f32 0.0, %v9098
      %v9100 = vpop.f32.mrb[0].mxu0
      %v9101 = vpop.f32.mrb[0].mxu0
      %v9102 = vadd.f32 0.0, %v9101
      %v9103 = vpop.f32.mrb[0].mxu0
      %9104 = vmatprep.mubr.bf16.mxu0 0
      %9105 = vmatmul.mubr.bf16.gmra.mrb[0].mxu0 %v8947
      %v9106 = vpop.f32.mrb[0].mxu0
      %v9107 = vadd.f32 0.0, %v9106
      %v9108 = vpop.f32.mrb[0].mxu0
      %v9109 = vpop.f32.mrb[0].mxu0
      %v9110 = vadd.f32 0.0, %v9109
      %v9111 = vpop.f32.mrb[0].mxu0
      %9112 = vdwg.mxu0
      %v9113 = vadd.f32 %v8643, %v8987
      %v9114 = vadd.f32 %v8644, %v8990
      %v9115 = vadd.f32 %v8645, %v8995
      %v9116 = vadd.f32 %v8646, %v8998
      %v9117 = vadd.f32 %v8647, %v9003
      %v9118 = vadd.f32 %v8648, %v9006
      %v9119 = vadd.f32 %v8649, %v9011
      %v9120 = vadd.f32 %v8650, %v9014
      %v9121 = vadd.f32 %v8651, %v9019
      %v9122 = vadd.f32 %v8652, %v9022
      %v9123 = vadd.f32 %v8653, %v9027
      %v9124 = vadd.f32 %v8654, %v9030
      %v9125 = vadd.f32 %v8655, %v9035
      %v9126 = vadd.f32 %v8656, %v9038
      %v9127 = vadd.f32 %v8657, %v9043
      %v9128 = vadd.f32 %v8658, %v9046
      %v9129 = vadd.f32 %v8659, %v9051
      %v9130 = vadd.f32 %v8660, %v9054
      %v9131 = vadd.f32 %v8661, %v9059
      %v9132 = vadd.f32 %v8662, %v9062
      %v9133 = vadd.f32 %v8663, %v9067
      %v9134 = vadd.f32 %v8664, %v9070
      %v9135 = vadd.f32 %v8665, %v9075
      %v9136 = vadd.f32 %v8666, %v9078
      %v9137 = vadd.f32 %v8667, %v9083
      %v9138 = vadd.f32 %v8668, %v9086
      %v9139 = vadd.f32 %v8669, %v9091
      %v9140 = vadd.f32 %v8670, %v9094
      %v9141 = vadd.f32 %v8671, %v9099
      %v9142 = vadd.f32 %v8672, %v9102
      %v9143 = vadd.f32 %v8673, %v9107
      %v9144 = vadd.f32 %v8674, %v9110
      %s9145 = scalar_lea.vmem [#allocation2], 24
      %v9146 = vld [vmem:[%s9145] sm:$0xf]
      %v9147 = vld [vmem:[%s9145 + $0x4] sm:$0xf]
      %v9148 = vld [vmem:[%s9145 + $0xc] sm:$0xf]
      %v9149 = vld [vmem:[%s9145 + $0x10] sm:$0xf]
      %v9150 = vld [vmem:[%s9145 + $0x18] sm:$0xf]
      %v9151 = vld [vmem:[%s9145 + $0x1c] sm:$0xf]
      %v9152 = vld [vmem:[%s9145 + $0x24] sm:$0xf]
      %v9153 = vld [vmem:[%s9145 + $0x28] sm:$0xf]
      %v9154 = vld [vmem:[%s9145 + $0x30] sm:$0xf]
      %v9155 = vld [vmem:[%s9145 + $0x34] sm:$0xf]
      %v9156 = vld [vmem:[%s9145 + $0x3c] sm:$0xf]
      %v9157 = vld [vmem:[%s9145 + $0x40] sm:$0xf]
      %v9158 = vld [vmem:[%s9145 + $0x48] sm:$0xf]
      %v9159 = vld [vmem:[%s9145 + $0x4c] sm:$0xf]
      %v9160 = vld [vmem:[%s9145 + $0x54] sm:$0xf]
      %v9161 = vld [vmem:[%s9145 + $0x58] sm:$0xf]
      %v9162 = vld [vmem:[%s9145 + $0x60] sm:$0xf]
      %v9163 = vld [vmem:[%s9145 + $0x64] sm:$0xf]
      %v9164 = vld [vmem:[%s9145 + $0x6c] sm:$0xf]
      %v9165 = vld [vmem:[%s9145 + $0x70] sm:$0xf]
      %v9166 = vld [vmem:[%s9145 + $0x78] sm:$0xf]
      %v9167 = vld [vmem:[%s9145 + $0x7c] sm:$0xf]
      %v9168 = vld [vmem:[%s9145 + $0x84] sm:$0xf]
      %v9169 = vld [vmem:[%s9145 + $0x88] sm:$0xf]
      %v9170 = vld [vmem:[%s9145 + $0x90] sm:$0xf]
      %v9171 = vld [vmem:[%s9145 + $0x94] sm:$0xf]
      %v9172 = vld [vmem:[%s9145 + $0x9c] sm:$0xf]
      %v9173 = vld [vmem:[%s9145 + $0xa0] sm:$0xf]
      %v9174 = vld [vmem:[%s9145 + $0xa8] sm:$0xf]
      %v9175 = vld [vmem:[%s9145 + $0xac] sm:$0xf]
      %v9176 = vld [vmem:[%s9145 + $0xb4] sm:$0xf]
      %v9177 = vld [vmem:[%s9145 + $0xb8] sm:$0xf]
      %s9178 = scalar_lea.vmem %s3, 12
      %v9179 = vld [vmem:[%s9178] sm:$0x3]
      %v9212 = vunpack.c.l.b16 %v9146
      %v9213 = vunpack.c.l.b16 %v9147
      %v9214 = vunpack.c.l.b16 %v9148
      %v9215 = vunpack.c.l.b16 %v9149
      %v9216 = vunpack.c.l.b16 %v9150
      %v9217 = vunpack.c.l.b16 %v9151
      %v9218 = vunpack.c.l.b16 %v9152
      %v9219 = vunpack.c.l.b16 %v9153
      %v9220 = vunpack.c.l.b16 %v9154
      %v9221 = vunpack.c.l.b16 %v9155
      %v9222 = vunpack.c.l.b16 %v9156
      %v9223 = vunpack.c.l.b16 %v9157
      %v9224 = vunpack.c.l.b16 %v9158
      %v9225 = vunpack.c.l.b16 %v9159
      %v9226 = vunpack.c.l.b16 %v9160
      %v9227 = vunpack.c.l.b16 %v9161
      %v9228 = vunpack.c.l.b16 %v9162
      %v9229 = vunpack.c.l.b16 %v9163
      %v9230 = vunpack.c.l.b16 %v9164
      %v9231 = vunpack.c.l.b16 %v9165
      %v9232 = vunpack.c.l.b16 %v9166
      %v9233 = vunpack.c.l.b16 %v9167
      %v9234 = vunpack.c.l.b16 %v9168
      %v9235 = vunpack.c.l.b16 %v9169
      %v9236 = vunpack.c.l.b16 %v9170
      %v9237 = vunpack.c.l.b16 %v9171
      %v9238 = vunpack.c.l.b16 %v9172
      %v9239 = vunpack.c.l.b16 %v9173
      %v9240 = vunpack.c.l.b16 %v9174
      %v9241 = vunpack.c.l.b16 %v9175
      %v9242 = vunpack.c.l.b16 %v9176
      %v9243 = vunpack.c.l.b16 %v9177
      %v9244 = vpack.c.b16 %v9213, %v9212
      %v9245 = vpack.c.b16 %v9215, %v9214
      %v9246 = vpack.c.b16 %v9217, %v9216
      %v9247 = vpack.c.b16 %v9219, %v9218
      %v9248 = vpack.c.b16 %v9221, %v9220
      %v9249 = vpack.c.b16 %v9223, %v9222
      %v9250 = vpack.c.b16 %v9225, %v9224
      %v9251 = vpack.c.b16 %v9227, %v9226
      %v9252 = vpack.c.b16 %v9229, %v9228
      %v9253 = vpack.c.b16 %v9231, %v9230
      %v9254 = vpack.c.b16 %v9233, %v9232
      %v9255 = vpack.c.b16 %v9235, %v9234
      %v9256 = vpack.c.b16 %v9237, %v9236
      %v9257 = vpack.c.b16 %v9239, %v9238
      %v9258 = vpack.c.b16 %v9241, %v9240
      %v9259 = vpack.c.b16 %v9243, %v9242
      %v9261 = vsel %vm801, %v9244, 0
      %v9264 = vsel %vm801, %v9245, 0
      %v9267 = vsel %vm801, %v9246, 0
      %v9270 = vsel %vm801, %v9247, 0
      %v9273 = vsel %vm801, %v9248, 0
      %v9276 = vsel %vm801, %v9249, 0
      %v9279 = vsel %vm801, %v9250, 0
      %v9282 = vsel %vm801, %v9251, 0
      %v9285 = vsel %vm801, %v9252, 0
      %v9288 = vsel %vm801, %v9253, 0
      %v9291 = vsel %vm801, %v9254, 0
      %v9294 = vsel %vm801, %v9255, 0
      %v9297 = vsel %vm801, %v9256, 0
      %v9300 = vsel %vm801, %v9257, 0
      %v9303 = vsel %vm801, %v9258, 0
      %v9306 = vsel %vm801, %v9259, 0
      %v9309 = vsel %vm856, %v9179, 0
      %9311 = vmatprep.subr.bf16.mxu0 0
      %9312 = vmatpush1.bf16.msra.mxu0 %v9309
      %9313 = vmatprep.subr.bf16.mxu0 0
      %9314 = vmatpush1.bf16.msra.mxu0 0
      %9315 = vmatprep.subr.bf16.mxu0 0
      %9316 = vmatpush1.bf16.msra.mxu0 0
      %9317 = vmatprep.subr.bf16.mxu0 0
      %9318 = vmatpush1.bf16.msra.mxu0 0
      %9319 = vmatprep.subr.bf16.mxu0 0
      %9320 = vmatpush1.bf16.msra.mxu0 0
      %9321 = vmatprep.subr.bf16.mxu0 0
      %9322 = vmatpush1.bf16.msra.mxu0 0
      %9323 = vmatprep.subr.bf16.mxu0 0
      %9324 = vmatpush1.bf16.msra.mxu0 0
      %9325 = vmatprep.subr.bf16.mxu0 0
      %9326 = vmatpush1.bf16.msra.mxu0 0
      %9327 = vmatprep.subr.bf16.mxu0 0
      %9328 = vmatpush1.bf16.msra.mxu0 0
      %9329 = vmatprep.subr.bf16.mxu0 0
      %9330 = vmatpush1.bf16.msra.mxu0 0
      %9331 = vmatprep.subr.bf16.mxu0 0
      %9332 = vmatpush1.bf16.msra.mxu0 0
      %9333 = vmatprep.subr.bf16.mxu0 0
      %9334 = vmatpush1.bf16.msra.mxu0 0
      %9335 = vmatprep.subr.bf16.mxu0 0
      %9336 = vmatpush1.bf16.msra.mxu0 0
      %9337 = vmatprep.subr.bf16.mxu0 0
      %9338 = vmatpush1.bf16.msra.mxu0 0
      %9339 = vmatprep.subr.bf16.mxu0 0
      %9340 = vmatpush1.bf16.msra.mxu0 0
      %9341 = vmatprep.subr.bf16.mxu0 0
      %9342 = vmatpush1.bf16.msra.mxu0 0
      %9343 = vmatprep.mubr.bf16.mxu0 0
      %9344 = vmatmul.mubr.bf16.gmra.mrb[0].mxu0 %v9261
      %v9345 = vpop.f32.mrb[0].mxu0
      %v9346 = vadd.f32 0.0, %v9345
      %v9347 = vpop.f32.mrb[0].mxu0
      %v9348 = vpop.f32.mrb[0].mxu0
      %v9349 = vadd.f32 0.0, %v9348
      %v9350 = vpop.f32.mrb[0].mxu0
      %9351 = vmatprep.mubr.bf16.mxu0 0
      %9352 = vmatmul.mubr.bf16.gmra.mrb[0].mxu0 %v9264
      %v9353 = vpop.f32.mrb[0].mxu0
      %v9354 = vadd.f32 0.0, %v9353
      %v9355 = vpop.f32.mrb[0].mxu0
      %v9356 = vpop.f32.mrb[0].mxu0
      %v9357 = vadd.f32 0.0, %v9356
      %v9358 = vpop.f32.mrb[0].mxu0
      %9359 = vmatprep.mubr.bf16.mxu0 0
      %9360 = vmatmul.mubr.bf16.gmra.mrb[0].mxu0 %v9267
      %v9361 = vpop.f32.mrb[0].mxu0
      %v9362 = vadd.f32 0.0, %v9361
      %v9363 = vpop.f32.mrb[0].mxu0
      %v9364 = vpop.f32.mrb[0].mxu0
      %v9365 = vadd.f32 0.0, %v9364
      %v9366 = vpop.f32.mrb[0].mxu0
      %9367 = vmatprep.mubr.bf16.mxu0 0
      %9368 = vmatmul.mubr.bf16.gmra.mrb[0].mxu0 %v9270
      %v9369 = vpop.f32.mrb[0].mxu0
      %v9370 = vadd.f32 0.0, %v9369
      %v9371 = vpop.f32.mrb[0].mxu0
      %v9372 = vpop.f32.mrb[0].mxu0
      %v9373 = vadd.f32 0.0, %v9372
      %v9374 = vpop.f32.mrb[0].mxu0
      %9375 = vmatprep.mubr.bf16.mxu0 0
      %9376 = vmatmul.mubr.bf16.gmra.mrb[0].mxu0 %v9273
      %v9377 = vpop.f32.mrb[0].mxu0
      %v9378 = vadd.f32 0.0, %v9377
      %v9379 = vpop.f32.mrb[0].mxu0
      %v9380 = vpop.f32.mrb[0].mxu0
      %v9381 = vadd.f32 0.0, %v9380
      %v9382 = vpop.f32.mrb[0].mxu0
      %9383 = vmatprep.mubr.bf16.mxu0 0
      %9384 = vmatmul.mubr.bf16.gmra.mrb[0].mxu0 %v9276
      %v9385 = vpop.f32.mrb[0].mxu0
      %v9386 = vadd.f32 0.0, %v9385
      %v9387 = vpop.f32.mrb[0].mxu0
      %v9388 = vpop.f32.mrb[0].mxu0
      %v9389 = vadd.f32 0.0, %v9388
      %v9390 = vpop.f32.mrb[0].mxu0
      %9391 = vmatprep.mubr.bf16.mxu0 0
      %9392 = vmatmul.mubr.bf16.gmra.mrb[0].mxu0 %v9279
      %v9393 = vpop.f32.mrb[0].mxu0
      %v9394 = vadd.f32 0.0, %v9393
      %v9395 = vpop.f32.mrb[0].mxu0
      %v9396 = vpop.f32.mrb[0].mxu0
      %v9397 = vadd.f32 0.0, %v9396
      %v9398 = vpop.f32.mrb[0].mxu0
      %9399 = vmatprep.mubr.bf16.mxu0 0
      %9400 = vmatmul.mubr.bf16.gmra.mrb[0].mxu0 %v9282
      %v9401 = vpop.f32.mrb[0].mxu0
      %v9402 = vadd.f32 0.0, %v9401
      %v9403 = vpop.f32.mrb[0].mxu0
      %v9404 = vpop.f32.mrb[0].mxu0
      %v9405 = vadd.f32 0.0, %v9404
      %v9406 = vpop.f32.mrb[0].mxu0
      %9407 = vmatprep.mubr.bf16.mxu0 0
      %9408 = vmatmul.mubr.bf16.gmra.mrb[0].mxu0 %v9285
      %v9409 = vpop.f32.mrb[0].mxu0
      %v9410 = vadd.f32 0.0, %v9409
      %v9411 = vpop.f32.mrb[0].mxu0
      %v9412 = vpop.f32.mrb[0].mxu0
      %v9413 = vadd.f32 0.0, %v9412
      %v9414 = vpop.f32.mrb[0].mxu0
      %9415 = vmatprep.mubr.bf16.mxu0 0
      %9416 = vmatmul.mubr.bf16.gmra.mrb[0].mxu0 %v9288
      %v9417 = vpop.f32.mrb[0].mxu0
      %v9418 = vadd.f32 0.0, %v9417
      %v9419 = vpop.f32.mrb[0].mxu0
      %v9420 = vpop.f32.mrb[0].mxu0
      %v9421 = vadd.f32 0.0, %v9420
      %v9422 = vpop.f32.mrb[0].mxu0
      %9423 = vmatprep.mubr.bf16.mxu0 0
      %9424 = vmatmul.mubr.bf16.gmra.mrb[0].mxu0 %v9291
      %v9425 = vpop.f32.mrb[0].mxu0
      %v9426 = vadd.f32 0.0, %v9425
      %v9427 = vpop.f32.mrb[0].mxu0
      %v9428 = vpop.f32.mrb[0].mxu0
      %v9429 = vadd.f32 0.0, %v9428
      %v9430 = vpop.f32.mrb[0].mxu0
      %9431 = vmatprep.mubr.bf16.mxu0 0
      %9432 = vmatmul.mubr.bf16.gmra.mrb[0].mxu0 %v9294
      %v9433 = vpop.f32.mrb[0].mxu0
      %v9434 = vadd.f32 0.0, %v9433
      %v9435 = vpop.f32.mrb[0].mxu0
      %v9436 = vpop.f32.mrb[0].mxu0
      %v9437 = vadd.f32 0.0, %v9436
      %v9438 = vpop.f32.mrb[0].mxu0
      %9439 = vmatprep.mubr.bf16.mxu0 0
      %9440 = vmatmul.mubr.bf16.gmra.mrb[0].mxu0 %v9297
      %v9441 = vpop.f32.mrb[0].mxu0
      %v9442 = vadd.f32 0.0, %v9441
      %v9443 = vpop.f32.mrb[0].mxu0
      %v9444 = vpop.f32.mrb[0].mxu0
      %v9445 = vadd.f32 0.0, %v9444
      %v9446 = vpop.f32.mrb[0].mxu0
      %9447 = vmatprep.mubr.bf16.mxu0 0
      %9448 = vmatmul.mubr.bf16.gmra.mrb[0].mxu0 %v9300
      %v9449 = vpop.f32.mrb[0].mxu0
      %v9450 = vadd.f32 0.0, %v9449
      %v9451 = vpop.f32.mrb[0].mxu0
      %v9452 = vpop.f32.mrb[0].mxu0
      %v9453 = vadd.f32 0.0, %v9452
      %v9454 = vpop.f32.mrb[0].mxu0
      %9455 = vmatprep.mubr.bf16.mxu0 0
      %9456 = vmatmul.mubr.bf16.gmra.mrb[0].mxu0 %v9303
      %v9457 = vpop.f32.mrb[0].mxu0
      %v9458 = vadd.f32 0.0, %v9457
      %v9459 = vpop.f32.mrb[0].mxu0
      %v9460 = vpop.f32.mrb[0].mxu0
      %v9461 = vadd.f32 0.0, %v9460
      %v9462 = vpop.f32.mrb[0].mxu0
      %9463 = vmatprep.mubr.bf16.mxu0 0
      %9464 = vmatmul.mubr.bf16.gmra.mrb[0].mxu0 %v9306
      %v9465 = vpop.f32.mrb[0].mxu0
      %v9466 = vadd.f32 0.0, %v9465
      %v9467 = vpop.f32.mrb[0].mxu0
      %v9468 = vpop.f32.mrb[0].mxu0
      %v9469 = vadd.f32 0.0, %v9468
      %v9470 = vpop.f32.mrb[0].mxu0
      %9471 = vdwg.mxu0
      %v9472 = vadd.f32 %v9113, %v9346
      %v9473 = vadd.f32 %v9114, %v9349
      %v9474 = vadd.f32 %v9115, %v9354
      %v9475 = vadd.f32 %v9116, %v9357
      %v9476 = vadd.f32 %v9117, %v9362
      %v9477 = vadd.f32 %v9118, %v9365
      %v9478 = vadd.f32 %v9119, %v9370
      %v9479 = vadd.f32 %v9120, %v9373
      %v9480 = vadd.f32 %v9121, %v9378
      %v9481 = vadd.f32 %v9122, %v9381
      %v9482 = vadd.f32 %v9123, %v9386
      %v9483 = vadd.f32 %v9124, %v9389
      %v9484 = vadd.f32 %v9125, %v9394
      %v9485 = vadd.f32 %v9126, %v9397
      %v9486 = vadd.f32 %v9127, %v9402
      %v9487 = vadd.f32 %v9128, %v9405
      %v9488 = vadd.f32 %v9129, %v9410
      %v9489 = vadd.f32 %v9130, %v9413
      %v9490 = vadd.f32 %v9131, %v9418
      %v9491 = vadd.f32 %v9132, %v9421
      %v9492 = vadd.f32 %v9133, %v9426
      %v9493 = vadd.f32 %v9134, %v9429
      %v9494 = vadd.f32 %v9135, %v9434
      %v9495 = vadd.f32 %v9136, %v9437
      %v9496 = vadd.f32 %v9137, %v9442
      %v9497 = vadd.f32 %v9138, %v9445
      %v9498 = vadd.f32 %v9139, %v9450
      %v9499 = vadd.f32 %v9140, %v9453
      %v9500 = vadd.f32 %v9141, %v9458
      %v9501 = vadd.f32 %v9142, %v9461
      %v9502 = vadd.f32 %v9143, %v9466
      %v9503 = vadd.f32 %v9144, %v9469
      %v9504 = vld [vmem:[%s9145] sm:$0xf]
      %v9505 = vld [vmem:[%s9145 + $0x4] sm:$0xf]
      %v9506 = vld [vmem:[%s9145 + $0x8] sm:$0x1]
      %v9507 = vld [vmem:[%s9145 + $0xc] sm:$0xf]
      %v9508 = vld [vmem:[%s9145 + $0x10] sm:$0xf]
      %v9509 = vld [vmem:[%s9145 + $0x14] sm:$0x1]
      %v9510 = vld [vmem:[%s9145 + $0x18] sm:$0xf]
      %v9511 = vld [vmem:[%s9145 + $0x1c] sm:$0xf]
      %v9512 = vld [vmem:[%s9145 + $0x20] sm:$0x1]
      %v9513 = vld [vmem:[%s9145 + $0x24] sm:$0xf]
      %v9514 = vld [vmem:[%s9145 + $0x28] sm:$0xf]
      %v9515 = vld [vmem:[%s9145 + $0x2c] sm:$0x1]
      %v9516 = vld [vmem:[%s9145 + $0x30] sm:$0xf]
      %v9517 = vld [vmem:[%s9145 + $0x34] sm:$0xf]
      %v9518 = vld [vmem:[%s9145 + $0x38] sm:$0x1]
      %v9519 = vld [vmem:[%s9145 + $0x3c] sm:$0xf]
      %v9520 = vld [vmem:[%s9145 + $0x40] sm:$0xf]
      %v9521 = vld [vmem:[%s9145 + $0x44] sm:$0x1]
      %v9522 = vld [vmem:[%s9145 + $0x48] sm:$0xf]
      %v9523 = vld [vmem:[%s9145 + $0x4c] sm:$0xf]
      %v9524 = vld [vmem:[%s9145 + $0x50] sm:$0x1]
      %v9525 = vld [vmem:[%s9145 + $0x54] sm:$0xf]
      %v9526 = vld [vmem:[%s9145 + $0x58] sm:$0xf]
      %v9527 = vld [vmem:[%s9145 + $0x5c] sm:$0x1]
      %v9528 = vld [vmem:[%s9145 + $0x60] sm:$0xf]
      %v9529 = vld [vmem:[%s9145 + $0x64] sm:$0xf]
      %v9530 = vld [vmem:[%s9145 + $0x68] sm:$0x1]
      %v9531 = vld [vmem:[%s9145 + $0x6c] sm:$0xf]
      %v9532 = vld [vmem:[%s9145 + $0x70] sm:$0xf]
      %v9533 = vld [vmem:[%s9145 + $0x74] sm:$0x1]
      %v9534 = vld [vmem:[%s9145 + $0x78] sm:$0xf]
      %v9535 = vld [vmem:[%s9145 + $0x7c] sm:$0xf]
      %v9536 = vld [vmem:[%s9145 + $0x80] sm:$0x1]
      %v9537 = vld [vmem:[%s9145 + $0x84] sm:$0xf]
      %v9538 = vld [vmem:[%s9145 + $0x88] sm:$0xf]
      %v9539 = vld [vmem:[%s9145 + $0x8c] sm:$0x1]
      %v9540 = vld [vmem:[%s9145 + $0x90] sm:$0xf]
      %v9541 = vld [vmem:[%s9145 + $0x94] sm:$0xf]
      %v9542 = vld [vmem:[%s9145 + $0x98] sm:$0x1]
      %v9543 = vld [vmem:[%s9145 + $0x9c] sm:$0xf]
      %v9544 = vld [vmem:[%s9145 + $0xa0] sm:$0xf]
      %v9545 = vld [vmem:[%s9145 + $0xa4] sm:$0x1]
      %v9546 = vld [vmem:[%s9145 + $0xa8] sm:$0xf]
      %v9547 = vld [vmem:[%s9145 + $0xac] sm:$0xf]
      %v9548 = vld [vmem:[%s9145 + $0xb0] sm:$0x1]
      %v9549 = vld [vmem:[%s9145 + $0xb4] sm:$0xf]
      %v9550 = vld [vmem:[%s9145 + $0xb8] sm:$0xf]
      %v9551 = vld [vmem:[%s9145 + $0xbc] sm:$0x1]
      %v9553 = vshrl.u32 %v9504, 16
      %v9555 = vrot.slane %v9553, 4
      %v9556 = vshll.u32 %v9504, 16
      %v9558 = vrot.slane %v9556, 5
      %v9559 = vor.u32 %v9555, %v9558
      %v9560 = vrot.slane %v9559, 4
      %v9562 = vshll.u32 %v9505, 16
      %v9564 = vrot.slane %v9562, 5
      %v9565 = vsel %vm312, %v9560, %v9564
      %v9566 = vshrl.u32 %v9505, 16
      %v9568 = vrot.slane %v9566, 4
      %v9569 = vor.u32 %v9568, %v9564
      %v9570 = vrot.slane %v9569, 4
      %v9572 = vshll.u32 %v9506, 16
      %v9574 = vrot.slane %v9572, 5
      %v9575 = vsel %vm312, %v9570, %v9574
      %v9577 = vshrl.u32 %v9507, 16
      %v9579 = vrot.slane %v9577, 4
      %v9580 = vshll.u32 %v9507, 16
      %v9582 = vrot.slane %v9580, 5
      %v9583 = vor.u32 %v9579, %v9582
      %v9584 = vrot.slane %v9583, 4
      %v9586 = vshll.u32 %v9508, 16
      %v9588 = vrot.slane %v9586, 5
      %v9589 = vsel %vm312, %v9584, %v9588
      %v9590 = vshrl.u32 %v9508, 16
      %v9592 = vrot.slane %v9590, 4
      %v9593 = vor.u32 %v9592, %v9588
      %v9594 = vrot.slane %v9593, 4
      %v9596 = vshll.u32 %v9509, 16
      %v9598 = vrot.slane %v9596, 5
      %v9599 = vsel %vm312, %v9594, %v9598
      %v9601 = vshrl.u32 %v9510, 16
      %v9603 = vrot.slane %v9601, 4
      %v9604 = vshll.u32 %v9510, 16
      %v9606 = vrot.slane %v9604, 5
      %v9607 = vor.u32 %v9603, %v9606
      %v9608 = vrot.slane %v9607, 4
      %v9610 = vshll.u32 %v9511, 16
      %v9612 = vrot.slane %v9610, 5
      %v9613 = vsel %vm312, %v9608, %v9612
      %v9614 = vshrl.u32 %v9511, 16
      %v9616 = vrot.slane %v9614, 4
      %v9617 = vor.u32 %v9616, %v9612
      %v9618 = vrot.slane %v9617, 4
      %v9620 = vshll.u32 %v9512, 16
      %v9622 = vrot.slane %v9620, 5
      %v9623 = vsel %vm312, %v9618, %v9622
      %v9625 = vshrl.u32 %v9513, 16
      %v9627 = vrot.slane %v9625, 4
      %v9628 = vshll.u32 %v9513, 16
      %v9630 = vrot.slane %v9628, 5
      %v9631 = vor.u32 %v9627, %v9630
      %v9632 = vrot.slane %v9631, 4
      %v9634 = vshll.u32 %v9514, 16
      %v9636 = vrot.slane %v9634, 5
      %v9637 = vsel %vm312, %v9632, %v9636
      %v9638 = vshrl.u32 %v9514, 16
      %v9640 = vrot.slane %v9638, 4
      %v9641 = vor.u32 %v9640, %v9636
      %v9642 = vrot.slane %v9641, 4
      %v9644 = vshll.u32 %v9515, 16
      %v9646 = vrot.slane %v9644, 5
      %v9647 = vsel %vm312, %v9642, %v9646
      %v9649 = vshrl.u32 %v9516, 16
      %v9651 = vrot.slane %v9649, 4
      %v9652 = vshll.u32 %v9516, 16
      %v9654 = vrot.slane %v9652, 5
      %v9655 = vor.u32 %v9651, %v9654
      %v9656 = vrot.slane %v9655, 4
      %v9658 = vshll.u32 %v9517, 16
      %v9660 = vrot.slane %v9658, 5
      %v9661 = vsel %vm312, %v9656, %v9660
      %v9662 = vshrl.u32 %v9517, 16
      %v9664 = vrot.slane %v9662, 4
      %v9665 = vor.u32 %v9664, %v9660
      %v9666 = vrot.slane %v9665, 4
      %v9668 = vshll.u32 %v9518, 16
      %v9670 = vrot.slane %v9668, 5
      %v9671 = vsel %vm312, %v9666, %v9670
      %v9673 = vshrl.u32 %v9519, 16
      %v9675 = vrot.slane %v9673, 4
      %v9676 = vshll.u32 %v9519, 16
      %v9678 = vrot.slane %v9676, 5
      %v9679 = vor.u32 %v9675, %v9678
      %v9680 = vrot.slane %v9679, 4
      %v9682 = vshll.u32 %v9520, 16
      %v9684 = vrot.slane %v9682, 5
      %v9685 = vsel %vm312, %v9680, %v9684
      %v9686 = vshrl.u32 %v9520, 16
      %v9688 = vrot.slane %v9686, 4
      %v9689 = vor.u32 %v9688, %v9684
      %v9690 = vrot.slane %v9689, 4
      %v9692 = vshll.u32 %v9521, 16
      %v9694 = vrot.slane %v9692, 5
      %v9695 = vsel %vm312, %v9690, %v9694
      %v9697 = vshrl.u32 %v9522, 16
      %v9699 = vrot.slane %v9697, 4
      %v9700 = vshll.u32 %v9522, 16
      %v9702 = vrot.slane %v9700, 5
      %v9703 = vor.u32 %v9699, %v9702
      %v9704 = vrot.slane %v9703, 4
      %v9706 = vshll.u32 %v9523, 16
      %v9708 = vrot.slane %v9706, 5
      %v9709 = vsel %vm312, %v9704, %v9708
      %v9710 = vshrl.u32 %v9523, 16
      %v9712 = vrot.slane %v9710, 4
      %v9713 = vor.u32 %v9712, %v9708
      %v9714 = vrot.slane %v9713, 4
      %v9716 = vshll.u32 %v9524, 16
      %v9718 = vrot.slane %v9716, 5
      %v9719 = vsel %vm312, %v9714, %v9718
      %v9721 = vshrl.u32 %v9525, 16
      %v9723 = vrot.slane %v9721, 4
      %v9724 = vshll.u32 %v9525, 16
      %v9726 = vrot.slane %v9724, 5
      %v9727 = vor.u32 %v9723, %v9726
      %v9728 = vrot.slane %v9727, 4
      %v9730 = vshll.u32 %v9526, 16
      %v9732 = vrot.slane %v9730, 5
      %v9733 = vsel %vm312, %v9728, %v9732
      %v9734 = vshrl.u32 %v9526, 16
      %v9736 = vrot.slane %v9734, 4
      %v9737 = vor.u32 %v9736, %v9732
      %v9738 = vrot.slane %v9737, 4
      %v9740 = vshll.u32 %v9527, 16
      %v9742 = vrot.slane %v9740, 5
      %v9743 = vsel %vm312, %v9738, %v9742
      %v9745 = vshrl.u32 %v9528, 16
      %v9747 = vrot.slane %v9745, 4
      %v9748 = vshll.u32 %v9528, 16
      %v9750 = vrot.slane %v9748, 5
      %v9751 = vor.u32 %v9747, %v9750
      %v9752 = vrot.slane %v9751, 4
      %v9754 = vshll.u32 %v9529, 16
      %v9756 = vrot.slane %v9754, 5
      %v9757 = vsel %vm312, %v9752, %v9756
      %v9758 = vshrl.u32 %v9529, 16
      %v9760 = vrot.slane %v9758, 4
      %v9761 = vor.u32 %v9760, %v9756
      %v9762 = vrot.slane %v9761, 4
      %v9764 = vshll.u32 %v9530, 16
      %v9766 = vrot.slane %v9764, 5
      %v9767 = vsel %vm312, %v9762, %v9766
      %v9769 = vshrl.u32 %v9531, 16
      %v9771 = vrot.slane %v9769, 4
      %v9772 = vshll.u32 %v9531, 16
      %v9774 = vrot.slane %v9772, 5
      %v9775 = vor.u32 %v9771, %v9774
      %v9776 = vrot.slane %v9775, 4
      %v9778 = vshll.u32 %v9532, 16
      %v9780 = vrot.slane %v9778, 5
      %v9781 = vsel %vm312, %v9776, %v9780
      %v9782 = vshrl.u32 %v9532, 16
      %v9784 = vrot.slane %v9782, 4
      %v9785 = vor.u32 %v9784, %v9780
      %v9786 = vrot.slane %v9785, 4
      %v9788 = vshll.u32 %v9533, 16
      %v9790 = vrot.slane %v9788, 5
      %v9791 = vsel %vm312, %v9786, %v9790
      %v9793 = vshrl.u32 %v9534, 16
      %v9795 = vrot.slane %v9793, 4
      %v9796 = vshll.u32 %v9534, 16
      %v9798 = vrot.slane %v9796, 5
      %v9799 = vor.u32 %v9795, %v9798
      %v9800 = vrot.slane %v9799, 4
      %v9802 = vshll.u32 %v9535, 16
      %v9804 = vrot.slane %v9802, 5
      %v9805 = vsel %vm312, %v9800, %v9804
      %v9806 = vshrl.u32 %v9535, 16
      %v9808 = vrot.slane %v9806, 4
      %v9809 = vor.u32 %v9808, %v9804
      %v9810 = vrot.slane %v9809, 4
      %v9812 = vshll.u32 %v9536, 16
      %v9814 = vrot.slane %v9812, 5
      %v9815 = vsel %vm312, %v9810, %v9814
      %v9817 = vshrl.u32 %v9537, 16
      %v9819 = vrot.slane %v9817, 4
      %v9820 = vshll.u32 %v9537, 16
      %v9822 = vrot.slane %v9820, 5
      %v9823 = vor.u32 %v9819, %v9822
      %v9824 = vrot.slane %v9823, 4
      %v9826 = vshll.u32 %v9538, 16
      %v9828 = vrot.slane %v9826, 5
      %v9829 = vsel %vm312, %v9824, %v9828
      %v9830 = vshrl.u32 %v9538, 16
      %v9832 = vrot.slane %v9830, 4
      %v9833 = vor.u32 %v9832, %v9828
      %v9834 = vrot.slane %v9833, 4
      %v9836 = vshll.u32 %v9539, 16
      %v9838 = vrot.slane %v9836, 5
      %v9839 = vsel %vm312, %v9834, %v9838
      %v9841 = vshrl.u32 %v9540, 16
      %v9843 = vrot.slane %v9841, 4
      %v9844 = vshll.u32 %v9540, 16
      %v9846 = vrot.slane %v9844, 5
      %v9847 = vor.u32 %v9843, %v9846
      %v9848 = vrot.slane %v9847, 4
      %v9850 = vshll.u32 %v9541, 16
      %v9852 = vrot.slane %v9850, 5
      %v9853 = vsel %vm312, %v9848, %v9852
      %v9854 = vshrl.u32 %v9541, 16
      %v9856 = vrot.slane %v9854, 4
      %v9857 = vor.u32 %v9856, %v9852
      %v9858 = vrot.slane %v9857, 4
      %v9860 = vshll.u32 %v9542, 16
      %v9862 = vrot.slane %v9860, 5
      %v9863 = vsel %vm312, %v9858, %v9862
      %v9865 = vshrl.u32 %v9543, 16
      %v9867 = vrot.slane %v9865, 4
      %v9868 = vshll.u32 %v9543, 16
      %v9870 = vrot.slane %v9868, 5
      %v9871 = vor.u32 %v9867, %v9870
      %v9872 = vrot.slane %v9871, 4
      %v9874 = vshll.u32 %v9544, 16
      %v9876 = vrot.slane %v9874, 5
      %v9877 = vsel %vm312, %v9872, %v9876
      %v9878 = vshrl.u32 %v9544, 16
      %v9880 = vrot.slane %v9878, 4
      %v9881 = vor.u32 %v9880, %v9876
      %v9882 = vrot.slane %v9881, 4
      %v9884 = vshll.u32 %v9545, 16
      %v9886 = vrot.slane %v9884, 5
      %v9887 = vsel %vm312, %v9882, %v9886
      %v9889 = vshrl.u32 %v9546, 16
      %v9891 = vrot.slane %v9889, 4
      %v9892 = vshll.u32 %v9546, 16
      %v9894 = vrot.slane %v9892, 5
      %v9895 = vor.u32 %v9891, %v9894
      %v9896 = vrot.slane %v9895, 4
      %v9898 = vshll.u32 %v9547, 16
      %v9900 = vrot.slane %v9898, 5
      %v9901 = vsel %vm312, %v9896, %v9900
      %v9902 = vshrl.u32 %v9547, 16
      %v9904 = vrot.slane %v9902, 4
      %v9905 = vor.u32 %v9904, %v9900
      %v9906 = vrot.slane %v9905, 4
      %v9908 = vshll.u32 %v9548, 16
      %v9910 = vrot.slane %v9908, 5
      %v9911 = vsel %vm312, %v9906, %v9910
      %v9913 = vshrl.u32 %v9549, 16
      %v9915 = vrot.slane %v9913, 4
      %v9916 = vshll.u32 %v9549, 16
      %v9918 = vrot.slane %v9916, 5
      %v9919 = vor.u32 %v9915, %v9918
      %v9920 = vrot.slane %v9919, 4
      %v9922 = vshll.u32 %v9550, 16
      %v9924 = vrot.slane %v9922, 5
      %v9925 = vsel %vm312, %v9920, %v9924
      %v9926 = vshrl.u32 %v9550, 16
      %v9928 = vrot.slane %v9926, 4
      %v9929 = vor.u32 %v9928, %v9924
      %v9930 = vrot.slane %v9929, 4
      %v9932 = vshll.u32 %v9551, 16
      %v9934 = vrot.slane %v9932, 5
      %v9935 = vsel %vm312, %v9930, %v9934
      %s9936 = scalar_lea.vmem %s3, 14
      %v9937 = vld [vmem:[%s9936] sm:$0x3]
      %v9938 = vunpack.c.l.b16 %v9565
      %v9939 = vunpack.c.l.b16 %v9575
      %v9940 = vunpack.c.l.b16 %v9589
      %v9941 = vunpack.c.l.b16 %v9599
      %v9942 = vunpack.c.l.b16 %v9613
      %v9943 = vunpack.c.l.b16 %v9623
      %v9944 = vunpack.c.l.b16 %v9637
      %v9945 = vunpack.c.l.b16 %v9647
      %v9946 = vunpack.c.l.b16 %v9661
      %v9947 = vunpack.c.l.b16 %v9671
      %v9948 = vunpack.c.l.b16 %v9685
      %v9949 = vunpack.c.l.b16 %v9695
      %v9950 = vunpack.c.l.b16 %v9709
      %v9951 = vunpack.c.l.b16 %v9719
      %v9952 = vunpack.c.l.b16 %v9733
      %v9953 = vunpack.c.l.b16 %v9743
      %v9954 = vunpack.c.l.b16 %v9757
      %v9955 = vunpack.c.l.b16 %v9767
      %v9956 = vunpack.c.l.b16 %v9781
      %v9957 = vunpack.c.l.b16 %v9791
      %v9958 = vunpack.c.l.b16 %v9805
      %v9959 = vunpack.c.l.b16 %v9815
      %v9960 = vunpack.c.l.b16 %v9829
      %v9961 = vunpack.c.l.b16 %v9839
      %v9962 = vunpack.c.l.b16 %v9853
      %v9963 = vunpack.c.l.b16 %v9863
      %v9964 = vunpack.c.l.b16 %v9877
      %v9965 = vunpack.c.l.b16 %v9887
      %v9966 = vunpack.c.l.b16 %v9901
      %v9967 = vunpack.c.l.b16 %v9911
      %v9968 = vunpack.c.l.b16 %v9925
      %v9969 = vunpack.c.l.b16 %v9935
      %v9970 = vpack.c.b16 %v9939, %v9938
      %v9971 = vpack.c.b16 %v9941, %v9940
      %v9972 = vpack.c.b16 %v9943, %v9942
      %v9973 = vpack.c.b16 %v9945, %v9944
      %v9974 = vpack.c.b16 %v9947, %v9946
      %v9975 = vpack.c.b16 %v9949, %v9948
      %v9976 = vpack.c.b16 %v9951, %v9950
      %v9977 = vpack.c.b16 %v9953, %v9952
      %v9978 = vpack.c.b16 %v9955, %v9954
      %v9979 = vpack.c.b16 %v9957, %v9956
      %v9980 = vpack.c.b16 %v9959, %v9958
      %v9981 = vpack.c.b16 %v9961, %v9960
      %v9982 = vpack.c.b16 %v9963, %v9962
      %v9983 = vpack.c.b16 %v9965, %v9964
      %v9984 = vpack.c.b16 %v9967, %v9966
      %v9985 = vpack.c.b16 %v9969, %v9968
      %v9987 = vsel %vm801, %v9970, 0
      %v9990 = vsel %vm801, %v9971, 0
      %v9993 = vsel %vm801, %v9972, 0
      %v9996 = vsel %vm801, %v9973, 0
      %v9999 = vsel %vm801, %v9974, 0
      %v10002 = vsel %vm801, %v9975, 0
      %v10005 = vsel %vm801, %v9976, 0
      %v10008 = vsel %vm801, %v9977, 0
      %v10011 = vsel %vm801, %v9978, 0
      %v10014 = vsel %vm801, %v9979, 0
      %v10017 = vsel %vm801, %v9980, 0
      %v10020 = vsel %vm801, %v9981, 0
      %v10023 = vsel %vm801, %v9982, 0
      %v10026 = vsel %vm801, %v9983, 0
      %v10029 = vsel %vm801, %v9984, 0
      %v10032 = vsel %vm801, %v9985, 0
      %v10035 = vsel %vm856, %v9937, 0
      %10037 = vmatprep.subr.bf16.mxu0 0
      %10038 = vmatpush1.bf16.msra.mxu0 %v10035
      %10039 = vmatprep.subr.bf16.mxu0 0
      %10040 = vmatpush1.bf16.msra.mxu0 0
      %10041 = vmatprep.subr.bf16.mxu0 0
      %10042 = vmatpush1.bf16.msra.mxu0 0
      %10043 = vmatprep.subr.bf16.mxu0 0
      %10044 = vmatpush1.bf16.msra.mxu0 0
      %10045 = vmatprep.subr.bf16.mxu0 0
      %10046 = vmatpush1.bf16.msra.mxu0 0
      %10047 = vmatprep.subr.bf16.mxu0 0
      %10048 = vmatpush1.bf16.msra.mxu0 0
      %10049 = vmatprep.subr.bf16.mxu0 0
      %10050 = vmatpush1.bf16.msra.mxu0 0
      %10051 = vmatprep.subr.bf16.mxu0 0
      %10052 = vmatpush1.bf16.msra.mxu0 0
      %10053 = vmatprep.subr.bf16.mxu0 0
      %10054 = vmatpush1.bf16.msra.mxu0 0
      %10055 = vmatprep.subr.bf16.mxu0 0
      %10056 = vmatpush1.bf16.msra.mxu0 0
      %10057 = vmatprep.subr.bf16.mxu0 0
      %10058 = vmatpush1.bf16.msra.mxu0 0
      %10059 = vmatprep.subr.bf16.mxu0 0
      %10060 = vmatpush1.bf16.msra.mxu0 0
      %10061 = vmatprep.subr.bf16.mxu0 0
      %10062 = vmatpush1.bf16.msra.mxu0 0
      %10063 = vmatprep.subr.bf16.mxu0 0
      %10064 = vmatpush1.bf16.msra.mxu0 0
      %10065 = vmatprep.subr.bf16.mxu0 0
      %10066 = vmatpush1.bf16.msra.mxu0 0
      %10067 = vmatprep.subr.bf16.mxu0 0
      %10068 = vmatpush1.bf16.msra.mxu0 0
      %10069 = vmatprep.mubr.bf16.mxu0 0
      %10070 = vmatmul.mubr.bf16.gmra.mrb[0].mxu0 %v9987
      %v10071 = vpop.f32.mrb[0].mxu0
      %v10072 = vadd.f32 0.0, %v10071
      %v10073 = vpop.f32.mrb[0].mxu0
      %v10074 = vpop.f32.mrb[0].mxu0
      %v10075 = vadd.f32 0.0, %v10074
      %v10076 = vpop.f32.mrb[0].mxu0
      %10077 = vmatprep.mubr.bf16.mxu0 0
      %10078 = vmatmul.mubr.bf16.gmra.mrb[0].mxu0 %v9990
      %v10079 = vpop.f32.mrb[0].mxu0
      %v10080 = vadd.f32 0.0, %v10079
      %v10081 = vpop.f32.mrb[0].mxu0
      %v10082 = vpop.f32.mrb[0].mxu0
      %v10083 = vadd.f32 0.0, %v10082
      %v10084 = vpop.f32.mrb[0].mxu0
      %10085 = vmatprep.mubr.bf16.mxu0 0
      %10086 = vmatmul.mubr.bf16.gmra.mrb[0].mxu0 %v9993
      %v10087 = vpop.f32.mrb[0].mxu0
      %v10088 = vadd.f32 0.0, %v10087
      %v10089 = vpop.f32.mrb[0].mxu0
      %v10090 = vpop.f32.mrb[0].mxu0
      %v10091 = vadd.f32 0.0, %v10090
      %v10092 = vpop.f32.mrb[0].mxu0
      %10093 = vmatprep.mubr.bf16.mxu0 0
      %10094 = vmatmul.mubr.bf16.gmra.mrb[0].mxu0 %v9996
      %v10095 = vpop.f32.mrb[0].mxu0
      %v10096 = vadd.f32 0.0, %v10095
      %v10097 = vpop.f32.mrb[0].mxu0
      %v10098 = vpop.f32.mrb[0].mxu0
      %v10099 = vadd.f32 0.0, %v10098
      %v10100 = vpop.f32.mrb[0].mxu0
      %10101 = vmatprep.mubr.bf16.mxu0 0
      %10102 = vmatmul.mubr.bf16.gmra.mrb[0].mxu0 %v9999
      %v10103 = vpop.f32.mrb[0].mxu0
      %v10104 = vadd.f32 0.0, %v10103
      %v10105 = vpop.f32.mrb[0].mxu0
      %v10106 = vpop.f32.mrb[0].mxu0
      %v10107 = vadd.f32 0.0, %v10106
      %v10108 = vpop.f32.mrb[0].mxu0
      %10109 = vmatprep.mubr.bf16.mxu0 0
      %10110 = vmatmul.mubr.bf16.gmra.mrb[0].mxu0 %v10002
      %v10111 = vpop.f32.mrb[0].mxu0
      %v10112 = vadd.f32 0.0, %v10111
      %v10113 = vpop.f32.mrb[0].mxu0
      %v10114 = vpop.f32.mrb[0].mxu0
      %v10115 = vadd.f32 0.0, %v10114
      %v10116 = vpop.f32.mrb[0].mxu0
      %10117 = vmatprep.mubr.bf16.mxu0 0
      %10118 = vmatmul.mubr.bf16.gmra.mrb[0].mxu0 %v10005
      %v10119 = vpop.f32.mrb[0].mxu0
      %v10120 = vadd.f32 0.0, %v10119
      %v10121 = vpop.f32.mrb[0].mxu0
      %v10122 = vpop.f32.mrb[0].mxu0
      %v10123 = vadd.f32 0.0, %v10122
      %v10124 = vpop.f32.mrb[0].mxu0
      %10125 = vmatprep.mubr.bf16.mxu0 0
      %10126 = vmatmul.mubr.bf16.gmra.mrb[0].mxu0 %v10008
      %v10127 = vpop.f32.mrb[0].mxu0
      %v10128 = vadd.f32 0.0, %v10127
      %v10129 = vpop.f32.mrb[0].mxu0
      %v10130 = vpop.f32.mrb[0].mxu0
      %v10131 = vadd.f32 0.0, %v10130
      %v10132 = vpop.f32.mrb[0].mxu0
      %10133 = vmatprep.mubr.bf16.mxu0 0
      %10134 = vmatmul.mubr.bf16.gmra.mrb[0].mxu0 %v10011
      %v10135 = vpop.f32.mrb[0].mxu0
      %v10136 = vadd.f32 0.0, %v10135
      %v10137 = vpop.f32.mrb[0].mxu0
      %v10138 = vpop.f32.mrb[0].mxu0
      %v10139 = vadd.f32 0.0, %v10138
      %v10140 = vpop.f32.mrb[0].mxu0
      %10141 = vmatprep.mubr.bf16.mxu0 0
      %10142 = vmatmul.mubr.bf16.gmra.mrb[0].mxu0 %v10014
      %v10143 = vpop.f32.mrb[0].mxu0
      %v10144 = vadd.f32 0.0, %v10143
      %v10145 = vpop.f32.mrb[0].mxu0
      %v10146 = vpop.f32.mrb[0].mxu0
      %v10147 = vadd.f32 0.0, %v10146
      %v10148 = vpop.f32.mrb[0].mxu0
      %10149 = vmatprep.mubr.bf16.mxu0 0
      %10150 = vmatmul.mubr.bf16.gmra.mrb[0].mxu0 %v10017
      %v10151 = vpop.f32.mrb[0].mxu0
      %v10152 = vadd.f32 0.0, %v10151
      %v10153 = vpop.f32.mrb[0].mxu0
      %v10154 = vpop.f32.mrb[0].mxu0
      %v10155 = vadd.f32 0.0, %v10154
      %v10156 = vpop.f32.mrb[0].mxu0
      %10157 = vmatprep.mubr.bf16.mxu0 0
      %10158 = vmatmul.mubr.bf16.gmra.mrb[0].mxu0 %v10020
      %v10159 = vpop.f32.mrb[0].mxu0
      %v10160 = vadd.f32 0.0, %v10159
      %v10161 = vpop.f32.mrb[0].mxu0
      %v10162 = vpop.f32.mrb[0].mxu0
      %v10163 = vadd.f32 0.0, %v10162
      %v10164 = vpop.f32.mrb[0].mxu0
      %10165 = vmatprep.mubr.bf16.mxu0 0
      %10166 = vmatmul.mubr.bf16.gmra.mrb[0].mxu0 %v10023
      %v10167 = vpop.f32.mrb[0].mxu0
      %v10168 = vadd.f32 0.0, %v10167
      %v10169 = vpop.f32.mrb[0].mxu0
      %v10170 = vpop.f32.mrb[0].mxu0
      %v10171 = vadd.f32 0.0, %v10170
      %v10172 = vpop.f32.mrb[0].mxu0
      %10173 = vmatprep.mubr.bf16.mxu0 0
      %10174 = vmatmul.mubr.bf16.gmra.mrb[0].mxu0 %v10026
      %v10175 = vpop.f32.mrb[0].mxu0
      %v10176 = vadd.f32 0.0, %v10175
      %v10177 = vpop.f32.mrb[0].mxu0
      %v10178 = vpop.f32.mrb[0].mxu0
      %v10179 = vadd.f32 0.0, %v10178
      %v10180 = vpop.f32.mrb[0].mxu0
      %10181 = vmatprep.mubr.bf16.mxu0 0
      %10182 = vmatmul.mubr.bf16.gmra.mrb[0].mxu0 %v10029
      %v10183 = vpop.f32.mrb[0].mxu0
      %v10184 = vadd.f32 0.0, %v10183
      %v10185 = vpop.f32.mrb[0].mxu0
      %v10186 = vpop.f32.mrb[0].mxu0
      %v10187 = vadd.f32 0.0, %v10186
      %v10188 = vpop.f32.mrb[0].mxu0
      %10189 = vmatprep.mubr.bf16.mxu0 0
      %10190 = vmatmul.mubr.bf16.gmra.mrb[0].mxu0 %v10032
      %v10191 = vpop.f32.mrb[0].mxu0
      %v10192 = vadd.f32 0.0, %v10191
      %v10193 = vpop.f32.mrb[0].mxu0
      %v10194 = vpop.f32.mrb[0].mxu0
      %v10195 = vadd.f32 0.0, %v10194
      %v10196 = vpop.f32.mrb[0].mxu0
      %10197 = vdwg.mxu0
      %v10198 = vadd.f32 %v9472, %v10072
      %v10199 = vadd.f32 %v9473, %v10075
      %v10200 = vadd.f32 %v9474, %v10080
      %v10201 = vadd.f32 %v9475, %v10083
      %v10202 = vadd.f32 %v9476, %v10088
      %v10203 = vadd.f32 %v9477, %v10091
      %v10204 = vadd.f32 %v9478, %v10096
      %v10205 = vadd.f32 %v9479, %v10099
      %v10206 = vadd.f32 %v9480, %v10104
      %v10207 = vadd.f32 %v9481, %v10107
      %v10208 = vadd.f32 %v9482, %v10112
      %v10209 = vadd.f32 %v9483, %v10115
      %v10210 = vadd.f32 %v9484, %v10120
      %v10211 = vadd.f32 %v9485, %v10123
      %v10212 = vadd.f32 %v9486, %v10128
      %v10213 = vadd.f32 %v9487, %v10131
      %v10214 = vadd.f32 %v9488, %v10136
      %v10215 = vadd.f32 %v9489, %v10139
      %v10216 = vadd.f32 %v9490, %v10144
      %v10217 = vadd.f32 %v9491, %v10147
      %v10218 = vadd.f32 %v9492, %v10152
      %v10219 = vadd.f32 %v9493, %v10155
      %v10220 = vadd.f32 %v9494, %v10160
      %v10221 = vadd.f32 %v9495, %v10163
      %v10222 = vadd.f32 %v9496, %v10168
      %v10223 = vadd.f32 %v9497, %v10171
      %v10224 = vadd.f32 %v9498, %v10176
      %v10225 = vadd.f32 %v9499, %v10179
      %v10226 = vadd.f32 %v9500, %v10184
      %v10227 = vadd.f32 %v9501, %v10187
      %v10228 = vadd.f32 %v9502, %v10192
      %v10229 = vadd.f32 %v9503, %v10195
      %v10230 = vld [vmem:[%s9145] sm:$0xe]
      %v10231 = vld [vmem:[%s9145 + $0xc] sm:$0xe]
      %v10232 = vld [vmem:[%s9145 + $0x18] sm:$0xe]
      %v10233 = vld [vmem:[%s9145 + $0x24] sm:$0xe]
      %v10234 = vld [vmem:[%s9145 + $0x30] sm:$0xe]
      %v10235 = vld [vmem:[%s9145 + $0x3c] sm:$0xe]
      %v10236 = vld [vmem:[%s9145 + $0x48] sm:$0xe]
      %v10237 = vld [vmem:[%s9145 + $0x54] sm:$0xe]
      %v10238 = vld [vmem:[%s9145 + $0x60] sm:$0xe]
      %v10239 = vld [vmem:[%s9145 + $0x6c] sm:$0xe]
      %v10240 = vld [vmem:[%s9145 + $0x78] sm:$0xe]
      %v10241 = vld [vmem:[%s9145 + $0x84] sm:$0xe]
      %v10242 = vld [vmem:[%s9145 + $0x90] sm:$0xe]
      %v10243 = vld [vmem:[%s9145 + $0x9c] sm:$0xe]
      %v10244 = vld [vmem:[%s9145 + $0xa8] sm:$0xe]
      %v10245 = vld [vmem:[%s9145 + $0xb4] sm:$0xe]
      %v10294 = vrot.slane %v10230, 5
      %v10295 = vrot.slane %v10294, 4
      %v10296 = vrot.slane %v9505, 5
      %v10297 = vsel %vm1417, %v10295, %v10296
      %v10298 = vrot.slane %v10296, 4
      %v10299 = vrot.slane %v9506, 5
      %v10300 = vsel %vm1417, %v10298, %v10299
      %v10301 = vrot.slane %v10231, 5
      %v10302 = vrot.slane %v10301, 4
      %v10303 = vrot.slane %v9508, 5
      %v10304 = vsel %vm1417, %v10302, %v10303
      %v10305 = vrot.slane %v10303, 4
      %v10306 = vrot.slane %v9509, 5
      %v10307 = vsel %vm1417, %v10305, %v10306
      %v10308 = vrot.slane %v10232, 5
      %v10309 = vrot.slane %v10308, 4
      %v10310 = vrot.slane %v9511, 5
      %v10311 = vsel %vm1417, %v10309, %v10310
      %v10312 = vrot.slane %v10310, 4
      %v10313 = vrot.slane %v9512, 5
      %v10314 = vsel %vm1417, %v10312, %v10313
      %v10315 = vrot.slane %v10233, 5
      %v10316 = vrot.slane %v10315, 4
      %v10317 = vrot.slane %v9514, 5
      %v10318 = vsel %vm1417, %v10316, %v10317
      %v10319 = vrot.slane %v10317, 4
      %v10320 = vrot.slane %v9515, 5
      %v10321 = vsel %vm1417, %v10319, %v10320
      %v10322 = vrot.slane %v10234, 5
      %v10323 = vrot.slane %v10322, 4
      %v10324 = vrot.slane %v9517, 5
      %v10325 = vsel %vm1417, %v10323, %v10324
      %v10326 = vrot.slane %v10324, 4
      %v10327 = vrot.slane %v9518, 5
      %v10328 = vsel %vm1417, %v10326, %v10327
      %v10329 = vrot.slane %v10235, 5
      %v10330 = vrot.slane %v10329, 4
      %v10331 = vrot.slane %v9520, 5
      %v10332 = vsel %vm1417, %v10330, %v10331
      %v10333 = vrot.slane %v10331, 4
      %v10334 = vrot.slane %v9521, 5
      %v10335 = vsel %vm1417, %v10333, %v10334
      %v10336 = vrot.slane %v10236, 5
      %v10337 = vrot.slane %v10336, 4
      %v10338 = vrot.slane %v9523, 5
      %v10339 = vsel %vm1417, %v10337, %v10338
      %v10340 = vrot.slane %v10338, 4
      %v10341 = vrot.slane %v9524, 5
      %v10342 = vsel %vm1417, %v10340, %v10341
      %v10343 = vrot.slane %v10237, 5
      %v10344 = vrot.slane %v10343, 4
      %v10345 = vrot.slane %v9526, 5
      %v10346 = vsel %vm1417, %v10344, %v10345
      %v10347 = vrot.slane %v10345, 4
      %v10348 = vrot.slane %v9527, 5
      %v10349 = vsel %vm1417, %v10347, %v10348
      %v10350 = vrot.slane %v10238, 5
      %v10351 = vrot.slane %v10350, 4
      %v10352 = vrot.slane %v9529, 5
      %v10353 = vsel %vm1417, %v10351, %v10352
      %v10354 = vrot.slane %v10352, 4
      %v10355 = vrot.slane %v9530, 5
      %v10356 = vsel %vm1417, %v10354, %v10355
      %v10357 = vrot.slane %v10239, 5
      %v10358 = vrot.slane %v10357, 4
      %v10359 = vrot.slane %v9532, 5
      %v10360 = vsel %vm1417, %v10358, %v10359
      %v10361 = vrot.slane %v10359, 4
      %v10362 = vrot.slane %v9533, 5
      %v10363 = vsel %vm1417, %v10361, %v10362
      %v10364 = vrot.slane %v10240, 5
      %v10365 = vrot.slane %v10364, 4
      %v10366 = vrot.slane %v9535, 5
      %v10367 = vsel %vm1417, %v10365, %v10366
      %v10368 = vrot.slane %v10366, 4
      %v10369 = vrot.slane %v9536, 5
      %v10370 = vsel %vm1417, %v10368, %v10369
      %v10371 = vrot.slane %v10241, 5
      %v10372 = vrot.slane %v10371, 4
      %v10373 = vrot.slane %v9538, 5
      %v10374 = vsel %vm1417, %v10372, %v10373
      %v10375 = vrot.slane %v10373, 4
      %v10376 = vrot.slane %v9539, 5
      %v10377 = vsel %vm1417, %v10375, %v10376
      %v10378 = vrot.slane %v10242, 5
      %v10379 = vrot.slane %v10378, 4
      %v10380 = vrot.slane %v9541, 5
      %v10381 = vsel %vm1417, %v10379, %v10380
      %v10382 = vrot.slane %v10380, 4
      %v10383 = vrot.slane %v9542, 5
      %v10384 = vsel %vm1417, %v10382, %v10383
      %v10385 = vrot.slane %v10243, 5
      %v10386 = vrot.slane %v10385, 4
      %v10387 = vrot.slane %v9544, 5
      %v10388 = vsel %vm1417, %v10386, %v10387
      %v10389 = vrot.slane %v10387, 4
      %v10390 = vrot.slane %v9545, 5
      %v10391 = vsel %vm1417, %v10389, %v10390
      %v10392 = vrot.slane %v10244, 5
      %v10393 = vrot.slane %v10392, 4
      %v10394 = vrot.slane %v9547, 5
      %v10395 = vsel %vm1417, %v10393, %v10394
      %v10396 = vrot.slane %v10394, 4
      %v10397 = vrot.slane %v9548, 5
      %v10398 = vsel %vm1417, %v10396, %v10397
      %v10399 = vrot.slane %v10245, 5
      %v10400 = vrot.slane %v10399, 4
      %v10401 = vrot.slane %v9550, 5
      %v10402 = vsel %vm1417, %v10400, %v10401
      %v10403 = vrot.slane %v10401, 4
      %v10404 = vrot.slane %v9551, 5
      %v10405 = vsel %vm1417, %v10403, %v10404
      %s10406 = scalar_lea.vmem %s3, 16
      %v10407 = vld [vmem:[%s10406] sm:$0x3]
      %v10408 = vunpack.c.l.b16 %v10297
      %v10409 = vunpack.c.l.b16 %v10300
      %v10410 = vunpack.c.l.b16 %v10304
      %v10411 = vunpack.c.l.b16 %v10307
      %v10412 = vunpack.c.l.b16 %v10311
      %v10413 = vunpack.c.l.b16 %v10314
      %v10414 = vunpack.c.l.b16 %v10318
      %v10415 = vunpack.c.l.b16 %v10321
      %v10416 = vunpack.c.l.b16 %v10325
      %v10417 = vunpack.c.l.b16 %v10328
      %v10418 = vunpack.c.l.b16 %v10332
      %v10419 = vunpack.c.l.b16 %v10335
      %v10420 = vunpack.c.l.b16 %v10339
      %v10421 = vunpack.c.l.b16 %v10342
      %v10422 = vunpack.c.l.b16 %v10346
      %v10423 = vunpack.c.l.b16 %v10349
      %v10424 = vunpack.c.l.b16 %v10353
      %v10425 = vunpack.c.l.b16 %v10356
      %v10426 = vunpack.c.l.b16 %v10360
      %v10427 = vunpack.c.l.b16 %v10363
      %v10428 = vunpack.c.l.b16 %v10367
      %v10429 = vunpack.c.l.b16 %v10370
      %v10430 = vunpack.c.l.b16 %v10374
      %v10431 = vunpack.c.l.b16 %v10377
      %v10432 = vunpack.c.l.b16 %v10381
      %v10433 = vunpack.c.l.b16 %v10384
      %v10434 = vunpack.c.l.b16 %v10388
      %v10435 = vunpack.c.l.b16 %v10391
      %v10436 = vunpack.c.l.b16 %v10395
      %v10437 = vunpack.c.l.b16 %v10398
      %v10438 = vunpack.c.l.b16 %v10402
      %v10439 = vunpack.c.l.b16 %v10405
      %v10440 = vpack.c.b16 %v10409, %v10408
      %v10441 = vpack.c.b16 %v10411, %v10410
      %v10442 = vpack.c.b16 %v10413, %v10412
      %v10443 = vpack.c.b16 %v10415, %v10414
      %v10444 = vpack.c.b16 %v10417, %v10416
      %v10445 = vpack.c.b16 %v10419, %v10418
      %v10446 = vpack.c.b16 %v10421, %v10420
      %v10447 = vpack.c.b16 %v10423, %v10422
      %v10448 = vpack.c.b16 %v10425, %v10424
      %v10449 = vpack.c.b16 %v10427, %v10426
      %v10450 = vpack.c.b16 %v10429, %v10428
      %v10451 = vpack.c.b16 %v10431, %v10430
      %v10452 = vpack.c.b16 %v10433, %v10432
      %v10453 = vpack.c.b16 %v10435, %v10434
      %v10454 = vpack.c.b16 %v10437, %v10436
      %v10455 = vpack.c.b16 %v10439, %v10438
      %v10457 = vsel %vm801, %v10440, 0
      %v10460 = vsel %vm801, %v10441, 0
      %v10463 = vsel %vm801, %v10442, 0
      %v10466 = vsel %vm801, %v10443, 0
      %v10469 = vsel %vm801, %v10444, 0
      %v10472 = vsel %vm801, %v10445, 0
      %v10475 = vsel %vm801, %v10446, 0
      %v10478 = vsel %vm801, %v10447, 0
      %v10481 = vsel %vm801, %v10448, 0
      %v10484 = vsel %vm801, %v10449, 0
      %v10487 = vsel %vm801, %v10450, 0
      %v10490 = vsel %vm801, %v10451, 0
      %v10493 = vsel %vm801, %v10452, 0
      %v10496 = vsel %vm801, %v10453, 0
      %v10499 = vsel %vm801, %v10454, 0
      %v10502 = vsel %vm801, %v10455, 0
      %v10505 = vsel %vm856, %v10407, 0
      %10507 = vmatprep.subr.bf16.mxu0 0
      %10508 = vmatpush1.bf16.msra.mxu0 %v10505
      %10509 = vmatprep.subr.bf16.mxu0 0
      %10510 = vmatpush1.bf16.msra.mxu0 0
      %10511 = vmatprep.subr.bf16.mxu0 0
      %10512 = vmatpush1.bf16.msra.mxu0 0
      %10513 = vmatprep.subr.bf16.mxu0 0
      %10514 = vmatpush1.bf16.msra.mxu0 0
      %10515 = vmatprep.subr.bf16.mxu0 0
      %10516 = vmatpush1.bf16.msra.mxu0 0
      %10517 = vmatprep.subr.bf16.mxu0 0
      %10518 = vmatpush1.bf16.msra.mxu0 0
      %10519 = vmatprep.subr.bf16.mxu0 0
      %10520 = vmatpush1.bf16.msra.mxu0 0
      %10521 = vmatprep.subr.bf16.mxu0 0
      %10522 = vmatpush1.bf16.msra.mxu0 0
      %10523 = vmatprep.subr.bf16.mxu0 0
      %10524 = vmatpush1.bf16.msra.mxu0 0
      %10525 = vmatprep.subr.bf16.mxu0 0
      %10526 = vmatpush1.bf16.msra.mxu0 0
      %10527 = vmatprep.subr.bf16.mxu0 0
      %10528 = vmatpush1.bf16.msra.mxu0 0
      %10529 = vmatprep.subr.bf16.mxu0 0
      %10530 = vmatpush1.bf16.msra.mxu0 0
      %10531 = vmatprep.subr.bf16.mxu0 0
      %10532 = vmatpush1.bf16.msra.mxu0 0
      %10533 = vmatprep.subr.bf16.mxu0 0
      %10534 = vmatpush1.bf16.msra.mxu0 0
      %10535 = vmatprep.subr.bf16.mxu0 0
      %10536 = vmatpush1.bf16.msra.mxu0 0
      %10537 = vmatprep.subr.bf16.mxu0 0
      %10538 = vmatpush1.bf16.msra.mxu0 0
      %10539 = vmatprep.mubr.bf16.mxu0 0
      %10540 = vmatmul.mubr.bf16.gmra.mrb[0].mxu0 %v10457
      %v10541 = vpop.f32.mrb[0].mxu0
      %v10542 = vadd.f32 0.0, %v10541
      %v10543 = vpop.f32.mrb[0].mxu0
      %v10544 = vpop.f32.mrb[0].mxu0
      %v10545 = vadd.f32 0.0, %v10544
      %v10546 = vpop.f32.mrb[0].mxu0
      %10547 = vmatprep.mubr.bf16.mxu0 0
      %10548 = vmatmul.mubr.bf16.gmra.mrb[0].mxu0 %v10460
      %v10549 = vpop.f32.mrb[0].mxu0
      %v10550 = vadd.f32 0.0, %v10549
      %v10551 = vpop.f32.mrb[0].mxu0
      %v10552 = vpop.f32.mrb[0].mxu0
      %v10553 = vadd.f32 0.0, %v10552
      %v10554 = vpop.f32.mrb[0].mxu0
      %10555 = vmatprep.mubr.bf16.mxu0 0
      %10556 = vmatmul.mubr.bf16.gmra.mrb[0].mxu0 %v10463
      %v10557 = vpop.f32.mrb[0].mxu0
      %v10558 = vadd.f32 0.0, %v10557
      %v10559 = vpop.f32.mrb[0].mxu0
      %v10560 = vpop.f32.mrb[0].mxu0
      %v10561 = vadd.f32 0.0, %v10560
      %v10562 = vpop.f32.mrb[0].mxu0
      %10563 = vmatprep.mubr.bf16.mxu0 0
      %10564 = vmatmul.mubr.bf16.gmra.mrb[0].mxu0 %v10466
      %v10565 = vpop.f32.mrb[0].mxu0
      %v10566 = vadd.f32 0.0, %v10565
      %v10567 = vpop.f32.mrb[0].mxu0
      %v10568 = vpop.f32.mrb[0].mxu0
      %v10569 = vadd.f32 0.0, %v10568
      %v10570 = vpop.f32.mrb[0].mxu0
      %10571 = vmatprep.mubr.bf16.mxu0 0
      %10572 = vmatmul.mubr.bf16.gmra.mrb[0].mxu0 %v10469
      %v10573 = vpop.f32.mrb[0].mxu0
      %v10574 = vadd.f32 0.0, %v10573
      %v10575 = vpop.f32.mrb[0].mxu0
      %v10576 = vpop.f32.mrb[0].mxu0
      %v10577 = vadd.f32 0.0, %v10576
      %v10578 = vpop.f32.mrb[0].mxu0
      %10579 = vmatprep.mubr.bf16.mxu0 0
      %10580 = vmatmul.mubr.bf16.gmra.mrb[0].mxu0 %v10472
      %v10581 = vpop.f32.mrb[0].mxu0
      %v10582 = vadd.f32 0.0, %v10581
      %v10583 = vpop.f32.mrb[0].mxu0
      %v10584 = vpop.f32.mrb[0].mxu0
      %v10585 = vadd.f32 0.0, %v10584
      %v10586 = vpop.f32.mrb[0].mxu0
      %10587 = vmatprep.mubr.bf16.mxu0 0
      %10588 = vmatmul.mubr.bf16.gmra.mrb[0].mxu0 %v10475
      %v10589 = vpop.f32.mrb[0].mxu0
      %v10590 = vadd.f32 0.0, %v10589
      %v10591 = vpop.f32.mrb[0].mxu0
      %v10592 = vpop.f32.mrb[0].mxu0
      %v10593 = vadd.f32 0.0, %v10592
      %v10594 = vpop.f32.mrb[0].mxu0
      %10595 = vmatprep.mubr.bf16.mxu0 0
      %10596 = vmatmul.mubr.bf16.gmra.mrb[0].mxu0 %v10478
      %v10597 = vpop.f32.mrb[0].mxu0
      %v10598 = vadd.f32 0.0, %v10597
      %v10599 = vpop.f32.mrb[0].mxu0
      %v10600 = vpop.f32.mrb[0].mxu0
      %v10601 = vadd.f32 0.0, %v10600
      %v10602 = vpop.f32.mrb[0].mxu0
      %10603 = vmatprep.mubr.bf16.mxu0 0
      %10604 = vmatmul.mubr.bf16.gmra.mrb[0].mxu0 %v10481
      %v10605 = vpop.f32.mrb[0].mxu0
      %v10606 = vadd.f32 0.0, %v10605
      %v10607 = vpop.f32.mrb[0].mxu0
      %v10608 = vpop.f32.mrb[0].mxu0
      %v10609 = vadd.f32 0.0, %v10608
      %v10610 = vpop.f32.mrb[0].mxu0
      %10611 = vmatprep.mubr.bf16.mxu0 0
      %10612 = vmatmul.mubr.bf16.gmra.mrb[0].mxu0 %v10484
      %v10613 = vpop.f32.mrb[0].mxu0
      %v10614 = vadd.f32 0.0, %v10613
      %v10615 = vpop.f32.mrb[0].mxu0
      %v10616 = vpop.f32.mrb[0].mxu0
      %v10617 = vadd.f32 0.0, %v10616
      %v10618 = vpop.f32.mrb[0].mxu0
      %10619 = vmatprep.mubr.bf16.mxu0 0
      %10620 = vmatmul.mubr.bf16.gmra.mrb[0].mxu0 %v10487
      %v10621 = vpop.f32.mrb[0].mxu0
      %v10622 = vadd.f32 0.0, %v10621
      %v10623 = vpop.f32.mrb[0].mxu0
      %v10624 = vpop.f32.mrb[0].mxu0
      %v10625 = vadd.f32 0.0, %v10624
      %v10626 = vpop.f32.mrb[0].mxu0
      %10627 = vmatprep.mubr.bf16.mxu0 0
      %10628 = vmatmul.mubr.bf16.gmra.mrb[0].mxu0 %v10490
      %v10629 = vpop.f32.mrb[0].mxu0
      %v10630 = vadd.f32 0.0, %v10629
      %v10631 = vpop.f32.mrb[0].mxu0
      %v10632 = vpop.f32.mrb[0].mxu0
      %v10633 = vadd.f32 0.0, %v10632
      %v10634 = vpop.f32.mrb[0].mxu0
      %10635 = vmatprep.mubr.bf16.mxu0 0
      %10636 = vmatmul.mubr.bf16.gmra.mrb[0].mxu0 %v10493
      %v10637 = vpop.f32.mrb[0].mxu0
      %v10638 = vadd.f32 0.0, %v10637
      %v10639 = vpop.f32.mrb[0].mxu0
      %v10640 = vpop.f32.mrb[0].mxu0
      %v10641 = vadd.f32 0.0, %v10640
      %v10642 = vpop.f32.mrb[0].mxu0
      %10643 = vmatprep.mubr.bf16.mxu0 0
      %10644 = vmatmul.mubr.bf16.gmra.mrb[0].mxu0 %v10496
      %v10645 = vpop.f32.mrb[0].mxu0
      %v10646 = vadd.f32 0.0, %v10645
      %v10647 = vpop.f32.mrb[0].mxu0
      %v10648 = vpop.f32.mrb[0].mxu0
      %v10649 = vadd.f32 0.0, %v10648
      %v10650 = vpop.f32.mrb[0].mxu0
      %10651 = vmatprep.mubr.bf16.mxu0 0
      %10652 = vmatmul.mubr.bf16.gmra.mrb[0].mxu0 %v10499
      %v10653 = vpop.f32.mrb[0].mxu0
      %v10654 = vadd.f32 0.0, %v10653
      %v10655 = vpop.f32.mrb[0].mxu0
      %v10656 = vpop.f32.mrb[0].mxu0
      %v10657 = vadd.f32 0.0, %v10656
      %v10658 = vpop.f32.mrb[0].mxu0
      %10659 = vmatprep.mubr.bf16.mxu0 0
      %10660 = vmatmul.mubr.bf16.gmra.mrb[0].mxu0 %v10502
      %v10661 = vpop.f32.mrb[0].mxu0
      %v10662 = vadd.f32 0.0, %v10661
      %v10663 = vpop.f32.mrb[0].mxu0
      %v10664 = vpop.f32.mrb[0].mxu0
      %v10665 = vadd.f32 0.0, %v10664
      %v10666 = vpop.f32.mrb[0].mxu0
      %10667 = vdwg.mxu0
      %v10668 = vadd.f32 %v10198, %v10542
      %v10669 = vadd.f32 %v10199, %v10545
      %v10670 = vadd.f32 %v10200, %v10550
      %v10671 = vadd.f32 %v10201, %v10553
      %v10672 = vadd.f32 %v10202, %v10558
      %v10673 = vadd.f32 %v10203, %v10561
      %v10674 = vadd.f32 %v10204, %v10566
      %v10675 = vadd.f32 %v10205, %v10569
      %v10676 = vadd.f32 %v10206, %v10574
      %v10677 = vadd.f32 %v10207, %v10577
      %v10678 = vadd.f32 %v10208, %v10582
      %v10679 = vadd.f32 %v10209, %v10585
      %v10680 = vadd.f32 %v10210, %v10590
      %v10681 = vadd.f32 %v10211, %v10593
      %v10682 = vadd.f32 %v10212, %v10598
      %v10683 = vadd.f32 %v10213, %v10601
      %v10684 = vadd.f32 %v10214, %v10606
      %v10685 = vadd.f32 %v10215, %v10609
      %v10686 = vadd.f32 %v10216, %v10614
      %v10687 = vadd.f32 %v10217, %v10617
      %v10688 = vadd.f32 %v10218, %v10622
      %v10689 = vadd.f32 %v10219, %v10625
      %v10690 = vadd.f32 %v10220, %v10630
      %v10691 = vadd.f32 %v10221, %v10633
      %v10692 = vadd.f32 %v10222, %v10638
      %v10693 = vadd.f32 %v10223, %v10641
      %v10694 = vadd.f32 %v10224, %v10646
      %v10695 = vadd.f32 %v10225, %v10649
      %v10696 = vadd.f32 %v10226, %v10654
      %v10697 = vadd.f32 %v10227, %v10657
      %v10698 = vadd.f32 %v10228, %v10662
      %v10699 = vadd.f32 %v10229, %v10665
      %v10700 = vld [vmem:[%s3611] sm:$0xf]
      %v10701 = vld [vmem:[%s3611 + $0x4] sm:$0xf]
      %v10702 = vld [vmem:[%s3611 + $0x8] sm:$0x1]
      %v10703 = vld [vmem:[%s3611 + $0xc] sm:$0xf]
      %v10704 = vld [vmem:[%s3611 + $0x10] sm:$0xf]
      %v10705 = vld [vmem:[%s3611 + $0x14] sm:$0x1]
      %v10706 = vld [vmem:[%s3611 + $0x18] sm:$0xf]
      %v10707 = vld [vmem:[%s3611 + $0x1c] sm:$0xf]
      %v10708 = vld [vmem:[%s3611 + $0x20] sm:$0x1]
      %v10709 = vld [vmem:[%s3611 + $0x24] sm:$0xf]
      %v10710 = vld [vmem:[%s3611 + $0x28] sm:$0xf]
      %v10711 = vld [vmem:[%s3611 + $0x2c] sm:$0x1]
      %v10712 = vld [vmem:[%s3611 + $0x30] sm:$0xf]
      %v10713 = vld [vmem:[%s3611 + $0x34] sm:$0xf]
      %v10714 = vld [vmem:[%s3611 + $0x38] sm:$0x1]
      %v10715 = vld [vmem:[%s3611 + $0x3c] sm:$0xf]
      %v10716 = vld [vmem:[%s3611 + $0x40] sm:$0xf]
      %v10717 = vld [vmem:[%s3611 + $0x44] sm:$0x1]
      %v10718 = vld [vmem:[%s3611 + $0x48] sm:$0xf]
      %v10719 = vld [vmem:[%s3611 + $0x4c] sm:$0xf]
      %v10720 = vld [vmem:[%s3611 + $0x50] sm:$0x1]
      %v10721 = vld [vmem:[%s3611 + $0x54] sm:$0xf]
      %v10722 = vld [vmem:[%s3611 + $0x58] sm:$0xf]
      %v10723 = vld [vmem:[%s3611 + $0x5c] sm:$0x1]
      %v10724 = vld [vmem:[%s3611 + $0x60] sm:$0xf]
      %v10725 = vld [vmem:[%s3611 + $0x64] sm:$0xf]
      %v10726 = vld [vmem:[%s3611 + $0x68] sm:$0x1]
      %v10727 = vld [vmem:[%s3611 + $0x6c] sm:$0xf]
      %v10728 = vld [vmem:[%s3611 + $0x70] sm:$0xf]
      %v10729 = vld [vmem:[%s3611 + $0x74] sm:$0x1]
      %v10730 = vld [vmem:[%s3611 + $0x78] sm:$0xf]
      %v10731 = vld [vmem:[%s3611 + $0x7c] sm:$0xf]
      %v10732 = vld [vmem:[%s3611 + $0x80] sm:$0x1]
      %v10733 = vld [vmem:[%s3611 + $0x84] sm:$0xf]
      %v10734 = vld [vmem:[%s3611 + $0x88] sm:$0xf]
      %v10735 = vld [vmem:[%s3611 + $0x8c] sm:$0x1]
      %v10736 = vld [vmem:[%s3611 + $0x90] sm:$0xf]
      %v10737 = vld [vmem:[%s3611 + $0x94] sm:$0xf]
      %v10738 = vld [vmem:[%s3611 + $0x98] sm:$0x1]
      %v10739 = vld [vmem:[%s3611 + $0x9c] sm:$0xf]
      %v10740 = vld [vmem:[%s3611 + $0xa0] sm:$0xf]
      %v10741 = vld [vmem:[%s3611 + $0xa4] sm:$0x1]
      %v10742 = vld [vmem:[%s3611 + $0xa8] sm:$0xf]
      %v10743 = vld [vmem:[%s3611 + $0xac] sm:$0xf]
      %v10744 = vld [vmem:[%s3611 + $0xb0] sm:$0x1]
      %v10745 = vld [vmem:[%s3611 + $0xb4] sm:$0xf]
      %v10746 = vld [vmem:[%s3611 + $0xb8] sm:$0xf]
      %v10747 = vld [vmem:[%s3611 + $0xbc] sm:$0x1]
      %v10749 = vshrl.u32 %v10700, 16
      %v10751 = vrot.slane %v10749, 4
      %v10752 = vshll.u32 %v10700, 16
      %v10754 = vrot.slane %v10752, 5
      %v10755 = vor.u32 %v10751, %v10754
      %v10756 = vrot.slane %v10755, 4
      %v10758 = vshll.u32 %v10701, 16
      %v10760 = vrot.slane %v10758, 5
      %v10761 = vsel %vm312, %v10756, %v10760
      %v10762 = vshrl.u32 %v10701, 16
      %v10764 = vrot.slane %v10762, 4
      %v10765 = vor.u32 %v10764, %v10760
      %v10766 = vrot.slane %v10765, 4
      %v10768 = vshll.u32 %v10702, 16
      %v10770 = vrot.slane %v10768, 5
      %v10771 = vsel %vm312, %v10766, %v10770
      %v10773 = vshrl.u32 %v10703, 16
      %v10775 = vrot.slane %v10773, 4
      %v10776 = vshll.u32 %v10703, 16
      %v10778 = vrot.slane %v10776, 5
      %v10779 = vor.u32 %v10775, %v10778
      %v10780 = vrot.slane %v10779, 4
      %v10782 = vshll.u32 %v10704, 16
      %v10784 = vrot.slane %v10782, 5
      %v10785 = vsel %vm312, %v10780, %v10784
      %v10786 = vshrl.u32 %v10704, 16
      %v10788 = vrot.slane %v10786, 4
      %v10789 = vor.u32 %v10788, %v10784
      %v10790 = vrot.slane %v10789, 4
      %v10792 = vshll.u32 %v10705, 16
      %v10794 = vrot.slane %v10792, 5
      %v10795 = vsel %vm312, %v10790, %v10794
      %v10797 = vshrl.u32 %v10706, 16
      %v10799 = vrot.slane %v10797, 4
      %v10800 = vshll.u32 %v10706, 16
      %v10802 = vrot.slane %v10800, 5
      %v10803 = vor.u32 %v10799, %v10802
      %v10804 = vrot.slane %v10803, 4
      %v10806 = vshll.u32 %v10707, 16
      %v10808 = vrot.slane %v10806, 5
      %v10809 = vsel %vm312, %v10804, %v10808
      %v10810 = vshrl.u32 %v10707, 16
      %v10812 = vrot.slane %v10810, 4
      %v10813 = vor.u32 %v10812, %v10808
      %v10814 = vrot.slane %v10813, 4
      %v10816 = vshll.u32 %v10708, 16
      %v10818 = vrot.slane %v10816, 5
      %v10819 = vsel %vm312, %v10814, %v10818
      %v10821 = vshrl.u32 %v10709, 16
      %v10823 = vrot.slane %v10821, 4
      %v10824 = vshll.u32 %v10709, 16
      %v10826 = vrot.slane %v10824, 5
      %v10827 = vor.u32 %v10823, %v10826
      %v10828 = vrot.slane %v10827, 4
      %v10830 = vshll.u32 %v10710, 16
      %v10832 = vrot.slane %v10830, 5
      %v10833 = vsel %vm312, %v10828, %v10832
      %v10834 = vshrl.u32 %v10710, 16
      %v10836 = vrot.slane %v10834, 4
      %v10837 = vor.u32 %v10836, %v10832
      %v10838 = vrot.slane %v10837, 4
      %v10840 = vshll.u32 %v10711, 16
      %v10842 = vrot.slane %v10840, 5
      %v10843 = vsel %vm312, %v10838, %v10842
      %v10845 = vshrl.u32 %v10712, 16
      %v10847 = vrot.slane %v10845, 4
      %v10848 = vshll.u32 %v10712, 16
      %v10850 = vrot.slane %v10848, 5
      %v10851 = vor.u32 %v10847, %v10850
      %v10852 = vrot.slane %v10851, 4
      %v10854 = vshll.u32 %v10713, 16
      %v10856 = vrot.slane %v10854, 5
      %v10857 = vsel %vm312, %v10852, %v10856
      %v10858 = vshrl.u32 %v10713, 16
      %v10860 = vrot.slane %v10858, 4
      %v10861 = vor.u32 %v10860, %v10856
      %v10862 = vrot.slane %v10861, 4
      %v10864 = vshll.u32 %v10714, 16
      %v10866 = vrot.slane %v10864, 5
      %v10867 = vsel %vm312, %v10862, %v10866
      %v10869 = vshrl.u32 %v10715, 16
      %v10871 = vrot.slane %v10869, 4
      %v10872 = vshll.u32 %v10715, 16
      %v10874 = vrot.slane %v10872, 5
      %v10875 = vor.u32 %v10871, %v10874
      %v10876 = vrot.slane %v10875, 4
      %v10878 = vshll.u32 %v10716, 16
      %v10880 = vrot.slane %v10878, 5
      %v10881 = vsel %vm312, %v10876, %v10880
      %v10882 = vshrl.u32 %v10716, 16
      %v10884 = vrot.slane %v10882, 4
      %v10885 = vor.u32 %v10884, %v10880
      %v10886 = vrot.slane %v10885, 4
      %v10888 = vshll.u32 %v10717, 16
      %v10890 = vrot.slane %v10888, 5
      %v10891 = vsel %vm312, %v10886, %v10890
      %v10893 = vshrl.u32 %v10718, 16
      %v10895 = vrot.slane %v10893, 4
      %v10896 = vshll.u32 %v10718, 16
      %v10898 = vrot.slane %v10896, 5
      %v10899 = vor.u32 %v10895, %v10898
      %v10900 = vrot.slane %v10899, 4
      %v10902 = vshll.u32 %v10719, 16
      %v10904 = vrot.slane %v10902, 5
      %v10905 = vsel %vm312, %v10900, %v10904
      %v10906 = vshrl.u32 %v10719, 16
      %v10908 = vrot.slane %v10906, 4
      %v10909 = vor.u32 %v10908, %v10904
      %v10910 = vrot.slane %v10909, 4
      %v10912 = vshll.u32 %v10720, 16
      %v10914 = vrot.slane %v10912, 5
      %v10915 = vsel %vm312, %v10910, %v10914
      %v10917 = vshrl.u32 %v10721, 16
      %v10919 = vrot.slane %v10917, 4
      %v10920 = vshll.u32 %v10721, 16
      %v10922 = vrot.slane %v10920, 5
      %v10923 = vor.u32 %v10919, %v10922
      %v10924 = vrot.slane %v10923, 4
      %v10926 = vshll.u32 %v10722, 16
      %v10928 = vrot.slane %v10926, 5
      %v10929 = vsel %vm312, %v10924, %v10928
      %v10930 = vshrl.u32 %v10722, 16
      %v10932 = vrot.slane %v10930, 4
      %v10933 = vor.u32 %v10932, %v10928
      %v10934 = vrot.slane %v10933, 4
      %v10936 = vshll.u32 %v10723, 16
      %v10938 = vrot.slane %v10936, 5
      %v10939 = vsel %vm312, %v10934, %v10938
      %v10941 = vshrl.u32 %v10724, 16
      %v10943 = vrot.slane %v10941, 4
      %v10944 = vshll.u32 %v10724, 16
      %v10946 = vrot.slane %v10944, 5
      %v10947 = vor.u32 %v10943, %v10946
      %v10948 = vrot.slane %v10947, 4
      %v10950 = vshll.u32 %v10725, 16
      %v10952 = vrot.slane %v10950, 5
      %v10953 = vsel %vm312, %v10948, %v10952
      %v10954 = vshrl.u32 %v10725, 16
      %v10956 = vrot.slane %v10954, 4
      %v10957 = vor.u32 %v10956, %v10952
      %v10958 = vrot.slane %v10957, 4
      %v10960 = vshll.u32 %v10726, 16
      %v10962 = vrot.slane %v10960, 5
      %v10963 = vsel %vm312, %v10958, %v10962
      %v10965 = vshrl.u32 %v10727, 16
      %v10967 = vrot.slane %v10965, 4
      %v10968 = vshll.u32 %v10727, 16
      %v10970 = vrot.slane %v10968, 5
      %v10971 = vor.u32 %v10967, %v10970
      %v10972 = vrot.slane %v10971, 4
      %v10974 = vshll.u32 %v10728, 16
      %v10976 = vrot.slane %v10974, 5
      %v10977 = vsel %vm312, %v10972, %v10976
      %v10978 = vshrl.u32 %v10728, 16
      %v10980 = vrot.slane %v10978, 4
      %v10981 = vor.u32 %v10980, %v10976
      %v10982 = vrot.slane %v10981, 4
      %v10984 = vshll.u32 %v10729, 16
      %v10986 = vrot.slane %v10984, 5
      %v10987 = vsel %vm312, %v10982, %v10986
      %v10989 = vshrl.u32 %v10730, 16
      %v10991 = vrot.slane %v10989, 4
      %v10992 = vshll.u32 %v10730, 16
      %v10994 = vrot.slane %v10992, 5
      %v10995 = vor.u32 %v10991, %v10994
      %v10996 = vrot.slane %v10995, 4
      %v10998 = vshll.u32 %v10731, 16
      %v11000 = vrot.slane %v10998, 5
      %v11001 = vsel %vm312, %v10996, %v11000
      %v11002 = vshrl.u32 %v10731, 16
      %v11004 = vrot.slane %v11002, 4
      %v11005 = vor.u32 %v11004, %v11000
      %v11006 = vrot.slane %v11005, 4
      %v11008 = vshll.u32 %v10732, 16
      %v11010 = vrot.slane %v11008, 5
      %v11011 = vsel %vm312, %v11006, %v11010
      %v11013 = vshrl.u32 %v10733, 16
      %v11015 = vrot.slane %v11013, 4
      %v11016 = vshll.u32 %v10733, 16
      %v11018 = vrot.slane %v11016, 5
      %v11019 = vor.u32 %v11015, %v11018
      %v11020 = vrot.slane %v11019, 4
      %v11022 = vshll.u32 %v10734, 16
      %v11024 = vrot.slane %v11022, 5
      %v11025 = vsel %vm312, %v11020, %v11024
      %v11026 = vshrl.u32 %v10734, 16
      %v11028 = vrot.slane %v11026, 4
      %v11029 = vor.u32 %v11028, %v11024
      %v11030 = vrot.slane %v11029, 4
      %v11032 = vshll.u32 %v10735, 16
      %v11034 = vrot.slane %v11032, 5
      %v11035 = vsel %vm312, %v11030, %v11034
      %v11037 = vshrl.u32 %v10736, 16
      %v11039 = vrot.slane %v11037, 4
      %v11040 = vshll.u32 %v10736, 16
      %v11042 = vrot.slane %v11040, 5
      %v11043 = vor.u32 %v11039, %v11042
      %v11044 = vrot.slane %v11043, 4
      %v11046 = vshll.u32 %v10737, 16
      %v11048 = vrot.slane %v11046, 5
      %v11049 = vsel %vm312, %v11044, %v11048
      %v11050 = vshrl.u32 %v10737, 16
      %v11052 = vrot.slane %v11050, 4
      %v11053 = vor.u32 %v11052, %v11048
      %v11054 = vrot.slane %v11053, 4
      %v11056 = vshll.u32 %v10738, 16
      %v11058 = vrot.slane %v11056, 5
      %v11059 = vsel %vm312, %v11054, %v11058
      %v11061 = vshrl.u32 %v10739, 16
      %v11063 = vrot.slane %v11061, 4
      %v11064 = vshll.u32 %v10739, 16
      %v11066 = vrot.slane %v11064, 5
      %v11067 = vor.u32 %v11063, %v11066
      %v11068 = vrot.slane %v11067, 4
      %v11070 = vshll.u32 %v10740, 16
      %v11072 = vrot.slane %v11070, 5
      %v11073 = vsel %vm312, %v11068, %v11072
      %v11074 = vshrl.u32 %v10740, 16
      %v11076 = vrot.slane %v11074, 4
      %v11077 = vor.u32 %v11076, %v11072
      %v11078 = vrot.slane %v11077, 4
      %v11080 = vshll.u32 %v10741, 16
      %v11082 = vrot.slane %v11080, 5
      %v11083 = vsel %vm312, %v11078, %v11082
      %v11085 = vshrl.u32 %v10742, 16
      %v11087 = vrot.slane %v11085, 4
      %v11088 = vshll.u32 %v10742, 16
      %v11090 = vrot.slane %v11088, 5
      %v11091 = vor.u32 %v11087, %v11090
      %v11092 = vrot.slane %v11091, 4
      %v11094 = vshll.u32 %v10743, 16
      %v11096 = vrot.slane %v11094, 5
      %v11097 = vsel %vm312, %v11092, %v11096
      %v11098 = vshrl.u32 %v10743, 16
      %v11100 = vrot.slane %v11098, 4
      %v11101 = vor.u32 %v11100, %v11096
      %v11102 = vrot.slane %v11101, 4
      %v11104 = vshll.u32 %v10744, 16
      %v11106 = vrot.slane %v11104, 5
      %v11107 = vsel %vm312, %v11102, %v11106
      %v11109 = vshrl.u32 %v10745, 16
      %v11111 = vrot.slane %v11109, 4
      %v11112 = vshll.u32 %v10745, 16
      %v11114 = vrot.slane %v11112, 5
      %v11115 = vor.u32 %v11111, %v11114
      %v11116 = vrot.slane %v11115, 4
      %v11118 = vshll.u32 %v10746, 16
      %v11120 = vrot.slane %v11118, 5
      %v11121 = vsel %vm312, %v11116, %v11120
      %v11122 = vshrl.u32 %v10746, 16
      %v11124 = vrot.slane %v11122, 4
      %v11125 = vor.u32 %v11124, %v11120
      %v11126 = vrot.slane %v11125, 4
      %v11128 = vshll.u32 %v10747, 16
      %v11130 = vrot.slane %v11128, 5
      %v11131 = vsel %vm312, %v11126, %v11130
      %v11164 = vld [vmem:[%s4] sm:$0x1]
      %v11166 = vlaneseq
      %v11167 = vshrl.u32 %v11166, 7
      %v11168 = vsub.s32 0, %v11167
      %v11169 = vrot.slane %v11164, %v11168
      %v11171 = vadd.f32 %v10668, %v11169
      %v11172 = vadd.f32 %v10669, %v11169
      %v11173 = vadd.f32 %v10670, %v11169
      %v11174 = vadd.f32 %v10671, %v11169
      %v11175 = vadd.f32 %v10672, %v11169
      %v11176 = vadd.f32 %v10673, %v11169
      %v11177 = vadd.f32 %v10674, %v11169
      %v11178 = vadd.f32 %v10675, %v11169
      %v11179 = vadd.f32 %v10676, %v11169
      %v11180 = vadd.f32 %v10677, %v11169
      %v11181 = vadd.f32 %v10678, %v11169
      %v11182 = vadd.f32 %v10679, %v11169
      %v11183 = vadd.f32 %v10680, %v11169
      %v11184 = vadd.f32 %v10681, %v11169
      %v11185 = vadd.f32 %v10682, %v11169
      %v11186 = vadd.f32 %v10683, %v11169
      %v11187 = vadd.f32 %v10684, %v11169
      %v11188 = vadd.f32 %v10685, %v11169
      %v11189 = vadd.f32 %v10686, %v11169
      %v11190 = vadd.f32 %v10687, %v11169
      %v11191 = vadd.f32 %v10688, %v11169
      %v11192 = vadd.f32 %v10689, %v11169
      %v11193 = vadd.f32 %v10690, %v11169
      %v11194 = vadd.f32 %v10691, %v11169
      %v11195 = vadd.f32 %v10692, %v11169
      %v11196 = vadd.f32 %v10693, %v11169
      %v11197 = vadd.f32 %v10694, %v11169
      %v11198 = vadd.f32 %v10695, %v11169
      %v11199 = vadd.f32 %v10696, %v11169
      %v11200 = vadd.f32 %v10697, %v11169
      %v11201 = vadd.f32 %v10698, %v11169
      %v11202 = vadd.f32 %v10699, %v11169
      %v11203 = vunpack.c.l.bf16 %v10761
      %v11204 = vunpack.c.l.bf16 %v10771
      %v11205 = vunpack.c.l.bf16 %v10785
      %v11206 = vunpack.c.l.bf16 %v10795
      %v11207 = vunpack.c.l.bf16 %v10809
      %v11208 = vunpack.c.l.bf16 %v10819
      %v11209 = vunpack.c.l.bf16 %v10833
      %v11210 = vunpack.c.l.bf16 %v10843
      %v11211 = vunpack.c.l.bf16 %v10857
      %v11212 = vunpack.c.l.bf16 %v10867
      %v11213 = vunpack.c.l.bf16 %v10881
      %v11214 = vunpack.c.l.bf16 %v10891
      %v11215 = vunpack.c.l.bf16 %v10905
      %v11216 = vunpack.c.l.bf16 %v10915
      %v11217 = vunpack.c.l.bf16 %v10929
      %v11218 = vunpack.c.l.bf16 %v10939
      %v11219 = vunpack.c.l.bf16 %v10953
      %v11220 = vunpack.c.l.bf16 %v10963
      %v11221 = vunpack.c.l.bf16 %v10977
      %v11222 = vunpack.c.l.bf16 %v10987
      %v11223 = vunpack.c.l.bf16 %v11001
      %v11224 = vunpack.c.l.bf16 %v11011
      %v11225 = vunpack.c.l.bf16 %v11025
      %v11226 = vunpack.c.l.bf16 %v11035
      %v11227 = vunpack.c.l.bf16 %v11049
      %v11228 = vunpack.c.l.bf16 %v11059
      %v11229 = vunpack.c.l.bf16 %v11073
      %v11230 = vunpack.c.l.bf16 %v11083
      %v11231 = vunpack.c.l.bf16 %v11097
      %v11232 = vunpack.c.l.bf16 %v11107
      %v11233 = vunpack.c.l.bf16 %v11121
      %v11234 = vunpack.c.l.bf16 %v11131
      %v11235 = vadd.f32 %v11171, %v11203
      %v11236 = vadd.f32 %v11172, %v11204
      %v11237 = vadd.f32 %v11173, %v11205
      %v11238 = vadd.f32 %v11174, %v11206
      %v11239 = vadd.f32 %v11175, %v11207
      %v11240 = vadd.f32 %v11176, %v11208
      %v11241 = vadd.f32 %v11177, %v11209
      %v11242 = vadd.f32 %v11178, %v11210
      %v11243 = vadd.f32 %v11179, %v11211
      %v11244 = vadd.f32 %v11180, %v11212
      %v11245 = vadd.f32 %v11181, %v11213
      %v11246 = vadd.f32 %v11182, %v11214
      %v11247 = vadd.f32 %v11183, %v11215
      %v11248 = vadd.f32 %v11184, %v11216
      %v11249 = vadd.f32 %v11185, %v11217
      %v11250 = vadd.f32 %v11186, %v11218
      %v11251 = vadd.f32 %v11187, %v11219
      %v11252 = vadd.f32 %v11188, %v11220
      %v11253 = vadd.f32 %v11189, %v11221
      %v11254 = vadd.f32 %v11190, %v11222
      %v11255 = vadd.f32 %v11191, %v11223
      %v11256 = vadd.f32 %v11192, %v11224
      %v11257 = vadd.f32 %v11193, %v11225
      %v11258 = vadd.f32 %v11194, %v11226
      %v11259 = vadd.f32 %v11195, %v11227
      %v11260 = vadd.f32 %v11196, %v11228
      %v11261 = vadd.f32 %v11197, %v11229
      %v11262 = vadd.f32 %v11198, %v11230
      %v11263 = vadd.f32 %v11199, %v11231
      %v11264 = vadd.f32 %v11200, %v11232
      %v11265 = vadd.f32 %v11201, %v11233
      %v11266 = vadd.f32 %v11202, %v11234
      %v11267 = vmax.f32 %v11235, 0.0
      %v11268 = vmax.f32 %v11236, 0.0
      %v11269 = vmax.f32 %v11237, 0.0
      %v11270 = vmax.f32 %v11238, 0.0
      %v11271 = vmax.f32 %v11239, 0.0
      %v11272 = vmax.f32 %v11240, 0.0
      %v11273 = vmax.f32 %v11241, 0.0
      %v11274 = vmax.f32 %v11242, 0.0
      %v11275 = vmax.f32 %v11243, 0.0
      %v11276 = vmax.f32 %v11244, 0.0
      %v11277 = vmax.f32 %v11245, 0.0
      %v11278 = vmax.f32 %v11246, 0.0
      %v11279 = vmax.f32 %v11247, 0.0
      %v11280 = vmax.f32 %v11248, 0.0
      %v11281 = vmax.f32 %v11249, 0.0
      %v11282 = vmax.f32 %v11250, 0.0
      %v11283 = vmax.f32 %v11251, 0.0
      %v11284 = vmax.f32 %v11252, 0.0
      %v11285 = vmax.f32 %v11253, 0.0
      %v11286 = vmax.f32 %v11254, 0.0
      %v11287 = vmax.f32 %v11255, 0.0
      %v11288 = vmax.f32 %v11256, 0.0
      %v11289 = vmax.f32 %v11257, 0.0
      %v11290 = vmax.f32 %v11258, 0.0
      %v11291 = vmax.f32 %v11259, 0.0
      %v11292 = vmax.f32 %v11260, 0.0
      %v11293 = vmax.f32 %v11261, 0.0
      %v11294 = vmax.f32 %v11262, 0.0
      %v11295 = vmax.f32 %v11263, 0.0
      %v11296 = vmax.f32 %v11264, 0.0
      %v11297 = vmax.f32 %v11265, 0.0
      %v11298 = vmax.f32 %v11266, 0.0
      %v11299 = vpack.c.bf16 %v11268, %v11267
      %v11300 = vpack.c.bf16 %v11270, %v11269
      %v11301 = vpack.c.bf16 %v11272, %v11271
      %v11302 = vpack.c.bf16 %v11274, %v11273
      %v11303 = vpack.c.bf16 %v11276, %v11275
      %v11304 = vpack.c.bf16 %v11278, %v11277
      %v11305 = vpack.c.bf16 %v11280, %v11279
      %v11306 = vpack.c.bf16 %v11282, %v11281
      %v11307 = vpack.c.bf16 %v11284, %v11283
      %v11308 = vpack.c.bf16 %v11286, %v11285
      %v11309 = vpack.c.bf16 %v11288, %v11287
      %v11310 = vpack.c.bf16 %v11290, %v11289
      %v11311 = vpack.c.bf16 %v11292, %v11291
      %v11312 = vpack.c.bf16 %v11294, %v11293
      %v11313 = vpack.c.bf16 %v11296, %v11295
      %v11314 = vpack.c.bf16 %v11298, %v11297
      %v11331 = vunpack.c.l.b16 %v11299
      %v11332 = vunpack.c.h.b16 %v11299
      %v11333 = vunpack.c.l.b16 %v11300
      %v11334 = vunpack.c.h.b16 %v11300
      %v11335 = vunpack.c.l.b16 %v11301
      %v11336 = vunpack.c.h.b16 %v11301
      %v11337 = vunpack.c.l.b16 %v11302
      %v11338 = vunpack.c.h.b16 %v11302
      %v11339 = vunpack.c.l.b16 %v11303
      %v11340 = vunpack.c.h.b16 %v11303
      %v11341 = vunpack.c.l.b16 %v11304
      %v11342 = vunpack.c.h.b16 %v11304
      %v11343 = vunpack.c.l.b16 %v11305
      %v11344 = vunpack.c.h.b16 %v11305
      %v11345 = vunpack.c.l.b16 %v11306
      %v11346 = vunpack.c.h.b16 %v11306
      %v11347 = vunpack.c.l.b16 %v11307
      %v11348 = vunpack.c.h.b16 %v11307
      %v11349 = vunpack.c.l.b16 %v11308
      %v11350 = vunpack.c.h.b16 %v11308
      %v11351 = vunpack.c.l.b16 %v11309
      %v11352 = vunpack.c.h.b16 %v11309
      %v11353 = vunpack.c.l.b16 %v11310
      %v11354 = vunpack.c.h.b16 %v11310
      %v11355 = vunpack.c.l.b16 %v11311
      %v11356 = vunpack.c.h.b16 %v11311
      %v11357 = vunpack.c.l.b16 %v11312
      %v11358 = vunpack.c.h.b16 %v11312
      %v11359 = vunpack.c.l.b16 %v11313
      %v11360 = vunpack.c.h.b16 %v11313
      %v11361 = vunpack.c.l.b16 %v11314
      %v11362 = vunpack.c.h.b16 %v11314
      %v11363 = vpack.c.b16 %v11331, %v11331
      %v11364 = vpack.c.b16 %v11332, %v11332
      %v11365 = vpack.c.b16 %v11333, %v11333
      %v11366 = vpack.c.b16 %v11334, %v11334
      %v11367 = vpack.c.b16 %v11335, %v11335
      %v11368 = vpack.c.b16 %v11336, %v11336
      %v11369 = vpack.c.b16 %v11337, %v11337
      %v11370 = vpack.c.b16 %v11338, %v11338
      %v11371 = vpack.c.b16 %v11339, %v11339
      %v11372 = vpack.c.b16 %v11340, %v11340
      %v11373 = vpack.c.b16 %v11341, %v11341
      %v11374 = vpack.c.b16 %v11342, %v11342
      %v11375 = vpack.c.b16 %v11343, %v11343
      %v11376 = vpack.c.b16 %v11344, %v11344
      %v11377 = vpack.c.b16 %v11345, %v11345
      %v11378 = vpack.c.b16 %v11346, %v11346
      %v11379 = vpack.c.b16 %v11347, %v11347
      %v11380 = vpack.c.b16 %v11348, %v11348
      %v11381 = vpack.c.b16 %v11349, %v11349
      %v11382 = vpack.c.b16 %v11350, %v11350
      %v11383 = vpack.c.b16 %v11351, %v11351
      %v11384 = vpack.c.b16 %v11352, %v11352
      %v11385 = vpack.c.b16 %v11353, %v11353
      %v11386 = vpack.c.b16 %v11354, %v11354
      %v11387 = vpack.c.b16 %v11355, %v11355
      %v11388 = vpack.c.b16 %v11356, %v11356
      %v11389 = vpack.c.b16 %v11357, %v11357
      %v11390 = vpack.c.b16 %v11358, %v11358
      %v11391 = vpack.c.b16 %v11359, %v11359
      %v11392 = vpack.c.b16 %v11360, %v11360
      %v11393 = vpack.c.b16 %v11361, %v11361
      %v11394 = vpack.c.b16 %v11362, %v11362
      %11427 = vst.msk [vmem:[%s248] sm:$0xf] %vm6013, %v11363
      %11428 = vst.msk [vmem:[%s248 + $0x4] sm:$0xf] %vm6013, %v11364
      %11429 = vst.msk [vmem:[%s248 + $0x8] sm:$0xf] %vm6013, %v11365
      %11430 = vst.msk [vmem:[%s248 + $0xc] sm:$0xf] %vm6013, %v11366
      %11431 = vst.msk [vmem:[%s248 + $0x10] sm:$0xf] %vm6013, %v11367
      %11432 = vst.msk [vmem:[%s248 + $0x14] sm:$0xf] %vm6013, %v11368
      %11433 = vst.msk [vmem:[%s248 + $0x18] sm:$0xf] %vm6013, %v11369
      %11434 = vst.msk [vmem:[%s248 + $0x1c] sm:$0xf] %vm6013, %v11370
      %11435 = vst.msk [vmem:[%s248 + $0x20] sm:$0xf] %vm6013, %v11371
      %11436 = vst.msk [vmem:[%s248 + $0x24] sm:$0xf] %vm6013, %v11372
      %11437 = vst.msk [vmem:[%s248 + $0x28] sm:$0xf] %vm6013, %v11373
      %11438 = vst.msk [vmem:[%s248 + $0x2c] sm:$0xf] %vm6013, %v11374
      %11439 = vst.msk [vmem:[%s248 + $0x30] sm:$0xf] %vm6013, %v11375
      %11440 = vst.msk [vmem:[%s248 + $0x34] sm:$0xf] %vm6013, %v11376
      %11441 = vst.msk [vmem:[%s248 + $0x38] sm:$0xf] %vm6013, %v11377
      %11442 = vst.msk [vmem:[%s248 + $0x3c] sm:$0xf] %vm6013, %v11378
      %11443 = vst.msk [vmem:[%s248 + $0x40] sm:$0xf] %vm6013, %v11379
      %11444 = vst.msk [vmem:[%s248 + $0x44] sm:$0xf] %vm6013, %v11380
      %11445 = vst.msk [vmem:[%s248 + $0x48] sm:$0xf] %vm6013, %v11381
      %11446 = vst.msk [vmem:[%s248 + $0x4c] sm:$0xf] %vm6013, %v11382
      %11447 = vst.msk [vmem:[%s248 + $0x50] sm:$0xf] %vm6013, %v11383
      %11448 = vst.msk [vmem:[%s248 + $0x54] sm:$0xf] %vm6013, %v11384
      %11449 = vst.msk [vmem:[%s248 + $0x58] sm:$0xf] %vm6013, %v11385
      %11450 = vst.msk [vmem:[%s248 + $0x5c] sm:$0xf] %vm6013, %v11386
      %11451 = vst.msk [vmem:[%s248 + $0x60] sm:$0xf] %vm6013, %v11387
      %11452 = vst.msk [vmem:[%s248 + $0x64] sm:$0xf] %vm6013, %v11388
      %11453 = vst.msk [vmem:[%s248 + $0x68] sm:$0xf] %vm6013, %v11389
      %11454 = vst.msk [vmem:[%s248 + $0x6c] sm:$0xf] %vm6013, %v11390
      %11455 = vst.msk [vmem:[%s248 + $0x70] sm:$0xf] %vm6013, %v11391
      %11456 = vst.msk [vmem:[%s248 + $0x74] sm:$0xf] %vm6013, %v11392
      %11457 = vst.msk [vmem:[%s248 + $0x78] sm:$0xf] %vm6013, %v11393
      %11458 = vst.msk [vmem:[%s248 + $0x7c] sm:$0xf] %vm6013, %v11394
      %s11459 = smul.u32 16, %s21
      %p11460 = scmp.lt.s32.totalorder %s20, 1
      %s11461 = scalar_select %p11460, %s20, 1
      %p11462 = scmp.lt.s32.totalorder %s11459, 15
      %s11463 = scalar_select %p11462, %s11459, 15
      %s11464 = smul.addr %s11463, 2
      %s11465 = smul.addr %s11461, 32
      %s11466 = sadd.s32 %s11464, %s11465
      %s11467 = smul.addr %s11466, 4
      %s11468 = scalar_lea.vmem %s5, %s11467
      // Predicated region
      $region45: #{basic_block_pallas_nhwc.1} parent=39 // pred_check
        %p11469 = pneg %p158
      $region46: #{basic_block_pallas_nhwc.1} parent=39 // pred_check_branch
        %11471 = sbr.rel (%p11469) target = $region48
      $region47: #{basic_block_pallas_nhwc.1} parent=39 // pred_region
        %s11472 = smul.u32 16, %s21
      $region48: #{basic_block_pallas_nhwc.1} parent=39 // pred_fallthru
        _
    $region40: #{basic_block_pallas_nhwc.1} parent=5 // pred_fallthru
      _
    %p11473 = scmp.le.s32.totalorder 2, %s11
    // Predicated region
    $region49: #{basic_block_pallas_nhwc.1} parent=5 // pred_check
      %p11474 = pneg %p11473
    $region50: #{basic_block_pallas_nhwc.1} parent=5 // pred_check_branch
      %11476 = sbr.rel (%p11474) target = $region52
    $region51: #{basic_block_pallas_nhwc.1} parent=5 // pred_region
      %s11477 = ssub.s32 %s11, 2
      // Predicated region
      $region53: #{basic_block_pallas_nhwc.1} parent=51 // pred_check
        %p11478 = pneg %p164
      $region54: #{basic_block_pallas_nhwc.1} parent=51 // pred_check_branch
        %11480 = sbr.rel (%p11478) target = $region56
      $region55: #{basic_block_pallas_nhwc.1} parent=51 // pred_region
        %s11481 = smul.u32 16, %s23
        %p11482 = scmp.lt.s32.totalorder %s22, 1
        %s11483 = scalar_select %p11482, %s22, 1
        %p11484 = scmp.lt.s32.totalorder %s11481, 15
        %s11485 = scalar_select %p11484, %s11481, 15
        %s11486 = smul.addr %s11485, 2
        %s11487 = smul.addr %s11483, 32
        %s11488 = sadd.s32 %s11486, %s11487
        %s11489 = smul.addr %s11488, 4
        %s11490 = scalar_lea.vmem %s5, %s11489
      $region56: #{basic_block_pallas_nhwc.1} parent=51 // pred_fallthru
        _
    $region52: #{basic_block_pallas_nhwc.1} parent=5 // pred_fallthru
      _
  $region6: #{basic_block_pallas_nhwc.1} parent=0 // loop_footer
    %s15 = sadd.s32 1, %s11
  $region7: #{basic_block_pallas_nhwc.1} parent=0 // loop_footer_branch
    %10 = sbr.rel target = $region3
  $region8: #{basic_block_pallas_nhwc.1} parent=0 // loop_exit
    _

</llo_original>
